<compile_context>
chip_gen: v7x
topology: tpu7x:2x2x1
jax: 0.10.0
libtpu: 0.0.40
codegen_flags: <defaults>
</compile_context>

<pallas_src>
import math
from functools import partial

import jax
import jax.numpy as jnp
from jax.experimental import pallas as pl
from jax.experimental.pallas import tpu as pltpu

# ---- small-scale config (original: n_embd=768, n_head=12, n_layer=12, vocab=50257,
#      visual_dim=1664, hidden=896, 256 image patches; scaled down, same structure,
#      feature dims chosen as 128-multiples so every kernel output is lane-dense) ----
IN_CH, IMG_SIZE, PATCH = 3, 16, 8
N_PATCH = (IMG_SIZE // PATCH) ** 2      # 4   (original: 256 -> hardcoded slice index)
D_ENC = 128                             # visual_dim       (original: 1664)
ENC_LAYERS, ENC_HEADS = 2, 2
HIDDEN_VIS = 128                        # visual_projection hidden (original: 896)
N_EMBD, N_HEAD, N_LAYER = 128, 2, 2
VOCAB, BLOCK_SIZE = 256, 32
T_TEXT = 8

# Parallel grid steps for the fused transformer-block kernel.
# 2 keeps both v7x TensorCores busy; set to 1 on single-TC v5e/v6e so the whole batch is
# folded into one (B*T, C) MXU slab with zero per-step grid overhead.
N_BLOCK_PROGRAMS = 2

# MXU operand dtype (accumulation stays f32; LN / softmax / GELU stay f32 on the VPU/EUP).
DOT_DT = jnp.bfloat16
W_DT = jnp.bfloat16                     # storage dtype for weight matrices / embeddings


def _vmem_limit_bytes():
    # Per-generation VMEM budget: ~3/4 of physical (128 MiB v5e/v6e -> ~96 MiB, 64 MiB v7x -> 48 MiB).
    try:
        phys = pltpu.get_tpu_info().vmem_capacity_bytes
    except Exception:
        phys = 64 * 1024 * 1024
    return int(min(phys * 3 // 4, 100 * 1024 * 1024))


_VMEM_LIMIT = _vmem_limit_bytes()


def _tile(dim, pref, align=128):
    """Largest `align`-aligned divisor of `dim` that is <= pref (full extent for small dims)."""
    if dim <= pref:
        return dim
    for cand in range(pref, 0, -align):
        if cand % align == 0 and dim % cand == 0:
            return cand
    # TODO(synk): dims with no aligned divisor (e.g. vocab=50257 at production scale) need a
    # pl.cdiv grid + tail masking rather than this full-extent fallback.
    return dim


# ============================ in-kernel math helpers ============================

def _ln(x, g, b):
    # PyTorch LayerNorm (biased variance, eps=1e-5), f32 math
    mu = jnp.mean(x, axis=-1, keepdims=True)
    xc = x - mu
    var = jnp.mean(xc * xc, axis=-1, keepdims=True)
    return xc * jax.lax.rsqrt(var + 1e-5) * g + b


def _gelu_tanh(x):
    # PyTorch nn.GELU(approximate='tanh')
    c = math.sqrt(2.0 / math.pi)
    return 0.5 * x * (1.0 + jnp.tanh(c * (x + 0.044715 * x * x * x)))


def _erf_approx(x):
    # Abramowitz & Stegun 7.1.26, max abs err ~1.5e-7 (float32-accurate); exp runs on the EUP.
    p = 0.3275911
    a1, a2, a3, a4, a5 = 0.254829592, -0.284496736, 1.421413741, -1.453152027, 1.061405429
    s = jnp.where(x < 0.0, -1.0, 1.0)
    ax = jnp.abs(x)
    t = 1.0 / (1.0 + p * ax)
    poly = ((((a5 * t + a4) * t + a3) * t + a2) * t + a1) * t
    return s * (1.0 - poly * jnp.exp(-ax * ax))


def _gelu_erf(x):
    # PyTorch nn.GELU() (exact, erf-based) implemented fully in-kernel
    return 0.5 * x * (1.0 + _erf_approx(x * (1.0 / math.sqrt(2.0))))


# ============================ Pallas kernels ============================

def _matmul_bias_kernel(x_ref, w_ref, b_ref, o_ref, acc_ref):
    # tiled y = x @ w + b with K-reduction accumulator in VMEM; bf16 operands, f32 accumulate
    @pl.when(pl.program_id(2) == 0)
    def _():
        acc_ref[...] = jnp.zeros_like(acc_ref)

    acc_ref[...] += jnp.dot(x_ref[...].astype(DOT_DT), w_ref[...],
                            preferred_element_type=jnp.float32)

    @pl.when(pl.program_id(2) == pl.num_programs(2) - 1)
    def _():
        o_ref[...] = acc_ref[...] + b_ref[...]


def pallas_linear(x, w, b):
    # general (in, out)-layout linear; used only for the patch embedding here
    lead, K = x.shape[:-1], x.shape[-1]
    N = w.shape[1]
    x2 = x.reshape(-1, K)
    M = x2.shape[0]
    tm, tn, tk = _tile(M, 256, 8), _tile(N, 256, 128), _tile(K, 512, 128)
    out = pl.pallas_call(
        _matmul_bias_kernel,
        out_shape=jax.ShapeDtypeStruct((M, N), jnp.float32),
        grid=(M // tm, N // tn, K // tk),
        in_specs=[
            pl.BlockSpec((tm, tk), lambda i, j, k: (i, k)),
            pl.BlockSpec((tk, tn), lambda i, j, k: (k, j)),
            pl.BlockSpec((1, tn), lambda i, j, k: (0, j)),
        ],
        out_specs=pl.BlockSpec((tm, tn), lambda i, j, k: (i, j)),
        scratch_shapes=[pltpu.VMEM((tm, tn), jnp.float32)],
        compiler_params=pltpu.CompilerParams(
            dimension_semantics=("parallel", "parallel", "arbitrary"),
            vmem_limit_bytes=_VMEM_LIMIT,
        ),
    )(x2, w, b.reshape(1, N))
    return out.reshape(*lead, N)


def _block_kernel(x_ref, ln1g, ln1b, wqkv, bqkv, wproj, bproj,
                  ln2g, ln2b, wfc, bfc, wmp, bmp, o_ref,
                  *, n_head, causal, gelu_tanh):
    # One full transformer block fused. The batch chunk is folded into the row dimension for
    # every dense op (big-M MXU slabs); attention uses head-batched contractions.
    Bc, T, C = x_ref.shape
    hd = C // n_head
    G = Bc * n_head
    scale = 1.0 / math.sqrt(hd)

    x = x_ref[...].reshape(Bc * T, C)                                     # (M, C), M = Bc*T

    # --- attention branch: LN -> fused QKV -> head-batched SDPA -> out-proj -> residual ---
    h = _ln(x, ln1g[...], ln1b[...])
    qkv = jnp.dot(h.astype(DOT_DT), wqkv[...],
                  preferred_element_type=jnp.float32) + bqkv[...]         # (M, 3C) f32

    def heads(m):   # (M, C) -> head-major (G, T, hd)
        return jnp.transpose(m.reshape(Bc, T, n_head, hd), (0, 2, 1, 3)).reshape(G, T, hd)

    q = heads(qkv[:, 0:C]).astype(DOT_DT)
    k = heads(qkv[:, C:2 * C]).astype(DOT_DT)
    v = heads(qkv[:, 2 * C:3 * C]).astype(DOT_DT)

    s = jnp.einsum('gtd,gsd->gts', q, k, preferred_element_type=jnp.float32) * scale
    if causal:
        row = jax.lax.broadcasted_iota(jnp.int32, (G, T, T), 1)
        col = jax.lax.broadcasted_iota(jnp.int32, (G, T, T), 2)
        s = jnp.where(col <= row, s, -jnp.inf)                            # masked_fill(mask==0, -inf)
    m = jnp.max(s, axis=-1, keepdims=True)
    p = jnp.exp(s - m)
    # NOTE: approx reciprocal (EUP) — swap for exact division when running strict parity tests.
    att = p * pl.reciprocal(jnp.sum(p, axis=-1, keepdims=True), approx=True)
    ctx = jnp.einsum('gts,gsd->gtd', att.astype(DOT_DT), v,
                     preferred_element_type=jnp.float32)                  # (G, T, hd) f32
    # merge heads back to (M, C); output projection is a single (M, C) x (C, C) dot
    ctx = jnp.transpose(ctx.reshape(Bc, n_head, T, hd), (0, 2, 1, 3)).reshape(Bc * T, C)
    x = x + jnp.dot(ctx.astype(DOT_DT), wproj[...],
                    preferred_element_type=jnp.float32) + bproj[...]

    # --- MLP branch ---
    h2 = _ln(x, ln2g[...], ln2b[...])
    hmid = jnp.dot(h2.astype(DOT_DT), wfc[...],
                   preferred_element_type=jnp.float32) + bfc[...]
    hact = _gelu_tanh(hmid) if gelu_tanh else _gelu_erf(hmid)
    y = x + jnp.dot(hact.astype(DOT_DT), wmp[...],
                    preferred_element_type=jnp.float32) + bmp[...]
    o_ref[...] = y.reshape(Bc, T, C)


def pallas_transformer_block(x, prm, *, n_head, causal, gelu_tanh):
    # prm: 12 arrays (all 2D) in kernel order; weights are grid-invariant full blocks.
    B, T, C = x.shape
    n_prog = N_BLOCK_PROGRAMS if (B % N_BLOCK_PROGRAMS == 0) else 1
    bc = B // n_prog
    x_spec = pl.BlockSpec((bc, T, C), lambda g: (g, 0, 0))
    return pl.pallas_call(
        partial(_block_kernel, n_head=n_head, causal=causal, gelu_tanh=gelu_tanh),
        out_shape=jax.ShapeDtypeStruct((B, T, C), jnp.float32),
        grid=(n_prog,),
        in_specs=[x_spec] + [pl.BlockSpec(a.shape, lambda g: (0, 0)) for a in prm],
        out_specs=x_spec,
        compiler_params=pltpu.CompilerParams(dimension_semantics=("parallel",),
                                             vmem_limit_bytes=_VMEM_LIMIT),
    )(x, *prm)


def _lnvp_kernel(x_ref, g_ref, b_ref, w1_ref, b1_ref, w2_ref, b2_ref, gate_ref, o_ref):
    # encoder final LayerNorm + visual_projection (Linear -> exact GELU -> Dropout(id) -> Linear)
    # + gate_image, fused; bf16 operands into the MXU, f32 elsewhere
    h = _ln(x_ref[...], g_ref[...], b_ref[...])
    h = jnp.dot(h.astype(DOT_DT), w1_ref[...], preferred_element_type=jnp.float32) + b1_ref[...]
    h = _gelu_erf(h)
    o_ref[...] = (jnp.dot(h.astype(DOT_DT), w2_ref[...], preferred_element_type=jnp.float32)
                  + b2_ref[...]) * gate_ref[...]


def pallas_ln_visproj(x, ln_g, ln_b, w1, b1, w2, b2, gate):
    B, N, D = x.shape
    x2 = x.reshape(B * N, D)
    M = B * N
    Hv, Dout = w1.shape[1], w2.shape[1]
    tm = _tile(M, 256, 8)
    out = pl.pallas_call(
        _lnvp_kernel,
        out_shape=jax.ShapeDtypeStruct((M, Dout), jnp.float32),
        grid=(M // tm,),
        in_specs=[
            pl.BlockSpec((tm, D), lambda i: (i, 0)),
            pl.BlockSpec((1, D), lambda i: (0, 0)),
            pl.BlockSpec((1, D), lambda i: (0, 0)),
            pl.BlockSpec((D, Hv), lambda i: (0, 0)),
            pl.BlockSpec((1, Hv), lambda i: (0, 0)),
            pl.BlockSpec((Hv, Dout), lambda i: (0, 0)),
            pl.BlockSpec((1, Dout), lambda i: (0, 0)),
            pl.BlockSpec((1, Dout), lambda i: (0, 0)),
        ],
        out_specs=pl.BlockSpec((tm, Dout), lambda i: (i, 0)),
        compiler_params=pltpu.CompilerParams(dimension_semantics=("parallel",),
                                             vmem_limit_bytes=_VMEM_LIMIT),
    )(x2, ln_g.reshape(1, D), ln_b.reshape(1, D), w1, b1.reshape(1, Hv),
      w2, b2.reshape(1, Dout), gate.reshape(1, Dout))
    return out.reshape(B, N, Dout)


def _lnf_lmhead_kernel(x_ref, g_ref, b_ref, wt_ref, o_ref, h_ref, *, n_img):
    # ln_f + tied lm_head (no bias) on the TEXT rows only.
    #  * text-row slice done here via the block view (no wrapper-side x[:, n_img:] HBM round trip)
    #  * LayerNorm hoisted out of the vocab axis: computed once per row tile (j == 0) and cached
    #    in a bf16 VMEM scratch; every vocab tile is then a pure (T_txt, C) x (C, tv) MXU dot.
    #  * wte was transposed once per forward in the wrapper -> no per-tile in-kernel transpose.
    @pl.when(pl.program_id(1) == 0)
    def _():
        h = _ln(x_ref[n_img:, :], g_ref[...], b_ref[...])
        h_ref[...] = h.astype(h_ref.dtype)

    o_ref[...] = jnp.dot(h_ref[...], wt_ref[...], preferred_element_type=jnp.float32)


def pallas_lnf_lmhead(x, g, b, wte, n_img):
    B, S, C = x.shape
    T_txt = S - n_img
    V = wte.shape[0]
    wte_t = wte.T                       # one (C, V) transpose per forward, reused by every tile
    tv = _tile(V, 512, 128)
    return pl.pallas_call(
        partial(_lnf_lmhead_kernel, n_img=n_img),
        out_shape=jax.ShapeDtypeStruct((B, T_txt, V), jnp.float32),
        grid=(B, V // tv),
        in_specs=[
            pl.BlockSpec((None, S, C), lambda i, j: (i, 0, 0)),
            pl.BlockSpec((1, C), lambda i, j: (0, 0)),
            pl.BlockSpec((1, C), lambda i, j: (0, 0)),
            pl.BlockSpec((C, tv), lambda i, j: (0, j)),
        ],
        out_specs=pl.BlockSpec((None, T_txt, tv), lambda i, j: (i, 0, j)),
        scratch_shapes=[pltpu.VMEM((T_txt, C), DOT_DT)],
        compiler_params=pltpu.CompilerParams(
            dimension_semantics=("parallel", "arbitrary"),
            vmem_limit_bytes=_VMEM_LIMIT,
        ),
    )(x, g.reshape(1, C), b.reshape(1, C), wte_t)


# ============================ model (glue in plain JAX) ============================

def _enc_block_params(bp):
    v = lambda a: a.reshape(1, -1)
    return (v(bp["ln1_g"]), v(bp["ln1_b"]),
            bp["qkv_w"], v(bp["qkv_b"]),
            bp["proj_w"], v(bp["proj_b"]),
            v(bp["ln2_g"]), v(bp["ln2_b"]),
            bp["fc1_w"], v(bp["fc1_b"]),
            bp["fc2_w"], v(bp["fc2_b"]))


def _dec_block_params(bp):
    v = lambda a: a.reshape(1, -1)
    return (v(bp["ln1_g"]), v(bp["ln1_b"]),
            bp["attn_w"], v(bp["attn_b"]),
            bp["attn_proj_w"], v(bp["attn_proj_b"]),
            v(bp["ln2_g"]), v(bp["ln2_b"]),
            bp["fc_w"], v(bp["fc_b"]),
            bp["mproj_w"], v(bp["mproj_b"]))


def encoder_forward(p, images):
    # images: (B, 3, 16, 16) NCHW -> im2col patches (B, N_PATCH, C*p*p)  [glue]
    B = images.shape[0]
    g = IMG_SIZE // PATCH
    x = images.reshape(B, IN_CH, g, PATCH, g, PATCH)
    x = jnp.transpose(x, (0, 2, 4, 1, 3, 5)).reshape(B, N_PATCH, IN_CH * PATCH * PATCH)
    tok = pallas_linear(x, p["patch_w"], p["patch_b"])             # patch embedding (conv-as-matmul)
    cls = jnp.broadcast_to(p["cls"], (B, 1, D_ENC))
    tok = jnp.concatenate([cls, tok], axis=1) + p["pos"]
    for bp in p["blocks"]:
        tok = pallas_transformer_block(tok, _enc_block_params(bp),
                                       n_head=ENC_HEADS, causal=False, gelu_tanh=False)
    return tok   # pre-final-norm; final encoder LN is fused into the visual-projection kernel


def decoder_forward(p, proj_features, text_tokens):
    B, Ttxt = text_tokens.shape
    pos = jnp.arange(Ttxt, dtype=jnp.int32)
    # token / position embedding gather stays in plain JAX (glue); gate_text applied here
    text_emb = (p["wte"][text_tokens] + p["wpe"][pos][None, :, :]) * p["gate_text"]
    x = jnp.concatenate([proj_features, text_emb], axis=1)          # (B, N_PATCH + Ttxt, n_embd)

    for bp in p["blocks"]:
        x = pallas_transformer_block(x, _dec_block_params(bp),
                                     n_head=N_HEAD, causal=True, gelu_tanh=True)
    # attn-weights aggregation in the original is dead code for attn_map=False -> dropped.

    # lm_head kernel slices the TEXT rows itself (N_PATCH image tokens up front; the original
    # hardcodes 256); ln_f is per-token so slice-then-normalize is identical to the original.
    return pallas_lnf_lmhead(x, p["lnf_g"], p["lnf_b"], p["wte"], N_PATCH)


def img_text_model_forward(params, images, captions):
    enc, dec = params["encoder"], params["decoder"]
    tokens = encoder_forward(enc, images)                           # encoder.forward_features (pre-norm)
    feats = tokens[:, 1:, :]                                        # drop CLS (per-token LN commutes with slice)
    proj = pallas_ln_visproj(feats, enc["ln_g"], enc["ln_b"],
                             dec["vp1_w"], dec["vp1_b"], dec["vp2_w"], dec["vp2_b"],
                             dec["gate_image"])                     # Dropout(0.2): eval identity
    return decoder_forward(dec, proj, captions)


# ============================ deterministic parameter init ============================

def init_params(key):
    ks = iter(jax.random.split(key, 512))

    def nrm(shape, dtype=W_DT, s=0.02):
        # weight matrices / embeddings stored in bf16 (MXU operand dtype, halves HBM/VMEM);
        # LN params, biases, gates, cls/pos stay f32
        return (jax.random.normal(next(ks), shape, jnp.float32) * s).astype(dtype)

    def ln(c):
        return jnp.ones((c,), jnp.float32), jnp.zeros((c,), jnp.float32)

    enc_blocks = []
    for _ in range(ENC_LAYERS):
        l1g, l1b = ln(D_ENC)
        l2g, l2b = ln(D_ENC)
        enc_blocks.append(dict(
            ln1_g=l1g, ln1_b=l1b,
            qkv_w=nrm((D_ENC, 3 * D_ENC)), qkv_b=jnp.zeros((3 * D_ENC,), jnp.float32),
            proj_w=nrm((D_ENC, D_ENC)), proj_b=jnp.zeros((D_ENC,), jnp.float32),
            ln2_g=l2g, ln2_b=l2b,
            fc1_w=nrm((D_ENC, 4 * D_ENC)), fc1_b=jnp.zeros((4 * D_ENC,), jnp.float32),
            fc2_w=nrm((4 * D_ENC, D_ENC)), fc2_b=jnp.zeros((D_ENC,), jnp.float32),
        ))
    lg, lb = ln(D_ENC)
    encoder = dict(
        patch_w=nrm((IN_CH * PATCH * PATCH, D_ENC)),
        patch_b=jnp.zeros((D_ENC,), jnp.float32),
        cls=nrm((1, 1, D_ENC), dtype=jnp.float32),
        pos=nrm((1, 1 + N_PATCH, D_ENC), dtype=jnp.float32),
        blocks=enc_blocks, ln_g=lg, ln_b=lb,
    )

    dec_blocks = []
    for _ in range(N_LAYER):
        l1g, l1b = ln(N_EMBD)
        l2g, l2b = ln(N_EMBD)
        dec_blocks.append(dict(
            ln1_g=l1g, ln1_b=l1b,
            attn_w=nrm((N_EMBD, 3 * N_EMBD)), attn_b=jnp.zeros((3 * N_EMBD,), jnp.float32),
            attn_proj_w=nrm((N_EMBD, N_EMBD)), attn_proj_b=jnp.zeros((N_EMBD,), jnp.float32),
            ln2_g=l2g, ln2_b=l2b,
            fc_w=nrm((N_EMBD, 4 * N_EMBD)), fc_b=jnp.zeros((4 * N_EMBD,), jnp.float32),
            mproj_w=nrm((4 * N_EMBD, N_EMBD)), mproj_b=jnp.zeros((N_EMBD,), jnp.float32),
        ))
    lfg, lfb = ln(N_EMBD)
    decoder = dict(
        vp1_w=nrm((D_ENC, HIDDEN_VIS)), vp1_b=jnp.zeros((HIDDEN_VIS,), jnp.float32),
        vp2_w=nrm((HIDDEN_VIS, N_EMBD)), vp2_b=jnp.zeros((N_EMBD,), jnp.float32),
        gate_image=jnp.ones((N_EMBD,), jnp.float32),
        gate_text=jnp.ones((N_EMBD,), jnp.float32),
        wte=nrm((VOCAB, N_EMBD)), wpe=nrm((BLOCK_SIZE, N_EMBD)),
        blocks=dec_blocks, lnf_g=lfg, lnf_b=lfb,
    )
    return dict(encoder=encoder, decoder=decoder)


# ============================ main ============================

if __name__ == "__main__":
    key = jax.random.PRNGKey(0)
    kp, ki, kc = jax.random.split(key, 3)

    params = init_params(kp)
    B = 2
    images = jax.random.normal(ki, (B, IN_CH, IMG_SIZE, IMG_SIZE), jnp.float32)   # NCHW
    captions = jax.random.randint(kc, (B, T_TEXT), 0, VOCAB, dtype=jnp.int32)

    fwd = jax.jit(img_text_model_forward)
    logits_text = fwd(params, images, captions)
    jax.block_until_ready(logits_text)

    assert logits_text.shape == (B, T_TEXT, VOCAB), logits_text.shape
    assert logits_text.dtype == jnp.float32
    print("KERNEL_OK")
</pallas_src>

<mosaic_0001>
module attributes {stable_mosaic.version = 11 : i64} {
  func.func @_matmul_bias_kernel(%arg0: i32, %arg1: i32, %arg2: i32, %arg3: memref<8x192xf32, #tpu.memory_space<vmem>>, %arg4: memref<192x128xbf16, #tpu.memory_space<vmem>>, %arg5: memref<1x128xf32, #tpu.memory_space<vmem>>, %arg6: memref<8x128xf32, #tpu.memory_space<vmem>>, %arg7: memref<8x128xf32, #tpu.memory_space<vmem>>) attributes {dimension_semantics = [#tpu.dimension_semantics<parallel>, #tpu.dimension_semantics<parallel>, #tpu.dimension_semantics<arbitrary>], iteration_bounds = array<i64: 1, 1, 1>, scalar_prefetch = 0 : i64, scratch_operands = 1 : i64, tpu.core_type = #tpu.core_type<tc>, window_params = [{transform_indices = @transform_0, window_bounds = array<i64: 8, 192>}, {transform_indices = @transform_1, window_bounds = array<i64: 192, 128>}, {transform_indices = @transform_2, window_bounds = array<i64: 1, 128>}, {transform_indices = @transform_3, window_bounds = array<i64: 8, 128>}]} {
    %c0_i32 = arith.constant 0 : i32
    %0 = arith.cmpi eq, %arg2, %c0_i32 : i32
    %1 = arith.extui %0 : i1 to i32
    %c0_i32_0 = arith.constant 0 : i32
    %2 = arith.cmpi ne, %1, %c0_i32_0 : i32
    scf.if %2 {
      %cst_10 = arith.constant 0.000000e+00 : f32
      %13 = vector.broadcast %cst_10 : f32 to vector<8x128xf32>
      %c0_11 = arith.constant 0 : index
      %c0_12 = arith.constant 0 : index
      %14 = vector.load %arg7[%c0_11, %c0_12] : memref<8x128xf32, #tpu.memory_space<vmem>>, vector<8x128xf32>
      tpu.vector_store %arg7[%c0_11, %c0_12], %13 {strides = array<i32>} : memref<8x128xf32, #tpu.memory_space<vmem>>, vector<8x128xf32>,
    } else {
    }
    %c0 = arith.constant 0 : index
    %c0_1 = arith.constant 0 : index
    %3 = vector.load %arg7[%c0, %c0_1] : memref<8x128xf32, #tpu.memory_space<vmem>>, vector<8x128xf32>
    %c0_2 = arith.constant 0 : index
    %c0_3 = arith.constant 0 : index
    %4 = vector.load %arg3[%c0_2, %c0_3] : memref<8x192xf32, #tpu.memory_space<vmem>>, vector<8x192xf32>
    %5 = arith.truncf %4 : vector<8x192xf32> to vector<8x192xbf16>
    %c0_4 = arith.constant 0 : index
    %c0_5 = arith.constant 0 : index
    %6 = vector.load %arg4[%c0_4, %c0_5] : memref<192x128xbf16, #tpu.memory_space<vmem>>, vector<192x128xbf16>
    %cst = arith.constant dense<0.000000e+00> : vector<8x128xf32>
    %7 = tpu.matmul %5, %6, %cst {dimension_numbers = #tpu.dot_dimension_numbers<[1], [0], [0], [1], [0, 0, 1, 1], [], []>} : vector<8x192xbf16>, vector<192x128xbf16>, vector<8x128xf32> -> vector<8x128xf32>
    %8 = arith.addf %3, %7 : vector<8x128xf32>
    %c0_6 = arith.constant 0 : index
    %c0_7 = arith.constant 0 : index
    %9 = vector.load %arg7[%c0_6, %c0_7] : memref<8x128xf32, #tpu.memory_space<vmem>>, vector<8x128xf32>
    tpu.vector_store %arg7[%c0_6, %c0_7], %8 {strides = array<i32>} : memref<8x128xf32, #tpu.memory_space<vmem>>, vector<8x128xf32>,
    %c0_i32_8 = arith.constant 0 : i32
    %10 = arith.cmpi eq, %arg2, %c0_i32_8 : i32
    %11 = arith.extui %10 : i1 to i32
    %c0_i32_9 = arith.constant 0 : i32
    %12 = arith.cmpi ne, %11, %c0_i32_9 : i32
    scf.if %12 {
      %c0_10 = arith.constant 0 : index
      %c0_11 = arith.constant 0 : index
      %13 = vector.load %arg7[%c0_10, %c0_11] : memref<8x128xf32, #tpu.memory_space<vmem>>, vector<8x128xf32>
      %c0_12 = arith.constant 0 : index
      %c0_13 = arith.constant 0 : index
      %14 = vector.load %arg5[%c0_12, %c0_13] : memref<1x128xf32, #tpu.memory_space<vmem>>, vector<1x128xf32>
      %15 = vector.broadcast %14 : vector<1x128xf32> to vector<8x128xf32>
      %16 = arith.addf %13, %15 : vector<8x128xf32>
      %c0_14 = arith.constant 0 : index
      %c0_15 = arith.constant 0 : index
      %17 = vector.load %arg6[%c0_14, %c0_15] : memref<8x128xf32, #tpu.memory_space<vmem>>, vector<8x128xf32>
      tpu.vector_store %arg6[%c0_14, %c0_15], %16 {strides = array<i32>} : memref<8x128xf32, #tpu.memory_space<vmem>>, vector<8x128xf32>,
    } else {
    }
    return
  }
  func.func @transform_0(%arg0: i32, %arg1: i32, %arg2: i32) -> (i32, i32) {
    %c0_i32 = arith.constant 0 : i32
    return %arg0, %arg2 : i32, i32
  }
  func.func @transform_1(%arg0: i32, %arg1: i32, %arg2: i32) -> (i32, i32) {
    %c0_i32 = arith.constant 0 : i32
    return %arg2, %arg1 : i32, i32
  }
  func.func @transform_2(%arg0: i32, %arg1: i32, %arg2: i32) -> (i32, i32) {
    %c0_i32 = arith.constant 0 : i32
    %c0_i32_0 = arith.constant 0 : i32
    return %c0_i32, %arg1 : i32, i32
  }
  func.func @transform_3(%arg0: i32, %arg1: i32, %arg2: i32) -> (i32, i32) {
    %c0_i32 = arith.constant 0 : i32
    return %arg0, %arg1 : i32, i32
  }
}

module attributes {stable_mosaic.version = 11 : i64} {
  func.func @_block_kernel(%arg0: i32, %arg1: memref<1x5x128xf32, #tpu.memory_space<vmem>>, %arg2: memref<1x128xf32, #tpu.memory_space<vmem>>, %arg3: memref<1x128xf32, #tpu.memory_space<vmem>>, %arg4: memref<128x384xbf16, #tpu.memory_space<vmem>>, %arg5: memref<1x384xf32, #tpu.memory_space<vmem>>, %arg6: memref<128x128xbf16, #tpu.memory_space<vmem>>, %arg7: memref<1x128xf32, #tpu.memory_space<vmem>>, %arg8: memref<1x128xf32, #tpu.memory_space<vmem>>, %arg9: memref<1x128xf32, #tpu.memory_space<vmem>>, %arg10: memref<128x512xbf16, #tpu.memory_space<vmem>>, %arg11: memref<1x512xf32, #tpu.memory_space<vmem>>, %arg12: memref<512x128xbf16, #tpu.memory_space<vmem>>, %arg13: memref<1x128xf32, #tpu.memory_space<vmem>>, %arg14: memref<1x5x128xf32, #tpu.memory_space<vmem>>) attributes {dimension_semantics = [#tpu.dimension_semantics<parallel>], iteration_bounds = array<i64: 2>, scalar_prefetch = 0 : i64, scratch_operands = 0 : i64, tpu.core_type = #tpu.core_type<tc>, window_params = [{transform_indices = @transform_0, window_bounds = array<i64: 1, 5, 128>}, {pipeline_mode = #tpu.pipeline_mode<synchronous>, transform_indices = @transform_1, window_bounds = array<i64: 1, 128>}, {pipeline_mode = #tpu.pipeline_mode<synchronous>, transform_indices = @transform_2, window_bounds = array<i64: 1, 128>}, {pipeline_mode = #tpu.pipeline_mode<synchronous>, transform_indices = @transform_3, window_bounds = array<i64: 128, 384>}, {pipeline_mode = #tpu.pipeline_mode<synchronous>, transform_indices = @transform_4, window_bounds = array<i64: 1, 384>}, {pipeline_mode = #tpu.pipeline_mode<synchronous>, transform_indices = @transform_5, window_bounds = array<i64: 128, 128>}, {pipeline_mode = #tpu.pipeline_mode<synchronous>, transform_indices = @transform_6, window_bounds = array<i64: 1, 128>}, {pipeline_mode = #tpu.pipeline_mode<synchronous>, transform_indices = @transform_7, window_bounds = array<i64: 1, 128>}, {pipeline_mode = #tpu.pipeline_mode<synchronous>, transform_indices = @transform_8, window_bounds = array<i64: 1, 128>}, {pipeline_mode = #tpu.pipeline_mode<synchronous>, transform_indices = @transform_9, window_bounds = array<i64: 128, 512>}, {pipeline_mode = #tpu.pipeline_mode<synchronous>, transform_indices = @transform_10, window_bounds = array<i64: 1, 512>}, {pipeline_mode = #tpu.pipeline_mode<synchronous>, transform_indices = @transform_11, window_bounds = array<i64: 512, 128>}, {pipeline_mode = #tpu.pipeline_mode<synchronous>, transform_indices = @transform_12, window_bounds = array<i64: 1, 128>}, {transform_indices = @transform_13, window_bounds = array<i64: 1, 5, 128>}]} {
    %c0 = arith.constant 0 : index
    %c0_0 = arith.constant 0 : index
    %c0_1 = arith.constant 0 : index
    %0 = vector.load %arg1[%c0, %c0_0, %c0_1] : memref<1x5x128xf32, #tpu.memory_space<vmem>>, vector<1x5x128xf32>
    %1 = vector.shape_cast %0 : vector<1x5x128xf32> to vector<5x128xf32>
    %c0_2 = arith.constant 0 : index
    %c0_3 = arith.constant 0 : index
    %2 = vector.load %arg2[%c0_2, %c0_3] : memref<1x128xf32, #tpu.memory_space<vmem>>, vector<1x128xf32>
    %c0_4 = arith.constant 0 : index
    %c0_5 = arith.constant 0 : index
    %3 = vector.load %arg3[%c0_4, %c0_5] : memref<1x128xf32, #tpu.memory_space<vmem>>, vector<1x128xf32>
    %cst = arith.constant dense<0.000000e+00> : vector<5xf32>
    %4 = vector.multi_reduction <add>, %1, %cst [1] : vector<5x128xf32> to vector<5xf32>
    %5 = vector.shape_cast %4 : vector<5xf32> to vector<5x1xf32>
    %cst_6 = arith.constant 1.280000e+02 : f32
    %6 = vector.broadcast %cst_6 : f32 to vector<5x1xf32>
    %7 = arith.divf %5, %6 : vector<5x1xf32>
    %8 = vector.broadcast %7 : vector<5x1xf32> to vector<5x128xf32>
    %9 = arith.subf %1, %8 : vector<5x128xf32>
    %10 = arith.mulf %9, %9 : vector<5x128xf32>
    %cst_7 = arith.constant dense<0.000000e+00> : vector<5xf32>
    %11 = vector.multi_reduction <add>, %10, %cst_7 [1] : vector<5x128xf32> to vector<5xf32>
    %12 = vector.shape_cast %11 : vector<5xf32> to vector<5x1xf32>
    %cst_8 = arith.constant 1.280000e+02 : f32
    %13 = vector.broadcast %cst_8 : f32 to vector<5x1xf32>
    %14 = arith.divf %12, %13 : vector<5x1xf32>
    %cst_9 = arith.constant 9.99999974E-6 : f32
    %15 = vector.broadcast %cst_9 : f32 to vector<5x1xf32>
    %16 = arith.addf %14, %15 : vector<5x1xf32>
    %17 = math.rsqrt %16 : vector<5x1xf32>
    %18 = vector.broadcast %17 : vector<5x1xf32> to vector<5x128xf32>
    %19 = arith.mulf %9, %18 : vector<5x128xf32>
    %20 = vector.broadcast %2 : vector<1x128xf32> to vector<5x128xf32>
    %21 = arith.mulf %19, %20 : vector<5x128xf32>
    %22 = vector.broadcast %3 : vector<1x128xf32> to vector<5x128xf32>
    %23 = arith.addf %21, %22 : vector<5x128xf32>
    %24 = arith.truncf %23 : vector<5x128xf32> to vector<5x128xbf16>
    %c0_10 = arith.constant 0 : index
    %c0_11 = arith.constant 0 : index
    %25 = vector.load %arg4[%c0_10, %c0_11] : memref<128x384xbf16, #tpu.memory_space<vmem>>, vector<128x384xbf16>
    %cst_12 = arith.constant dense<0.000000e+00> : vector<5x384xf32>
    %26 = tpu.matmul %24, %25, %cst_12 {dimension_numbers = #tpu.dot_dimension_numbers<[1], [0], [0], [1], [0, 0, 1, 1], [], []>} : vector<5x128xbf16>, vector<128x384xbf16>, vector<5x384xf32> -> vector<5x384xf32>
    %c0_13 = arith.constant 0 : index
    %c0_14 = arith.constant 0 : index
    %27 = vector.load %arg5[%c0_13, %c0_14] : memref<1x384xf32, #tpu.memory_space<vmem>>, vector<1x384xf32>
    %28 = vector.broadcast %27 : vector<1x384xf32> to vector<5x384xf32>
    %29 = arith.addf %26, %28 : vector<5x384xf32>
    %30 = vector.extract_strided_slice %29 {offsets = [0, 0], sizes = [5, 128], strides = [1, 1]} : vector<5x384xf32> to vector<5x128xf32>
    %31 = vector.shape_cast %30 : vector<5x128xf32> to vector<1x5x2x64xf32>
    %32 = tpu.transpose %31, [0, 2, 1, 3] : vector<1x5x2x64xf32> -> vector<1x2x5x64xf32>
    %33 = vector.shape_cast %32 : vector<1x2x5x64xf32> to vector<2x5x64xf32>
    %34 = arith.truncf %33 : vector<2x5x64xf32> to vector<2x5x64xbf16>
    %35 = vector.extract_strided_slice %29 {offsets = [0, 128], sizes = [5, 128], strides = [1, 1]} : vector<5x384xf32> to vector<5x128xf32>
    %36 = vector.shape_cast %35 : vector<5x128xf32> to vector<1x5x2x64xf32>
    %37 = tpu.transpose %36, [0, 2, 1, 3] : vector<1x5x2x64xf32> -> vector<1x2x5x64xf32>
    %38 = vector.shape_cast %37 : vector<1x2x5x64xf32> to vector<2x5x64xf32>
    %39 = arith.truncf %38 : vector<2x5x64xf32> to vector<2x5x64xbf16>
    %40 = vector.extract_strided_slice %29 {offsets = [0, 256], sizes = [5, 128], strides = [1, 1]} : vector<5x384xf32> to vector<5x128xf32>
    %41 = vector.shape_cast %40 : vector<5x128xf32> to vector<1x5x2x64xf32>
    %42 = tpu.transpose %41, [0, 2, 1, 3] : vector<1x5x2x64xf32> -> vector<1x2x5x64xf32>
    %43 = vector.shape_cast %42 : vector<1x2x5x64xf32> to vector<2x5x64xf32>
    %44 = arith.truncf %43 : vector<2x5x64xf32> to vector<2x5x64xbf16>
    "tpu.trace_start"() <{level = 10 : i32, message = "gtd,gsd->gts"}> : () -> ()
    %cst_15 = arith.constant dense<0.000000e+00> : vector<2x5x5xf32>
    %45 = tpu.matmul %34, %39, %cst_15 {dimension_numbers = #tpu.dot_dimension_numbers<[2], [2], [1], [1], [0, 0, 0, 1, 1, 1], [0], [0]>} : vector<2x5x64xbf16>, vector<2x5x64xbf16>, vector<2x5x5xf32> -> vector<2x5x5xf32>
    "tpu.trace_stop"() : () -> ()
    %cst_16 = arith.constant 1.250000e-01 : f32
    %46 = vector.broadcast %cst_16 : f32 to vector<2x5x5xf32>
    %47 = arith.mulf %45, %46 : vector<2x5x5xf32>
    %cst_17 = arith.constant dense<0xFF800000> : vector<2x5xf32>
    %48 = vector.multi_reduction <maximumf>, %47, %cst_17 [2] : vector<2x5x5xf32> to vector<2x5xf32>
    %49 = vector.shape_cast %48 : vector<2x5xf32> to vector<2x5x1xf32>
    %50 = vector.broadcast %49 : vector<2x5x1xf32> to vector<2x5x5xf32>
    %51 = arith.subf %47, %50 : vector<2x5x5xf32>
    %52 = math.exp %51 : vector<2x5x5xf32>
    %cst_18 = arith.constant dense<0.000000e+00> : vector<2x5xf32>
    %53 = vector.multi_reduction <add>, %52, %cst_18 [2] : vector<2x5x5xf32> to vector<2x5xf32>
    %54 = vector.shape_cast %53 : vector<2x5xf32> to vector<2x5x1xf32>
    %55 = tpu.reciprocal %54 {approx = true} : vector<2x5x1xf32> -> vector<2x5x1xf32>
    %56 = vector.broadcast %55 : vector<2x5x1xf32> to vector<2x5x5xf32>
    %57 = arith.mulf %52, %56 : vector<2x5x5xf32>
    %58 = arith.truncf %57 : vector<2x5x5xf32> to vector<2x5x5xbf16>
    "tpu.trace_start"() <{level = 10 : i32, message = "gts,gsd->gtd"}> : () -> ()
    %cst_19 = arith.constant dense<0.000000e+00> : vector<2x5x64xf32>
    %59 = tpu.matmul %58, %44, %cst_19 {dimension_numbers = #tpu.dot_dimension_numbers<[2], [1], [1], [2], [0, 0, 0, 1, 1, 2], [0], [0]>} : vector<2x5x5xbf16>, vector<2x5x64xbf16>, vector<2x5x64xf32> -> vector<2x5x64xf32>
    "tpu.trace_stop"() : () -> ()
    %60 = vector.shape_cast %59 : vector<2x5x64xf32> to vector<1x2x5x64xf32>
    %61 = tpu.transpose %60, [0, 2, 1, 3] : vector<1x2x5x64xf32> -> vector<1x5x2x64xf32>
    %62 = vector.shape_cast %61 : vector<1x5x2x64xf32> to vector<5x128xf32>
    %63 = arith.truncf %62 : vector<5x128xf32> to vector<5x128xbf16>
    %c0_20 = arith.constant 0 : index
    %c0_21 = arith.constant 0 : index
    %64 = vector.load %arg6[%c0_20, %c0_21] : memref<128x128xbf16, #tpu.memory_space<vmem>>, vector<128x128xbf16>
    %cst_22 = arith.constant dense<0.000000e+00> : vector<5x128xf32>
    %65 = tpu.matmul %63, %64, %cst_22 {dimension_numbers = #tpu.dot_dimension_numbers<[1], [0], [0], [1], [0, 0, 1, 1], [], []>} : vector<5x128xbf16>, vector<128x128xbf16>, vector<5x128xf32> -> vector<5x128xf32>
    %66 = arith.addf %1, %65 : vector<5x128xf32>
    %c0_23 = arith.constant 0 : index
    %c0_24 = arith.constant 0 : index
    %67 = vector.load %arg7[%c0_23, %c0_24] : memref<1x128xf32, #tpu.memory_space<vmem>>, vector<1x128xf32>
    %68 = vector.broadcast %67 : vector<1x128xf32> to vector<5x128xf32>
    %69 = arith.addf %66, %68 : vector<5x128xf32>
    %c0_25 = arith.constant 0 : index
    %c0_26 = arith.constant 0 : index
    %70 = vector.load %arg8[%c0_25, %c0_26] : memref<1x128xf32, #tpu.memory_space<vmem>>, vector<1x128xf32>
    %c0_27 = arith.constant 0 : index
    %c0_28 = arith.constant 0 : index
    %71 = vector.load %arg9[%c0_27, %c0_28] : memref<1x128xf32, #tpu.memory_space<vmem>>, vector<1x128xf32>
    %cst_29 = arith.constant dense<0.000000e+00> : vector<5xf32>
    %72 = vector.multi_reduction <add>, %69, %cst_29 [1] : vector<5x128xf32> to vector<5xf32>
    %73 = vector.shape_cast %72 : vector<5xf32> to vector<5x1xf32>
    %cst_30 = arith.constant 1.280000e+02 : f32
    %74 = vector.broadcast %cst_30 : f32 to vector<5x1xf32>
    %75 = arith.divf %73, %74 : vector<5x1xf32>
    %76 = vector.broadcast %75 : vector<5x1xf32> to vector<5x128xf32>
    %77 = arith.subf %69, %76 : vector<5x128xf32>
    %78 = arith.mulf %77, %77 : vector<5x128xf32>
    %cst_31 = arith.constant dense<0.000000e+00> : vector<5xf32>
    %79 = vector.multi_reduction <add>, %78, %cst_31 [1] : vector<5x128xf32> to vector<5xf32>
    %80 = vector.shape_cast %79 : vector<5xf32> to vector<5x1xf32>
    %cst_32 = arith.constant 1.280000e+02 : f32
    %81 = vector.broadcast %cst_32 : f32 to vector<5x1xf32>
    %82 = arith.divf %80, %81 : vector<5x1xf32>
    %cst_33 = arith.constant 9.99999974E-6 : f32
    %83 = vector.broadcast %cst_33 : f32 to vector<5x1xf32>
    %84 = arith.addf %82, %83 : vector<5x1xf32>
    %85 = math.rsqrt %84 : vector<5x1xf32>
    %86 = vector.broadcast %85 : vector<5x1xf32> to vector<5x128xf32>
    %87 = arith.mulf %77, %86 : vector<5x128xf32>
    %88 = vector.broadcast %70 : vector<1x128xf32> to vector<5x128xf32>
    %89 = arith.mulf %87, %88 : vector<5x128xf32>
    %90 = vector.broadcast %71 : vector<1x128xf32> to vector<5x128xf32>
    %91 = arith.addf %89, %90 : vector<5x128xf32>
    %92 = arith.truncf %91 : vector<5x128xf32> to vector<5x128xbf16>
    %c0_34 = arith.constant 0 : index
    %c0_35 = arith.constant 0 : index
    %93 = vector.load %arg10[%c0_34, %c0_35] : memref<128x512xbf16, #tpu.memory_space<vmem>>, vector<128x512xbf16>
    %cst_36 = arith.constant dense<0.000000e+00> : vector<5x512xf32>
    %94 = tpu.matmul %92, %93, %cst_36 {dimension_numbers = #tpu.dot_dimension_numbers<[1], [0], [0], [1], [0, 0, 1, 1], [], []>} : vector<5x128xbf16>, vector<128x512xbf16>, vector<5x512xf32> -> vector<5x512xf32>
    %c0_37 = arith.constant 0 : index
    %c0_38 = arith.constant 0 : index
    %95 = vector.load %arg11[%c0_37, %c0_38] : memref<1x512xf32, #tpu.memory_space<vmem>>, vector<1x512xf32>
    %96 = vector.broadcast %95 : vector<1x512xf32> to vector<5x512xf32>
    %97 = arith.addf %94, %96 : vector<5x512xf32>
    %cst_39 = arith.constant 5.000000e-01 : f32
    %98 = vector.broadcast %cst_39 : f32 to vector<5x512xf32>
    %99 = arith.mulf %98, %97 : vector<5x512xf32>
    %cst_40 = arith.constant 0.707106769 : f32
    %100 = vector.broadcast %cst_40 : f32 to vector<5x512xf32>
    %101 = arith.mulf %97, %100 : vector<5x512xf32>
    %cst_41 = arith.constant 0.000000e+00 : f32
    %102 = vector.broadcast %cst_41 : f32 to vector<5x512xf32>
    %103 = arith.cmpf olt, %101, %102 : vector<5x512xf32>
    %cst_42 = arith.constant -1.000000e+00 : f32
    %cst_43 = arith.constant 1.000000e+00 : f32
    %104 = vector.broadcast %cst_42 : f32 to vector<5x512xf32>
    %105 = vector.broadcast %cst_43 : f32 to vector<5x512xf32>
    %106 = arith.select %103, %104, %105 : vector<5x512xi1>, vector<5x512xf32>
    %107 = math.absf %101 : vector<5x512xf32>
    %cst_44 = arith.constant 0.327591091 : f32
    %108 = vector.broadcast %cst_44 : f32 to vector<5x512xf32>
    %109 = arith.mulf %108, %107 : vector<5x512xf32>
    %cst_45 = arith.constant 1.000000e+00 : f32
    %110 = vector.broadcast %cst_45 : f32 to vector<5x512xf32>
    %111 = arith.addf %110, %109 : vector<5x512xf32>
    %cst_46 = arith.constant 1.000000e+00 : f32
    %112 = vector.broadcast %cst_46 : f32 to vector<5x512xf32>
    %113 = arith.divf %112, %111 : vector<5x512xf32>
    %cst_47 = arith.constant 1.06140542 : f32
    %114 = vector.broadcast %cst_47 : f32 to vector<5x512xf32>
    %115 = arith.mulf %114, %113 : vector<5x512xf32>
    %cst_48 = arith.constant -1.45315206 : f32
    %116 = vector.broadcast %cst_48 : f32 to vector<5x512xf32>
    %117 = arith.addf %115, %116 : vector<5x512xf32>
    %118 = arith.mulf %117, %113 : vector<5x512xf32>
    %cst_49 = arith.constant 1.42141378 : f32
    %119 = vector.broadcast %cst_49 : f32 to vector<5x512xf32>
    %120 = arith.addf %118, %119 : vector<5x512xf32>
    %121 = arith.mulf %120, %113 : vector<5x512xf32>
    %cst_50 = arith.constant -0.284496725 : f32
    %122 = vector.broadcast %cst_50 : f32 to vector<5x512xf32>
    %123 = arith.addf %121, %122 : vector<5x512xf32>
    %124 = arith.mulf %123, %113 : vector<5x512xf32>
    %cst_51 = arith.constant 0.254829586 : f32
    %125 = vector.broadcast %cst_51 : f32 to vector<5x512xf32>
    %126 = arith.addf %124, %125 : vector<5x512xf32>
    %127 = arith.mulf %126, %113 : vector<5x512xf32>
    %cst_52 = arith.constant 0.000000e+00 : f32
    %128 = vector.broadcast %cst_52 : f32 to vector<5x512xf32>
    %129 = arith.subf %128, %107 : vector<5x512xf32>
    %130 = arith.mulf %129, %107 : vector<5x512xf32>
    %131 = math.exp %130 : vector<5x512xf32>
    %132 = arith.mulf %127, %131 : vector<5x512xf32>
    %cst_53 = arith.constant 1.000000e+00 : f32
    %133 = vector.broadcast %cst_53 : f32 to vector<5x512xf32>
    %134 = arith.subf %133, %132 : vector<5x512xf32>
    %135 = arith.mulf %106, %134 : vector<5x512xf32>
    %cst_54 = arith.constant 1.000000e+00 : f32
    %136 = vector.broadcast %cst_54 : f32 to vector<5x512xf32>
    %137 = arith.addf %136, %135 : vector<5x512xf32>
    %138 = arith.mulf %99, %137 : vector<5x512xf32>
    %139 = arith.truncf %138 : vector<5x512xf32> to vector<5x512xbf16>
    %c0_55 = arith.constant 0 : index
    %c0_56 = arith.constant 0 : index
    %140 = vector.load %arg12[%c0_55, %c0_56] : memref<512x128xbf16, #tpu.memory_space<vmem>>, vector<512x128xbf16>
    %cst_57 = arith.constant dense<0.000000e+00> : vector<5x128xf32>
    %141 = tpu.matmul %139, %140, %cst_57 {dimension_numbers = #tpu.dot_dimension_numbers<[1], [0], [0], [1], [0, 0, 1, 1], [], []>} : vector<5x512xbf16>, vector<512x128xbf16>, vector<5x128xf32> -> vector<5x128xf32>
    %142 = arith.addf %69, %141 : vector<5x128xf32>
    %c0_58 = arith.constant 0 : index
    %c0_59 = arith.constant 0 : index
    %143 = vector.load %arg13[%c0_58, %c0_59] : memref<1x128xf32, #tpu.memory_space<vmem>>, vector<1x128xf32>
    %144 = vector.broadcast %143 : vector<1x128xf32> to vector<5x128xf32>
    %145 = arith.addf %142, %144 : vector<5x128xf32>
    %146 = vector.shape_cast %145 : vector<5x128xf32> to vector<1x5x128xf32>
    %c0_60 = arith.constant 0 : index
    %c0_61 = arith.constant 0 : index
    %c0_62 = arith.constant 0 : index
    %147 = vector.load %arg14[%c0_60, %c0_61, %c0_62] : memref<1x5x128xf32, #tpu.memory_space<vmem>>, vector<1x5x128xf32>
    tpu.vector_store %arg14[%c0_60, %c0_61, %c0_62], %146 {strides = array<i32>} : memref<1x5x128xf32, #tpu.memory_space<vmem>>, vector<1x5x128xf32>,
    return
  }
  func.func @transform_0(%arg0: i32) -> (i32, i32, i32) {
    %c0_i32 = arith.constant 0 : i32
    %c0_i32_0 = arith.constant 0 : i32
    %c0_i32_1 = arith.constant 0 : i32
    return %arg0, %c0_i32, %c0_i32_0 : i32, i32, i32
  }
  func.func @transform_1(%arg0: i32) -> (i32, i32) {
    %c0_i32 = arith.constant 0 : i32
    %c0_i32_0 = arith.constant 0 : i32
    %c0_i32_1 = arith.constant 0 : i32
    return %c0_i32, %c0_i32_0 : i32, i32
  }
  func.func @transform_2(%arg0: i32) -> (i32, i32) {
    %c0_i32 = arith.constant 0 : i32
    %c0_i32_0 = arith.constant 0 : i32
    %c0_i32_1 = arith.constant 0 : i32
    return %c0_i32, %c0_i32_0 : i32, i32
  }
  func.func @transform_3(%arg0: i32) -> (i32, i32) {
    %c0_i32 = arith.constant 0 : i32
    %c0_i32_0 = arith.constant 0 : i32
    %c0_i32_1 = arith.constant 0 : i32
    return %c0_i32, %c0_i32_0 : i32, i32
  }
  func.func @transform_4(%arg0: i32) -> (i32, i32) {
    %c0_i32 = arith.constant 0 : i32
    %c0_i32_0 = arith.constant 0 : i32
    %c0_i32_1 = arith.constant 0 : i32
    return %c0_i32, %c0_i32_0 : i32, i32
  }
  func.func @transform_5(%arg0: i32) -> (i32, i32) {
    %c0_i32 = arith.constant 0 : i32
    %c0_i32_0 = arith.constant 0 : i32
    %c0_i32_1 = arith.constant 0 : i32
    return %c0_i32, %c0_i32_0 : i32, i32
  }
  func.func @transform_6(%arg0: i32) -> (i32, i32) {
    %c0_i32 = arith.constant 0 : i32
    %c0_i32_0 = arith.constant 0 : i32
    %c0_i32_1 = arith.constant 0 : i32
    return %c0_i32, %c0_i32_0 : i32, i32
  }
  func.func @transform_7(%arg0: i32) -> (i32, i32) {
    %c0_i32 = arith.constant 0 : i32
    %c0_i32_0 = arith.constant 0 : i32
    %c0_i32_1 = arith.constant 0 : i32
    return %c0_i32, %c0_i32_0 : i32, i32
  }
  func.func @transform_8(%arg0: i32) -> (i32, i32) {
    %c0_i32 = arith.constant 0 : i32
    %c0_i32_0 = arith.constant 0 : i32
    %c0_i32_1 = arith.constant 0 : i32
    return %c0_i32, %c0_i32_0 : i32, i32
  }
  func.func @transform_9(%arg0: i32) -> (i32, i32) {
    %c0_i32 = arith.constant 0 : i32
    %c0_i32_0 = arith.constant 0 : i32
    %c0_i32_1 = arith.constant 0 : i32
    return %c0_i32, %c0_i32_0 : i32, i32
  }
  func.func @transform_10(%arg0: i32) -> (i32, i32) {
    %c0_i32 = arith.constant 0 : i32
    %c0_i32_0 = arith.constant 0 : i32
    %c0_i32_1 = arith.constant 0 : i32
    return %c0_i32, %c0_i32_0 : i32, i32
  }
  func.func @transform_11(%arg0: i32) -> (i32, i32) {
    %c0_i32 = arith.constant 0 : i32
    %c0_i32_0 = arith.constant 0 : i32
    %c0_i32_1 = arith.constant 0 : i32
    return %c0_i32, %c0_i32_0 : i32, i32
  }
  func.func @transform_12(%arg0: i32) -> (i32, i32) {
    %c0_i32 = arith.constant 0 : i32
    %c0_i32_0 = arith.constant 0 : i32
    %c0_i32_1 = arith.constant 0 : i32
    return %c0_i32, %c0_i32_0 : i32, i32
  }
  func.func @transform_13(%arg0: i32) -> (i32, i32, i32) {
    %c0_i32 = arith.constant 0 : i32
    %c0_i32_0 = arith.constant 0 : i32
    %c0_i32_1 = arith.constant 0 : i32
    return %arg0, %c0_i32, %c0_i32_0 : i32, i32, i32
  }
}

module attributes {stable_mosaic.version = 11 : i64} {
  func.func @_lnvp_kernel(%arg0: i32, %arg1: memref<8x128xf32, #tpu.memory_space<vmem>>, %arg2: memref<1x128xf32, #tpu.memory_space<vmem>>, %arg3: memref<1x128xf32, #tpu.memory_space<vmem>>, %arg4: memref<128x128xbf16, #tpu.memory_space<vmem>>, %arg5: memref<1x128xf32, #tpu.memory_space<vmem>>, %arg6: memref<128x128xbf16, #tpu.memory_space<vmem>>, %arg7: memref<1x128xf32, #tpu.memory_space<vmem>>, %arg8: memref<1x128xf32, #tpu.memory_space<vmem>>, %arg9: memref<8x128xf32, #tpu.memory_space<vmem>>) attributes {dimension_semantics = [#tpu.dimension_semantics<parallel>], iteration_bounds = array<i64: 1>, scalar_prefetch = 0 : i64, scratch_operands = 0 : i64, tpu.core_type = #tpu.core_type<tc>, window_params = [{transform_indices = @transform_0, window_bounds = array<i64: 8, 128>}, {pipeline_mode = #tpu.pipeline_mode<synchronous>, transform_indices = @transform_1, window_bounds = array<i64: 1, 128>}, {pipeline_mode = #tpu.pipeline_mode<synchronous>, transform_indices = @transform_2, window_bounds = array<i64: 1, 128>}, {pipeline_mode = #tpu.pipeline_mode<synchronous>, transform_indices = @transform_3, window_bounds = array<i64: 128, 128>}, {pipeline_mode = #tpu.pipeline_mode<synchronous>, transform_indices = @transform_4, window_bounds = array<i64: 1, 128>}, {pipeline_mode = #tpu.pipeline_mode<synchronous>, transform_indices = @transform_5, window_bounds = array<i64: 128, 128>}, {pipeline_mode = #tpu.pipeline_mode<synchronous>, transform_indices = @transform_6, window_bounds = array<i64: 1, 128>}, {pipeline_mode = #tpu.pipeline_mode<synchronous>, transform_indices = @transform_7, window_bounds = array<i64: 1, 128>}, {transform_indices = @transform_8, window_bounds = array<i64: 8, 128>}]} {
    %c0 = arith.constant 0 : index
    %c0_0 = arith.constant 0 : index
    %0 = vector.load %arg1[%c0, %c0_0] : memref<8x128xf32, #tpu.memory_space<vmem>>, vector<8x128xf32>
    %c0_1 = arith.constant 0 : index
    %c0_2 = arith.constant 0 : index
    %1 = vector.load %arg2[%c0_1, %c0_2] : memref<1x128xf32, #tpu.memory_space<vmem>>, vector<1x128xf32>
    %c0_3 = arith.constant 0 : index
    %c0_4 = arith.constant 0 : index
    %2 = vector.load %arg3[%c0_3, %c0_4] : memref<1x128xf32, #tpu.memory_space<vmem>>, vector<1x128xf32>
    %cst = arith.constant dense<0.000000e+00> : vector<8xf32>
    %3 = vector.multi_reduction <add>, %0, %cst [1] : vector<8x128xf32> to vector<8xf32>
    %4 = vector.shape_cast %3 : vector<8xf32> to vector<8x1xf32>
    %cst_5 = arith.constant 1.280000e+02 : f32
    %5 = vector.broadcast %cst_5 : f32 to vector<8x1xf32>
    %6 = arith.divf %4, %5 : vector<8x1xf32>
    %7 = vector.broadcast %6 : vector<8x1xf32> to vector<8x128xf32>
    %8 = arith.subf %0, %7 : vector<8x128xf32>
    %9 = arith.mulf %8, %8 : vector<8x128xf32>
    %cst_6 = arith.constant dense<0.000000e+00> : vector<8xf32>
    %10 = vector.multi_reduction <add>, %9, %cst_6 [1] : vector<8x128xf32> to vector<8xf32>
    %11 = vector.shape_cast %10 : vector<8xf32> to vector<8x1xf32>
    %cst_7 = arith.constant 1.280000e+02 : f32
    %12 = vector.broadcast %cst_7 : f32 to vector<8x1xf32>
    %13 = arith.divf %11, %12 : vector<8x1xf32>
    %cst_8 = arith.constant 9.99999974E-6 : f32
    %14 = vector.broadcast %cst_8 : f32 to vector<8x1xf32>
    %15 = arith.addf %13, %14 : vector<8x1xf32>
    %16 = math.rsqrt %15 : vector<8x1xf32>
    %17 = vector.broadcast %16 : vector<8x1xf32> to vector<8x128xf32>
    %18 = arith.mulf %8, %17 : vector<8x128xf32>
    %19 = vector.broadcast %1 : vector<1x128xf32> to vector<8x128xf32>
    %20 = arith.mulf %18, %19 : vector<8x128xf32>
    %21 = vector.broadcast %2 : vector<1x128xf32> to vector<8x128xf32>
    %22 = arith.addf %20, %21 : vector<8x128xf32>
    %23 = arith.truncf %22 : vector<8x128xf32> to vector<8x128xbf16>
    %c0_9 = arith.constant 0 : index
    %c0_10 = arith.constant 0 : index
    %24 = vector.load %arg4[%c0_9, %c0_10] : memref<128x128xbf16, #tpu.memory_space<vmem>>, vector<128x128xbf16>
    %cst_11 = arith.constant dense<0.000000e+00> : vector<8x128xf32>
    %25 = tpu.matmul %23, %24, %cst_11 {dimension_numbers = #tpu.dot_dimension_numbers<[1], [0], [0], [1], [0, 0, 1, 1], [], []>} : vector<8x128xbf16>, vector<128x128xbf16>, vector<8x128xf32> -> vector<8x128xf32>
    %c0_12 = arith.constant 0 : index
    %c0_13 = arith.constant 0 : index
    %26 = vector.load %arg5[%c0_12, %c0_13] : memref<1x128xf32, #tpu.memory_space<vmem>>, vector<1x128xf32>
    %27 = vector.broadcast %26 : vector<1x128xf32> to vector<8x128xf32>
    %28 = arith.addf %25, %27 : vector<8x128xf32>
    %cst_14 = arith.constant 5.000000e-01 : f32
    %29 = vector.broadcast %cst_14 : f32 to vector<8x128xf32>
    %30 = arith.mulf %29, %28 : vector<8x128xf32>
    %cst_15 = arith.constant 0.707106769 : f32
    %31 = vector.broadcast %cst_15 : f32 to vector<8x128xf32>
    %32 = arith.mulf %28, %31 : vector<8x128xf32>
    %cst_16 = arith.constant 0.000000e+00 : f32
    %33 = vector.broadcast %cst_16 : f32 to vector<8x128xf32>
    %34 = arith.cmpf olt, %32, %33 : vector<8x128xf32>
    %cst_17 = arith.constant -1.000000e+00 : f32
    %cst_18 = arith.constant 1.000000e+00 : f32
    %35 = vector.broadcast %cst_17 : f32 to vector<8x128xf32>
    %36 = vector.broadcast %cst_18 : f32 to vector<8x128xf32>
    %37 = arith.select %34, %35, %36 : vector<8x128xi1>, vector<8x128xf32>
    %38 = math.absf %32 : vector<8x128xf32>
    %cst_19 = arith.constant 0.327591091 : f32
    %39 = vector.broadcast %cst_19 : f32 to vector<8x128xf32>
    %40 = arith.mulf %39, %38 : vector<8x128xf32>
    %cst_20 = arith.constant 1.000000e+00 : f32
    %41 = vector.broadcast %cst_20 : f32 to vector<8x128xf32>
    %42 = arith.addf %41, %40 : vector<8x128xf32>
    %cst_21 = arith.constant 1.000000e+00 : f32
    %43 = vector.broadcast %cst_21 : f32 to vector<8x128xf32>
    %44 = arith.divf %43, %42 : vector<8x128xf32>
    %cst_22 = arith.constant 1.06140542 : f32
    %45 = vector.broadcast %cst_22 : f32 to vector<8x128xf32>
    %46 = arith.mulf %45, %44 : vector<8x128xf32>
    %cst_23 = arith.constant -1.45315206 : f32
    %47 = vector.broadcast %cst_23 : f32 to vector<8x128xf32>
    %48 = arith.addf %46, %47 : vector<8x128xf32>
    %49 = arith.mulf %48, %44 : vector<8x128xf32>
    %cst_24 = arith.constant 1.42141378 : f32
    %50 = vector.broadcast %cst_24 : f32 to vector<8x128xf32>
    %51 = arith.addf %49, %50 : vector<8x128xf32>
    %52 = arith.mulf %51, %44 : vector<8x128xf32>
    %cst_25 = arith.constant -0.284496725 : f32
    %53 = vector.broadcast %cst_25 : f32 to vector<8x128xf32>
    %54 = arith.addf %52, %53 : vector<8x128xf32>
    %55 = arith.mulf %54, %44 : vector<8x128xf32>
    %cst_26 = arith.constant 0.254829586 : f32
    %56 = vector.broadcast %cst_26 : f32 to vector<8x128xf32>
    %57 = arith.addf %55, %56 : vector<8x128xf32>
    %58 = arith.mulf %57, %44 : vector<8x128xf32>
    %cst_27 = arith.constant 0.000000e+00 : f32
    %59 = vector.broadcast %cst_27 : f32 to vector<8x128xf32>
    %60 = arith.subf %59, %38 : vector<8x128xf32>
    %61 = arith.mulf %60, %38 : vector<8x128xf32>
    %62 = math.exp %61 : vector<8x128xf32>
    %63 = arith.mulf %58, %62 : vector<8x128xf32>
    %cst_28 = arith.constant 1.000000e+00 : f32
    %64 = vector.broadcast %cst_28 : f32 to vector<8x128xf32>
    %65 = arith.subf %64, %63 : vector<8x128xf32>
    %66 = arith.mulf %37, %65 : vector<8x128xf32>
    %cst_29 = arith.constant 1.000000e+00 : f32
    %67 = vector.broadcast %cst_29 : f32 to vector<8x128xf32>
    %68 = arith.addf %67, %66 : vector<8x128xf32>
    %69 = arith.mulf %30, %68 : vector<8x128xf32>
    %70 = arith.truncf %69 : vector<8x128xf32> to vector<8x128xbf16>
    %c0_30 = arith.constant 0 : index
    %c0_31 = arith.constant 0 : index
    %71 = vector.load %arg6[%c0_30, %c0_31] : memref<128x128xbf16, #tpu.memory_space<vmem>>, vector<128x128xbf16>
    %cst_32 = arith.constant dense<0.000000e+00> : vector<8x128xf32>
    %72 = tpu.matmul %70, %71, %cst_32 {dimension_numbers = #tpu.dot_dimension_numbers<[1], [0], [0], [1], [0, 0, 1, 1], [], []>} : vector<8x128xbf16>, vector<128x128xbf16>, vector<8x128xf32> -> vector<8x128xf32>
    %c0_33 = arith.constant 0 : index
    %c0_34 = arith.constant 0 : index
    %73 = vector.load %arg7[%c0_33, %c0_34] : memref<1x128xf32, #tpu.memory_space<vmem>>, vector<1x128xf32>
    %74 = vector.broadcast %73 : vector<1x128xf32> to vector<8x128xf32>
    %75 = arith.addf %72, %74 : vector<8x128xf32>
    %c0_35 = arith.constant 0 : index
    %c0_36 = arith.constant 0 : index
    %76 = vector.load %arg8[%c0_35, %c0_36] : memref<1x128xf32, #tpu.memory_space<vmem>>, vector<1x128xf32>
    %77 = vector.broadcast %76 : vector<1x128xf32> to vector<8x128xf32>
    %78 = arith.mulf %75, %77 : vector<8x128xf32>
    %c0_37 = arith.constant 0 : index
    %c0_38 = arith.constant 0 : index
    %79 = vector.load %arg9[%c0_37, %c0_38] : memref<8x128xf32, #tpu.memory_space<vmem>>, vector<8x128xf32>
    tpu.vector_store %arg9[%c0_37, %c0_38], %78 {strides = array<i32>} : memref<8x128xf32, #tpu.memory_space<vmem>>, vector<8x128xf32>,
    return
  }
  func.func @transform_0(%arg0: i32) -> (i32, i32) {
    %c0_i32 = arith.constant 0 : i32
    %c0_i32_0 = arith.constant 0 : i32
    return %arg0, %c0_i32 : i32, i32
  }
  func.func @transform_1(%arg0: i32) -> (i32, i32) {
    %c0_i32 = arith.constant 0 : i32
    %c0_i32_0 = arith.constant 0 : i32
    %c0_i32_1 = arith.constant 0 : i32
    return %c0_i32, %c0_i32_0 : i32, i32
  }
  func.func @transform_2(%arg0: i32) -> (i32, i32) {
    %c0_i32 = arith.constant 0 : i32
    %c0_i32_0 = arith.constant 0 : i32
    %c0_i32_1 = arith.constant 0 : i32
    return %c0_i32, %c0_i32_0 : i32, i32
  }
  func.func @transform_3(%arg0: i32) -> (i32, i32) {
    %c0_i32 = arith.constant 0 : i32
    %c0_i32_0 = arith.constant 0 : i32
    %c0_i32_1 = arith.constant 0 : i32
    return %c0_i32, %c0_i32_0 : i32, i32
  }
  func.func @transform_4(%arg0: i32) -> (i32, i32) {
    %c0_i32 = arith.constant 0 : i32
    %c0_i32_0 = arith.constant 0 : i32
    %c0_i32_1 = arith.constant 0 : i32
    return %c0_i32, %c0_i32_0 : i32, i32
  }
  func.func @transform_5(%arg0: i32) -> (i32, i32) {
    %c0_i32 = arith.constant 0 : i32
    %c0_i32_0 = arith.constant 0 : i32
    %c0_i32_1 = arith.constant 0 : i32
    return %c0_i32, %c0_i32_0 : i32, i32
  }
  func.func @transform_6(%arg0: i32) -> (i32, i32) {
    %c0_i32 = arith.constant 0 : i32
    %c0_i32_0 = arith.constant 0 : i32
    %c0_i32_1 = arith.constant 0 : i32
    return %c0_i32, %c0_i32_0 : i32, i32
  }
  func.func @transform_7(%arg0: i32) -> (i32, i32) {
    %c0_i32 = arith.constant 0 : i32
    %c0_i32_0 = arith.constant 0 : i32
    %c0_i32_1 = arith.constant 0 : i32
    return %c0_i32, %c0_i32_0 : i32, i32
  }
  func.func @transform_8(%arg0: i32) -> (i32, i32) {
    %c0_i32 = arith.constant 0 : i32
    %c0_i32_0 = arith.constant 0 : i32
    return %arg0, %c0_i32 : i32, i32
  }
}

module attributes {stable_mosaic.version = 11 : i64} {
  func.func @_lnf_lmhead_kernel(%arg0: i32, %arg1: i32, %arg2: memref<1x12x128xf32, #tpu.memory_space<vmem>>, %arg3: memref<1x128xf32, #tpu.memory_space<vmem>>, %arg4: memref<1x128xf32, #tpu.memory_space<vmem>>, %arg5: memref<128x256xbf16, #tpu.memory_space<vmem>>, %arg6: memref<1x8x256xf32, #tpu.memory_space<vmem>>, %arg7: memref<8x128xbf16, #tpu.memory_space<vmem>>) attributes {dimension_semantics = [#tpu.dimension_semantics<parallel>, #tpu.dimension_semantics<arbitrary>], iteration_bounds = array<i64: 2, 1>, scalar_prefetch = 0 : i64, scratch_operands = 1 : i64, tpu.core_type = #tpu.core_type<tc>, window_params = [{transform_indices = @transform_0, window_bounds = array<i64: 1, 12, 128>}, {pipeline_mode = #tpu.pipeline_mode<synchronous>, transform_indices = @transform_1, window_bounds = array<i64: 1, 128>}, {pipeline_mode = #tpu.pipeline_mode<synchronous>, transform_indices = @transform_2, window_bounds = array<i64: 1, 128>}, {transform_indices = @transform_3, window_bounds = array<i64: 128, 256>}, {transform_indices = @transform_4, window_bounds = array<i64: 1, 8, 256>}]} {
    %c0_i32 = arith.constant 0 : i32
    %0 = arith.cmpi eq, %arg1, %c0_i32 : i32
    %1 = arith.extui %0 : i1 to i32
    %c0_i32_0 = arith.constant 0 : i32
    %2 = arith.cmpi ne, %1, %c0_i32_0 : i32
    scf.if %2 {
      %c0_7 = arith.constant 0 : index
      %c4 = arith.constant 4 : index
      %c0_8 = arith.constant 0 : index
      %9 = vector.load %arg2[%c0_7, %c4, %c0_8] : memref<1x12x128xf32, #tpu.memory_space<vmem>>, vector<1x8x128xf32>
      %10 = vector.shape_cast %9 : vector<1x8x128xf32> to vector<8x128xf32>
      %c0_9 = arith.constant 0 : index
      %c0_10 = arith.constant 0 : index
      %11 = vector.load %arg3[%c0_9, %c0_10] : memref<1x128xf32, #tpu.memory_space<vmem>>, vector<1x128xf32>
      %c0_11 = arith.constant 0 : index
      %c0_12 = arith.constant 0 : index
      %12 = vector.load %arg4[%c0_11, %c0_12] : memref<1x128xf32, #tpu.memory_space<vmem>>, vector<1x128xf32>
      %cst_13 = arith.constant dense<0.000000e+00> : vector<8xf32>
      %13 = vector.multi_reduction <add>, %10, %cst_13 [1] : vector<8x128xf32> to vector<8xf32>
      %14 = vector.shape_cast %13 : vector<8xf32> to vector<8x1xf32>
      %cst_14 = arith.constant 1.280000e+02 : f32
      %15 = vector.broadcast %cst_14 : f32 to vector<8x1xf32>
      %16 = arith.divf %14, %15 : vector<8x1xf32>
      %17 = vector.broadcast %16 : vector<8x1xf32> to vector<8x128xf32>
      %18 = arith.subf %10, %17 : vector<8x128xf32>
      %19 = arith.mulf %18, %18 : vector<8x128xf32>
      %cst_15 = arith.constant dense<0.000000e+00> : vector<8xf32>
      %20 = vector.multi_reduction <add>, %19, %cst_15 [1] : vector<8x128xf32> to vector<8xf32>
      %21 = vector.shape_cast %20 : vector<8xf32> to vector<8x1xf32>
      %cst_16 = arith.constant 1.280000e+02 : f32
      %22 = vector.broadcast %cst_16 : f32 to vector<8x1xf32>
      %23 = arith.divf %21, %22 : vector<8x1xf32>
      %cst_17 = arith.constant 9.99999974E-6 : f32
      %24 = vector.broadcast %cst_17 : f32 to vector<8x1xf32>
      %25 = arith.addf %23, %24 : vector<8x1xf32>
      %26 = math.rsqrt %25 : vector<8x1xf32>
      %27 = vector.broadcast %26 : vector<8x1xf32> to vector<8x128xf32>
      %28 = arith.mulf %18, %27 : vector<8x128xf32>
      %29 = vector.broadcast %11 : vector<1x128xf32> to vector<8x128xf32>
      %30 = arith.mulf %28, %29 : vector<8x128xf32>
      %31 = vector.broadcast %12 : vector<1x128xf32> to vector<8x128xf32>
      %32 = arith.addf %30, %31 : vector<8x128xf32>
      %33 = arith.truncf %32 : vector<8x128xf32> to vector<8x128xbf16>
      %c0_18 = arith.constant 0 : index
      %c0_19 = arith.constant 0 : index
      %34 = vector.load %arg7[%c0_18, %c0_19] : memref<8x128xbf16, #tpu.memory_space<vmem>>, vector<8x128xbf16>
      tpu.vector_store %arg7[%c0_18, %c0_19], %33 {strides = array<i32>} : memref<8x128xbf16, #tpu.memory_space<vmem>>, vector<8x128xbf16>,
    } else {
    }
    %c0 = arith.constant 0 : index
    %c0_1 = arith.constant 0 : index
    %3 = vector.load %arg7[%c0, %c0_1] : memref<8x128xbf16, #tpu.memory_space<vmem>>, vector<8x128xbf16>
    %c0_2 = arith.constant 0 : index
    %c0_3 = arith.constant 0 : index
    %4 = vector.load %arg5[%c0_2, %c0_3] : memref<128x256xbf16, #tpu.memory_space<vmem>>, vector<128x256xbf16>
    %cst = arith.constant dense<0.000000e+00> : vector<8x256xf32>
    %5 = tpu.matmul %3, %4, %cst {dimension_numbers = #tpu.dot_dimension_numbers<[1], [0], [0], [1], [0, 0, 1, 1], [], []>} : vector<8x128xbf16>, vector<128x256xbf16>, vector<8x256xf32> -> vector<8x256xf32>
    %c0_4 = arith.constant 0 : index
    %c0_5 = arith.constant 0 : index
    %c0_6 = arith.constant 0 : index
    %6 = vector.load %arg6[%c0_4, %c0_5, %c0_6] : memref<1x8x256xf32, #tpu.memory_space<vmem>>, vector<1x8x256xf32>
    %7 = vector.shape_cast %6 : vector<1x8x256xf32> to vector<8x256xf32>
    %8 = vector.shape_cast %5 : vector<8x256xf32> to vector<1x8x256xf32>
    tpu.vector_store %arg6[%c0_4, %c0_5, %c0_6], %8 {strides = array<i32>} : memref<1x8x256xf32, #tpu.memory_space<vmem>>, vector<1x8x256xf32>,
    return
  }
  func.func @transform_0(%arg0: i32, %arg1: i32) -> (i32, i32, i32) {
    %c0_i32 = arith.constant 0 : i32
    %c0_i32_0 = arith.constant 0 : i32
    %c0_i32_1 = arith.constant 0 : i32
    return %arg0, %c0_i32, %c0_i32_0 : i32, i32, i32
  }
  func.func @transform_1(%arg0: i32, %arg1: i32) -> (i32, i32) {
    %c0_i32 = arith.constant 0 : i32
    %c0_i32_0 = arith.constant 0 : i32
    %c0_i32_1 = arith.constant 0 : i32
    return %c0_i32, %c0_i32_0 : i32, i32
  }
  func.func @transform_2(%arg0: i32, %arg1: i32) -> (i32, i32) {
    %c0_i32 = arith.constant 0 : i32
    %c0_i32_0 = arith.constant 0 : i32
    %c0_i32_1 = arith.constant 0 : i32
    return %c0_i32, %c0_i32_0 : i32, i32
  }
  func.func @transform_3(%arg0: i32, %arg1: i32) -> (i32, i32) {
    %c0_i32 = arith.constant 0 : i32
    %c0_i32_0 = arith.constant 0 : i32
    return %c0_i32, %arg1 : i32, i32
  }
  func.func @transform_4(%arg0: i32, %arg1: i32) -> (i32, i32, i32) {
    %c0_i32 = arith.constant 0 : i32
    %c0_i32_0 = arith.constant 0 : i32
    return %arg0, %c0_i32, %arg1 : i32, i32, i32
  }
}

module attributes {stable_mosaic.version = 11 : i64} {
  func.func @_block_kernel(%arg0: i32, %arg1: memref<1x12x128xf32, #tpu.memory_space<vmem>>, %arg2: memref<1x128xf32, #tpu.memory_space<vmem>>, %arg3: memref<1x128xf32, #tpu.memory_space<vmem>>, %arg4: memref<128x384xbf16, #tpu.memory_space<vmem>>, %arg5: memref<1x384xf32, #tpu.memory_space<vmem>>, %arg6: memref<128x128xbf16, #tpu.memory_space<vmem>>, %arg7: memref<1x128xf32, #tpu.memory_space<vmem>>, %arg8: memref<1x128xf32, #tpu.memory_space<vmem>>, %arg9: memref<1x128xf32, #tpu.memory_space<vmem>>, %arg10: memref<128x512xbf16, #tpu.memory_space<vmem>>, %arg11: memref<1x512xf32, #tpu.memory_space<vmem>>, %arg12: memref<512x128xbf16, #tpu.memory_space<vmem>>, %arg13: memref<1x128xf32, #tpu.memory_space<vmem>>, %arg14: memref<1x12x128xf32, #tpu.memory_space<vmem>>) attributes {dimension_semantics = [#tpu.dimension_semantics<parallel>], iteration_bounds = array<i64: 2>, scalar_prefetch = 0 : i64, scratch_operands = 0 : i64, tpu.core_type = #tpu.core_type<tc>, window_params = [{transform_indices = @transform_0, window_bounds = array<i64: 1, 12, 128>}, {pipeline_mode = #tpu.pipeline_mode<synchronous>, transform_indices = @transform_1, window_bounds = array<i64: 1, 128>}, {pipeline_mode = #tpu.pipeline_mode<synchronous>, transform_indices = @transform_2, window_bounds = array<i64: 1, 128>}, {pipeline_mode = #tpu.pipeline_mode<synchronous>, transform_indices = @transform_3, window_bounds = array<i64: 128, 384>}, {pipeline_mode = #tpu.pipeline_mode<synchronous>, transform_indices = @transform_4, window_bounds = array<i64: 1, 384>}, {pipeline_mode = #tpu.pipeline_mode<synchronous>, transform_indices = @transform_5, window_bounds = array<i64: 128, 128>}, {pipeline_mode = #tpu.pipeline_mode<synchronous>, transform_indices = @transform_6, window_bounds = array<i64: 1, 128>}, {pipeline_mode = #tpu.pipeline_mode<synchronous>, transform_indices = @transform_7, window_bounds = array<i64: 1, 128>}, {pipeline_mode = #tpu.pipeline_mode<synchronous>, transform_indices = @transform_8, window_bounds = array<i64: 1, 128>}, {pipeline_mode = #tpu.pipeline_mode<synchronous>, transform_indices = @transform_9, window_bounds = array<i64: 128, 512>}, {pipeline_mode = #tpu.pipeline_mode<synchronous>, transform_indices = @transform_10, window_bounds = array<i64: 1, 512>}, {pipeline_mode = #tpu.pipeline_mode<synchronous>, transform_indices = @transform_11, window_bounds = array<i64: 512, 128>}, {pipeline_mode = #tpu.pipeline_mode<synchronous>, transform_indices = @transform_12, window_bounds = array<i64: 1, 128>}, {transform_indices = @transform_13, window_bounds = array<i64: 1, 12, 128>}]} {
    %c0 = arith.constant 0 : index
    %c0_0 = arith.constant 0 : index
    %c0_1 = arith.constant 0 : index
    %0 = vector.load %arg1[%c0, %c0_0, %c0_1] : memref<1x12x128xf32, #tpu.memory_space<vmem>>, vector<1x12x128xf32>
    %1 = vector.shape_cast %0 : vector<1x12x128xf32> to vector<12x128xf32>
    %c0_2 = arith.constant 0 : index
    %c0_3 = arith.constant 0 : index
    %2 = vector.load %arg2[%c0_2, %c0_3] : memref<1x128xf32, #tpu.memory_space<vmem>>, vector<1x128xf32>
    %c0_4 = arith.constant 0 : index
    %c0_5 = arith.constant 0 : index
    %3 = vector.load %arg3[%c0_4, %c0_5] : memref<1x128xf32, #tpu.memory_space<vmem>>, vector<1x128xf32>
    %cst = arith.constant dense<0.000000e+00> : vector<12xf32>
    %4 = vector.multi_reduction <add>, %1, %cst [1] : vector<12x128xf32> to vector<12xf32>
    %5 = vector.shape_cast %4 : vector<12xf32> to vector<12x1xf32>
    %cst_6 = arith.constant 1.280000e+02 : f32
    %6 = vector.broadcast %cst_6 : f32 to vector<12x1xf32>
    %7 = arith.divf %5, %6 : vector<12x1xf32>
    %8 = vector.broadcast %7 : vector<12x1xf32> to vector<12x128xf32>
    %9 = arith.subf %1, %8 : vector<12x128xf32>
    %10 = arith.mulf %9, %9 : vector<12x128xf32>
    %cst_7 = arith.constant dense<0.000000e+00> : vector<12xf32>
    %11 = vector.multi_reduction <add>, %10, %cst_7 [1] : vector<12x128xf32> to vector<12xf32>
    %12 = vector.shape_cast %11 : vector<12xf32> to vector<12x1xf32>
    %cst_8 = arith.constant 1.280000e+02 : f32
    %13 = vector.broadcast %cst_8 : f32 to vector<12x1xf32>
    %14 = arith.divf %12, %13 : vector<12x1xf32>
    %cst_9 = arith.constant 9.99999974E-6 : f32
    %15 = vector.broadcast %cst_9 : f32 to vector<12x1xf32>
    %16 = arith.addf %14, %15 : vector<12x1xf32>
    %17 = math.rsqrt %16 : vector<12x1xf32>
    %18 = vector.broadcast %17 : vector<12x1xf32> to vector<12x128xf32>
    %19 = arith.mulf %9, %18 : vector<12x128xf32>
    %20 = vector.broadcast %2 : vector<1x128xf32> to vector<12x128xf32>
    %21 = arith.mulf %19, %20 : vector<12x128xf32>
    %22 = vector.broadcast %3 : vector<1x128xf32> to vector<12x128xf32>
    %23 = arith.addf %21, %22 : vector<12x128xf32>
    %24 = arith.truncf %23 : vector<12x128xf32> to vector<12x128xbf16>
    %c0_10 = arith.constant 0 : index
    %c0_11 = arith.constant 0 : index
    %25 = vector.load %arg4[%c0_10, %c0_11] : memref<128x384xbf16, #tpu.memory_space<vmem>>, vector<128x384xbf16>
    %cst_12 = arith.constant dense<0.000000e+00> : vector<12x384xf32>
    %26 = tpu.matmul %24, %25, %cst_12 {dimension_numbers = #tpu.dot_dimension_numbers<[1], [0], [0], [1], [0, 0, 1, 1], [], []>} : vector<12x128xbf16>, vector<128x384xbf16>, vector<12x384xf32> -> vector<12x384xf32>
    %c0_13 = arith.constant 0 : index
    %c0_14 = arith.constant 0 : index
    %27 = vector.load %arg5[%c0_13, %c0_14] : memref<1x384xf32, #tpu.memory_space<vmem>>, vector<1x384xf32>
    %28 = vector.broadcast %27 : vector<1x384xf32> to vector<12x384xf32>
    %29 = arith.addf %26, %28 : vector<12x384xf32>
    %30 = vector.extract_strided_slice %29 {offsets = [0, 0], sizes = [12, 128], strides = [1, 1]} : vector<12x384xf32> to vector<12x128xf32>
    %31 = vector.shape_cast %30 : vector<12x128xf32> to vector<1x12x2x64xf32>
    %32 = tpu.transpose %31, [0, 2, 1, 3] : vector<1x12x2x64xf32> -> vector<1x2x12x64xf32>
    %33 = vector.shape_cast %32 : vector<1x2x12x64xf32> to vector<2x12x64xf32>
    %34 = arith.truncf %33 : vector<2x12x64xf32> to vector<2x12x64xbf16>
    %35 = vector.extract_strided_slice %29 {offsets = [0, 128], sizes = [12, 128], strides = [1, 1]} : vector<12x384xf32> to vector<12x128xf32>
    %36 = vector.shape_cast %35 : vector<12x128xf32> to vector<1x12x2x64xf32>
    %37 = tpu.transpose %36, [0, 2, 1, 3] : vector<1x12x2x64xf32> -> vector<1x2x12x64xf32>
    %38 = vector.shape_cast %37 : vector<1x2x12x64xf32> to vector<2x12x64xf32>
    %39 = arith.truncf %38 : vector<2x12x64xf32> to vector<2x12x64xbf16>
    %40 = vector.extract_strided_slice %29 {offsets = [0, 256], sizes = [12, 128], strides = [1, 1]} : vector<12x384xf32> to vector<12x128xf32>
    %41 = vector.shape_cast %40 : vector<12x128xf32> to vector<1x12x2x64xf32>
    %42 = tpu.transpose %41, [0, 2, 1, 3] : vector<1x12x2x64xf32> -> vector<1x2x12x64xf32>
    %43 = vector.shape_cast %42 : vector<1x2x12x64xf32> to vector<2x12x64xf32>
    %44 = arith.truncf %43 : vector<2x12x64xf32> to vector<2x12x64xbf16>
    "tpu.trace_start"() <{level = 10 : i32, message = "gtd,gsd->gts"}> : () -> ()
    %cst_15 = arith.constant dense<0.000000e+00> : vector<2x12x12xf32>
    %45 = tpu.matmul %34, %39, %cst_15 {dimension_numbers = #tpu.dot_dimension_numbers<[2], [2], [1], [1], [0, 0, 0, 1, 1, 1], [0], [0]>} : vector<2x12x64xbf16>, vector<2x12x64xbf16>, vector<2x12x12xf32> -> vector<2x12x12xf32>
    "tpu.trace_stop"() : () -> ()
    %cst_16 = arith.constant 1.250000e-01 : f32
    %46 = vector.broadcast %cst_16 : f32 to vector<2x12x12xf32>
    %47 = arith.mulf %45, %46 : vector<2x12x12xf32>
    %48 = tpu.iota {dimensions = array<i32: 1>} : vector<2x12x12xi32>
    %49 = tpu.iota {dimensions = array<i32: 2>} : vector<2x12x12xi32>
    %50 = arith.cmpi sle, %49, %48 : vector<2x12x12xi32>
    %cst_17 = arith.constant 0xFF800000 : f32
    %51 = vector.broadcast %cst_17 : f32 to vector<2x12x12xf32>
    %52 = arith.select %50, %47, %51 : vector<2x12x12xi1>, vector<2x12x12xf32>
    %cst_18 = arith.constant dense<0xFF800000> : vector<2x12xf32>
    %53 = vector.multi_reduction <maximumf>, %52, %cst_18 [2] : vector<2x12x12xf32> to vector<2x12xf32>
    %54 = vector.shape_cast %53 : vector<2x12xf32> to vector<2x12x1xf32>
    %55 = vector.broadcast %54 : vector<2x12x1xf32> to vector<2x12x12xf32>
    %56 = arith.subf %52, %55 : vector<2x12x12xf32>
    %57 = math.exp %56 : vector<2x12x12xf32>
    %cst_19 = arith.constant dense<0.000000e+00> : vector<2x12xf32>
    %58 = vector.multi_reduction <add>, %57, %cst_19 [2] : vector<2x12x12xf32> to vector<2x12xf32>
    %59 = vector.shape_cast %58 : vector<2x12xf32> to vector<2x12x1xf32>
    %60 = tpu.reciprocal %59 {approx = true} : vector<2x12x1xf32> -> vector<2x12x1xf32>
    %61 = vector.broadcast %60 : vector<2x12x1xf32> to vector<2x12x12xf32>
    %62 = arith.mulf %57, %61 : vector<2x12x12xf32>
    %63 = arith.truncf %62 : vector<2x12x12xf32> to vector<2x12x12xbf16>
    "tpu.trace_start"() <{level = 10 : i32, message = "gts,gsd->gtd"}> : () -> ()
    %cst_20 = arith.constant dense<0.000000e+00> : vector<2x12x64xf32>
    %64 = tpu.matmul %63, %44, %cst_20 {dimension_numbers = #tpu.dot_dimension_numbers<[2], [1], [1], [2], [0, 0, 0, 1, 1, 2], [0], [0]>} : vector<2x12x12xbf16>, vector<2x12x64xbf16>, vector<2x12x64xf32> -> vector<2x12x64xf32>
    "tpu.trace_stop"() : () -> ()
    %65 = vector.shape_cast %64 : vector<2x12x64xf32> to vector<1x2x12x64xf32>
    %66 = tpu.transpose %65, [0, 2, 1, 3] : vector<1x2x12x64xf32> -> vector<1x12x2x64xf32>
    %67 = vector.shape_cast %66 : vector<1x12x2x64xf32> to vector<12x128xf32>
    %68 = arith.truncf %67 : vector<12x128xf32> to vector<12x128xbf16>
    %c0_21 = arith.constant 0 : index
    %c0_22 = arith.constant 0 : index
    %69 = vector.load %arg6[%c0_21, %c0_22] : memref<128x128xbf16, #tpu.memory_space<vmem>>, vector<128x128xbf16>
    %cst_23 = arith.constant dense<0.000000e+00> : vector<12x128xf32>
    %70 = tpu.matmul %68, %69, %cst_23 {dimension_numbers = #tpu.dot_dimension_numbers<[1], [0], [0], [1], [0, 0, 1, 1], [], []>} : vector<12x128xbf16>, vector<128x128xbf16>, vector<12x128xf32> -> vector<12x128xf32>
    %71 = arith.addf %1, %70 : vector<12x128xf32>
    %c0_24 = arith.constant 0 : index
    %c0_25 = arith.constant 0 : index
    %72 = vector.load %arg7[%c0_24, %c0_25] : memref<1x128xf32, #tpu.memory_space<vmem>>, vector<1x128xf32>
    %73 = vector.broadcast %72 : vector<1x128xf32> to vector<12x128xf32>
    %74 = arith.addf %71, %73 : vector<12x128xf32>
    %c0_26 = arith.constant 0 : index
    %c0_27 = arith.constant 0 : index
    %75 = vector.load %arg8[%c0_26, %c0_27] : memref<1x128xf32, #tpu.memory_space<vmem>>, vector<1x128xf32>
    %c0_28 = arith.constant 0 : index
    %c0_29 = arith.constant 0 : index
    %76 = vector.load %arg9[%c0_28, %c0_29] : memref<1x128xf32, #tpu.memory_space<vmem>>, vector<1x128xf32>
    %cst_30 = arith.constant dense<0.000000e+00> : vector<12xf32>
    %77 = vector.multi_reduction <add>, %74, %cst_30 [1] : vector<12x128xf32> to vector<12xf32>
    %78 = vector.shape_cast %77 : vector<12xf32> to vector<12x1xf32>
    %cst_31 = arith.constant 1.280000e+02 : f32
    %79 = vector.broadcast %cst_31 : f32 to vector<12x1xf32>
    %80 = arith.divf %78, %79 : vector<12x1xf32>
    %81 = vector.broadcast %80 : vector<12x1xf32> to vector<12x128xf32>
    %82 = arith.subf %74, %81 : vector<12x128xf32>
    %83 = arith.mulf %82, %82 : vector<12x128xf32>
    %cst_32 = arith.constant dense<0.000000e+00> : vector<12xf32>
    %84 = vector.multi_reduction <add>, %83, %cst_32 [1] : vector<12x128xf32> to vector<12xf32>
    %85 = vector.shape_cast %84 : vector<12xf32> to vector<12x1xf32>
    %cst_33 = arith.constant 1.280000e+02 : f32
    %86 = vector.broadcast %cst_33 : f32 to vector<12x1xf32>
    %87 = arith.divf %85, %86 : vector<12x1xf32>
    %cst_34 = arith.constant 9.99999974E-6 : f32
    %88 = vector.broadcast %cst_34 : f32 to vector<12x1xf32>
    %89 = arith.addf %87, %88 : vector<12x1xf32>
    %90 = math.rsqrt %89 : vector<12x1xf32>
    %91 = vector.broadcast %90 : vector<12x1xf32> to vector<12x128xf32>
    %92 = arith.mulf %82, %91 : vector<12x128xf32>
    %93 = vector.broadcast %75 : vector<1x128xf32> to vector<12x128xf32>
    %94 = arith.mulf %92, %93 : vector<12x128xf32>
    %95 = vector.broadcast %76 : vector<1x128xf32> to vector<12x128xf32>
    %96 = arith.addf %94, %95 : vector<12x128xf32>
    %97 = arith.truncf %96 : vector<12x128xf32> to vector<12x128xbf16>
    %c0_35 = arith.constant 0 : index
    %c0_36 = arith.constant 0 : index
    %98 = vector.load %arg10[%c0_35, %c0_36] : memref<128x512xbf16, #tpu.memory_space<vmem>>, vector<128x512xbf16>
    %cst_37 = arith.constant dense<0.000000e+00> : vector<12x512xf32>
    %99 = tpu.matmul %97, %98, %cst_37 {dimension_numbers = #tpu.dot_dimension_numbers<[1], [0], [0], [1], [0, 0, 1, 1], [], []>} : vector<12x128xbf16>, vector<128x512xbf16>, vector<12x512xf32> -> vector<12x512xf32>
    %c0_38 = arith.constant 0 : index
    %c0_39 = arith.constant 0 : index
    %100 = vector.load %arg11[%c0_38, %c0_39] : memref<1x512xf32, #tpu.memory_space<vmem>>, vector<1x512xf32>
    %101 = vector.broadcast %100 : vector<1x512xf32> to vector<12x512xf32>
    %102 = arith.addf %99, %101 : vector<12x512xf32>
    %cst_40 = arith.constant 5.000000e-01 : f32
    %103 = vector.broadcast %cst_40 : f32 to vector<12x512xf32>
    %104 = arith.mulf %103, %102 : vector<12x512xf32>
    %cst_41 = arith.constant 4.471500e-02 : f32
    %105 = vector.broadcast %cst_41 : f32 to vector<12x512xf32>
    %106 = arith.mulf %105, %102 : vector<12x512xf32>
    %107 = arith.mulf %106, %102 : vector<12x512xf32>
    %108 = arith.mulf %107, %102 : vector<12x512xf32>
    %109 = arith.addf %102, %108 : vector<12x512xf32>
    %cst_42 = arith.constant 0.797884583 : f32
    %110 = vector.broadcast %cst_42 : f32 to vector<12x512xf32>
    %111 = arith.mulf %110, %109 : vector<12x512xf32>
    %112 = math.tanh %111 : vector<12x512xf32>
    %cst_43 = arith.constant 1.000000e+00 : f32
    %113 = vector.broadcast %cst_43 : f32 to vector<12x512xf32>
    %114 = arith.addf %113, %112 : vector<12x512xf32>
    %115 = arith.mulf %104, %114 : vector<12x512xf32>
    %116 = arith.truncf %115 : vector<12x512xf32> to vector<12x512xbf16>
    %c0_44 = arith.constant 0 : index
    %c0_45 = arith.constant 0 : index
    %117 = vector.load %arg12[%c0_44, %c0_45] : memref<512x128xbf16, #tpu.memory_space<vmem>>, vector<512x128xbf16>
    %cst_46 = arith.constant dense<0.000000e+00> : vector<12x128xf32>
    %118 = tpu.matmul %116, %117, %cst_46 {dimension_numbers = #tpu.dot_dimension_numbers<[1], [0], [0], [1], [0, 0, 1, 1], [], []>} : vector<12x512xbf16>, vector<512x128xbf16>, vector<12x128xf32> -> vector<12x128xf32>
    %119 = arith.addf %74, %118 : vector<12x128xf32>
    %c0_47 = arith.constant 0 : index
    %c0_48 = arith.constant 0 : index
    %120 = vector.load %arg13[%c0_47, %c0_48] : memref<1x128xf32, #tpu.memory_space<vmem>>, vector<1x128xf32>
    %121 = vector.broadcast %120 : vector<1x128xf32> to vector<12x128xf32>
    %122 = arith.addf %119, %121 : vector<12x128xf32>
    %123 = vector.shape_cast %122 : vector<12x128xf32> to vector<1x12x128xf32>
    %c0_49 = arith.constant 0 : index
    %c0_50 = arith.constant 0 : index
    %c0_51 = arith.constant 0 : index
    %124 = vector.load %arg14[%c0_49, %c0_50, %c0_51] : memref<1x12x128xf32, #tpu.memory_space<vmem>>, vector<1x12x128xf32>
    tpu.vector_store %arg14[%c0_49, %c0_50, %c0_51], %123 {strides = array<i32>} : memref<1x12x128xf32, #tpu.memory_space<vmem>>, vector<1x12x128xf32>,
    return
  }
  func.func @transform_0(%arg0: i32) -> (i32, i32, i32) {
    %c0_i32 = arith.constant 0 : i32
    %c0_i32_0 = arith.constant 0 : i32
    %c0_i32_1 = arith.constant 0 : i32
    return %arg0, %c0_i32, %c0_i32_0 : i32, i32, i32
  }
  func.func @transform_1(%arg0: i32) -> (i32, i32) {
    %c0_i32 = arith.constant 0 : i32
    %c0_i32_0 = arith.constant 0 : i32
    %c0_i32_1 = arith.constant 0 : i32
    return %c0_i32, %c0_i32_0 : i32, i32
  }
  func.func @transform_2(%arg0: i32) -> (i32, i32) {
    %c0_i32 = arith.constant 0 : i32
    %c0_i32_0 = arith.constant 0 : i32
    %c0_i32_1 = arith.constant 0 : i32
    return %c0_i32, %c0_i32_0 : i32, i32
  }
  func.func @transform_3(%arg0: i32) -> (i32, i32) {
    %c0_i32 = arith.constant 0 : i32
    %c0_i32_0 = arith.constant 0 : i32
    %c0_i32_1 = arith.constant 0 : i32
    return %c0_i32, %c0_i32_0 : i32, i32
  }
  func.func @transform_4(%arg0: i32) -> (i32, i32) {
    %c0_i32 = arith.constant 0 : i32
    %c0_i32_0 = arith.constant 0 : i32
    %c0_i32_1 = arith.constant 0 : i32
    return %c0_i32, %c0_i32_0 : i32, i32
  }
  func.func @transform_5(%arg0: i32) -> (i32, i32) {
    %c0_i32 = arith.constant 0 : i32
    %c0_i32_0 = arith.constant 0 : i32
    %c0_i32_1 = arith.constant 0 : i32
    return %c0_i32, %c0_i32_0 : i32, i32
  }
  func.func @transform_6(%arg0: i32) -> (i32, i32) {
    %c0_i32 = arith.constant 0 : i32
    %c0_i32_0 = arith.constant 0 : i32
    %c0_i32_1 = arith.constant 0 : i32
    return %c0_i32, %c0_i32_0 : i32, i32
  }
  func.func @transform_7(%arg0: i32) -> (i32, i32) {
    %c0_i32 = arith.constant 0 : i32
    %c0_i32_0 = arith.constant 0 : i32
    %c0_i32_1 = arith.constant 0 : i32
    return %c0_i32, %c0_i32_0 : i32, i32
  }
  func.func @transform_8(%arg0: i32) -> (i32, i32) {
    %c0_i32 = arith.constant 0 : i32
    %c0_i32_0 = arith.constant 0 : i32
    %c0_i32_1 = arith.constant 0 : i32
    return %c0_i32, %c0_i32_0 : i32, i32
  }
  func.func @transform_9(%arg0: i32) -> (i32, i32) {
    %c0_i32 = arith.constant 0 : i32
    %c0_i32_0 = arith.constant 0 : i32
    %c0_i32_1 = arith.constant 0 : i32
    return %c0_i32, %c0_i32_0 : i32, i32
  }
  func.func @transform_10(%arg0: i32) -> (i32, i32) {
    %c0_i32 = arith.constant 0 : i32
    %c0_i32_0 = arith.constant 0 : i32
    %c0_i32_1 = arith.constant 0 : i32
    return %c0_i32, %c0_i32_0 : i32, i32
  }
  func.func @transform_11(%arg0: i32) -> (i32, i32) {
    %c0_i32 = arith.constant 0 : i32
    %c0_i32_0 = arith.constant 0 : i32
    %c0_i32_1 = arith.constant 0 : i32
    return %c0_i32, %c0_i32_0 : i32, i32
  }
  func.func @transform_12(%arg0: i32) -> (i32, i32) {
    %c0_i32 = arith.constant 0 : i32
    %c0_i32_0 = arith.constant 0 : i32
    %c0_i32_1 = arith.constant 0 : i32
    return %c0_i32, %c0_i32_0 : i32, i32
  }
  func.func @transform_13(%arg0: i32) -> (i32, i32, i32) {
    %c0_i32 = arith.constant 0 : i32
    %c0_i32_0 = arith.constant 0 : i32
    %c0_i32_1 = arith.constant 0 : i32
    return %arg0, %c0_i32, %c0_i32_0 : i32, i32, i32
  }
}

</mosaic_0001>

<llo_original>
// kernel: img_text_model_forward.7
$region0: #{img_text_model_forward.7}
  #allocation0 [shape = 'u32[]', space=smem, size = 0x4, offset = 0x4, fixed_abs, tag = 'smem constant byte address 0x4 - core index']
  #allocation1 [shape = 'u32[144,128]{1,0:T(1,128)}', space=vmem, size = 0x12000, scoped, tag = 'internal scratch']
  #allocation2 [shape = 'f32[8,128]{1,0:T(8,128)}', space=vmem, size = 0x1000, scoped, tag = 'scratch operand']
  %s0 = inlined_call_operand.vmem [shape: f32[8,192], index: 0, kind: input, shape index: {}]
  %s1 = inlined_call_operand.vmem [shape: bf16[192,128], index: 1, kind: input, shape index: {}]
  %s2 = inlined_call_operand.vmem [shape: f32[1,128], index: 2, kind: input, shape index: {}]
  %s3 = inlined_call_operand.vmem [shape: f32[8,128], index: 3, kind: output, shape index: {}]
  %s4 = sld [smem:[#allocation0]]
  $region30: #{img_text_model_forward.7} parent=0
    _
  %s6 = ssub.s32 1, %s4
  %s7 = scalar_select 0, %s6, %s4
  // Predicated region
  $region2: #{img_text_model_forward.7} parent=0 // pred_check
    _
  $region3: #{img_text_model_forward.7} parent=0 // pred_check_branch
    %9 = sbr.rel (0) target = $region5
  $region4: #{img_text_model_forward.7} parent=0 // pred_region
    _
  $region5: #{img_text_model_forward.7} parent=0 // pred_fallthru
    _
  // Predicated region
  $region6: #{img_text_model_forward.7} parent=0 // pred_check
    _
  $region7: #{img_text_model_forward.7} parent=0 // pred_check_branch
    %11 = sbr.rel (0) target = $region9
  $region8: #{img_text_model_forward.7} parent=0 // pred_region
    _
  $region9: #{img_text_model_forward.7} parent=0 // pred_fallthru
    _
  // Predicated region
  $region10: #{img_text_model_forward.7} parent=0 // pred_check
    _
  $region11: #{img_text_model_forward.7} parent=0 // pred_check_branch
    %13 = sbr.rel (0) target = $region13
  $region12: #{img_text_model_forward.7} parent=0 // pred_region
    _
  $region13: #{img_text_model_forward.7} parent=0 // pred_fallthru
    _
  %p15 = scmp.eq.s32.totalorder 0, 0
  // Predicated region
  $region14: #{img_text_model_forward.7} parent=0 // pred_check
    %p16 = pneg %p15
  $region15: #{img_text_model_forward.7} parent=0 // pred_check_branch
    %18 = sbr.rel (%p16) target = $region17
  $region16: #{img_text_model_forward.7} parent=0 // pred_region
    %19 = vst [vmem:[#allocation2] sm:$0xff] 0.0
  $region17: #{img_text_model_forward.7} parent=0 // pred_fallthru
    _
  %v20 = vld [vmem:[#allocation2] sm:$0xff]
  %v21 = vld [vmem:[%s0] sm:$0xff]
  %v22 = vld [vmem:[%s0 + $0x8] sm:$0xff]
  %v23 = vpack.c.bf16 %v21, %v21
  %v24 = vpack.c.bf16 %v22, %v22
  %v25 = vld [vmem:[%s1] sm:$0xf]
  %v26 = vld [vmem:[%s1 + $0x4] sm:$0xf]
  %v27 = vld [vmem:[%s1 + $0x8] sm:$0xf]
  %v28 = vld [vmem:[%s1 + $0xc] sm:$0xf]
  %v29 = vld [vmem:[%s1 + $0x10] sm:$0xf]
  %v30 = vld [vmem:[%s1 + $0x14] sm:$0xf]
  %v31 = vld [vmem:[%s1 + $0x18] sm:$0xf]
  %v32 = vld [vmem:[%s1 + $0x1c] sm:$0xf]
  %v33 = vld [vmem:[%s1 + $0x20] sm:$0xf]
  %v34 = vld [vmem:[%s1 + $0x24] sm:$0xf]
  %v35 = vld [vmem:[%s1 + $0x28] sm:$0xf]
  %v36 = vld [vmem:[%s1 + $0x2c] sm:$0xf]
  %v37 = vld [vmem:[%s1 + $0x30] sm:$0xf]
  %v38 = vld [vmem:[%s1 + $0x34] sm:$0xf]
  %v39 = vld [vmem:[%s1 + $0x38] sm:$0xf]
  %v40 = vld [vmem:[%s1 + $0x3c] sm:$0xf]
  %v41 = vld [vmem:[%s1 + $0x40] sm:$0xf]
  %v42 = vld [vmem:[%s1 + $0x44] sm:$0xf]
  %v43 = vld [vmem:[%s1 + $0x48] sm:$0xf]
  %v44 = vld [vmem:[%s1 + $0x4c] sm:$0xf]
  %v45 = vld [vmem:[%s1 + $0x50] sm:$0xf]
  %v46 = vld [vmem:[%s1 + $0x54] sm:$0xf]
  %v47 = vld [vmem:[%s1 + $0x58] sm:$0xf]
  %v48 = vld [vmem:[%s1 + $0x5c] sm:$0xf]
  %v73 = vunpack.c.l.b16 %v25
  %v74 = vunpack.c.l.b16 %v26
  %v75 = vunpack.c.l.b16 %v27
  %v76 = vunpack.c.l.b16 %v28
  %v77 = vunpack.c.l.b16 %v29
  %v78 = vunpack.c.l.b16 %v30
  %v79 = vunpack.c.l.b16 %v31
  %v80 = vunpack.c.l.b16 %v32
  %v81 = vunpack.c.l.b16 %v33
  %v82 = vunpack.c.l.b16 %v34
  %v83 = vunpack.c.l.b16 %v35
  %v84 = vunpack.c.l.b16 %v36
  %v85 = vunpack.c.l.b16 %v37
  %v86 = vunpack.c.l.b16 %v38
  %v87 = vunpack.c.l.b16 %v39
  %v88 = vunpack.c.l.b16 %v40
  %v89 = vunpack.c.l.b16 %v41
  %v90 = vunpack.c.l.b16 %v42
  %v91 = vunpack.c.l.b16 %v43
  %v92 = vunpack.c.l.b16 %v44
  %v93 = vunpack.c.l.b16 %v45
  %v94 = vunpack.c.l.b16 %v46
  %v95 = vunpack.c.l.b16 %v47
  %v96 = vunpack.c.l.b16 %v48
  %v97 = vpack.c.b16 %v74, %v73
  %v98 = vpack.c.b16 %v76, %v75
  %v99 = vpack.c.b16 %v78, %v77
  %v100 = vpack.c.b16 %v80, %v79
  %v101 = vpack.c.b16 %v82, %v81
  %v102 = vpack.c.b16 %v84, %v83
  %v103 = vpack.c.b16 %v86, %v85
  %v104 = vpack.c.b16 %v88, %v87
  %v105 = vpack.c.b16 %v90, %v89
  %v106 = vpack.c.b16 %v92, %v91
  %v107 = vpack.c.b16 %v94, %v93
  %v108 = vpack.c.b16 %v96, %v95
  %vm121 = vcmask 523264
  %v123 = vsel %vm121, %v24, 0
  %125 = vmatprep.subr.bf16.mxu0 0
  %126 = vmatpush1.bf16.msra.mxu0 %v97
  %127 = vmatprep.subr.bf16.mxu0 0
  %128 = vmatpush1.bf16.msra.mxu0 %v98
  %129 = vmatprep.subr.bf16.mxu0 0
  %130 = vmatpush1.bf16.msra.mxu0 %v99
  %131 = vmatprep.subr.bf16.mxu0 0
  %132 = vmatpush1.bf16.msra.mxu0 %v100
  %133 = vmatprep.subr.bf16.mxu0 0
  %134 = vmatpush1.bf16.msra.mxu0 %v101
  %135 = vmatprep.subr.bf16.mxu0 0
  %136 = vmatpush1.bf16.msra.mxu0 %v102
  %137 = vmatprep.subr.bf16.mxu0 0
  %138 = vmatpush1.bf16.msra.mxu0 %v103
  %139 = vmatprep.subr.bf16.mxu0 0
  %140 = vmatpush1.bf16.msra.mxu0 %v104
  %141 = vmatprep.subr.bf16.mxu0 0
  %142 = vmatpush1.bf16.msra.mxu0 %v105
  %143 = vmatprep.subr.bf16.mxu0 0
  %144 = vmatpush1.bf16.msra.mxu0 %v106
  %145 = vmatprep.subr.bf16.mxu0 0
  %146 = vmatpush1.bf16.msra.mxu0 %v107
  %147 = vmatprep.subr.bf16.mxu0 0
  %148 = vmatpush1.bf16.msra.mxu0 %v108
  %149 = vmatprep.subr.bf16.mxu0 0
  %150 = vmatpush1.bf16.msra.mxu0 0
  %151 = vmatprep.subr.bf16.mxu0 0
  %152 = vmatpush1.bf16.msra.mxu0 0
  %153 = vmatprep.subr.bf16.mxu0 0
  %154 = vmatpush1.bf16.msra.mxu0 0
  %155 = vmatprep.subr.bf16.mxu0 0
  %156 = vmatpush1.bf16.msra.mxu0 0
  %157 = vmatprep.mubr.bf16.mxu0 %v123
  %158 = vmatmul.mubr.bf16.gmra.mrb[0].mxu0 %v23
  %v159 = vpop.f32.mrb[0].mxu0
  %v160 = vadd.f32 0.0, %v159
  %v161 = vpop.f32.mrb[0].mxu0
  %v162 = vpop.f32.mrb[0].mxu0
  %v163 = vpop.f32.mrb[0].mxu0
  %164 = vdwg.mxu0
  %v165 = vadd.f32 %v20, %v160
  %166 = vst [vmem:[#allocation2] sm:$0xff] %v165
  // Predicated region
  $region18: #{img_text_model_forward.7} parent=0 // pred_check
    %p167 = pneg %p15
  $region19: #{img_text_model_forward.7} parent=0 // pred_check_branch
    %169 = sbr.rel (%p167) target = $region21
  $region20: #{img_text_model_forward.7} parent=0 // pred_region
    %v170 = vld [vmem:[#allocation2] sm:$0xff]
    %v171 = vld [vmem:[%s2] sm:$0x1]
    %v173 = vlaneseq
    %v174 = vshrl.u32 %v173, 7
    %v175 = vsub.s32 0, %v174
    %v176 = vrot.slane %v171, %v175
    %v178 = vadd.f32 %v170, %v176
    %179 = vst [vmem:[%s3] sm:$0xff] %v178
  $region21: #{img_text_model_forward.7} parent=0 // pred_fallthru
    _
  // Predicated region
  $region22: #{img_text_model_forward.7} parent=0 // pred_check
    _
  $region23: #{img_text_model_forward.7} parent=0 // pred_check_branch
    %181 = sbr.rel (0) target = $region25
  $region24: #{img_text_model_forward.7} parent=0 // pred_region
    _
  $region25: #{img_text_model_forward.7} parent=0 // pred_fallthru
    _
  // Predicated region
  $region26: #{img_text_model_forward.7} parent=0 // pred_check
    _
  $region27: #{img_text_model_forward.7} parent=0 // pred_check_branch
    %183 = sbr.rel (0) target = $region29
  $region28: #{img_text_model_forward.7} parent=0 // pred_region
    _
  $region29: #{img_text_model_forward.7} parent=0 // pred_fallthru
    _

// kernel: img_text_model_forward.10
$region0: #{img_text_model_forward.10}
  #allocation0 [shape = 'u32[]', space=smem, size = 0x4, offset = 0x4, fixed_abs, tag = 'smem constant byte address 0x4 - core index']
  #allocation1 [shape = 'u32[144,128]{1,0:T(1,128)}', space=vmem, size = 0x12000, scoped, tag = 'internal scratch']
  %s0 = inlined_call_operand.vmem [shape: f32[8,128], index: 0, kind: input, shape index: {}]
  %s1 = inlined_call_operand.vmem [shape: f32[1,128], index: 1, kind: input, shape index: {}]
  %s2 = inlined_call_operand.vmem [shape: f32[1,128], index: 2, kind: input, shape index: {}]
  %s3 = inlined_call_operand.vmem [shape: bf16[128,128], index: 3, kind: input, shape index: {}]
  %s4 = inlined_call_operand.vmem [shape: f32[1,128], index: 4, kind: input, shape index: {}]
  %s5 = inlined_call_operand.vmem [shape: bf16[128,128], index: 5, kind: input, shape index: {}]
  %s6 = inlined_call_operand.vmem [shape: f32[1,128], index: 6, kind: input, shape index: {}]
  %s7 = inlined_call_operand.vmem [shape: f32[1,128], index: 7, kind: input, shape index: {}]
  %s8 = inlined_call_operand.vmem [shape: f32[8,128], index: 8, kind: output, shape index: {}]
  %s9 = sld [smem:[#allocation0]]
  $region42: #{img_text_model_forward.10} parent=0
    _
  %s11 = ssub.s32 1, %s9
  %s12 = scalar_select 0, %s11, %s9
  // Predicated region
  $region2: #{img_text_model_forward.10} parent=0 // pred_check
    _
  $region3: #{img_text_model_forward.10} parent=0 // pred_check_branch
    %14 = sbr.rel (0) target = $region5
  $region4: #{img_text_model_forward.10} parent=0 // pred_region
    _
  $region5: #{img_text_model_forward.10} parent=0 // pred_fallthru
    _
  // Predicated region
  $region6: #{img_text_model_forward.10} parent=0 // pred_check
    _
  $region7: #{img_text_model_forward.10} parent=0 // pred_check_branch
    %16 = sbr.rel (0) target = $region9
  $region8: #{img_text_model_forward.10} parent=0 // pred_region
    _
  $region9: #{img_text_model_forward.10} parent=0 // pred_fallthru
    _
  // Predicated region
  $region10: #{img_text_model_forward.10} parent=0 // pred_check
    _
  $region11: #{img_text_model_forward.10} parent=0 // pred_check_branch
    %18 = sbr.rel (0) target = $region13
  $region12: #{img_text_model_forward.10} parent=0 // pred_region
    _
  $region13: #{img_text_model_forward.10} parent=0 // pred_fallthru
    _
  // Predicated region
  $region14: #{img_text_model_forward.10} parent=0 // pred_check
    _
  $region15: #{img_text_model_forward.10} parent=0 // pred_check_branch
    %20 = sbr.rel (0) target = $region17
  $region16: #{img_text_model_forward.10} parent=0 // pred_region
    _
  $region17: #{img_text_model_forward.10} parent=0 // pred_fallthru
    _
  // Predicated region
  $region18: #{img_text_model_forward.10} parent=0 // pred_check
    _
  $region19: #{img_text_model_forward.10} parent=0 // pred_check_branch
    %22 = sbr.rel (0) target = $region21
  $region20: #{img_text_model_forward.10} parent=0 // pred_region
    _
  $region21: #{img_text_model_forward.10} parent=0 // pred_fallthru
    _
  // Predicated region
  $region22: #{img_text_model_forward.10} parent=0 // pred_check
    _
  $region23: #{img_text_model_forward.10} parent=0 // pred_check_branch
    %24 = sbr.rel (0) target = $region25
  $region24: #{img_text_model_forward.10} parent=0 // pred_region
    _
  $region25: #{img_text_model_forward.10} parent=0 // pred_fallthru
    _
  // Predicated region
  $region26: #{img_text_model_forward.10} parent=0 // pred_check
    _
  $region27: #{img_text_model_forward.10} parent=0 // pred_check_branch
    %26 = sbr.rel (0) target = $region29
  $region28: #{img_text_model_forward.10} parent=0 // pred_region
    _
  $region29: #{img_text_model_forward.10} parent=0 // pred_fallthru
    _
  // Predicated region
  $region30: #{img_text_model_forward.10} parent=0 // pred_check
    _
  $region31: #{img_text_model_forward.10} parent=0 // pred_check_branch
    %28 = sbr.rel (0) target = $region33
  $region32: #{img_text_model_forward.10} parent=0 // pred_region
    _
  $region33: #{img_text_model_forward.10} parent=0 // pred_fallthru
    _
  %v30 = vld [vmem:[%s0] sm:$0xff]
  %v31 = vld [vmem:[%s1] sm:$0x1]
  %v32 = vld [vmem:[%s2] sm:$0x1]
  %33 = vadd.xlane.f32.xlu0 %v30
  %v34 = vpop.xlane.xlu0 %33
  %v35 = vrcp.pop 128.0
  %v36 = vmul.f32 %v34, %v35
  %v37 = vsub.f32 %v30, %v36
  %v38 = vmul.f32 %v37, %v37
  %39 = vadd.xlane.f32.xlu0 %v38
  %v40 = vpop.xlane.xlu0 %39
  %v41 = vmul.f32 %v40, %v35
  %v42 = vadd.f32 %v41, 1e-05
  %v43 = vrsqrt.pop %v42
  %v44 = vmul.f32 %v37, %v43
  %v46 = vlaneseq
  %v47 = vshrl.u32 %v46, 7
  %v48 = vsub.s32 0, %v47
  %v49 = vrot.slane %v31, %v48
  %v51 = vmul.f32 %v44, %v49
  %v53 = vlaneseq
  %v54 = vshrl.u32 %v53, 7
  %v55 = vsub.s32 0, %v54
  %v56 = vrot.slane %v32, %v55
  %v58 = vadd.f32 %v51, %v56
  %v59 = vpack.c.bf16 %v58, %v58
  %v60 = vld [vmem:[%s3] sm:$0xf]
  %v61 = vld [vmem:[%s3 + $0x4] sm:$0xf]
  %v62 = vld [vmem:[%s3 + $0x8] sm:$0xf]
  %v63 = vld [vmem:[%s3 + $0xc] sm:$0xf]
  %v64 = vld [vmem:[%s3 + $0x10] sm:$0xf]
  %v65 = vld [vmem:[%s3 + $0x14] sm:$0xf]
  %v66 = vld [vmem:[%s3 + $0x18] sm:$0xf]
  %v67 = vld [vmem:[%s3 + $0x1c] sm:$0xf]
  %v68 = vld [vmem:[%s3 + $0x20] sm:$0xf]
  %v69 = vld [vmem:[%s3 + $0x24] sm:$0xf]
  %v70 = vld [vmem:[%s3 + $0x28] sm:$0xf]
  %v71 = vld [vmem:[%s3 + $0x2c] sm:$0xf]
  %v72 = vld [vmem:[%s3 + $0x30] sm:$0xf]
  %v73 = vld [vmem:[%s3 + $0x34] sm:$0xf]
  %v74 = vld [vmem:[%s3 + $0x38] sm:$0xf]
  %v75 = vld [vmem:[%s3 + $0x3c] sm:$0xf]
  %v76 = vld [vmem:[%s4] sm:$0x1]
  %v78 = vlaneseq
  %v79 = vshrl.u32 %v78, 7
  %v80 = vsub.s32 0, %v79
  %v81 = vrot.slane %v76, %v80
  %v99 = vunpack.c.l.b16 %v60
  %v100 = vunpack.c.l.b16 %v61
  %v101 = vunpack.c.l.b16 %v62
  %v102 = vunpack.c.l.b16 %v63
  %v103 = vunpack.c.l.b16 %v64
  %v104 = vunpack.c.l.b16 %v65
  %v105 = vunpack.c.l.b16 %v66
  %v106 = vunpack.c.l.b16 %v67
  %v107 = vunpack.c.l.b16 %v68
  %v108 = vunpack.c.l.b16 %v69
  %v109 = vunpack.c.l.b16 %v70
  %v110 = vunpack.c.l.b16 %v71
  %v111 = vunpack.c.l.b16 %v72
  %v112 = vunpack.c.l.b16 %v73
  %v113 = vunpack.c.l.b16 %v74
  %v114 = vunpack.c.l.b16 %v75
  %v115 = vpack.c.b16 %v100, %v99
  %v116 = vpack.c.b16 %v102, %v101
  %v117 = vpack.c.b16 %v104, %v103
  %v118 = vpack.c.b16 %v106, %v105
  %v119 = vpack.c.b16 %v108, %v107
  %v120 = vpack.c.b16 %v110, %v109
  %v121 = vpack.c.b16 %v112, %v111
  %v122 = vpack.c.b16 %v114, %v113
  %131 = vmatprep.subr.bf16.mxu0 0
  %132 = vmatpush1.bf16.msra.mxu0 %v115
  %133 = vmatprep.subr.bf16.mxu0 0
  %134 = vmatpush1.bf16.msra.mxu0 %v116
  %135 = vmatprep.subr.bf16.mxu0 0
  %136 = vmatpush1.bf16.msra.mxu0 %v117
  %137 = vmatprep.subr.bf16.mxu0 0
  %138 = vmatpush1.bf16.msra.mxu0 %v118
  %139 = vmatprep.subr.bf16.mxu0 0
  %140 = vmatpush1.bf16.msra.mxu0 %v119
  %141 = vmatprep.subr.bf16.mxu0 0
  %142 = vmatpush1.bf16.msra.mxu0 %v120
  %143 = vmatprep.subr.bf16.mxu0 0
  %144 = vmatpush1.bf16.msra.mxu0 %v121
  %145 = vmatprep.subr.bf16.mxu0 0
  %146 = vmatpush1.bf16.msra.mxu0 %v122
  %147 = vmatprep.subr.bf16.mxu0 0
  %148 = vmatpush1.bf16.msra.mxu0 0
  %149 = vmatprep.subr.bf16.mxu0 0
  %150 = vmatpush1.bf16.msra.mxu0 0
  %151 = vmatprep.subr.bf16.mxu0 0
  %152 = vmatpush1.bf16.msra.mxu0 0
  %153 = vmatprep.subr.bf16.mxu0 0
  %154 = vmatpush1.bf16.msra.mxu0 0
  %155 = vmatprep.subr.bf16.mxu0 0
  %156 = vmatpush1.bf16.msra.mxu0 0
  %157 = vmatprep.subr.bf16.mxu0 0
  %158 = vmatpush1.bf16.msra.mxu0 0
  %159 = vmatprep.subr.bf16.mxu0 0
  %160 = vmatpush1.bf16.msra.mxu0 0
  %161 = vmatprep.subr.bf16.mxu0 0
  %162 = vmatpush1.bf16.msra.mxu0 0
  %163 = vmatprep.mubr.bf16.mxu0 0
  %164 = vmatmul.mubr.bf16.gmra.mrb[0].mxu0 %v59
  %v165 = vpop.f32.mrb[0].mxu0
  %v166 = vadd.f32 %v81, %v165
  %v167 = vpop.f32.mrb[0].mxu0
  %v168 = vpop.f32.mrb[0].mxu0
  %v169 = vpop.f32.mrb[0].mxu0
  %170 = vdwg.mxu0
  %v171 = vmul.f32 %v166, 0.5
  %v172 = vmul.f32 %v166, 0.70710677
  %vm173 = vcmp.lt.f32.partialorder %v172, 0.0
  %v174 = vsel %vm173, -1.0, 1.0
  %v175 = vand.u32 2147483647, %v172
  %v176 = vmul.f32 %v175, 0.3275911
  %v177 = vadd.f32 %v176, 1.0
  %v178 = vrcp.pop %v177
  %v179 = vmul.f32 1.0, %v178
  %v180 = vmul.f32 %v179, 1.0614054
  %v181 = vadd.f32 %v180, -1.4531521
  %v182 = vmul.f32 %v181, %v179
  %v183 = vadd.f32 %v182, 1.4214138
  %v184 = vmul.f32 %v183, %v179
  %v185 = vadd.f32 %v184, -0.28449672
  %v186 = vmul.f32 %v185, %v179
  %v187 = vadd.f32 %v186, 0.2548296
  %v188 = vmul.f32 %v187, %v179
  %v189 = vsub.f32 0.0, %v175
  %v190 = vmul.f32 %v189, %v175
  %v191 = vmul.f32 %v190, 1.442695
  %v192 = vpow.pop %v191
  %v193 = vmul.f32 %v188, %v192
  %v194 = vsub.f32 1.0, %v193
  %v195 = vmul.f32 %v174, %v194
  %v196 = vadd.f32 %v195, 1.0
  %v197 = vmul.f32 %v171, %v196
  %v198 = vpack.c.bf16 %v197, %v197
  %v199 = vld [vmem:[%s5] sm:$0xf]
  %v200 = vld [vmem:[%s5 + $0x4] sm:$0xf]
  %v201 = vld [vmem:[%s5 + $0x8] sm:$0xf]
  %v202 = vld [vmem:[%s5 + $0xc] sm:$0xf]
  %v203 = vld [vmem:[%s5 + $0x10] sm:$0xf]
  %v204 = vld [vmem:[%s5 + $0x14] sm:$0xf]
  %v205 = vld [vmem:[%s5 + $0x18] sm:$0xf]
  %v206 = vld [vmem:[%s5 + $0x1c] sm:$0xf]
  %v207 = vld [vmem:[%s5 + $0x20] sm:$0xf]
  %v208 = vld [vmem:[%s5 + $0x24] sm:$0xf]
  %v209 = vld [vmem:[%s5 + $0x28] sm:$0xf]
  %v210 = vld [vmem:[%s5 + $0x2c] sm:$0xf]
  %v211 = vld [vmem:[%s5 + $0x30] sm:$0xf]
  %v212 = vld [vmem:[%s5 + $0x34] sm:$0xf]
  %v213 = vld [vmem:[%s5 + $0x38] sm:$0xf]
  %v214 = vld [vmem:[%s5 + $0x3c] sm:$0xf]
  %v215 = vld [vmem:[%s6] sm:$0x1]
  %v217 = vlaneseq
  %v218 = vshrl.u32 %v217, 7
  %v219 = vsub.s32 0, %v218
  %v220 = vrot.slane %v215, %v219
  %v238 = vunpack.c.l.b16 %v199
  %v239 = vunpack.c.l.b16 %v200
  %v240 = vunpack.c.l.b16 %v201
  %v241 = vunpack.c.l.b16 %v202
  %v242 = vunpack.c.l.b16 %v203
  %v243 = vunpack.c.l.b16 %v204
  %v244 = vunpack.c.l.b16 %v205
  %v245 = vunpack.c.l.b16 %v206
  %v246 = vunpack.c.l.b16 %v207
  %v247 = vunpack.c.l.b16 %v208
  %v248 = vunpack.c.l.b16 %v209
  %v249 = vunpack.c.l.b16 %v210
  %v250 = vunpack.c.l.b16 %v211
  %v251 = vunpack.c.l.b16 %v212
  %v252 = vunpack.c.l.b16 %v213
  %v253 = vunpack.c.l.b16 %v214
  %v254 = vpack.c.b16 %v239, %v238
  %v255 = vpack.c.b16 %v241, %v240
  %v256 = vpack.c.b16 %v243, %v242
  %v257 = vpack.c.b16 %v245, %v244
  %v258 = vpack.c.b16 %v247, %v246
  %v259 = vpack.c.b16 %v249, %v248
  %v260 = vpack.c.b16 %v251, %v250
  %v261 = vpack.c.b16 %v253, %v252
  %270 = vmatprep.subr.bf16.mxu0 0
  %271 = vmatpush1.bf16.msra.mxu0 %v254
  %272 = vmatprep.subr.bf16.mxu0 0
  %273 = vmatpush1.bf16.msra.mxu0 %v255
  %274 = vmatprep.subr.bf16.mxu0 0
  %275 = vmatpush1.bf16.msra.mxu0 %v256
  %276 = vmatprep.subr.bf16.mxu0 0
  %277 = vmatpush1.bf16.msra.mxu0 %v257
  %278 = vmatprep.subr.bf16.mxu0 0
  %279 = vmatpush1.bf16.msra.mxu0 %v258
  %280 = vmatprep.subr.bf16.mxu0 0
  %281 = vmatpush1.bf16.msra.mxu0 %v259
  %282 = vmatprep.subr.bf16.mxu0 0
  %283 = vmatpush1.bf16.msra.mxu0 %v260
  %284 = vmatprep.subr.bf16.mxu0 0
  %285 = vmatpush1.bf16.msra.mxu0 %v261
  %286 = vmatprep.subr.bf16.mxu0 0
  %287 = vmatpush1.bf16.msra.mxu0 0
  %288 = vmatprep.subr.bf16.mxu0 0
  %289 = vmatpush1.bf16.msra.mxu0 0
  %290 = vmatprep.subr.bf16.mxu0 0
  %291 = vmatpush1.bf16.msra.mxu0 0
  %292 = vmatprep.subr.bf16.mxu0 0
  %293 = vmatpush1.bf16.msra.mxu0 0
  %294 = vmatprep.subr.bf16.mxu0 0
  %295 = vmatpush1.bf16.msra.mxu0 0
  %296 = vmatprep.subr.bf16.mxu0 0
  %297 = vmatpush1.bf16.msra.mxu0 0
  %298 = vmatprep.subr.bf16.mxu0 0
  %299 = vmatpush1.bf16.msra.mxu0 0
  %300 = vmatprep.subr.bf16.mxu0 0
  %301 = vmatpush1.bf16.msra.mxu0 0
  %302 = vmatprep.mubr.bf16.mxu0 0
  %303 = vmatmul.mubr.bf16.gmra.mrb[0].mxu0 %v198
  %v304 = vpop.f32.mrb[0].mxu0
  %v305 = vadd.f32 %v220, %v304
  %v306 = vpop.f32.mrb[0].mxu0
  %v307 = vpop.f32.mrb[0].mxu0
  %v308 = vpop.f32.mrb[0].mxu0
  %309 = vdwg.mxu0
  %v310 = vld [vmem:[%s7] sm:$0x1]
  %v312 = vlaneseq
  %v313 = vshrl.u32 %v312, 7
  %v314 = vsub.s32 0, %v313
  %v315 = vrot.slane %v310, %v314
  %v317 = vmul.f32 %v305, %v315
  %318 = vst [vmem:[%s8] sm:$0xff] %v317
  // Predicated region
  $region34: #{img_text_model_forward.10} parent=0 // pred_check
    _
  $region35: #{img_text_model_forward.10} parent=0 // pred_check_branch
    %320 = sbr.rel (0) target = $region37
  $region36: #{img_text_model_forward.10} parent=0 // pred_region
    _
  $region37: #{img_text_model_forward.10} parent=0 // pred_fallthru
    _
  // Predicated region
  $region38: #{img_text_model_forward.10} parent=0 // pred_check
    _
  $region39: #{img_text_model_forward.10} parent=0 // pred_check_branch
    %322 = sbr.rel (0) target = $region41
  $region40: #{img_text_model_forward.10} parent=0 // pred_region
    _
  $region41: #{img_text_model_forward.10} parent=0 // pred_fallthru
    _

// kernel: img_text_model_forward.8
$region0: #{img_text_model_forward.8}
  #allocation0 [shape = 'u32[]', space=smem, size = 0x4, offset = 0x4, fixed_abs, tag = 'smem constant byte address 0x4 - core index']
  #allocation1 [shape = 'u32[144,128]{1,0:T(1,128)}', space=vmem, size = 0x12000, scoped, tag = 'internal scratch']
  %s0 = inlined_call_operand.vmem [shape: f32[2,5,128], index: 0, kind: input, shape index: {}]
  %s1 = inlined_call_operand.vmem [shape: f32[1,128], index: 1, kind: input, shape index: {}]
  %s2 = inlined_call_operand.vmem [shape: f32[1,128], index: 2, kind: input, shape index: {}]
  %s3 = inlined_call_operand.vmem [shape: bf16[128,384], index: 3, kind: input, shape index: {}]
  %s4 = inlined_call_operand.vmem [shape: f32[1,384], index: 4, kind: input, shape index: {}]
  %s5 = inlined_call_operand.vmem [shape: bf16[128,128], index: 5, kind: input, shape index: {}]
  %s6 = inlined_call_operand.vmem [shape: f32[1,128], index: 6, kind: input, shape index: {}]
  %s7 = inlined_call_operand.vmem [shape: f32[1,128], index: 7, kind: input, shape index: {}]
  %s8 = inlined_call_operand.vmem [shape: f32[1,128], index: 8, kind: input, shape index: {}]
  %s9 = inlined_call_operand.vmem [shape: bf16[128,512], index: 9, kind: input, shape index: {}]
  %s10 = inlined_call_operand.vmem [shape: f32[1,512], index: 10, kind: input, shape index: {}]
  %s11 = inlined_call_operand.vmem [shape: bf16[512,128], index: 11, kind: input, shape index: {}]
  %s12 = inlined_call_operand.vmem [shape: f32[1,128], index: 12, kind: input, shape index: {}]
  %s13 = inlined_call_operand.vmem [shape: f32[2,5,128], index: 13, kind: output, shape index: {}]
  %s14 = sld [smem:[#allocation0]]
  $region85: #{img_text_model_forward.8} parent=0
    _
  %s16 = ssub.s32 1, %s14
  %s17 = scalar_select 0, %s16, %s14
  loop: start=0, step=1, limit=4
  $region2: #{img_text_model_forward.8} parent=0 // loop_pre_header
    _
  $region3: #{img_text_model_forward.8} parent=0 // loop_header
    %s19 = sphi 0, %s23
    %p20 = scmp.ge.s32.totalorder %s19, 4
    %s29 = sphi 0, %s31
    %s32 = sphi 0, %s29
    %s33 = sphi 0, %s32
    %s49 = sphi 0, %s33
    %s53 = sphi 0, %s53
    %s55 = sphi 0, %s53
    %s56 = sphi 0, %s55
    %s70 = sphi 0, %s56
    %s74 = sphi 0, %s74
    %s76 = sphi 0, %s74
    %s77 = sphi 0, %s76
    %s91 = sphi 0, %s77
    %s95 = sphi 0, %s95
    %s97 = sphi 0, %s95
    %s98 = sphi 0, %s97
    %s112 = sphi 0, %s98
    %s116 = sphi 0, %s116
    %s118 = sphi 0, %s116
    %s119 = sphi 0, %s118
    %s133 = sphi 0, %s119
    %s137 = sphi 0, %s137
    %s139 = sphi 0, %s137
    %s140 = sphi 0, %s139
    %s154 = sphi 0, %s140
    %s158 = sphi 0, %s158
    %s160 = sphi 0, %s158
    %s161 = sphi 0, %s160
    %s175 = sphi 0, %s161
    %s179 = sphi 0, %s179
    %s181 = sphi 0, %s179
    %s182 = sphi 0, %s181
    %s196 = sphi 0, %s182
    %s200 = sphi 0, %s200
    %s202 = sphi 0, %s200
    %s203 = sphi 0, %s202
    %s217 = sphi 0, %s203
    %s221 = sphi 0, %s221
    %s223 = sphi 0, %s221
    %s224 = sphi 0, %s223
    %s238 = sphi 0, %s224
    %s242 = sphi 0, %s242
    %s244 = sphi 0, %s242
    %s245 = sphi 0, %s244
    %s259 = sphi 0, %s245
    %s263 = sphi 0, %s263
    %s265 = sphi 0, %s263
    %s266 = sphi 0, %s265
    %s280 = sphi 0, %s266
    %s284 = sphi 0, %s284
    %s286 = sphi 0, %s284
    %s287 = sphi 0, %s286
    %s301 = sphi 0, %s287
    %s307 = sphi 0, %s309
    %s310 = sphi 0, %s307
    %s311 = sphi 0, %s310
    %s327 = sphi 0, %s311
  $region4: #{img_text_model_forward.8} parent=0 // loop_header_branch
    %22 = sbr.rel (%p20) target = $region8
  $region5: #{img_text_model_forward.8} parent=0 // loop_body
    %s24 = ssub.s32 %s19, 1
    %s25 = ssub.s32 %s19, 2
    %s26 = sadd.s32 %s19, 1
    %s27 = ssub.s32 %s19, %s26
    %p28 = scmp.eq.s32.totalorder %s27, 0
    %s30 = sadd.s32 %s29, 1
    %s31 = scalar_select %p28, %s29, %s30
    %p34 = pneg %p28
    %p35 = scmp.eq.s32.totalorder %s19, 1
    %p36 = por %p34, %p35
    %p37 = scmp.ne.s32.totalorder %s29, %s32
    %p38 = scmp.eq.s32.totalorder %s19, 0
    %p39 = por %p37, %p38
    %p40 = scmp.ne.s32.totalorder %s29, %s32
    %p41 = scmp.eq.s32.totalorder %s24, 1
    %p42 = por %p40, %p41
    %p43 = scmp.ne.s32.totalorder %s32, %s33
    %p44 = scmp.eq.s32.totalorder %s24, 0
    %p45 = por %p43, %p44
    %p46 = scmp.ne.s32.totalorder %s32, %s33
    %p47 = scmp.eq.s32.totalorder %s25, 1
    %p48 = por %p46, %p47
    %p50 = scmp.ne.s32.totalorder %s33, %s49
    %p51 = scmp.eq.s32.totalorder %s25, 0
    %p52 = por %p50, %p51
    %s54 = sadd.s32 %s53, 1
    %p57 = scmp.eq.s32.totalorder %s19, 1
    %p58 = scmp.ne.s32.totalorder %s53, %s55
    %p59 = scmp.eq.s32.totalorder %s19, 0
    %p60 = por %p58, %p59
    %p61 = scmp.ne.s32.totalorder %s53, %s55
    %p62 = scmp.eq.s32.totalorder %s24, 1
    %p63 = por %p61, %p62
    %p64 = scmp.ne.s32.totalorder %s55, %s56
    %p65 = scmp.eq.s32.totalorder %s24, 0
    %p66 = por %p64, %p65
    %p67 = scmp.ne.s32.totalorder %s55, %s56
    %p68 = scmp.eq.s32.totalorder %s25, 1
    %p69 = por %p67, %p68
    %p71 = scmp.ne.s32.totalorder %s56, %s70
    %p72 = scmp.eq.s32.totalorder %s25, 0
    %p73 = por %p71, %p72
    %s75 = sadd.s32 %s74, 1
    %p78 = scmp.eq.s32.totalorder %s19, 1
    %p79 = scmp.ne.s32.totalorder %s74, %s76
    %p80 = scmp.eq.s32.totalorder %s19, 0
    %p81 = por %p79, %p80
    %p82 = scmp.ne.s32.totalorder %s74, %s76
    %p83 = scmp.eq.s32.totalorder %s24, 1
    %p84 = por %p82, %p83
    %p85 = scmp.ne.s32.totalorder %s76, %s77
    %p86 = scmp.eq.s32.totalorder %s24, 0
    %p87 = por %p85, %p86
    %p88 = scmp.ne.s32.totalorder %s76, %s77
    %p89 = scmp.eq.s32.totalorder %s25, 1
    %p90 = por %p88, %p89
    %p92 = scmp.ne.s32.totalorder %s77, %s91
    %p93 = scmp.eq.s32.totalorder %s25, 0
    %p94 = por %p92, %p93
    %s96 = sadd.s32 %s95, 1
    %p99 = scmp.eq.s32.totalorder %s19, 1
    %p100 = scmp.ne.s32.totalorder %s95, %s97
    %p101 = scmp.eq.s32.totalorder %s19, 0
    %p102 = por %p100, %p101
    %p103 = scmp.ne.s32.totalorder %s95, %s97
    %p104 = scmp.eq.s32.totalorder %s24, 1
    %p105 = por %p103, %p104
    %p106 = scmp.ne.s32.totalorder %s97, %s98
    %p107 = scmp.eq.s32.totalorder %s24, 0
    %p108 = por %p106, %p107
    %p109 = scmp.ne.s32.totalorder %s97, %s98
    %p110 = scmp.eq.s32.totalorder %s25, 1
    %p111 = por %p109, %p110
    %p113 = scmp.ne.s32.totalorder %s98, %s112
    %p114 = scmp.eq.s32.totalorder %s25, 0
    %p115 = por %p113, %p114
    %s117 = sadd.s32 %s116, 1
    %p120 = scmp.eq.s32.totalorder %s19, 1
    %p121 = scmp.ne.s32.totalorder %s116, %s118
    %p122 = scmp.eq.s32.totalorder %s19, 0
    %p123 = por %p121, %p122
    %p124 = scmp.ne.s32.totalorder %s116, %s118
    %p125 = scmp.eq.s32.totalorder %s24, 1
    %p126 = por %p124, %p125
    %p127 = scmp.ne.s32.totalorder %s118, %s119
    %p128 = scmp.eq.s32.totalorder %s24, 0
    %p129 = por %p127, %p128
    %p130 = scmp.ne.s32.totalorder %s118, %s119
    %p131 = scmp.eq.s32.totalorder %s25, 1
    %p132 = por %p130, %p131
    %p134 = scmp.ne.s32.totalorder %s119, %s133
    %p135 = scmp.eq.s32.totalorder %s25, 0
    %p136 = por %p134, %p135
    %s138 = sadd.s32 %s137, 1
    %p141 = scmp.eq.s32.totalorder %s19, 1
    %p142 = scmp.ne.s32.totalorder %s137, %s139
    %p143 = scmp.eq.s32.totalorder %s19, 0
    %p144 = por %p142, %p143
    %p145 = scmp.ne.s32.totalorder %s137, %s139
    %p146 = scmp.eq.s32.totalorder %s24, 1
    %p147 = por %p145, %p146
    %p148 = scmp.ne.s32.totalorder %s139, %s140
    %p149 = scmp.eq.s32.totalorder %s24, 0
    %p150 = por %p148, %p149
    %p151 = scmp.ne.s32.totalorder %s139, %s140
    %p152 = scmp.eq.s32.totalorder %s25, 1
    %p153 = por %p151, %p152
    %p155 = scmp.ne.s32.totalorder %s140, %s154
    %p156 = scmp.eq.s32.totalorder %s25, 0
    %p157 = por %p155, %p156
    %s159 = sadd.s32 %s158, 1
    %p162 = scmp.eq.s32.totalorder %s19, 1
    %p163 = scmp.ne.s32.totalorder %s158, %s160
    %p164 = scmp.eq.s32.totalorder %s19, 0
    %p165 = por %p163, %p164
    %p166 = scmp.ne.s32.totalorder %s158, %s160
    %p167 = scmp.eq.s32.totalorder %s24, 1
    %p168 = por %p166, %p167
    %p169 = scmp.ne.s32.totalorder %s160, %s161
    %p170 = scmp.eq.s32.totalorder %s24, 0
    %p171 = por %p169, %p170
    %p172 = scmp.ne.s32.totalorder %s160, %s161
    %p173 = scmp.eq.s32.totalorder %s25, 1
    %p174 = por %p172, %p173
    %p176 = scmp.ne.s32.totalorder %s161, %s175
    %p177 = scmp.eq.s32.totalorder %s25, 0
    %p178 = por %p176, %p177
    %s180 = sadd.s32 %s179, 1
    %p183 = scmp.eq.s32.totalorder %s19, 1
    %p184 = scmp.ne.s32.totalorder %s179, %s181
    %p185 = scmp.eq.s32.totalorder %s19, 0
    %p186 = por %p184, %p185
    %p187 = scmp.ne.s32.totalorder %s179, %s181
    %p188 = scmp.eq.s32.totalorder %s24, 1
    %p189 = por %p187, %p188
    %p190 = scmp.ne.s32.totalorder %s181, %s182
    %p191 = scmp.eq.s32.totalorder %s24, 0
    %p192 = por %p190, %p191
    %p193 = scmp.ne.s32.totalorder %s181, %s182
    %p194 = scmp.eq.s32.totalorder %s25, 1
    %p195 = por %p193, %p194
    %p197 = scmp.ne.s32.totalorder %s182, %s196
    %p198 = scmp.eq.s32.totalorder %s25, 0
    %p199 = por %p197, %p198
    %s201 = sadd.s32 %s200, 1
    %p204 = scmp.eq.s32.totalorder %s19, 1
    %p205 = scmp.ne.s32.totalorder %s200, %s202
    %p206 = scmp.eq.s32.totalorder %s19, 0
    %p207 = por %p205, %p206
    %p208 = scmp.ne.s32.totalorder %s200, %s202
    %p209 = scmp.eq.s32.totalorder %s24, 1
    %p210 = por %p208, %p209
    %p211 = scmp.ne.s32.totalorder %s202, %s203
    %p212 = scmp.eq.s32.totalorder %s24, 0
    %p213 = por %p211, %p212
    %p214 = scmp.ne.s32.totalorder %s202, %s203
    %p215 = scmp.eq.s32.totalorder %s25, 1
    %p216 = por %p214, %p215
    %p218 = scmp.ne.s32.totalorder %s203, %s217
    %p219 = scmp.eq.s32.totalorder %s25, 0
    %p220 = por %p218, %p219
    %s222 = sadd.s32 %s221, 1
    %p225 = scmp.eq.s32.totalorder %s19, 1
    %p226 = scmp.ne.s32.totalorder %s221, %s223
    %p227 = scmp.eq.s32.totalorder %s19, 0
    %p228 = por %p226, %p227
    %p229 = scmp.ne.s32.totalorder %s221, %s223
    %p230 = scmp.eq.s32.totalorder %s24, 1
    %p231 = por %p229, %p230
    %p232 = scmp.ne.s32.totalorder %s223, %s224
    %p233 = scmp.eq.s32.totalorder %s24, 0
    %p234 = por %p232, %p233
    %p235 = scmp.ne.s32.totalorder %s223, %s224
    %p236 = scmp.eq.s32.totalorder %s25, 1
    %p237 = por %p235, %p236
    %p239 = scmp.ne.s32.totalorder %s224, %s238
    %p240 = scmp.eq.s32.totalorder %s25, 0
    %p241 = por %p239, %p240
    %s243 = sadd.s32 %s242, 1
    %p246 = scmp.eq.s32.totalorder %s19, 1
    %p247 = scmp.ne.s32.totalorder %s242, %s244
    %p248 = scmp.eq.s32.totalorder %s19, 0
    %p249 = por %p247, %p248
    %p250 = scmp.ne.s32.totalorder %s242, %s244
    %p251 = scmp.eq.s32.totalorder %s24, 1
    %p252 = por %p250, %p251
    %p253 = scmp.ne.s32.totalorder %s244, %s245
    %p254 = scmp.eq.s32.totalorder %s24, 0
    %p255 = por %p253, %p254
    %p256 = scmp.ne.s32.totalorder %s244, %s245
    %p257 = scmp.eq.s32.totalorder %s25, 1
    %p258 = por %p256, %p257
    %p260 = scmp.ne.s32.totalorder %s245, %s259
    %p261 = scmp.eq.s32.totalorder %s25, 0
    %p262 = por %p260, %p261
    %s264 = sadd.s32 %s263, 1
    %p267 = scmp.eq.s32.totalorder %s19, 1
    %p268 = scmp.ne.s32.totalorder %s263, %s265
    %p269 = scmp.eq.s32.totalorder %s19, 0
    %p270 = por %p268, %p269
    %p271 = scmp.ne.s32.totalorder %s263, %s265
    %p272 = scmp.eq.s32.totalorder %s24, 1
    %p273 = por %p271, %p272
    %p274 = scmp.ne.s32.totalorder %s265, %s266
    %p275 = scmp.eq.s32.totalorder %s24, 0
    %p276 = por %p274, %p275
    %p277 = scmp.ne.s32.totalorder %s265, %s266
    %p278 = scmp.eq.s32.totalorder %s25, 1
    %p279 = por %p277, %p278
    %p281 = scmp.ne.s32.totalorder %s266, %s280
    %p282 = scmp.eq.s32.totalorder %s25, 0
    %p283 = por %p281, %p282
    %s285 = sadd.s32 %s284, 1
    %p288 = scmp.eq.s32.totalorder %s19, 1
    %p289 = scmp.ne.s32.totalorder %s284, %s286
    %p290 = scmp.eq.s32.totalorder %s19, 0
    %p291 = por %p289, %p290
    %p292 = scmp.ne.s32.totalorder %s284, %s286
    %p293 = scmp.eq.s32.totalorder %s24, 1
    %p294 = por %p292, %p293
    %p295 = scmp.ne.s32.totalorder %s286, %s287
    %p296 = scmp.eq.s32.totalorder %s24, 0
    %p297 = por %p295, %p296
    %p298 = scmp.ne.s32.totalorder %s286, %s287
    %p299 = scmp.eq.s32.totalorder %s25, 1
    %p300 = por %p298, %p299
    %p302 = scmp.ne.s32.totalorder %s287, %s301
    %p303 = scmp.eq.s32.totalorder %s25, 0
    %p304 = por %p302, %p303
    %s305 = ssub.s32 %s19, %s26
    %p306 = scmp.eq.s32.totalorder %s305, 0
    %s308 = sadd.s32 %s307, 1
    %s309 = scalar_select %p306, %s307, %s308
    %p312 = pneg %p306
    %p313 = scmp.eq.s32.totalorder %s19, 1
    %p314 = por %p312, %p313
    %p315 = scmp.ne.s32.totalorder %s307, %s310
    %p316 = scmp.eq.s32.totalorder %s19, 0
    %p317 = por %p315, %p316
    %p318 = scmp.ne.s32.totalorder %s307, %s310
    %p319 = scmp.eq.s32.totalorder %s24, 1
    %p320 = por %p318, %p319
    %p321 = scmp.ne.s32.totalorder %s310, %s311
    %p322 = scmp.eq.s32.totalorder %s24, 0
    %p323 = por %p321, %p322
    %p324 = scmp.ne.s32.totalorder %s310, %s311
    %p325 = scmp.eq.s32.totalorder %s25, 1
    %p326 = por %p324, %p325
    %p328 = scmp.ne.s32.totalorder %s311, %s327
    %p329 = scmp.eq.s32.totalorder %s25, 0
    %p330 = por %p328, %p329
    %p331 = scmp.le.s32.totalorder 1, %s19
    %p332 = scmp.lt.s32.totalorder %s19, 3
    %p333 = pnand %p331, %p332
    %p334 = pneg %p333
    // Predicated region
    $region9: #{img_text_model_forward.8} parent=5 // pred_check
      _
    $region10: #{img_text_model_forward.8} parent=5 // pred_check_branch
      %336 = sbr.rel (%p333) target = $region12
    $region11: #{img_text_model_forward.8} parent=5 // pred_region
      %s337 = ssub.s32 %s19, 1
      // Predicated region
      $region13: #{img_text_model_forward.8} parent=11 // pred_check
        %p338 = pneg %p66
      $region14: #{img_text_model_forward.8} parent=11 // pred_check_branch
        %340 = sbr.rel (%p338) target = $region16
      $region15: #{img_text_model_forward.8} parent=11 // pred_region
        _
      $region16: #{img_text_model_forward.8} parent=11 // pred_fallthru
        _
      // Predicated region
      $region17: #{img_text_model_forward.8} parent=11 // pred_check
        %p341 = pneg %p87
      $region18: #{img_text_model_forward.8} parent=11 // pred_check_branch
        %343 = sbr.rel (%p341) target = $region20
      $region19: #{img_text_model_forward.8} parent=11 // pred_region
        _
      $region20: #{img_text_model_forward.8} parent=11 // pred_fallthru
        _
      // Predicated region
      $region21: #{img_text_model_forward.8} parent=11 // pred_check
        %p344 = pneg %p108
      $region22: #{img_text_model_forward.8} parent=11 // pred_check_branch
        %346 = sbr.rel (%p344) target = $region24
      $region23: #{img_text_model_forward.8} parent=11 // pred_region
        _
      $region24: #{img_text_model_forward.8} parent=11 // pred_fallthru
        _
      // Predicated region
      $region25: #{img_text_model_forward.8} parent=11 // pred_check
        %p347 = pneg %p129
      $region26: #{img_text_model_forward.8} parent=11 // pred_check_branch
        %349 = sbr.rel (%p347) target = $region28
      $region27: #{img_text_model_forward.8} parent=11 // pred_region
        _
      $region28: #{img_text_model_forward.8} parent=11 // pred_fallthru
        _
      // Predicated region
      $region29: #{img_text_model_forward.8} parent=11 // pred_check
        %p350 = pneg %p150
      $region30: #{img_text_model_forward.8} parent=11 // pred_check_branch
        %352 = sbr.rel (%p350) target = $region32
      $region31: #{img_text_model_forward.8} parent=11 // pred_region
        _
      $region32: #{img_text_model_forward.8} parent=11 // pred_fallthru
        _
      // Predicated region
      $region33: #{img_text_model_forward.8} parent=11 // pred_check
        %p353 = pneg %p171
      $region34: #{img_text_model_forward.8} parent=11 // pred_check_branch
        %355 = sbr.rel (%p353) target = $region36
      $region35: #{img_text_model_forward.8} parent=11 // pred_region
        _
      $region36: #{img_text_model_forward.8} parent=11 // pred_fallthru
        _
      // Predicated region
      $region37: #{img_text_model_forward.8} parent=11 // pred_check
        %p356 = pneg %p192
      $region38: #{img_text_model_forward.8} parent=11 // pred_check_branch
        %358 = sbr.rel (%p356) target = $region40
      $region39: #{img_text_model_forward.8} parent=11 // pred_region
        _
      $region40: #{img_text_model_forward.8} parent=11 // pred_fallthru
        _
      // Predicated region
      $region41: #{img_text_model_forward.8} parent=11 // pred_check
        %p359 = pneg %p213
      $region42: #{img_text_model_forward.8} parent=11 // pred_check_branch
        %361 = sbr.rel (%p359) target = $region44
      $region43: #{img_text_model_forward.8} parent=11 // pred_region
        _
      $region44: #{img_text_model_forward.8} parent=11 // pred_fallthru
        _
      // Predicated region
      $region45: #{img_text_model_forward.8} parent=11 // pred_check
        %p362 = pneg %p234
      $region46: #{img_text_model_forward.8} parent=11 // pred_check_branch
        %364 = sbr.rel (%p362) target = $region48
      $region47: #{img_text_model_forward.8} parent=11 // pred_region
        _
      $region48: #{img_text_model_forward.8} parent=11 // pred_fallthru
        _
      // Predicated region
      $region49: #{img_text_model_forward.8} parent=11 // pred_check
        %p365 = pneg %p255
      $region50: #{img_text_model_forward.8} parent=11 // pred_check_branch
        %367 = sbr.rel (%p365) target = $region52
      $region51: #{img_text_model_forward.8} parent=11 // pred_region
        _
      $region52: #{img_text_model_forward.8} parent=11 // pred_fallthru
        _
      // Predicated region
      $region53: #{img_text_model_forward.8} parent=11 // pred_check
        %p368 = pneg %p276
      $region54: #{img_text_model_forward.8} parent=11 // pred_check_branch
        %370 = sbr.rel (%p368) target = $region56
      $region55: #{img_text_model_forward.8} parent=11 // pred_region
        _
      $region56: #{img_text_model_forward.8} parent=11 // pred_fallthru
        _
      // Predicated region
      $region57: #{img_text_model_forward.8} parent=11 // pred_check
        %p371 = pneg %p297
      $region58: #{img_text_model_forward.8} parent=11 // pred_check_branch
        %373 = sbr.rel (%p371) target = $region60
      $region59: #{img_text_model_forward.8} parent=11 // pred_region
        _
      $region60: #{img_text_model_forward.8} parent=11 // pred_fallthru
        _
    $region12: #{img_text_model_forward.8} parent=5 // pred_fallthru
      _
    %p374 = scmp.lt.s32.totalorder %s19, 2
    // Predicated region
    $region61: #{img_text_model_forward.8} parent=5 // pred_check
      %p375 = pneg %p374
    $region62: #{img_text_model_forward.8} parent=5 // pred_check_branch
      %377 = sbr.rel (%p375) target = $region64
    $region63: #{img_text_model_forward.8} parent=5 // pred_region
      // Predicated region
      $region65: #{img_text_model_forward.8} parent=63 // pred_check
        %p378 = pneg %p39
      $region66: #{img_text_model_forward.8} parent=63 // pred_check_branch
        %380 = sbr.rel (%p378) target = $region68
      $region67: #{img_text_model_forward.8} parent=63 // pred_region
        %p381 = scmp.lt.s32.totalorder %s19, 1
        %s382 = scalar_select %p381, %s19, 1
        %s383 = smul.addr %s382, 8
        %s384 = scalar_lea.vmem %s0, %s383
      $region68: #{img_text_model_forward.8} parent=63 // pred_fallthru
        _
    $region64: #{img_text_model_forward.8} parent=5 // pred_fallthru
      _
    %p385 = scmp.le.s32.totalorder 1, %s19
    %p386 = scmp.lt.s32.totalorder %s19, 3
    %p387 = pnand %p385, %p386
    %p388 = pneg %p387
    // Predicated region
    $region69: #{img_text_model_forward.8} parent=5 // pred_check
      _
    $region70: #{img_text_model_forward.8} parent=5 // pred_check_branch
      %390 = sbr.rel (%p387) target = $region72
    $region71: #{img_text_model_forward.8} parent=5 // pred_region
      %s391 = ssub.s32 %s19, 1
      %p392 = scmp.lt.s32.totalorder %s24, 1
      %s393 = scalar_select %p392, %s24, 1
      %s394 = smul.addr %s393, 8
      %s395 = scalar_lea.vmem %s0, %s394
      %p396 = pneg %p45
      %p397 = pneg %p42
      %p398 = pneg %p66
      %p399 = pneg %p63
      %p400 = pneg %p87
      %p401 = pneg %p84
      %p402 = pneg %p108
      %p403 = pneg %p105
      %p404 = pneg %p129
      %p405 = pneg %p126
      %p406 = pneg %p150
      %p407 = pneg %p147
      %p408 = pneg %p171
      %p409 = pneg %p168
      %p410 = pneg %p192
      %p411 = pneg %p189
      %p412 = pneg %p213
      %p413 = pneg %p210
      %p414 = pneg %p234
      %p415 = pneg %p231
      %p416 = pneg %p255
      %p417 = pneg %p252
      %p418 = pneg %p276
      %p419 = pneg %p273
      %p420 = pneg %p297
      %p421 = pneg %p294
      %p422 = pneg %p323
      %p423 = pneg %p320
      %p424 = scmp.lt.s32.totalorder %s24, 1
      %s425 = scalar_select %p424, %s24, 1
      %s426 = smul.addr %s425, 8
      %s427 = scalar_lea.vmem %s13, %s426
      %p428 = scmp.lt.s32.totalorder %s24, 1
      %s429 = scalar_select %p428, %s24, 1
      %s430 = smul.addr %s429, 8
      %s431 = scalar_lea.vmem %s0, %s430
      %p432 = scmp.lt.s32.totalorder %s24, 1
      %s433 = scalar_select %p432, %s24, 1
      %s434 = smul.addr %s433, 8
      %s435 = scalar_lea.vmem %s13, %s434
      %v437 = vld [vmem:[%s431] sm:$0x1f]
      %v438 = vld [vmem:[%s1] sm:$0x1]
      %v439 = vld [vmem:[%s2] sm:$0x1]
      %vm440 = vcmask 1044480
      %v441 = vsel %vm440, %v437, 0.0
      %442 = vadd.xlane.f32.xlu0 %v441
      %v443 = vpop.xlane.xlu0 %442
      %v444 = vrcp.pop 128.0
      %v445 = vmul.f32 %v443, %v444
      %v446 = vsub.f32 %v437, %v445
      %v447 = vmul.f32 %v446, %v446
      %v448 = vsel %vm440, %v447, 0.0
      %449 = vadd.xlane.f32.xlu0 %v448
      %v450 = vpop.xlane.xlu0 %449
      %v451 = vmul.f32 %v450, %v444
      %v452 = vadd.f32 %v451, 1e-05
      %v453 = vrsqrt.pop %v452
      %v454 = vmul.f32 %v446, %v453
      %v456 = vlaneseq
      %v457 = vshrl.u32 %v456, 7
      %v458 = vsub.s32 0, %v457
      %v459 = vrot.slane %v438, %v458
      %v461 = vmul.f32 %v454, %v459
      %v463 = vlaneseq
      %v464 = vshrl.u32 %v463, 7
      %v465 = vsub.s32 0, %v464
      %v466 = vrot.slane %v439, %v465
      %v468 = vadd.f32 %v461, %v466
      %v469 = vpack.c.bf16 %v468, %v468
      %v470 = vld [vmem:[%s3] sm:$0xff]
      %v471 = vld [vmem:[%s3 + $0x8] sm:$0xf]
      %v472 = vld [vmem:[%s3 + $0xc] sm:$0xff]
      %v473 = vld [vmem:[%s3 + $0x14] sm:$0xf]
      %v474 = vld [vmem:[%s3 + $0x18] sm:$0xff]
      %v475 = vld [vmem:[%s3 + $0x20] sm:$0xf]
      %v476 = vld [vmem:[%s3 + $0x24] sm:$0xff]
      %v477 = vld [vmem:[%s3 + $0x2c] sm:$0xf]
      %v478 = vld [vmem:[%s3 + $0x30] sm:$0xff]
      %v479 = vld [vmem:[%s3 + $0x38] sm:$0xf]
      %v480 = vld [vmem:[%s3 + $0x3c] sm:$0xff]
      %v481 = vld [vmem:[%s3 + $0x44] sm:$0xf]
      %v482 = vld [vmem:[%s3 + $0x48] sm:$0xff]
      %v483 = vld [vmem:[%s3 + $0x50] sm:$0xf]
      %v484 = vld [vmem:[%s3 + $0x54] sm:$0xff]
      %v485 = vld [vmem:[%s3 + $0x5c] sm:$0xf]
      %v486 = vld [vmem:[%s3 + $0x60] sm:$0xff]
      %v487 = vld [vmem:[%s3 + $0x68] sm:$0xf]
      %v488 = vld [vmem:[%s3 + $0x6c] sm:$0xff]
      %v489 = vld [vmem:[%s3 + $0x74] sm:$0xf]
      %v490 = vld [vmem:[%s3 + $0x78] sm:$0xff]
      %v491 = vld [vmem:[%s3 + $0x80] sm:$0xf]
      %v492 = vld [vmem:[%s3 + $0x84] sm:$0xff]
      %v493 = vld [vmem:[%s3 + $0x8c] sm:$0xf]
      %v494 = vld [vmem:[%s3 + $0x90] sm:$0xff]
      %v495 = vld [vmem:[%s3 + $0x98] sm:$0xf]
      %v496 = vld [vmem:[%s3 + $0x9c] sm:$0xff]
      %v497 = vld [vmem:[%s3 + $0xa4] sm:$0xf]
      %v498 = vld [vmem:[%s3 + $0xa8] sm:$0xff]
      %v499 = vld [vmem:[%s3 + $0xb0] sm:$0xf]
      %v500 = vld [vmem:[%s3 + $0xb4] sm:$0xff]
      %v501 = vld [vmem:[%s3 + $0xbc] sm:$0xf]
      %v502 = vld [vmem:[%s4] sm:$0x7]
      %v504 = vlaneseq
      %v505 = vshrl.u32 %v504, 7
      %v506 = vsub.s32 0, %v505
      %v507 = vrot.slane %v502, %v506
      %v508 = vlaneseq
      %v509 = vshrl.u32 %v508, 7
      %v510 = vsub.s32 1, %v509
      %v511 = vrot.slane %v502, %v510
      %v512 = vlaneseq
      %v513 = vshrl.u32 %v512, 7
      %v514 = vsub.s32 2, %v513
      %v515 = vrot.slane %v502, %v514
      %v551 = vunpack.c.l.b16 %v470
      %v552 = vunpack.c.h.b16 %v470
      %v553 = vunpack.c.l.b16 %v471
      %v554 = vunpack.c.l.b16 %v472
      %v555 = vunpack.c.h.b16 %v472
      %v556 = vunpack.c.l.b16 %v473
      %v557 = vunpack.c.l.b16 %v474
      %v558 = vunpack.c.h.b16 %v474
      %v559 = vunpack.c.l.b16 %v475
      %v560 = vunpack.c.l.b16 %v476
      %v561 = vunpack.c.h.b16 %v476
      %v562 = vunpack.c.l.b16 %v477
      %v563 = vunpack.c.l.b16 %v478
      %v564 = vunpack.c.h.b16 %v478
      %v565 = vunpack.c.l.b16 %v479
      %v566 = vunpack.c.l.b16 %v480
      %v567 = vunpack.c.h.b16 %v480
      %v568 = vunpack.c.l.b16 %v481
      %v569 = vunpack.c.l.b16 %v482
      %v570 = vunpack.c.h.b16 %v482
      %v571 = vunpack.c.l.b16 %v483
      %v572 = vunpack.c.l.b16 %v484
      %v573 = vunpack.c.h.b16 %v484
      %v574 = vunpack.c.l.b16 %v485
      %v575 = vunpack.c.l.b16 %v486
      %v576 = vunpack.c.h.b16 %v486
      %v577 = vunpack.c.l.b16 %v487
      %v578 = vunpack.c.l.b16 %v488
      %v579 = vunpack.c.h.b16 %v488
      %v580 = vunpack.c.l.b16 %v489
      %v581 = vunpack.c.l.b16 %v490
      %v582 = vunpack.c.h.b16 %v490
      %v583 = vunpack.c.l.b16 %v491
      %v584 = vunpack.c.l.b16 %v492
      %v585 = vunpack.c.h.b16 %v492
      %v586 = vunpack.c.l.b16 %v493
      %v587 = vunpack.c.l.b16 %v494
      %v588 = vunpack.c.h.b16 %v494
      %v589 = vunpack.c.l.b16 %v495
      %v590 = vunpack.c.l.b16 %v496
      %v591 = vunpack.c.h.b16 %v496
      %v592 = vunpack.c.l.b16 %v497
      %v593 = vunpack.c.l.b16 %v498
      %v594 = vunpack.c.h.b16 %v498
      %v595 = vunpack.c.l.b16 %v499
      %v596 = vunpack.c.l.b16 %v500
      %v597 = vunpack.c.h.b16 %v500
      %v598 = vunpack.c.l.b16 %v501
      %v599 = vpack.c.b16 %v554, %v551
      %v600 = vpack.c.b16 %v555, %v552
      %v601 = vpack.c.b16 %v556, %v553
      %v602 = vpack.c.b16 %v560, %v557
      %v603 = vpack.c.b16 %v561, %v558
      %v604 = vpack.c.b16 %v562, %v559
      %v605 = vpack.c.b16 %v566, %v563
      %v606 = vpack.c.b16 %v567, %v564
      %v607 = vpack.c.b16 %v568, %v565
      %v608 = vpack.c.b16 %v572, %v569
      %v609 = vpack.c.b16 %v573, %v570
      %v610 = vpack.c.b16 %v574, %v571
      %v611 = vpack.c.b16 %v578, %v575
      %v612 = vpack.c.b16 %v579, %v576
      %v613 = vpack.c.b16 %v580, %v577
      %v614 = vpack.c.b16 %v584, %v581
      %v615 = vpack.c.b16 %v585, %v582
      %v616 = vpack.c.b16 %v586, %v583
      %v617 = vpack.c.b16 %v590, %v587
      %v618 = vpack.c.b16 %v591, %v588
      %v619 = vpack.c.b16 %v592, %v589
      %v620 = vpack.c.b16 %v596, %v593
      %v621 = vpack.c.b16 %v597, %v594
      %v622 = vpack.c.b16 %v598, %v595
      %647 = vmatprep.subr.bf16.mxu0 %v600
      %648 = vmatpush1.bf16.msra.mxu0 %v599
      %649 = vmatprep.subr.bf16.mxu0 %v603
      %650 = vmatpush1.bf16.msra.mxu0 %v602
      %651 = vmatprep.subr.bf16.mxu0 %v606
      %652 = vmatpush1.bf16.msra.mxu0 %v605
      %653 = vmatprep.subr.bf16.mxu0 %v609
      %654 = vmatpush1.bf16.msra.mxu0 %v608
      %655 = vmatprep.subr.bf16.mxu0 %v612
      %656 = vmatpush1.bf16.msra.mxu0 %v611
      %657 = vmatprep.subr.bf16.mxu0 %v615
      %658 = vmatpush1.bf16.msra.mxu0 %v614
      %659 = vmatprep.subr.bf16.mxu0 %v618
      %660 = vmatpush1.bf16.msra.mxu0 %v617
      %661 = vmatprep.subr.bf16.mxu0 %v621
      %662 = vmatpush1.bf16.msra.mxu0 %v620
      %663 = vmatprep.subr.bf16.mxu0 0
      %664 = vmatpush1.bf16.msra.mxu0 0
      %665 = vmatprep.subr.bf16.mxu0 0
      %666 = vmatpush1.bf16.msra.mxu0 0
      %667 = vmatprep.subr.bf16.mxu0 0
      %668 = vmatpush1.bf16.msra.mxu0 0
      %669 = vmatprep.subr.bf16.mxu0 0
      %670 = vmatpush1.bf16.msra.mxu0 0
      %671 = vmatprep.subr.bf16.mxu0 0
      %672 = vmatpush1.bf16.msra.mxu0 0
      %673 = vmatprep.subr.bf16.mxu0 0
      %674 = vmatpush1.bf16.msra.mxu0 0
      %675 = vmatprep.subr.bf16.mxu0 0
      %676 = vmatpush1.bf16.msra.mxu0 0
      %677 = vmatprep.subr.bf16.mxu0 0
      %678 = vmatpush1.bf16.msra.mxu0 0
      %679 = vmatprep.mubr.bf16.mxu0 0
      %680 = vmatmul.mubr.bf16.gmra.mrb[0].mxu0 %v469
      %v681 = vpop.f32.mrb[0].mxu0
      %v682 = vadd.f32 %v507, %v681
      %v683 = vpop.f32.mrb[0].mxu0
      %v684 = vadd.f32 %v511, %v683
      %v685 = vpop.f32.mrb[0].mxu0
      %v686 = vpop.f32.mrb[0].mxu0
      %687 = vdwg.mxu0
      %688 = vmatprep.subr.bf16.mxu0 0
      %689 = vmatpush1.bf16.msra.mxu0 %v601
      %690 = vmatprep.subr.bf16.mxu0 0
      %691 = vmatpush1.bf16.msra.mxu0 %v604
      %692 = vmatprep.subr.bf16.mxu0 0
      %693 = vmatpush1.bf16.msra.mxu0 %v607
      %694 = vmatprep.subr.bf16.mxu0 0
      %695 = vmatpush1.bf16.msra.mxu0 %v610
      %696 = vmatprep.subr.bf16.mxu0 0
      %697 = vmatpush1.bf16.msra.mxu0 %v613
      %698 = vmatprep.subr.bf16.mxu0 0
      %699 = vmatpush1.bf16.msra.mxu0 %v616
      %700 = vmatprep.subr.bf16.mxu0 0
      %701 = vmatpush1.bf16.msra.mxu0 %v619
      %702 = vmatprep.subr.bf16.mxu0 0
      %703 = vmatpush1.bf16.msra.mxu0 %v622
      %704 = vmatprep.subr.bf16.mxu0 0
      %705 = vmatpush1.bf16.msra.mxu0 0
      %706 = vmatprep.subr.bf16.mxu0 0
      %707 = vmatpush1.bf16.msra.mxu0 0
      %708 = vmatprep.subr.bf16.mxu0 0
      %709 = vmatpush1.bf16.msra.mxu0 0
      %710 = vmatprep.subr.bf16.mxu0 0
      %711 = vmatpush1.bf16.msra.mxu0 0
      %712 = vmatprep.subr.bf16.mxu0 0
      %713 = vmatpush1.bf16.msra.mxu0 0
      %714 = vmatprep.subr.bf16.mxu0 0
      %715 = vmatpush1.bf16.msra.mxu0 0
      %716 = vmatprep.subr.bf16.mxu0 0
      %717 = vmatpush1.bf16.msra.mxu0 0
      %718 = vmatprep.subr.bf16.mxu0 0
      %719 = vmatpush1.bf16.msra.mxu0 0
      %720 = vmatprep.mubr.bf16.mxu0 0
      %721 = vmatmul.mubr.bf16.gmra.mrb[0].mxu0 %v469
      %v722 = vpop.f32.mrb[0].mxu0
      %v723 = vadd.f32 %v515, %v722
      %v724 = vpop.f32.mrb[0].mxu0
      %v725 = vpop.f32.mrb[0].mxu0
      %v726 = vpop.f32.mrb[0].mxu0
      %727 = vdwg.mxu0
      %729 = vrot.lane.b32.xlu0 %v682, 64
      %v730 = vpop.permute.xlu0 %729
      %v733 = vunpack.c.l.s4 1983009808
      %v734 = vunpack.c.0.s8 %v733
      %v735 = vlaneseq
      %v736 = vshrl.u32 %v735, 7
      %v737 = vsub.s32 %v734, %v736
      %v738 = vrot.slane %v682, %v737
      %v739 = vcombine.high %v682, 0.0
      %v741 = vunpack.c.l.s4 1983009808
      %v742 = vunpack.c.0.s8 %v741
      %v743 = vlaneseq
      %v744 = vshrl.u32 %v743, 7
      %v745 = vsub.s32 %v742, %v744
      %v746 = vrot.slane %v730, %v745
      %v747 = vcombine.high %v730, 0.0
      %v748 = vcombine.low %v738, %v746
      %v749 = vcombine.high %v738, %v746
      %v751 = vunpack.c.l.s4 1934713408
      %v752 = vunpack.c.0.s8 %v751
      %v753 = vlaneseq
      %v754 = vshrl.u32 %v753, 7
      %v755 = vsub.s32 %v752, %v754
      %v756 = vrot.slane %v748, %v755
      %v758 = vunpack.c.l.s4 1934713408
      %v759 = vunpack.c.0.s8 %v758
      %v760 = vlaneseq
      %v761 = vshrl.u32 %v760, 7
      %v762 = vsub.s32 %v759, %v761
      %v763 = vrot.slane %v749, %v762
      %v764 = vcombine.low %v739, %v747
      %v765 = vcombine.high %v756, 0.0
      %v766 = vcombine.high %v763, 0.0
      %v767 = vcombine.low %v756, %v763
      %v769 = vunpack.c.l.s4 1983009808
      %v770 = vunpack.c.0.s8 %v769
      %v771 = vlaneseq
      %v772 = vshrl.u32 %v771, 7
      %v773 = vsub.s32 %v770, %v772
      %v774 = vrot.slane %v767, %v773
      %v775 = vcombine.low %v765, %v766
      %v777 = vunpack.c.l.s4 1983009808
      %v778 = vunpack.c.0.s8 %v777
      %v779 = vlaneseq
      %v780 = vshrl.u32 %v779, 7
      %v781 = vsub.s32 %v778, %v780
      %v782 = vrot.slane %v775, %v781
      %v783 = vcombine.low %v774, %v782
      %v785 = vunpack.c.l.s4 1934713408
      %v786 = vunpack.c.0.s8 %v785
      %v787 = vlaneseq
      %v788 = vshrl.u32 %v787, 7
      %v789 = vsub.s32 %v786, %v788
      %v790 = vrot.slane %v783, %v789
      %v792 = vunpack.c.l.s4 1934713408
      %v793 = vunpack.c.0.s8 %v792
      %v794 = vlaneseq
      %v795 = vshrl.u32 %v794, 7
      %v796 = vsub.s32 %v793, %v795
      %v797 = vrot.slane %v764, %v796
      %v799 = vunpack.c.l.s4 1934713408
      %v800 = vunpack.c.0.s8 %v799
      %v801 = vlaneseq
      %v802 = vshrl.u32 %v801, 7
      %v803 = vsub.s32 %v800, %v802
      %v804 = vrot.slane %v797, %v803
      %v805 = vcombine.low %v790, %v804
      %v806 = vcombine.high %v790, %v804
      %v807 = vpack.c.bf16 %v805, %v805
      %v808 = vpack.c.bf16 %v806, %v806
      %810 = vrot.lane.b32.xlu0 %v684, 64
      %v811 = vpop.permute.xlu0 %810
      %v814 = vunpack.c.l.s4 1983009808
      %v815 = vunpack.c.0.s8 %v814
      %v816 = vlaneseq
      %v817 = vshrl.u32 %v816, 7
      %v818 = vsub.s32 %v815, %v817
      %v819 = vrot.slane %v684, %v818
      %v820 = vcombine.high %v684, 0.0
      %v822 = vunpack.c.l.s4 1983009808
      %v823 = vunpack.c.0.s8 %v822
      %v824 = vlaneseq
      %v825 = vshrl.u32 %v824, 7
      %v826 = vsub.s32 %v823, %v825
      %v827 = vrot.slane %v811, %v826
      %v828 = vcombine.high %v811, 0.0
      %v829 = vcombine.low %v819, %v827
      %v830 = vcombine.high %v819, %v827
      %v832 = vunpack.c.l.s4 1934713408
      %v833 = vunpack.c.0.s8 %v832
      %v834 = vlaneseq
      %v835 = vshrl.u32 %v834, 7
      %v836 = vsub.s32 %v833, %v835
      %v837 = vrot.slane %v829, %v836
      %v839 = vunpack.c.l.s4 1934713408
      %v840 = vunpack.c.0.s8 %v839
      %v841 = vlaneseq
      %v842 = vshrl.u32 %v841, 7
      %v843 = vsub.s32 %v840, %v842
      %v844 = vrot.slane %v830, %v843
      %v845 = vcombine.low %v820, %v828
      %v846 = vcombine.high %v837, 0.0
      %v847 = vcombine.high %v844, 0.0
      %v848 = vcombine.low %v837, %v844
      %v850 = vunpack.c.l.s4 1983009808
      %v851 = vunpack.c.0.s8 %v850
      %v852 = vlaneseq
      %v853 = vshrl.u32 %v852, 7
      %v854 = vsub.s32 %v851, %v853
      %v855 = vrot.slane %v848, %v854
      %v856 = vcombine.low %v846, %v847
      %v858 = vunpack.c.l.s4 1983009808
      %v859 = vunpack.c.0.s8 %v858
      %v860 = vlaneseq
      %v861 = vshrl.u32 %v860, 7
      %v862 = vsub.s32 %v859, %v861
      %v863 = vrot.slane %v856, %v862
      %v864 = vcombine.low %v855, %v863
      %v866 = vunpack.c.l.s4 1934713408
      %v867 = vunpack.c.0.s8 %v866
      %v868 = vlaneseq
      %v869 = vshrl.u32 %v868, 7
      %v870 = vsub.s32 %v867, %v869
      %v871 = vrot.slane %v864, %v870
      %v873 = vunpack.c.l.s4 1934713408
      %v874 = vunpack.c.0.s8 %v873
      %v875 = vlaneseq
      %v876 = vshrl.u32 %v875, 7
      %v877 = vsub.s32 %v874, %v876
      %v878 = vrot.slane %v845, %v877
      %v880 = vunpack.c.l.s4 1934713408
      %v881 = vunpack.c.0.s8 %v880
      %v882 = vlaneseq
      %v883 = vshrl.u32 %v882, 7
      %v884 = vsub.s32 %v881, %v883
      %v885 = vrot.slane %v878, %v884
      %v886 = vcombine.low %v871, %v885
      %v887 = vcombine.high %v871, %v885
      %v888 = vpack.c.bf16 %v886, %v886
      %v889 = vpack.c.bf16 %v887, %v887
      %891 = vrot.lane.b32.xlu0 %v723, 64
      %v892 = vpop.permute.xlu0 %891
      %v895 = vunpack.c.l.s4 1983009808
      %v896 = vunpack.c.0.s8 %v895
      %v897 = vlaneseq
      %v898 = vshrl.u32 %v897, 7
      %v899 = vsub.s32 %v896, %v898
      %v900 = vrot.slane %v723, %v899
      %v901 = vcombine.high %v723, 0.0
      %v903 = vunpack.c.l.s4 1983009808
      %v904 = vunpack.c.0.s8 %v903
      %v905 = vlaneseq
      %v906 = vshrl.u32 %v905, 7
      %v907 = vsub.s32 %v904, %v906
      %v908 = vrot.slane %v892, %v907
      %v909 = vcombine.high %v892, 0.0
      %v910 = vcombine.low %v900, %v908
      %v911 = vcombine.high %v900, %v908
      %v913 = vunpack.c.l.s4 1934713408
      %v914 = vunpack.c.0.s8 %v913
      %v915 = vlaneseq
      %v916 = vshrl.u32 %v915, 7
      %v917 = vsub.s32 %v914, %v916
      %v918 = vrot.slane %v910, %v917
      %v920 = vunpack.c.l.s4 1934713408
      %v921 = vunpack.c.0.s8 %v920
      %v922 = vlaneseq
      %v923 = vshrl.u32 %v922, 7
      %v924 = vsub.s32 %v921, %v923
      %v925 = vrot.slane %v911, %v924
      %v926 = vcombine.low %v901, %v909
      %v927 = vcombine.high %v918, 0.0
      %v928 = vcombine.high %v925, 0.0
      %v929 = vcombine.low %v918, %v925
      %v931 = vunpack.c.l.s4 1983009808
      %v932 = vunpack.c.0.s8 %v931
      %v933 = vlaneseq
      %v934 = vshrl.u32 %v933, 7
      %v935 = vsub.s32 %v932, %v934
      %v936 = vrot.slane %v929, %v935
      %v937 = vcombine.low %v927, %v928
      %v939 = vunpack.c.l.s4 1983009808
      %v940 = vunpack.c.0.s8 %v939
      %v941 = vlaneseq
      %v942 = vshrl.u32 %v941, 7
      %v943 = vsub.s32 %v940, %v942
      %v944 = vrot.slane %v937, %v943
      %v945 = vcombine.low %v936, %v944
      %v947 = vunpack.c.l.s4 1934713408
      %v948 = vunpack.c.0.s8 %v947
      %v949 = vlaneseq
      %v950 = vshrl.u32 %v949, 7
      %v951 = vsub.s32 %v948, %v950
      %v952 = vrot.slane %v945, %v951
      %v954 = vunpack.c.l.s4 1934713408
      %v955 = vunpack.c.0.s8 %v954
      %v956 = vlaneseq
      %v957 = vshrl.u32 %v956, 7
      %v958 = vsub.s32 %v955, %v957
      %v959 = vrot.slane %v926, %v958
      %v961 = vunpack.c.l.s4 1934713408
      %v962 = vunpack.c.0.s8 %v961
      %v963 = vlaneseq
      %v964 = vshrl.u32 %v963, 7
      %v965 = vsub.s32 %v962, %v964
      %v966 = vrot.slane %v959, %v965
      %v967 = vcombine.low %v952, %v966
      %v968 = vcombine.high %v952, %v966
      %v969 = vpack.c.bf16 %v967, %v967
      %v970 = vpack.c.bf16 %v968, %v968
      %vm971 = vcmask 523264
      %v973 = vsel %vm971, %v807, 0
      %v976 = vsel %vm971, %v888, 0
      %978 = vmatprep.subr.bf16.mxu0 0
      %979 = vmatpush1.bf16.xpose.msra.mxu0 %v976
      %980 = vmatprep.subr.bf16.mxu0 0
      %981 = vmatpush1.bf16.xpose.msra.mxu0 0
      %982 = vmatprep.subr.bf16.mxu0 0
      %983 = vmatpush1.bf16.xpose.msra.mxu0 0
      %984 = vmatprep.subr.bf16.mxu0 0
      %985 = vmatpush1.bf16.xpose.msra.mxu0 0
      %986 = vmatprep.subr.bf16.mxu0 0
      %987 = vmatpush1.bf16.xpose.msra.mxu0 0
      %988 = vmatprep.subr.bf16.mxu0 0
      %989 = vmatpush1.bf16.xpose.msra.mxu0 0
      %990 = vmatprep.subr.bf16.mxu0 0
      %991 = vmatpush1.bf16.xpose.msra.mxu0 0
      %992 = vmatprep.subr.bf16.mxu0 0
      %993 = vmatpush1.bf16.xpose.msra.mxu0 0
      %994 = vmatprep.subr.bf16.mxu0 0
      %995 = vmatpush1.bf16.xpose.msra.mxu0 0
      %996 = vmatprep.subr.bf16.mxu0 0
      %997 = vmatpush1.bf16.xpose.msra.mxu0 0
      %998 = vmatprep.subr.bf16.mxu0 0
      %999 = vmatpush1.bf16.xpose.msra.mxu0 0
      %1000 = vmatprep.subr.bf16.mxu0 0
      %1001 = vmatpush1.bf16.xpose.msra.mxu0 0
      %1002 = vmatprep.subr.bf16.mxu0 0
      %1003 = vmatpush1.bf16.xpose.msra.mxu0 0
      %1004 = vmatprep.subr.bf16.mxu0 0
      %1005 = vmatpush1.bf16.xpose.msra.mxu0 0
      %1006 = vmatprep.subr.bf16.mxu0 0
      %1007 = vmatpush1.bf16.xpose.msra.mxu0 0
      %1008 = vmatprep.subr.bf16.mxu0 0
      %1009 = vmatpush1.bf16.xpose.msra.mxu0 0
      %1010 = vmatprep.mubr.bf16.mxu0 0
      %1011 = vmatmul.mubr.bf16.gmra.mrb[0].mxu0 %v973
      %v1012 = vpop.f32.mrb[0].mxu0
      %v1013 = vadd.f32 0.0, %v1012
      %v1014 = vpop.f32.mrb[0].mxu0
      %v1015 = vpop.f32.mrb[0].mxu0
      %v1016 = vpop.f32.mrb[0].mxu0
      %1017 = vdwg.mxu0
      %v1019 = vsel %vm971, %v808, 0
      %v1022 = vsel %vm971, %v889, 0
      %1024 = vmatprep.subr.bf16.mxu0 0
      %1025 = vmatpush1.bf16.xpose.msra.mxu0 %v1022
      %1026 = vmatprep.subr.bf16.mxu0 0
      %1027 = vmatpush1.bf16.xpose.msra.mxu0 0
      %1028 = vmatprep.subr.bf16.mxu0 0
      %1029 = vmatpush1.bf16.xpose.msra.mxu0 0
      %1030 = vmatprep.subr.bf16.mxu0 0
      %1031 = vmatpush1.bf16.xpose.msra.mxu0 0
      %1032 = vmatprep.subr.bf16.mxu0 0
      %1033 = vmatpush1.bf16.xpose.msra.mxu0 0
      %1034 = vmatprep.subr.bf16.mxu0 0
      %1035 = vmatpush1.bf16.xpose.msra.mxu0 0
      %1036 = vmatprep.subr.bf16.mxu0 0
      %1037 = vmatpush1.bf16.xpose.msra.mxu0 0
      %1038 = vmatprep.subr.bf16.mxu0 0
      %1039 = vmatpush1.bf16.xpose.msra.mxu0 0
      %1040 = vmatprep.subr.bf16.mxu0 0
      %1041 = vmatpush1.bf16.xpose.msra.mxu0 0
      %1042 = vmatprep.subr.bf16.mxu0 0
      %1043 = vmatpush1.bf16.xpose.msra.mxu0 0
      %1044 = vmatprep.subr.bf16.mxu0 0
      %1045 = vmatpush1.bf16.xpose.msra.mxu0 0
      %1046 = vmatprep.subr.bf16.mxu0 0
      %1047 = vmatpush1.bf16.xpose.msra.mxu0 0
      %1048 = vmatprep.subr.bf16.mxu0 0
      %1049 = vmatpush1.bf16.xpose.msra.mxu0 0
      %1050 = vmatprep.subr.bf16.mxu0 0
      %1051 = vmatpush1.bf16.xpose.msra.mxu0 0
      %1052 = vmatprep.subr.bf16.mxu0 0
      %1053 = vmatpush1.bf16.xpose.msra.mxu0 0
      %1054 = vmatprep.subr.bf16.mxu0 0
      %1055 = vmatpush1.bf16.xpose.msra.mxu0 0
      %1056 = vmatprep.mubr.bf16.mxu0 0
      %1057 = vmatmul.mubr.bf16.gmra.mrb[0].mxu0 %v1019
      %v1058 = vpop.f32.mrb[0].mxu0
      %v1059 = vadd.f32 0.0, %v1058
      %v1060 = vpop.f32.mrb[0].mxu0
      %v1061 = vpop.f32.mrb[0].mxu0
      %v1062 = vpop.f32.mrb[0].mxu0
      %1063 = vdwg.mxu0
      %v1064 = vmul.f32 %v1013, 0.125
      %v1065 = vmul.f32 %v1059, 0.125
      %vm1066 = vcmask 36864
      %v1067 = vsel %vm1066, %v1064, -inf
      %1068 = vmax.xlane.f32.xlu0 %v1067
      %v1069 = vpop.xlane.xlu0 %1068
      %v1070 = vsel %vm1066, %v1065, -inf
      %1071 = vmax.xlane.f32.xlu0 %v1070
      %v1072 = vpop.xlane.xlu0 %1071
      %v1073 = vsub.f32 %v1064, %v1069
      %v1074 = vsub.f32 %v1065, %v1072
      %v1075 = vmul.f32 %v1073, 1.442695
      %v1076 = vpow.pop %v1075
      %v1077 = vmul.f32 %v1074, 1.442695
      %v1078 = vpow.pop %v1077
      %v1079 = vsel %vm1066, %v1076, 0.0
      %1080 = vadd.xlane.f32.xlu0 %v1079
      %v1081 = vpop.xlane.xlu0 %1080
      %v1082 = vsel %vm1066, %v1078, 0.0
      %1083 = vadd.xlane.f32.xlu0 %v1082
      %v1084 = vpop.xlane.xlu0 %1083
      %v1085 = vrcp.pop %v1081
      %v1086 = vrcp.pop %v1084
      %v1087 = vmul.f32 %v1076, %v1085
      %v1088 = vmul.f32 %v1078, %v1086
      %v1089 = vpack.c.bf16 %v1087, %v1087
      %v1090 = vpack.c.bf16 %v1088, %v1088
      %vm1091 = vcmask 39936
      %v1093 = vsel %vm1091, %v1089, 0
      %vm1095 = vcmask 1041408
      %vm1096 = vcmask 1042432
      %v1097 = vsel %vm1095, 4294967295, 65535
      %v1098 = vsel %vm1096, %v1097, 0
      %v1100 = vand.u32 %v969, %v1098
      %1102 = vmatprep.subr.bf16.mxu0 0
      %1103 = vmatpush1.bf16.msra.mxu0 %v1100
      %1104 = vmatprep.subr.bf16.mxu0 0
      %1105 = vmatpush1.bf16.msra.mxu0 0
      %1106 = vmatprep.subr.bf16.mxu0 0
      %1107 = vmatpush1.bf16.msra.mxu0 0
      %1108 = vmatprep.subr.bf16.mxu0 0
      %1109 = vmatpush1.bf16.msra.mxu0 0
      %1110 = vmatprep.subr.bf16.mxu0 0
      %1111 = vmatpush1.bf16.msra.mxu0 0
      %1112 = vmatprep.subr.bf16.mxu0 0
      %1113 = vmatpush1.bf16.msra.mxu0 0
      %1114 = vmatprep.subr.bf16.mxu0 0
      %1115 = vmatpush1.bf16.msra.mxu0 0
      %1116 = vmatprep.subr.bf16.mxu0 0
      %1117 = vmatpush1.bf16.msra.mxu0 0
      %1118 = vmatprep.subr.bf16.mxu0 0
      %1119 = vmatpush1.bf16.msra.mxu0 0
      %1120 = vmatprep.subr.bf16.mxu0 0
      %1121 = vmatpush1.bf16.msra.mxu0 0
      %1122 = vmatprep.subr.bf16.mxu0 0
      %1123 = vmatpush1.bf16.msra.mxu0 0
      %1124 = vmatprep.subr.bf16.mxu0 0
      %1125 = vmatpush1.bf16.msra.mxu0 0
      %1126 = vmatprep.subr.bf16.mxu0 0
      %1127 = vmatpush1.bf16.msra.mxu0 0
      %1128 = vmatprep.subr.bf16.mxu0 0
      %1129 = vmatpush1.bf16.msra.mxu0 0
      %1130 = vmatprep.subr.bf16.mxu0 0
      %1131 = vmatpush1.bf16.msra.mxu0 0
      %1132 = vmatprep.subr.bf16.mxu0 0
      %1133 = vmatpush1.bf16.msra.mxu0 0
      %1134 = vmatprep.mubr.bf16.mxu0 0
      %1135 = vmatmul.mubr.bf16.gmra.mrb[0].mxu0 %v1093
      %v1136 = vpop.f32.mrb[0].mxu0
      %v1137 = vadd.f32 0.0, %v1136
      %v1138 = vpop.f32.mrb[0].mxu0
      %v1139 = vpop.f32.mrb[0].mxu0
      %v1140 = vpop.f32.mrb[0].mxu0
      %1141 = vdwg.mxu0
      %v1143 = vsel %vm1091, %v1090, 0
      %v1146 = vand.u32 %v970, %v1098
      %1148 = vmatprep.subr.bf16.mxu0 0
      %1149 = vmatpush1.bf16.msra.mxu0 %v1146
      %1150 = vmatprep.subr.bf16.mxu0 0
      %1151 = vmatpush1.bf16.msra.mxu0 0
      %1152 = vmatprep.subr.bf16.mxu0 0
      %1153 = vmatpush1.bf16.msra.mxu0 0
      %1154 = vmatprep.subr.bf16.mxu0 0
      %1155 = vmatpush1.bf16.msra.mxu0 0
      %1156 = vmatprep.subr.bf16.mxu0 0
      %1157 = vmatpush1.bf16.msra.mxu0 0
      %1158 = vmatprep.subr.bf16.mxu0 0
      %1159 = vmatpush1.bf16.msra.mxu0 0
      %1160 = vmatprep.subr.bf16.mxu0 0
      %1161 = vmatpush1.bf16.msra.mxu0 0
      %1162 = vmatprep.subr.bf16.mxu0 0
      %1163 = vmatpush1.bf16.msra.mxu0 0
      %1164 = vmatprep.subr.bf16.mxu0 0
      %1165 = vmatpush1.bf16.msra.mxu0 0
      %1166 = vmatprep.subr.bf16.mxu0 0
      %1167 = vmatpush1.bf16.msra.mxu0 0
      %1168 = vmatprep.subr.bf16.mxu0 0
      %1169 = vmatpush1.bf16.msra.mxu0 0
      %1170 = vmatprep.subr.bf16.mxu0 0
      %1171 = vmatpush1.bf16.msra.mxu0 0
      %1172 = vmatprep.subr.bf16.mxu0 0
      %1173 = vmatpush1.bf16.msra.mxu0 0
      %1174 = vmatprep.subr.bf16.mxu0 0
      %1175 = vmatpush1.bf16.msra.mxu0 0
      %1176 = vmatprep.subr.bf16.mxu0 0
      %1177 = vmatpush1.bf16.msra.mxu0 0
      %1178 = vmatprep.subr.bf16.mxu0 0
      %1179 = vmatpush1.bf16.msra.mxu0 0
      %1180 = vmatprep.mubr.bf16.mxu0 0
      %1181 = vmatmul.mubr.bf16.gmra.mrb[0].mxu0 %v1143
      %v1182 = vpop.f32.mrb[0].mxu0
      %v1183 = vadd.f32 0.0, %v1182
      %v1184 = vpop.f32.mrb[0].mxu0
      %v1185 = vpop.f32.mrb[0].mxu0
      %v1186 = vpop.f32.mrb[0].mxu0
      %1187 = vdwg.mxu0
      %v1189 = vunpack.c.l.s4 1983009808
      %v1190 = vunpack.c.0.s8 %v1189
      %v1191 = vlaneseq
      %v1192 = vshrl.u32 %v1191, 7
      %v1193 = vsub.s32 %v1190, %v1192
      %v1194 = vrot.slane %v1137, %v1193
      %v1195 = vcombine.high %v1137, 0.0
      %v1197 = vunpack.c.l.s4 1983009808
      %v1198 = vunpack.c.0.s8 %v1197
      %v1199 = vlaneseq
      %v1200 = vshrl.u32 %v1199, 7
      %v1201 = vsub.s32 %v1198, %v1200
      %v1202 = vrot.slane %v1183, %v1201
      %v1203 = vcombine.high %v1183, 0.0
      %v1204 = vcombine.low %v1194, %v1202
      %v1205 = vcombine.high %v1194, %v1202
      %v1207 = vunpack.c.l.s4 1934713408
      %v1208 = vunpack.c.0.s8 %v1207
      %v1209 = vlaneseq
      %v1210 = vshrl.u32 %v1209, 7
      %v1211 = vsub.s32 %v1208, %v1210
      %v1212 = vrot.slane %v1204, %v1211
      %v1214 = vunpack.c.l.s4 1934713408
      %v1215 = vunpack.c.0.s8 %v1214
      %v1216 = vlaneseq
      %v1217 = vshrl.u32 %v1216, 7
      %v1218 = vsub.s32 %v1215, %v1217
      %v1219 = vrot.slane %v1205, %v1218
      %v1220 = vcombine.low %v1195, %v1203
      %v1221 = vcombine.high %v1212, 0.0
      %v1222 = vcombine.high %v1219, 0.0
      %v1223 = vcombine.low %v1212, %v1219
      %v1225 = vunpack.c.l.s4 1983009808
      %v1226 = vunpack.c.0.s8 %v1225
      %v1227 = vlaneseq
      %v1228 = vshrl.u32 %v1227, 7
      %v1229 = vsub.s32 %v1226, %v1228
      %v1230 = vrot.slane %v1223, %v1229
      %v1231 = vcombine.low %v1221, %v1222
      %v1233 = vunpack.c.l.s4 1983009808
      %v1234 = vunpack.c.0.s8 %v1233
      %v1235 = vlaneseq
      %v1236 = vshrl.u32 %v1235, 7
      %v1237 = vsub.s32 %v1234, %v1236
      %v1238 = vrot.slane %v1231, %v1237
      %v1239 = vcombine.low %v1230, %v1238
      %v1241 = vunpack.c.l.s4 1934713408
      %v1242 = vunpack.c.0.s8 %v1241
      %v1243 = vlaneseq
      %v1244 = vshrl.u32 %v1243, 7
      %v1245 = vsub.s32 %v1242, %v1244
      %v1246 = vrot.slane %v1239, %v1245
      %v1248 = vunpack.c.l.s4 1934713408
      %v1249 = vunpack.c.0.s8 %v1248
      %v1250 = vlaneseq
      %v1251 = vshrl.u32 %v1250, 7
      %v1252 = vsub.s32 %v1249, %v1251
      %v1253 = vrot.slane %v1220, %v1252
      %v1255 = vunpack.c.l.s4 1934713408
      %v1256 = vunpack.c.0.s8 %v1255
      %v1257 = vlaneseq
      %v1258 = vshrl.u32 %v1257, 7
      %v1259 = vsub.s32 %v1256, %v1258
      %v1260 = vrot.slane %v1253, %v1259
      %v1261 = vcombine.low %v1246, %v1260
      %v1262 = vcombine.high %v1246, %v1260
      %1264 = vrot.lane.b32.xlu0 %v1262, 64
      %v1265 = vpop.permute.xlu0 %1264
      %v1267 = vsel %vm971, %v1261, %v1265
      %v1268 = vpack.c.bf16 %v1267, %v1267
      %v1269 = vld [vmem:[%s5] sm:$0xf]
      %v1270 = vld [vmem:[%s5 + $0x4] sm:$0xf]
      %v1271 = vld [vmem:[%s5 + $0x8] sm:$0xf]
      %v1272 = vld [vmem:[%s5 + $0xc] sm:$0xf]
      %v1273 = vld [vmem:[%s5 + $0x10] sm:$0xf]
      %v1274 = vld [vmem:[%s5 + $0x14] sm:$0xf]
      %v1275 = vld [vmem:[%s5 + $0x18] sm:$0xf]
      %v1276 = vld [vmem:[%s5 + $0x1c] sm:$0xf]
      %v1277 = vld [vmem:[%s5 + $0x20] sm:$0xf]
      %v1278 = vld [vmem:[%s5 + $0x24] sm:$0xf]
      %v1279 = vld [vmem:[%s5 + $0x28] sm:$0xf]
      %v1280 = vld [vmem:[%s5 + $0x2c] sm:$0xf]
      %v1281 = vld [vmem:[%s5 + $0x30] sm:$0xf]
      %v1282 = vld [vmem:[%s5 + $0x34] sm:$0xf]
      %v1283 = vld [vmem:[%s5 + $0x38] sm:$0xf]
      %v1284 = vld [vmem:[%s5 + $0x3c] sm:$0xf]
      %v1301 = vunpack.c.l.b16 %v1269
      %v1302 = vunpack.c.l.b16 %v1270
      %v1303 = vunpack.c.l.b16 %v1271
      %v1304 = vunpack.c.l.b16 %v1272
      %v1305 = vunpack.c.l.b16 %v1273
      %v1306 = vunpack.c.l.b16 %v1274
      %v1307 = vunpack.c.l.b16 %v1275
      %v1308 = vunpack.c.l.b16 %v1276
      %v1309 = vunpack.c.l.b16 %v1277
      %v1310 = vunpack.c.l.b16 %v1278
      %v1311 = vunpack.c.l.b16 %v1279
      %v1312 = vunpack.c.l.b16 %v1280
      %v1313 = vunpack.c.l.b16 %v1281
      %v1314 = vunpack.c.l.b16 %v1282
      %v1315 = vunpack.c.l.b16 %v1283
      %v1316 = vunpack.c.l.b16 %v1284
      %v1317 = vpack.c.b16 %v1302, %v1301
      %v1318 = vpack.c.b16 %v1304, %v1303
      %v1319 = vpack.c.b16 %v1306, %v1305
      %v1320 = vpack.c.b16 %v1308, %v1307
      %v1321 = vpack.c.b16 %v1310, %v1309
      %v1322 = vpack.c.b16 %v1312, %v1311
      %v1323 = vpack.c.b16 %v1314, %v1313
      %v1324 = vpack.c.b16 %v1316, %v1315
      %1333 = vmatprep.subr.bf16.mxu0 0
      %1334 = vmatpush1.bf16.msra.mxu0 %v1317
      %1335 = vmatprep.subr.bf16.mxu0 0
      %1336 = vmatpush1.bf16.msra.mxu0 %v1318
      %1337 = vmatprep.subr.bf16.mxu0 0
      %1338 = vmatpush1.bf16.msra.mxu0 %v1319
      %1339 = vmatprep.subr.bf16.mxu0 0
      %1340 = vmatpush1.bf16.msra.mxu0 %v1320
      %1341 = vmatprep.subr.bf16.mxu0 0
      %1342 = vmatpush1.bf16.msra.mxu0 %v1321
      %1343 = vmatprep.subr.bf16.mxu0 0
      %1344 = vmatpush1.bf16.msra.mxu0 %v1322
      %1345 = vmatprep.subr.bf16.mxu0 0
      %1346 = vmatpush1.bf16.msra.mxu0 %v1323
      %1347 = vmatprep.subr.bf16.mxu0 0
      %1348 = vmatpush1.bf16.msra.mxu0 %v1324
      %1349 = vmatprep.subr.bf16.mxu0 0
      %1350 = vmatpush1.bf16.msra.mxu0 0
      %1351 = vmatprep.subr.bf16.mxu0 0
      %1352 = vmatpush1.bf16.msra.mxu0 0
      %1353 = vmatprep.subr.bf16.mxu0 0
      %1354 = vmatpush1.bf16.msra.mxu0 0
      %1355 = vmatprep.subr.bf16.mxu0 0
      %1356 = vmatpush1.bf16.msra.mxu0 0
      %1357 = vmatprep.subr.bf16.mxu0 0
      %1358 = vmatpush1.bf16.msra.mxu0 0
      %1359 = vmatprep.subr.bf16.mxu0 0
      %1360 = vmatpush1.bf16.msra.mxu0 0
      %1361 = vmatprep.subr.bf16.mxu0 0
      %1362 = vmatpush1.bf16.msra.mxu0 0
      %1363 = vmatprep.subr.bf16.mxu0 0
      %1364 = vmatpush1.bf16.msra.mxu0 0
      %1365 = vmatprep.mubr.bf16.mxu0 0
      %1366 = vmatmul.mubr.bf16.gmra.mrb[0].mxu0 %v1268
      %v1367 = vpop.f32.mrb[0].mxu0
      %v1368 = vadd.f32 0.0, %v1367
      %v1369 = vpop.f32.mrb[0].mxu0
      %v1370 = vpop.f32.mrb[0].mxu0
      %v1371 = vpop.f32.mrb[0].mxu0
      %1372 = vdwg.mxu0
      %v1373 = vadd.f32 %v437, %v1368
      %v1374 = vld [vmem:[%s6] sm:$0x1]
      %v1376 = vlaneseq
      %v1377 = vshrl.u32 %v1376, 7
      %v1378 = vsub.s32 0, %v1377
      %v1379 = vrot.slane %v1374, %v1378
      %v1381 = vadd.f32 %v1373, %v1379
      %v1382 = vld [vmem:[%s7] sm:$0x1]
      %v1383 = vld [vmem:[%s8] sm:$0x1]
      %v1384 = vsel %vm440, %v1381, 0.0
      %1385 = vadd.xlane.f32.xlu0 %v1384
      %v1386 = vpop.xlane.xlu0 %1385
      %v1387 = vmul.f32 %v1386, %v444
      %v1388 = vsub.f32 %v1381, %v1387
      %v1389 = vmul.f32 %v1388, %v1388
      %v1390 = vsel %vm440, %v1389, 0.0
      %1391 = vadd.xlane.f32.xlu0 %v1390
      %v1392 = vpop.xlane.xlu0 %1391
      %v1393 = vmul.f32 %v1392, %v444
      %v1394 = vadd.f32 %v1393, 1e-05
      %v1395 = vrsqrt.pop %v1394
      %v1396 = vmul.f32 %v1388, %v1395
      %v1398 = vlaneseq
      %v1399 = vshrl.u32 %v1398, 7
      %v1400 = vsub.s32 0, %v1399
      %v1401 = vrot.slane %v1382, %v1400
      %v1403 = vmul.f32 %v1396, %v1401
      %v1405 = vlaneseq
      %v1406 = vshrl.u32 %v1405, 7
      %v1407 = vsub.s32 0, %v1406
      %v1408 = vrot.slane %v1383, %v1407
      %v1410 = vadd.f32 %v1403, %v1408
      %v1411 = vpack.c.bf16 %v1410, %v1410
      %v1412 = vld [vmem:[%s9] sm:$0xff]
      %v1413 = vld [vmem:[%s9 + $0x8] sm:$0xff]
      %v1414 = vld [vmem:[%s9 + $0x10] sm:$0xff]
      %v1415 = vld [vmem:[%s9 + $0x18] sm:$0xff]
      %v1416 = vld [vmem:[%s9 + $0x20] sm:$0xff]
      %v1417 = vld [vmem:[%s9 + $0x28] sm:$0xff]
      %v1418 = vld [vmem:[%s9 + $0x30] sm:$0xff]
      %v1419 = vld [vmem:[%s9 + $0x38] sm:$0xff]
      %v1420 = vld [vmem:[%s9 + $0x40] sm:$0xff]
      %v1421 = vld [vmem:[%s9 + $0x48] sm:$0xff]
      %v1422 = vld [vmem:[%s9 + $0x50] sm:$0xff]
      %v1423 = vld [vmem:[%s9 + $0x58] sm:$0xff]
      %v1424 = vld [vmem:[%s9 + $0x60] sm:$0xff]
      %v1425 = vld [vmem:[%s9 + $0x68] sm:$0xff]
      %v1426 = vld [vmem:[%s9 + $0x70] sm:$0xff]
      %v1427 = vld [vmem:[%s9 + $0x78] sm:$0xff]
      %v1428 = vld [vmem:[%s9 + $0x80] sm:$0xff]
      %v1429 = vld [vmem:[%s9 + $0x88] sm:$0xff]
      %v1430 = vld [vmem:[%s9 + $0x90] sm:$0xff]
      %v1431 = vld [vmem:[%s9 + $0x98] sm:$0xff]
      %v1432 = vld [vmem:[%s9 + $0xa0] sm:$0xff]
      %v1433 = vld [vmem:[%s9 + $0xa8] sm:$0xff]
      %v1434 = vld [vmem:[%s9 + $0xb0] sm:$0xff]
      %v1435 = vld [vmem:[%s9 + $0xb8] sm:$0xff]
      %v1436 = vld [vmem:[%s9 + $0xc0] sm:$0xff]
      %v1437 = vld [vmem:[%s9 + $0xc8] sm:$0xff]
      %v1438 = vld [vmem:[%s9 + $0xd0] sm:$0xff]
      %v1439 = vld [vmem:[%s9 + $0xd8] sm:$0xff]
      %v1440 = vld [vmem:[%s9 + $0xe0] sm:$0xff]
      %v1441 = vld [vmem:[%s9 + $0xe8] sm:$0xff]
      %v1442 = vld [vmem:[%s9 + $0xf0] sm:$0xff]
      %v1443 = vld [vmem:[%s9 + $0xf8] sm:$0xff]
      %v1444 = vld [vmem:[%s10] sm:$0xf]
      %v1446 = vlaneseq
      %v1447 = vshrl.u32 %v1446, 7
      %v1448 = vsub.s32 0, %v1447
      %v1449 = vrot.slane %v1444, %v1448
      %v1450 = vlaneseq
      %v1451 = vshrl.u32 %v1450, 7
      %v1452 = vsub.s32 1, %v1451
      %v1453 = vrot.slane %v1444, %v1452
      %v1454 = vlaneseq
      %v1455 = vshrl.u32 %v1454, 7
      %v1456 = vsub.s32 2, %v1455
      %v1457 = vrot.slane %v1444, %v1456
      %v1458 = vlaneseq
      %v1459 = vshrl.u32 %v1458, 7
      %v1460 = vsub.s32 3, %v1459
      %v1461 = vrot.slane %v1444, %v1460
      %v1498 = vunpack.c.l.b16 %v1412
      %v1499 = vunpack.c.h.b16 %v1412
      %v1500 = vunpack.c.l.b16 %v1413
      %v1501 = vunpack.c.h.b16 %v1413
      %v1502 = vunpack.c.l.b16 %v1414
      %v1503 = vunpack.c.h.b16 %v1414
      %v1504 = vunpack.c.l.b16 %v1415
      %v1505 = vunpack.c.h.b16 %v1415
      %v1506 = vunpack.c.l.b16 %v1416
      %v1507 = vunpack.c.h.b16 %v1416
      %v1508 = vunpack.c.l.b16 %v1417
      %v1509 = vunpack.c.h.b16 %v1417
      %v1510 = vunpack.c.l.b16 %v1418
      %v1511 = vunpack.c.h.b16 %v1418
      %v1512 = vunpack.c.l.b16 %v1419
      %v1513 = vunpack.c.h.b16 %v1419
      %v1514 = vunpack.c.l.b16 %v1420
      %v1515 = vunpack.c.h.b16 %v1420
      %v1516 = vunpack.c.l.b16 %v1421
      %v1517 = vunpack.c.h.b16 %v1421
      %v1518 = vunpack.c.l.b16 %v1422
      %v1519 = vunpack.c.h.b16 %v1422
      %v1520 = vunpack.c.l.b16 %v1423
      %v1521 = vunpack.c.h.b16 %v1423
      %v1522 = vunpack.c.l.b16 %v1424
      %v1523 = vunpack.c.h.b16 %v1424
      %v1524 = vunpack.c.l.b16 %v1425
      %v1525 = vunpack.c.h.b16 %v1425
      %v1526 = vunpack.c.l.b16 %v1426
      %v1527 = vunpack.c.h.b16 %v1426
      %v1528 = vunpack.c.l.b16 %v1427
      %v1529 = vunpack.c.h.b16 %v1427
      %v1530 = vunpack.c.l.b16 %v1428
      %v1531 = vunpack.c.h.b16 %v1428
      %v1532 = vunpack.c.l.b16 %v1429
      %v1533 = vunpack.c.h.b16 %v1429
      %v1534 = vunpack.c.l.b16 %v1430
      %v1535 = vunpack.c.h.b16 %v1430
      %v1536 = vunpack.c.l.b16 %v1431
      %v1537 = vunpack.c.h.b16 %v1431
      %v1538 = vunpack.c.l.b16 %v1432
      %v1539 = vunpack.c.h.b16 %v1432
      %v1540 = vunpack.c.l.b16 %v1433
      %v1541 = vunpack.c.h.b16 %v1433
      %v1542 = vunpack.c.l.b16 %v1434
      %v1543 = vunpack.c.h.b16 %v1434
      %v1544 = vunpack.c.l.b16 %v1435
      %v1545 = vunpack.c.h.b16 %v1435
      %v1546 = vunpack.c.l.b16 %v1436
      %v1547 = vunpack.c.h.b16 %v1436
      %v1548 = vunpack.c.l.b16 %v1437
      %v1549 = vunpack.c.h.b16 %v1437
      %v1550 = vunpack.c.l.b16 %v1438
      %v1551 = vunpack.c.h.b16 %v1438
      %v1552 = vunpack.c.l.b16 %v1439
      %v1553 = vunpack.c.h.b16 %v1439
      %v1554 = vunpack.c.l.b16 %v1440
      %v1555 = vunpack.c.h.b16 %v1440
      %v1556 = vunpack.c.l.b16 %v1441
      %v1557 = vunpack.c.h.b16 %v1441
      %v1558 = vunpack.c.l.b16 %v1442
      %v1559 = vunpack.c.h.b16 %v1442
      %v1560 = vunpack.c.l.b16 %v1443
      %v1561 = vunpack.c.h.b16 %v1443
      %v1562 = vpack.c.b16 %v1502, %v1498
      %v1563 = vpack.c.b16 %v1503, %v1499
      %v1564 = vpack.c.b16 %v1504, %v1500
      %v1565 = vpack.c.b16 %v1505, %v1501
      %v1566 = vpack.c.b16 %v1510, %v1506
      %v1567 = vpack.c.b16 %v1511, %v1507
      %v1568 = vpack.c.b16 %v1512, %v1508
      %v1569 = vpack.c.b16 %v1513, %v1509
      %v1570 = vpack.c.b16 %v1518, %v1514
      %v1571 = vpack.c.b16 %v1519, %v1515
      %v1572 = vpack.c.b16 %v1520, %v1516
      %v1573 = vpack.c.b16 %v1521, %v1517
      %v1574 = vpack.c.b16 %v1526, %v1522
      %v1575 = vpack.c.b16 %v1527, %v1523
      %v1576 = vpack.c.b16 %v1528, %v1524
      %v1577 = vpack.c.b16 %v1529, %v1525
      %v1578 = vpack.c.b16 %v1534, %v1530
      %v1579 = vpack.c.b16 %v1535, %v1531
      %v1580 = vpack.c.b16 %v1536, %v1532
      %v1581 = vpack.c.b16 %v1537, %v1533
      %v1582 = vpack.c.b16 %v1542, %v1538
      %v1583 = vpack.c.b16 %v1543, %v1539
      %v1584 = vpack.c.b16 %v1544, %v1540
      %v1585 = vpack.c.b16 %v1545, %v1541
      %v1586 = vpack.c.b16 %v1550, %v1546
      %v1587 = vpack.c.b16 %v1551, %v1547
      %v1588 = vpack.c.b16 %v1552, %v1548
      %v1589 = vpack.c.b16 %v1553, %v1549
      %v1590 = vpack.c.b16 %v1558, %v1554
      %v1591 = vpack.c.b16 %v1559, %v1555
      %v1592 = vpack.c.b16 %v1560, %v1556
      %v1593 = vpack.c.b16 %v1561, %v1557
      %1626 = vmatprep.subr.bf16.mxu0 %v1563
      %1627 = vmatpush1.bf16.msra.mxu0 %v1562
      %1628 = vmatprep.subr.bf16.mxu0 %v1567
      %1629 = vmatpush1.bf16.msra.mxu0 %v1566
      %1630 = vmatprep.subr.bf16.mxu0 %v1571
      %1631 = vmatpush1.bf16.msra.mxu0 %v1570
      %1632 = vmatprep.subr.bf16.mxu0 %v1575
      %1633 = vmatpush1.bf16.msra.mxu0 %v1574
      %1634 = vmatprep.subr.bf16.mxu0 %v1579
      %1635 = vmatpush1.bf16.msra.mxu0 %v1578
      %1636 = vmatprep.subr.bf16.mxu0 %v1583
      %1637 = vmatpush1.bf16.msra.mxu0 %v1582
      %1638 = vmatprep.subr.bf16.mxu0 %v1587
      %1639 = vmatpush1.bf16.msra.mxu0 %v1586
      %1640 = vmatprep.subr.bf16.mxu0 %v1591
      %1641 = vmatpush1.bf16.msra.mxu0 %v1590
      %1642 = vmatprep.subr.bf16.mxu0 0
      %1643 = vmatpush1.bf16.msra.mxu0 0
      %1644 = vmatprep.subr.bf16.mxu0 0
      %1645 = vmatpush1.bf16.msra.mxu0 0
      %1646 = vmatprep.subr.bf16.mxu0 0
      %1647 = vmatpush1.bf16.msra.mxu0 0
      %1648 = vmatprep.subr.bf16.mxu0 0
      %1649 = vmatpush1.bf16.msra.mxu0 0
      %1650 = vmatprep.subr.bf16.mxu0 0
      %1651 = vmatpush1.bf16.msra.mxu0 0
      %1652 = vmatprep.subr.bf16.mxu0 0
      %1653 = vmatpush1.bf16.msra.mxu0 0
      %1654 = vmatprep.subr.bf16.mxu0 0
      %1655 = vmatpush1.bf16.msra.mxu0 0
      %1656 = vmatprep.subr.bf16.mxu0 0
      %1657 = vmatpush1.bf16.msra.mxu0 0
      %1658 = vmatprep.mubr.bf16.mxu0 0
      %1659 = vmatmul.mubr.bf16.gmra.mrb[0].mxu0 %v1411
      %v1660 = vpop.f32.mrb[0].mxu0
      %v1661 = vadd.f32 %v1449, %v1660
      %v1662 = vpop.f32.mrb[0].mxu0
      %v1663 = vadd.f32 %v1453, %v1662
      %v1664 = vpop.f32.mrb[0].mxu0
      %v1665 = vpop.f32.mrb[0].mxu0
      %1666 = vdwg.mxu0
      %1667 = vmatprep.subr.bf16.mxu0 %v1565
      %1668 = vmatpush1.bf16.msra.mxu0 %v1564
      %1669 = vmatprep.subr.bf16.mxu0 %v1569
      %1670 = vmatpush1.bf16.msra.mxu0 %v1568
      %1671 = vmatprep.subr.bf16.mxu0 %v1573
      %1672 = vmatpush1.bf16.msra.mxu0 %v1572
      %1673 = vmatprep.subr.bf16.mxu0 %v1577
      %1674 = vmatpush1.bf16.msra.mxu0 %v1576
      %1675 = vmatprep.subr.bf16.mxu0 %v1581
      %1676 = vmatpush1.bf16.msra.mxu0 %v1580
      %1677 = vmatprep.subr.bf16.mxu0 %v1585
      %1678 = vmatpush1.bf16.msra.mxu0 %v1584
      %1679 = vmatprep.subr.bf16.mxu0 %v1589
      %1680 = vmatpush1.bf16.msra.mxu0 %v1588
      %1681 = vmatprep.subr.bf16.mxu0 %v1593
      %1682 = vmatpush1.bf16.msra.mxu0 %v1592
      %1683 = vmatprep.subr.bf16.mxu0 0
      %1684 = vmatpush1.bf16.msra.mxu0 0
      %1685 = vmatprep.subr.bf16.mxu0 0
      %1686 = vmatpush1.bf16.msra.mxu0 0
      %1687 = vmatprep.subr.bf16.mxu0 0
      %1688 = vmatpush1.bf16.msra.mxu0 0
      %1689 = vmatprep.subr.bf16.mxu0 0
      %1690 = vmatpush1.bf16.msra.mxu0 0
      %1691 = vmatprep.subr.bf16.mxu0 0
      %1692 = vmatpush1.bf16.msra.mxu0 0
      %1693 = vmatprep.subr.bf16.mxu0 0
      %1694 = vmatpush1.bf16.msra.mxu0 0
      %1695 = vmatprep.subr.bf16.mxu0 0
      %1696 = vmatpush1.bf16.msra.mxu0 0
      %1697 = vmatprep.subr.bf16.mxu0 0
      %1698 = vmatpush1.bf16.msra.mxu0 0
      %1699 = vmatprep.mubr.bf16.mxu0 0
      %1700 = vmatmul.mubr.bf16.gmra.mrb[0].mxu0 %v1411
      %v1701 = vpop.f32.mrb[0].mxu0
      %v1702 = vadd.f32 %v1457, %v1701
      %v1703 = vpop.f32.mrb[0].mxu0
      %v1704 = vadd.f32 %v1461, %v1703
      %v1705 = vpop.f32.mrb[0].mxu0
      %v1706 = vpop.f32.mrb[0].mxu0
      %1707 = vdwg.mxu0
      %v1708 = vmul.f32 %v1661, 0.5
      %v1709 = vmul.f32 %v1663, 0.5
      %v1710 = vmul.f32 %v1702, 0.5
      %v1711 = vmul.f32 %v1704, 0.5
      %v1712 = vmul.f32 %v1661, 0.70710677
      %v1713 = vmul.f32 %v1663, 0.70710677
      %v1714 = vmul.f32 %v1702, 0.70710677
      %v1715 = vmul.f32 %v1704, 0.70710677
      %vm1716 = vcmp.lt.f32.partialorder %v1712, 0.0
      %vm1717 = vcmp.lt.f32.partialorder %v1713, 0.0
      %vm1718 = vcmp.lt.f32.partialorder %v1714, 0.0
      %vm1719 = vcmp.lt.f32.partialorder %v1715, 0.0
      %v1720 = vsel %vm1716, -1.0, 1.0
      %v1721 = vsel %vm1717, -1.0, 1.0
      %v1722 = vsel %vm1718, -1.0, 1.0
      %v1723 = vsel %vm1719, -1.0, 1.0
      %v1724 = vand.u32 2147483647, %v1712
      %v1725 = vand.u32 2147483647, %v1713
      %v1726 = vand.u32 2147483647, %v1714
      %v1727 = vand.u32 2147483647, %v1715
      %v1728 = vmul.f32 %v1724, 0.3275911
      %v1729 = vmul.f32 %v1725, 0.3275911
      %v1730 = vmul.f32 %v1726, 0.3275911
      %v1731 = vmul.f32 %v1727, 0.3275911
      %v1732 = vadd.f32 %v1728, 1.0
      %v1733 = vadd.f32 %v1729, 1.0
      %v1734 = vadd.f32 %v1730, 1.0
      %v1735 = vadd.f32 %v1731, 1.0
      %v1736 = vrcp.pop %v1732
      %v1737 = vmul.f32 1.0, %v1736
      %v1738 = vrcp.pop %v1733
      %v1739 = vmul.f32 1.0, %v1738
      %v1740 = vrcp.pop %v1734
      %v1741 = vmul.f32 1.0, %v1740
      %v1742 = vrcp.pop %v1735
      %v1743 = vmul.f32 1.0, %v1742
      %v1744 = vmul.f32 %v1737, 1.0614054
      %v1745 = vmul.f32 %v1739, 1.0614054
      %v1746 = vmul.f32 %v1741, 1.0614054
      %v1747 = vmul.f32 %v1743, 1.0614054
      %v1748 = vadd.f32 %v1744, -1.4531521
      %v1749 = vadd.f32 %v1745, -1.4531521
      %v1750 = vadd.f32 %v1746, -1.4531521
      %v1751 = vadd.f32 %v1747, -1.4531521
      %v1752 = vmul.f32 %v1748, %v1737
      %v1753 = vmul.f32 %v1749, %v1739
      %v1754 = vmul.f32 %v1750, %v1741
      %v1755 = vmul.f32 %v1751, %v1743
      %v1756 = vadd.f32 %v1752, 1.4214138
      %v1757 = vadd.f32 %v1753, 1.4214138
      %v1758 = vadd.f32 %v1754, 1.4214138
      %v1759 = vadd.f32 %v1755, 1.4214138
      %v1760 = vmul.f32 %v1756, %v1737
      %v1761 = vmul.f32 %v1757, %v1739
      %v1762 = vmul.f32 %v1758, %v1741
      %v1763 = vmul.f32 %v1759, %v1743
      %v1764 = vadd.f32 %v1760, -0.28449672
      %v1765 = vadd.f32 %v1761, -0.28449672
      %v1766 = vadd.f32 %v1762, -0.28449672
      %v1767 = vadd.f32 %v1763, -0.28449672
      %v1768 = vmul.f32 %v1764, %v1737
      %v1769 = vmul.f32 %v1765, %v1739
      %v1770 = vmul.f32 %v1766, %v1741
      %v1771 = vmul.f32 %v1767, %v1743
      %v1772 = vadd.f32 %v1768, 0.2548296
      %v1773 = vadd.f32 %v1769, 0.2548296
      %v1774 = vadd.f32 %v1770, 0.2548296
      %v1775 = vadd.f32 %v1771, 0.2548296
      %v1776 = vmul.f32 %v1772, %v1737
      %v1777 = vmul.f32 %v1773, %v1739
      %v1778 = vmul.f32 %v1774, %v1741
      %v1779 = vmul.f32 %v1775, %v1743
      %v1780 = vsub.f32 0.0, %v1724
      %v1781 = vsub.f32 0.0, %v1725
      %v1782 = vsub.f32 0.0, %v1726
      %v1783 = vsub.f32 0.0, %v1727
      %v1784 = vmul.f32 %v1780, %v1724
      %v1785 = vmul.f32 %v1781, %v1725
      %v1786 = vmul.f32 %v1782, %v1726
      %v1787 = vmul.f32 %v1783, %v1727
      %v1788 = vmul.f32 %v1784, 1.442695
      %v1789 = vpow.pop %v1788
      %v1790 = vmul.f32 %v1785, 1.442695
      %v1791 = vpow.pop %v1790
      %v1792 = vmul.f32 %v1786, 1.442695
      %v1793 = vpow.pop %v1792
      %v1794 = vmul.f32 %v1787, 1.442695
      %v1795 = vpow.pop %v1794
      %v1796 = vmul.f32 %v1776, %v1789
      %v1797 = vmul.f32 %v1777, %v1791
      %v1798 = vmul.f32 %v1778, %v1793
      %v1799 = vmul.f32 %v1779, %v1795
      %v1800 = vsub.f32 1.0, %v1796
      %v1801 = vsub.f32 1.0, %v1797
      %v1802 = vsub.f32 1.0, %v1798
      %v1803 = vsub.f32 1.0, %v1799
      %v1804 = vmul.f32 %v1720, %v1800
      %v1805 = vmul.f32 %v1721, %v1801
      %v1806 = vmul.f32 %v1722, %v1802
      %v1807 = vmul.f32 %v1723, %v1803
      %v1808 = vadd.f32 %v1804, 1.0
      %v1809 = vadd.f32 %v1805, 1.0
      %v1810 = vadd.f32 %v1806, 1.0
      %v1811 = vadd.f32 %v1807, 1.0
      %v1812 = vmul.f32 %v1708, %v1808
      %v1813 = vmul.f32 %v1709, %v1809
      %v1814 = vmul.f32 %v1710, %v1810
      %v1815 = vmul.f32 %v1711, %v1811
      %v1816 = vpack.c.bf16 %v1812, %v1812
      %v1817 = vpack.c.bf16 %v1813, %v1813
      %v1818 = vpack.c.bf16 %v1814, %v1814
      %v1819 = vpack.c.bf16 %v1815, %v1815
      %v1820 = vld [vmem:[%s11] sm:$0xf]
      %v1821 = vld [vmem:[%s11 + $0x4] sm:$0xf]
      %v1822 = vld [vmem:[%s11 + $0x8] sm:$0xf]
      %v1823 = vld [vmem:[%s11 + $0xc] sm:$0xf]
      %v1824 = vld [vmem:[%s11 + $0x10] sm:$0xf]
      %v1825 = vld [vmem:[%s11 + $0x14] sm:$0xf]
      %v1826 = vld [vmem:[%s11 + $0x18] sm:$0xf]
      %v1827 = vld [vmem:[%s11 + $0x1c] sm:$0xf]
      %v1828 = vld [vmem:[%s11 + $0x20] sm:$0xf]
      %v1829 = vld [vmem:[%s11 + $0x24] sm:$0xf]
      %v1830 = vld [vmem:[%s11 + $0x28] sm:$0xf]
      %v1831 = vld [vmem:[%s11 + $0x2c] sm:$0xf]
      %v1832 = vld [vmem:[%s11 + $0x30] sm:$0xf]
      %v1833 = vld [vmem:[%s11 + $0x34] sm:$0xf]
      %v1834 = vld [vmem:[%s11 + $0x38] sm:$0xf]
      %v1835 = vld [vmem:[%s11 + $0x3c] sm:$0xf]
      %v1836 = vld [vmem:[%s11 + $0x40] sm:$0xf]
      %v1837 = vld [vmem:[%s11 + $0x44] sm:$0xf]
      %v1838 = vld [vmem:[%s11 + $0x48] sm:$0xf]
      %v1839 = vld [vmem:[%s11 + $0x4c] sm:$0xf]
      %v1840 = vld [vmem:[%s11 + $0x50] sm:$0xf]
      %v1841 = vld [vmem:[%s11 + $0x54] sm:$0xf]
      %v1842 = vld [vmem:[%s11 + $0x58] sm:$0xf]
      %v1843 = vld [vmem:[%s11 + $0x5c] sm:$0xf]
      %v1844 = vld [vmem:[%s11 + $0x60] sm:$0xf]
      %v1845 = vld [vmem:[%s11 + $0x64] sm:$0xf]
      %v1846 = vld [vmem:[%s11 + $0x68] sm:$0xf]
      %v1847 = vld [vmem:[%s11 + $0x6c] sm:$0xf]
      %v1848 = vld [vmem:[%s11 + $0x70] sm:$0xf]
      %v1849 = vld [vmem:[%s11 + $0x74] sm:$0xf]
      %v1850 = vld [vmem:[%s11 + $0x78] sm:$0xf]
      %v1851 = vld [vmem:[%s11 + $0x7c] sm:$0xf]
      %v1852 = vld [vmem:[%s11 + $0x80] sm:$0xf]
      %v1853 = vld [vmem:[%s11 + $0x84] sm:$0xf]
      %v1854 = vld [vmem:[%s11 + $0x88] sm:$0xf]
      %v1855 = vld [vmem:[%s11 + $0x8c] sm:$0xf]
      %v1856 = vld [vmem:[%s11 + $0x90] sm:$0xf]
      %v1857 = vld [vmem:[%s11 + $0x94] sm:$0xf]
      %v1858 = vld [vmem:[%s11 + $0x98] sm:$0xf]
      %v1859 = vld [vmem:[%s11 + $0x9c] sm:$0xf]
      %v1860 = vld [vmem:[%s11 + $0xa0] sm:$0xf]
      %v1861 = vld [vmem:[%s11 + $0xa4] sm:$0xf]
      %v1862 = vld [vmem:[%s11 + $0xa8] sm:$0xf]
      %v1863 = vld [vmem:[%s11 + $0xac] sm:$0xf]
      %v1864 = vld [vmem:[%s11 + $0xb0] sm:$0xf]
      %v1865 = vld [vmem:[%s11 + $0xb4] sm:$0xf]
      %v1866 = vld [vmem:[%s11 + $0xb8] sm:$0xf]
      %v1867 = vld [vmem:[%s11 + $0xbc] sm:$0xf]
      %v1868 = vld [vmem:[%s11 + $0xc0] sm:$0xf]
      %v1869 = vld [vmem:[%s11 + $0xc4] sm:$0xf]
      %v1870 = vld [vmem:[%s11 + $0xc8] sm:$0xf]
      %v1871 = vld [vmem:[%s11 + $0xcc] sm:$0xf]
      %v1872 = vld [vmem:[%s11 + $0xd0] sm:$0xf]
      %v1873 = vld [vmem:[%s11 + $0xd4] sm:$0xf]
      %v1874 = vld [vmem:[%s11 + $0xd8] sm:$0xf]
      %v1875 = vld [vmem:[%s11 + $0xdc] sm:$0xf]
      %v1876 = vld [vmem:[%s11 + $0xe0] sm:$0xf]
      %v1877 = vld [vmem:[%s11 + $0xe4] sm:$0xf]
      %v1878 = vld [vmem:[%s11 + $0xe8] sm:$0xf]
      %v1879 = vld [vmem:[%s11 + $0xec] sm:$0xf]
      %v1880 = vld [vmem:[%s11 + $0xf0] sm:$0xf]
      %v1881 = vld [vmem:[%s11 + $0xf4] sm:$0xf]
      %v1882 = vld [vmem:[%s11 + $0xf8] sm:$0xf]
      %v1883 = vld [vmem:[%s11 + $0xfc] sm:$0xf]
      %v1948 = vunpack.c.l.b16 %v1820
      %v1949 = vunpack.c.l.b16 %v1821
      %v1950 = vunpack.c.l.b16 %v1822
      %v1951 = vunpack.c.l.b16 %v1823
      %v1952 = vunpack.c.l.b16 %v1824
      %v1953 = vunpack.c.l.b16 %v1825
      %v1954 = vunpack.c.l.b16 %v1826
      %v1955 = vunpack.c.l.b16 %v1827
      %v1956 = vunpack.c.l.b16 %v1828
      %v1957 = vunpack.c.l.b16 %v1829
      %v1958 = vunpack.c.l.b16 %v1830
      %v1959 = vunpack.c.l.b16 %v1831
      %v1960 = vunpack.c.l.b16 %v1832
      %v1961 = vunpack.c.l.b16 %v1833
      %v1962 = vunpack.c.l.b16 %v1834
      %v1963 = vunpack.c.l.b16 %v1835
      %v1964 = vunpack.c.l.b16 %v1836
      %v1965 = vunpack.c.l.b16 %v1837
      %v1966 = vunpack.c.l.b16 %v1838
      %v1967 = vunpack.c.l.b16 %v1839
      %v1968 = vunpack.c.l.b16 %v1840
      %v1969 = vunpack.c.l.b16 %v1841
      %v1970 = vunpack.c.l.b16 %v1842
      %v1971 = vunpack.c.l.b16 %v1843
      %v1972 = vunpack.c.l.b16 %v1844
      %v1973 = vunpack.c.l.b16 %v1845
      %v1974 = vunpack.c.l.b16 %v1846
      %v1975 = vunpack.c.l.b16 %v1847
      %v1976 = vunpack.c.l.b16 %v1848
      %v1977 = vunpack.c.l.b16 %v1849
      %v1978 = vunpack.c.l.b16 %v1850
      %v1979 = vunpack.c.l.b16 %v1851
      %v1980 = vunpack.c.l.b16 %v1852
      %v1981 = vunpack.c.l.b16 %v1853
      %v1982 = vunpack.c.l.b16 %v1854
      %v1983 = vunpack.c.l.b16 %v1855
      %v1984 = vunpack.c.l.b16 %v1856
      %v1985 = vunpack.c.l.b16 %v1857
      %v1986 = vunpack.c.l.b16 %v1858
      %v1987 = vunpack.c.l.b16 %v1859
      %v1988 = vunpack.c.l.b16 %v1860
      %v1989 = vunpack.c.l.b16 %v1861
      %v1990 = vunpack.c.l.b16 %v1862
      %v1991 = vunpack.c.l.b16 %v1863
      %v1992 = vunpack.c.l.b16 %v1864
      %v1993 = vunpack.c.l.b16 %v1865
      %v1994 = vunpack.c.l.b16 %v1866
      %v1995 = vunpack.c.l.b16 %v1867
      %v1996 = vunpack.c.l.b16 %v1868
      %v1997 = vunpack.c.l.b16 %v1869
      %v1998 = vunpack.c.l.b16 %v1870
      %v1999 = vunpack.c.l.b16 %v1871
      %v2000 = vunpack.c.l.b16 %v1872
      %v2001 = vunpack.c.l.b16 %v1873
      %v2002 = vunpack.c.l.b16 %v1874
      %v2003 = vunpack.c.l.b16 %v1875
      %v2004 = vunpack.c.l.b16 %v1876
      %v2005 = vunpack.c.l.b16 %v1877
      %v2006 = vunpack.c.l.b16 %v1878
      %v2007 = vunpack.c.l.b16 %v1879
      %v2008 = vunpack.c.l.b16 %v1880
      %v2009 = vunpack.c.l.b16 %v1881
      %v2010 = vunpack.c.l.b16 %v1882
      %v2011 = vunpack.c.l.b16 %v1883
      %v2012 = vpack.c.b16 %v1949, %v1948
      %v2013 = vpack.c.b16 %v1951, %v1950
      %v2014 = vpack.c.b16 %v1953, %v1952
      %v2015 = vpack.c.b16 %v1955, %v1954
      %v2016 = vpack.c.b16 %v1957, %v1956
      %v2017 = vpack.c.b16 %v1959, %v1958
      %v2018 = vpack.c.b16 %v1961, %v1960
      %v2019 = vpack.c.b16 %v1963, %v1962
      %v2020 = vpack.c.b16 %v1965, %v1964
      %v2021 = vpack.c.b16 %v1967, %v1966
      %v2022 = vpack.c.b16 %v1969, %v1968
      %v2023 = vpack.c.b16 %v1971, %v1970
      %v2024 = vpack.c.b16 %v1973, %v1972
      %v2025 = vpack.c.b16 %v1975, %v1974
      %v2026 = vpack.c.b16 %v1977, %v1976
      %v2027 = vpack.c.b16 %v1979, %v1978
      %v2028 = vpack.c.b16 %v1981, %v1980
      %v2029 = vpack.c.b16 %v1983, %v1982
      %v2030 = vpack.c.b16 %v1985, %v1984
      %v2031 = vpack.c.b16 %v1987, %v1986
      %v2032 = vpack.c.b16 %v1989, %v1988
      %v2033 = vpack.c.b16 %v1991, %v1990
      %v2034 = vpack.c.b16 %v1993, %v1992
      %v2035 = vpack.c.b16 %v1995, %v1994
      %v2036 = vpack.c.b16 %v1997, %v1996
      %v2037 = vpack.c.b16 %v1999, %v1998
      %v2038 = vpack.c.b16 %v2001, %v2000
      %v2039 = vpack.c.b16 %v2003, %v2002
      %v2040 = vpack.c.b16 %v2005, %v2004
      %v2041 = vpack.c.b16 %v2007, %v2006
      %v2042 = vpack.c.b16 %v2009, %v2008
      %v2043 = vpack.c.b16 %v2011, %v2010
      %2076 = vmatprep.subr.bf16.mxu0 0
      %2077 = vmatpush1.bf16.msra.mxu0 %v2012
      %2078 = vmatprep.subr.bf16.mxu0 0
      %2079 = vmatpush1.bf16.msra.mxu0 %v2013
      %2080 = vmatprep.subr.bf16.mxu0 0
      %2081 = vmatpush1.bf16.msra.mxu0 %v2014
      %2082 = vmatprep.subr.bf16.mxu0 0
      %2083 = vmatpush1.bf16.msra.mxu0 %v2015
      %2084 = vmatprep.subr.bf16.mxu0 0
      %2085 = vmatpush1.bf16.msra.mxu0 %v2016
      %2086 = vmatprep.subr.bf16.mxu0 0
      %2087 = vmatpush1.bf16.msra.mxu0 %v2017
      %2088 = vmatprep.subr.bf16.mxu0 0
      %2089 = vmatpush1.bf16.msra.mxu0 %v2018
      %2090 = vmatprep.subr.bf16.mxu0 0
      %2091 = vmatpush1.bf16.msra.mxu0 %v2019
      %2092 = vmatprep.subr.bf16.mxu0 0
      %2093 = vmatpush1.bf16.msra.mxu0 %v2020
      %2094 = vmatprep.subr.bf16.mxu0 0
      %2095 = vmatpush1.bf16.msra.mxu0 %v2021
      %2096 = vmatprep.subr.bf16.mxu0 0
      %2097 = vmatpush1.bf16.msra.mxu0 %v2022
      %2098 = vmatprep.subr.bf16.mxu0 0
      %2099 = vmatpush1.bf16.msra.mxu0 %v2023
      %2100 = vmatprep.subr.bf16.mxu0 0
      %2101 = vmatpush1.bf16.msra.mxu0 %v2024
      %2102 = vmatprep.subr.bf16.mxu0 0
      %2103 = vmatpush1.bf16.msra.mxu0 %v2025
      %2104 = vmatprep.subr.bf16.mxu0 0
      %2105 = vmatpush1.bf16.msra.mxu0 %v2026
      %2106 = vmatprep.subr.bf16.mxu0 0
      %2107 = vmatpush1.bf16.msra.mxu0 %v2027
      %2108 = vmatprep.mubr.bf16.mxu0 %v1817
      %2109 = vmatmul.mubr.bf16.gmra.mrb[0].mxu0 %v1816
      %v2110 = vpop.f32.mrb[0].mxu0
      %v2111 = vadd.f32 0.0, %v2110
      %v2112 = vpop.f32.mrb[0].mxu0
      %v2113 = vpop.f32.mrb[0].mxu0
      %v2114 = vpop.f32.mrb[0].mxu0
      %2115 = vdwg.mxu0
      %2116 = vmatprep.subr.bf16.mxu0 0
      %2117 = vmatpush1.bf16.msra.mxu0 %v2028
      %2118 = vmatprep.subr.bf16.mxu0 0
      %2119 = vmatpush1.bf16.msra.mxu0 %v2029
      %2120 = vmatprep.subr.bf16.mxu0 0
      %2121 = vmatpush1.bf16.msra.mxu0 %v2030
      %2122 = vmatprep.subr.bf16.mxu0 0
      %2123 = vmatpush1.bf16.msra.mxu0 %v2031
      %2124 = vmatprep.subr.bf16.mxu0 0
      %2125 = vmatpush1.bf16.msra.mxu0 %v2032
      %2126 = vmatprep.subr.bf16.mxu0 0
      %2127 = vmatpush1.bf16.msra.mxu0 %v2033
      %2128 = vmatprep.subr.bf16.mxu0 0
      %2129 = vmatpush1.bf16.msra.mxu0 %v2034
      %2130 = vmatprep.subr.bf16.mxu0 0
      %2131 = vmatpush1.bf16.msra.mxu0 %v2035
      %2132 = vmatprep.subr.bf16.mxu0 0
      %2133 = vmatpush1.bf16.msra.mxu0 %v2036
      %2134 = vmatprep.subr.bf16.mxu0 0
      %2135 = vmatpush1.bf16.msra.mxu0 %v2037
      %2136 = vmatprep.subr.bf16.mxu0 0
      %2137 = vmatpush1.bf16.msra.mxu0 %v2038
      %2138 = vmatprep.subr.bf16.mxu0 0
      %2139 = vmatpush1.bf16.msra.mxu0 %v2039
      %2140 = vmatprep.subr.bf16.mxu0 0
      %2141 = vmatpush1.bf16.msra.mxu0 %v2040
      %2142 = vmatprep.subr.bf16.mxu0 0
      %2143 = vmatpush1.bf16.msra.mxu0 %v2041
      %2144 = vmatprep.subr.bf16.mxu0 0
      %2145 = vmatpush1.bf16.msra.mxu0 %v2042
      %2146 = vmatprep.subr.bf16.mxu0 0
      %2147 = vmatpush1.bf16.msra.mxu0 %v2043
      %2148 = vmatprep.mubr.bf16.mxu0 %v1819
      %2149 = vmatmul.mubr.bf16.gmra.mrb[0].mxu0 %v1818
      %v2150 = vpop.f32.mrb[0].mxu0
      %v2151 = vadd.f32 %v2111, %v2150
      %v2152 = vpop.f32.mrb[0].mxu0
      %v2153 = vpop.f32.mrb[0].mxu0
      %v2154 = vpop.f32.mrb[0].mxu0
      %2155 = vdwg.mxu0
      %v2156 = vadd.f32 %v1381, %v2151
      %v2157 = vld [vmem:[%s12] sm:$0x1]
      %v2159 = vlaneseq
      %v2160 = vshrl.u32 %v2159, 7
      %v2161 = vsub.s32 0, %v2160
      %v2162 = vrot.slane %v2157, %v2161
      %v2164 = vadd.f32 %v2156, %v2162
      %2165 = vst [vmem:[%s435] sm:$0x1f] %v2164
      %p2166 = scmp.lt.s32.totalorder %s24, 1
      %s2167 = scalar_select %p2166, %s24, 1
      %s2168 = smul.addr %s2167, 8
      %s2169 = scalar_lea.vmem %s13, %s2168
      // Predicated region
      $region73: #{img_text_model_forward.8} parent=71 // pred_check
        %p2170 = pneg %p320
      $region74: #{img_text_model_forward.8} parent=71 // pred_check_branch
        %2172 = sbr.rel (%p2170) target = $region76
      $region75: #{img_text_model_forward.8} parent=71 // pred_region
        _
      $region76: #{img_text_model_forward.8} parent=71 // pred_fallthru
        _
    $region72: #{img_text_model_forward.8} parent=5 // pred_fallthru
      _
    %p2173 = scmp.le.s32.totalorder 2, %s19
    // Predicated region
    $region77: #{img_text_model_forward.8} parent=5 // pred_check
      %p2174 = pneg %p2173
    $region78: #{img_text_model_forward.8} parent=5 // pred_check_branch
      %2176 = sbr.rel (%p2174) target = $region80
    $region79: #{img_text_model_forward.8} parent=5 // pred_region
      %s2177 = ssub.s32 %s19, 2
      // Predicated region
      $region81: #{img_text_model_forward.8} parent=79 // pred_check
        %p2178 = pneg %p326
      $region82: #{img_text_model_forward.8} parent=79 // pred_check_branch
        %2180 = sbr.rel (%p2178) target = $region84
      $region83: #{img_text_model_forward.8} parent=79 // pred_region
        %p2181 = scmp.lt.s32.totalorder %s25, 1
        %s2182 = scalar_select %p2181, %s25, 1
        %s2183 = smul.addr %s2182, 8
        %s2184 = scalar_lea.vmem %s13, %s2183
      $region84: #{img_text_model_forward.8} parent=79 // pred_fallthru
        _
    $region80: #{img_text_model_forward.8} parent=5 // pred_fallthru
      _
  $region6: #{img_text_model_forward.8} parent=0 // loop_footer
    %s23 = sadd.s32 1, %s19
  $region7: #{img_text_model_forward.8} parent=0 // loop_footer_branch
    %18 = sbr.rel target = $region3
  $region8: #{img_text_model_forward.8} parent=0 // loop_exit
    _

// kernel: img_text_model_forward.13
$region0: #{img_text_model_forward.13}
  #allocation0 [shape = 'u32[]', space=smem, size = 0x4, offset = 0x4, fixed_abs, tag = 'smem constant byte address 0x4 - core index']
  #allocation1 [shape = 'u32[144,128]{1,0:T(1,128)}', space=vmem, size = 0x12000, scoped, tag = 'internal scratch']
  #allocation2 [shape = 'bf16[8,128]{1,0:T(8,128)(2,1)}', space=vmem, size = 0x800, scoped, tag = 'scratch operand']
  %s0 = inlined_call_operand.vmem [shape: f32[2,12,128], index: 0, kind: input, shape index: {}]
  %s1 = inlined_call_operand.vmem [shape: f32[1,128], index: 1, kind: input, shape index: {}]
  %s2 = inlined_call_operand.vmem [shape: f32[1,128], index: 2, kind: input, shape index: {}]
  %s3 = inlined_call_operand.vmem [shape: bf16[128,256], index: 3, kind: input, shape index: {}]
  %s4 = inlined_call_operand.hbm [shape: f32[2,8,256], index: 4, kind: output, shape index: {}]
  %s5 = sld [smem:[#allocation0]]
  $region53: #{img_text_model_forward.13} parent=0
    _
  %s7 = ssub.s32 1, %s5
  %s8 = scalar_select 0, %s7, %s5
  $region1: #{img_text_model_forward.13} parent=0
    #allocation3 [shape = 'u8[16384]{0}', space=vmem, size = 0x4000, scoped, tag = 'output window, operand 0']
    #allocation4 [shape = 's32[2]{0}', space=sflag, size = 0x8, scoped, tag = 'scoped memory for img_text_model_forward.13']
    %9 = vsyncpa [#allocation4], 0
    %s10 = scalar_lea.sflag [#allocation4], 1
    %11 = vsyncpa %s10, 0
    loop: start=0, step=1, limit=4
    $region2: #{img_text_model_forward.13} parent=1 // loop_pre_header
      _
    $region3: #{img_text_model_forward.13} parent=1 // loop_header
      %s13 = sphi 0, %s17
      %p14 = scmp.ge.s32.totalorder %s13, 4
      %s20 = sphi 0, %s32
      %s21 = sphi 0, %s28
      %s22 = sphi 0, %s20
      %s23 = sphi 0, %s21
      %s24 = sphi 0, %s22
      %s25 = sphi 0, %s23
      %s35 = sphi 0, %s37
      %s38 = sphi 0, %s35
      %s39 = sphi 0, %s38
      %s55 = sphi 0, %s39
      %s59 = sphi 0, %s59
      %s61 = sphi 0, %s59
      %s62 = sphi 0, %s61
      %s76 = sphi 0, %s62
      %s80 = sphi 0, %s80
      %s82 = sphi 0, %s80
      %s83 = sphi 0, %s82
      %s97 = sphi 0, %s83
      %s103 = sphi 0, %s105
      %s106 = sphi 0, %s103
      %s107 = sphi 0, %s106
      %s123 = sphi 0, %s107
      %s131 = sphi 0, %s133
      %s134 = sphi 0, %s131
      %s135 = sphi 0, %s134
      %s151 = sphi 0, %s135
    $region4: #{img_text_model_forward.13} parent=1 // loop_header_branch
      %16 = sbr.rel (%p14) target = $region8
    $region5: #{img_text_model_forward.13} parent=1 // loop_body
      %s18 = ssub.s32 %s13, 1
      %s19 = ssub.s32 %s13, 2
      %s26 = sadd.s32 1, %s21
      %p27 = scmp.ge.s32.totalorder %s26, 1
      %s28 = scalar_select %p27, 0, %s26
      %s29 = sadd.s32 1, %s20
      %s30 = scalar_select %p27, %s29, %s20
      %p31 = scmp.ge.s32.totalorder %s30, 2
      %s32 = scalar_select %p31, 0, %s30
      %s33 = ssub.s32 %s20, %s32
      %p34 = scmp.eq.s32.totalorder %s33, 0
      %s36 = sadd.s32 %s35, 1
      %s37 = scalar_select %p34, %s35, %s36
      %p40 = pneg %p34
      %p41 = scmp.eq.s32.totalorder %s13, 1
      %p42 = por %p40, %p41
      %p43 = scmp.ne.s32.totalorder %s35, %s38
      %p44 = scmp.eq.s32.totalorder %s13, 0
      %p45 = por %p43, %p44
      %p46 = scmp.ne.s32.totalorder %s35, %s38
      %p47 = scmp.eq.s32.totalorder %s18, 1
      %p48 = por %p46, %p47
      %p49 = scmp.ne.s32.totalorder %s38, %s39
      %p50 = scmp.eq.s32.totalorder %s18, 0
      %p51 = por %p49, %p50
      %p52 = scmp.ne.s32.totalorder %s38, %s39
      %p53 = scmp.eq.s32.totalorder %s19, 1
      %p54 = por %p52, %p53
      %p56 = scmp.ne.s32.totalorder %s39, %s55
      %p57 = scmp.eq.s32.totalorder %s19, 0
      %p58 = por %p56, %p57
      %s60 = sadd.s32 %s59, 1
      %p63 = scmp.eq.s32.totalorder %s13, 1
      %p64 = scmp.ne.s32.totalorder %s59, %s61
      %p65 = scmp.eq.s32.totalorder %s13, 0
      %p66 = por %p64, %p65
      %p67 = scmp.ne.s32.totalorder %s59, %s61
      %p68 = scmp.eq.s32.totalorder %s18, 1
      %p69 = por %p67, %p68
      %p70 = scmp.ne.s32.totalorder %s61, %s62
      %p71 = scmp.eq.s32.totalorder %s18, 0
      %p72 = por %p70, %p71
      %p73 = scmp.ne.s32.totalorder %s61, %s62
      %p74 = scmp.eq.s32.totalorder %s19, 1
      %p75 = por %p73, %p74
      %p77 = scmp.ne.s32.totalorder %s62, %s76
      %p78 = scmp.eq.s32.totalorder %s19, 0
      %p79 = por %p77, %p78
      %s81 = sadd.s32 %s80, 1
      %p84 = scmp.eq.s32.totalorder %s13, 1
      %p85 = scmp.ne.s32.totalorder %s80, %s82
      %p86 = scmp.eq.s32.totalorder %s13, 0
      %p87 = por %p85, %p86
      %p88 = scmp.ne.s32.totalorder %s80, %s82
      %p89 = scmp.eq.s32.totalorder %s18, 1
      %p90 = por %p88, %p89
      %p91 = scmp.ne.s32.totalorder %s82, %s83
      %p92 = scmp.eq.s32.totalorder %s18, 0
      %p93 = por %p91, %p92
      %p94 = scmp.ne.s32.totalorder %s82, %s83
      %p95 = scmp.eq.s32.totalorder %s19, 1
      %p96 = por %p94, %p95
      %p98 = scmp.ne.s32.totalorder %s83, %s97
      %p99 = scmp.eq.s32.totalorder %s19, 0
      %p100 = por %p98, %p99
      %s101 = ssub.s32 %s21, %s28
      %p102 = scmp.eq.s32.totalorder %s101, 0
      %s104 = sadd.s32 %s103, 1
      %s105 = scalar_select %p102, %s103, %s104
      %p108 = pneg %p102
      %p109 = scmp.eq.s32.totalorder %s13, 1
      %p110 = por %p108, %p109
      %p111 = scmp.ne.s32.totalorder %s103, %s106
      %p112 = scmp.eq.s32.totalorder %s13, 0
      %p113 = por %p111, %p112
      %p114 = scmp.ne.s32.totalorder %s103, %s106
      %p115 = scmp.eq.s32.totalorder %s18, 1
      %p116 = por %p114, %p115
      %p117 = scmp.ne.s32.totalorder %s106, %s107
      %p118 = scmp.eq.s32.totalorder %s18, 0
      %p119 = por %p117, %p118
      %p120 = scmp.ne.s32.totalorder %s106, %s107
      %p121 = scmp.eq.s32.totalorder %s19, 1
      %p122 = por %p120, %p121
      %p124 = scmp.ne.s32.totalorder %s107, %s123
      %p125 = scmp.eq.s32.totalorder %s19, 0
      %p126 = por %p124, %p125
      %s127 = ssub.s32 %s20, %s32
      %s128 = ssub.s32 %s21, %s28
      %s129 = sor.u32 %s127, %s128
      %p130 = scmp.eq.s32.totalorder %s129, 0
      %s132 = sadd.s32 %s131, 1
      %s133 = scalar_select %p130, %s131, %s132
      %p136 = pneg %p130
      %p137 = scmp.eq.s32.totalorder %s13, 1
      %p138 = por %p136, %p137
      %p139 = scmp.ne.s32.totalorder %s131, %s134
      %p140 = scmp.eq.s32.totalorder %s13, 0
      %p141 = por %p139, %p140
      %p142 = scmp.ne.s32.totalorder %s131, %s134
      %p143 = scmp.eq.s32.totalorder %s18, 1
      %p144 = por %p142, %p143
      %p145 = scmp.ne.s32.totalorder %s134, %s135
      %p146 = scmp.eq.s32.totalorder %s18, 0
      %p147 = por %p145, %p146
      %p148 = scmp.ne.s32.totalorder %s134, %s135
      %p149 = scmp.eq.s32.totalorder %s19, 1
      %p150 = por %p148, %p149
      %p152 = scmp.ne.s32.totalorder %s135, %s151
      %p153 = scmp.eq.s32.totalorder %s19, 0
      %p154 = por %p152, %p153
      %p155 = scmp.le.s32.totalorder 1, %s13
      %p156 = scmp.lt.s32.totalorder %s13, 3
      %p157 = pnand %p155, %p156
      %p158 = pneg %p157
      // Predicated region
      $region9: #{img_text_model_forward.13} parent=5 // pred_check
        _
      $region10: #{img_text_model_forward.13} parent=5 // pred_check_branch
        %160 = sbr.rel (%p157) target = $region12
      $region11: #{img_text_model_forward.13} parent=5 // pred_region
        %s161 = ssub.s32 %s13, 1
        // Predicated region
        $region13: #{img_text_model_forward.13} parent=11 // pred_check
          %p162 = pneg %p72
        $region14: #{img_text_model_forward.13} parent=11 // pred_check_branch
          %164 = sbr.rel (%p162) target = $region16
        $region15: #{img_text_model_forward.13} parent=11 // pred_region
          _
        $region16: #{img_text_model_forward.13} parent=11 // pred_fallthru
          _
        // Predicated region
        $region17: #{img_text_model_forward.13} parent=11 // pred_check
          %p165 = pneg %p93
        $region18: #{img_text_model_forward.13} parent=11 // pred_check_branch
          %167 = sbr.rel (%p165) target = $region20
        $region19: #{img_text_model_forward.13} parent=11 // pred_region
          _
        $region20: #{img_text_model_forward.13} parent=11 // pred_fallthru
          _
        // Predicated region
        $region21: #{img_text_model_forward.13} parent=11 // pred_check
          %p168 = pneg %p119
        $region22: #{img_text_model_forward.13} parent=11 // pred_check_branch
          %170 = sbr.rel (%p168) target = $region24
        $region23: #{img_text_model_forward.13} parent=11 // pred_region
          %s171 = smul.u32 2, %s23
          %p172 = scmp.lt.s32.totalorder %s171, 1
          %s173 = scalar_select %p172, %s171, 1
          %s174 = smul.addr %s173, 4
          %s175 = scalar_lea.vmem %s3, %s174
          %s176 = smul.u32 2, %s23
        $region24: #{img_text_model_forward.13} parent=11 // pred_fallthru
          _
      $region12: #{img_text_model_forward.13} parent=5 // pred_fallthru
        _
      %p177 = scmp.lt.s32.totalorder %s13, 2
      // Predicated region
      $region25: #{img_text_model_forward.13} parent=5 // pred_check
        %p178 = pneg %p177
      $region26: #{img_text_model_forward.13} parent=5 // pred_check_branch
        %180 = sbr.rel (%p178) target = $region28
      $region27: #{img_text_model_forward.13} parent=5 // pred_region
        // Predicated region
        $region29: #{img_text_model_forward.13} parent=27 // pred_check
          %p181 = pneg %p45
        $region30: #{img_text_model_forward.13} parent=27 // pred_check_branch
          %183 = sbr.rel (%p181) target = $region32
        $region31: #{img_text_model_forward.13} parent=27 // pred_region
          %p184 = scmp.lt.s32.totalorder %s20, 1
          %s185 = scalar_select %p184, %s20, 1
          %s186 = smul.addr %s185, 2
          %s187 = smul.addr %s186, 8
          %s188 = scalar_lea.vmem %s0, %s187
        $region32: #{img_text_model_forward.13} parent=27 // pred_fallthru
          _
      $region28: #{img_text_model_forward.13} parent=5 // pred_fallthru
        _
      %p189 = scmp.le.s32.totalorder 1, %s13
      %p190 = scmp.lt.s32.totalorder %s13, 3
      %p191 = pnand %p189, %p190
      %p192 = pneg %p191
      // Predicated region
      $region33: #{img_text_model_forward.13} parent=5 // pred_check
        _
      $region34: #{img_text_model_forward.13} parent=5 // pred_check_branch
        %194 = sbr.rel (%p191) target = $region36
      $region35: #{img_text_model_forward.13} parent=5 // pred_region
        %s195 = ssub.s32 %s13, 1
        %p196 = scmp.lt.s32.totalorder %s22, 1
        %s197 = scalar_select %p196, %s22, 1
        %s198 = smul.addr %s197, 2
        %s199 = smul.addr %s198, 8
        %s200 = scalar_lea.vmem %s0, %s199
        %p201 = pneg %p51
        %p202 = pneg %p48
        %p203 = pneg %p72
        %p204 = pneg %p69
        %p205 = pneg %p93
        %p206 = pneg %p90
        %s207 = smul.u32 2, %s23
        %p208 = scmp.lt.s32.totalorder %s207, 1
        %s209 = scalar_select %p208, %s207, 1
        %s210 = smul.addr %s209, 4
        %s211 = scalar_lea.vmem %s3, %s210
        %p212 = pneg %p119
        %p213 = pneg %p116
        %p214 = pneg %p147
        %p215 = pneg %p144
        %s216 = sand.u32 %s134, 1
        %s217 = scalar_lea.sflag [#allocation4], %s216
        %s218 = sand.u32 %s134, 1
        %s219 = smul.addr %s218, 16
        %s220 = scalar_lea.vmem [#allocation3], %s219
        %p221 = scmp.lt.s32.totalorder %s22, 1
        %s222 = scalar_select %p221, %s22, 1
        %s223 = smul.addr %s222, 2
        %s224 = smul.addr %s223, 8
        %s225 = scalar_lea.vmem %s0, %s224
        %s226 = smul.u32 2, %s23
        %p227 = scmp.lt.s32.totalorder %s226, 1
        %s228 = scalar_select %p227, %s226, 1
        %s229 = smul.addr %s228, 4
        %s230 = scalar_lea.vmem %s3, %s229
        %s231 = smul.u32 2, %s23
        %s232 = smul.u32 2, %s23
        %p234 = scmp.eq.s32.totalorder %s23, 0
        // Predicated region
        $region37: #{img_text_model_forward.13} parent=35 // pred_check
          %p235 = pneg %p234
        $region38: #{img_text_model_forward.13} parent=35 // pred_check_branch
          %237 = sbr.rel (%p235) target = $region40
        $region39: #{img_text_model_forward.13} parent=35 // pred_region
          %v238 = vld [vmem:[%s225 + $0x4] sm:$0xff]
          %v239 = vld [vmem:[%s1] sm:$0x1]
          %v240 = vld [vmem:[%s2] sm:$0x1]
          %241 = vadd.xlane.f32.xlu0 %v238
          %v242 = vpop.xlane.xlu0 %241
          %v243 = vrcp.pop 128.0
          %v244 = vmul.f32 %v242, %v243
          %v245 = vsub.f32 %v238, %v244
          %v246 = vmul.f32 %v245, %v245
          %247 = vadd.xlane.f32.xlu0 %v246
          %v248 = vpop.xlane.xlu0 %247
          %v249 = vmul.f32 %v248, %v243
          %v250 = vadd.f32 %v249, 1e-05
          %v251 = vrsqrt.pop %v250
          %v252 = vmul.f32 %v245, %v251
          %v254 = vlaneseq
          %v255 = vshrl.u32 %v254, 7
          %v256 = vsub.s32 0, %v255
          %v257 = vrot.slane %v239, %v256
          %v259 = vmul.f32 %v252, %v257
          %v261 = vlaneseq
          %v262 = vshrl.u32 %v261, 7
          %v263 = vsub.s32 0, %v262
          %v264 = vrot.slane %v240, %v263
          %v266 = vadd.f32 %v259, %v264
          %v267 = vpack.c.bf16 %v266, %v266
          %268 = vst [vmem:[#allocation2] sm:$0xf] %v267
        $region40: #{img_text_model_forward.13} parent=35 // pred_fallthru
          _
        %v269 = vld [vmem:[#allocation2] sm:$0xf]
        %v270 = vld [vmem:[%s230] sm:$0xff]
        %v271 = vld [vmem:[%s230 + $0x8] sm:$0xff]
        %v272 = vld [vmem:[%s230 + $0x10] sm:$0xff]
        %v273 = vld [vmem:[%s230 + $0x18] sm:$0xff]
        %v274 = vld [vmem:[%s230 + $0x20] sm:$0xff]
        %v275 = vld [vmem:[%s230 + $0x28] sm:$0xff]
        %v276 = vld [vmem:[%s230 + $0x30] sm:$0xff]
        %v277 = vld [vmem:[%s230 + $0x38] sm:$0xff]
        %v278 = vld [vmem:[%s230 + $0x40] sm:$0xff]
        %v279 = vld [vmem:[%s230 + $0x48] sm:$0xff]
        %v280 = vld [vmem:[%s230 + $0x50] sm:$0xff]
        %v281 = vld [vmem:[%s230 + $0x58] sm:$0xff]
        %v282 = vld [vmem:[%s230 + $0x60] sm:$0xff]
        %v283 = vld [vmem:[%s230 + $0x68] sm:$0xff]
        %v284 = vld [vmem:[%s230 + $0x70] sm:$0xff]
        %v285 = vld [vmem:[%s230 + $0x78] sm:$0xff]
        %v302 = vunpack.c.l.b16 %v270
        %v303 = vunpack.c.h.b16 %v270
        %v304 = vunpack.c.l.b16 %v271
        %v305 = vunpack.c.h.b16 %v271
        %v306 = vunpack.c.l.b16 %v272
        %v307 = vunpack.c.h.b16 %v272
        %v308 = vunpack.c.l.b16 %v273
        %v309 = vunpack.c.h.b16 %v273
        %v310 = vunpack.c.l.b16 %v274
        %v311 = vunpack.c.h.b16 %v274
        %v312 = vunpack.c.l.b16 %v275
        %v313 = vunpack.c.h.b16 %v275
        %v314 = vunpack.c.l.b16 %v276
        %v315 = vunpack.c.h.b16 %v276
        %v316 = vunpack.c.l.b16 %v277
        %v317 = vunpack.c.h.b16 %v277
        %v318 = vunpack.c.l.b16 %v278
        %v319 = vunpack.c.h.b16 %v278
        %v320 = vunpack.c.l.b16 %v279
        %v321 = vunpack.c.h.b16 %v279
        %v322 = vunpack.c.l.b16 %v280
        %v323 = vunpack.c.h.b16 %v280
        %v324 = vunpack.c.l.b16 %v281
        %v325 = vunpack.c.h.b16 %v281
        %v326 = vunpack.c.l.b16 %v282
        %v327 = vunpack.c.h.b16 %v282
        %v328 = vunpack.c.l.b16 %v283
        %v329 = vunpack.c.h.b16 %v283
        %v330 = vunpack.c.l.b16 %v284
        %v331 = vunpack.c.h.b16 %v284
        %v332 = vunpack.c.l.b16 %v285
        %v333 = vunpack.c.h.b16 %v285
        %v334 = vpack.c.b16 %v304, %v302
        %v335 = vpack.c.b16 %v305, %v303
        %v336 = vpack.c.b16 %v308, %v306
        %v337 = vpack.c.b16 %v309, %v307
        %v338 = vpack.c.b16 %v312, %v310
        %v339 = vpack.c.b16 %v313, %v311
        %v340 = vpack.c.b16 %v316, %v314
        %v341 = vpack.c.b16 %v317, %v315
        %v342 = vpack.c.b16 %v320, %v318
        %v343 = vpack.c.b16 %v321, %v319
        %v344 = vpack.c.b16 %v324, %v322
        %v345 = vpack.c.b16 %v325, %v323
        %v346 = vpack.c.b16 %v328, %v326
        %v347 = vpack.c.b16 %v329, %v327
        %v348 = vpack.c.b16 %v332, %v330
        %v349 = vpack.c.b16 %v333, %v331
        %366 = vmatprep.subr.bf16.mxu0 %v335
        %367 = vmatpush1.bf16.msra.mxu0 %v334
        %368 = vmatprep.subr.bf16.mxu0 %v337
        %369 = vmatpush1.bf16.msra.mxu0 %v336
        %370 = vmatprep.subr.bf16.mxu0 %v339
        %371 = vmatpush1.bf16.msra.mxu0 %v338
        %372 = vmatprep.subr.bf16.mxu0 %v341
        %373 = vmatpush1.bf16.msra.mxu0 %v340
        %374 = vmatprep.subr.bf16.mxu0 %v343
        %375 = vmatpush1.bf16.msra.mxu0 %v342
        %376 = vmatprep.subr.bf16.mxu0 %v345
        %377 = vmatpush1.bf16.msra.mxu0 %v344
        %378 = vmatprep.subr.bf16.mxu0 %v347
        %379 = vmatpush1.bf16.msra.mxu0 %v346
        %380 = vmatprep.subr.bf16.mxu0 %v349
        %381 = vmatpush1.bf16.msra.mxu0 %v348
        %382 = vmatprep.subr.bf16.mxu0 0
        %383 = vmatpush1.bf16.msra.mxu0 0
        %384 = vmatprep.subr.bf16.mxu0 0
        %385 = vmatpush1.bf16.msra.mxu0 0
        %386 = vmatprep.subr.bf16.mxu0 0
        %387 = vmatpush1.bf16.msra.mxu0 0
        %388 = vmatprep.subr.bf16.mxu0 0
        %389 = vmatpush1.bf16.msra.mxu0 0
        %390 = vmatprep.subr.bf16.mxu0 0
        %391 = vmatpush1.bf16.msra.mxu0 0
        %392 = vmatprep.subr.bf16.mxu0 0
        %393 = vmatpush1.bf16.msra.mxu0 0
        %394 = vmatprep.subr.bf16.mxu0 0
        %395 = vmatpush1.bf16.msra.mxu0 0
        %396 = vmatprep.subr.bf16.mxu0 0
        %397 = vmatpush1.bf16.msra.mxu0 0
        %398 = vmatprep.mubr.bf16.mxu0 0
        %399 = vmatmul.mubr.bf16.gmra.mrb[0].mxu0 %v269
        %v400 = vpop.f32.mrb[0].mxu0
        %v401 = vadd.f32 0.0, %v400
        %v402 = vpop.f32.mrb[0].mxu0
        %v403 = vadd.f32 0.0, %v402
        %v404 = vpop.f32.mrb[0].mxu0
        %v405 = vpop.f32.mrb[0].mxu0
        %406 = vdwg.mxu0
        %407 = vst [vmem:[%s220] sm:$0xff] %v401
        %408 = vst [vmem:[%s220 + $0x8] sm:$0xff] %v403
        %s409 = sand.u32 %s134, 1
        %s410 = scalar_lea.sflag [#allocation4], %s409
        %s411 = sand.u32 %s134, 1
        %s412 = smul.addr %s411, 16
        %s413 = scalar_lea.vmem [#allocation3], %s412
        // Predicated region
        $region41: #{img_text_model_forward.13} parent=35 // pred_check
          %p414 = pneg %p144
        $region42: #{img_text_model_forward.13} parent=35 // pred_check_branch
          %416 = sbr.rel (%p414) target = $region44
        $region43: #{img_text_model_forward.13} parent=35 // pred_region
          %s417 = smul.u32 2, %s23
          %s419 = ssub.s32 256, 256
          %420 = vsyncadd %s410, %s419
          %s421 = smul.addr %s22, 2
          %s422 = sadd.s32 %s417, %s421
          %s423 = smul.addr %s422, 128
          %s424 = scalar_lea.hbm %s4, %s423
          %s426 = sshll.u32 %s413, 4
          %s427 = int_to_ptr.vmem [resolvable:$true] %s426
          %429 = dma.vmem_to_hbm [thread:$0]  %s427, 256, %s424, %s410
        $region44: #{img_text_model_forward.13} parent=35 // pred_fallthru
          _
      $region36: #{img_text_model_forward.13} parent=5 // pred_fallthru
        _
      %p430 = scmp.le.s32.totalorder 2, %s13
      // Predicated region
      $region45: #{img_text_model_forward.13} parent=5 // pred_check
        %p431 = pneg %p430
      $region46: #{img_text_model_forward.13} parent=5 // pred_check_branch
        %433 = sbr.rel (%p431) target = $region48
      $region47: #{img_text_model_forward.13} parent=5 // pred_region
        %s434 = ssub.s32 %s13, 2
        // Predicated region
        $region49: #{img_text_model_forward.13} parent=47 // pred_check
          %p435 = pneg %p150
        $region50: #{img_text_model_forward.13} parent=47 // pred_check_branch
          %437 = sbr.rel (%p435) target = $region52
        $region51: #{img_text_model_forward.13} parent=47 // pred_region
          %s438 = sand.u32 %s135, 1
          %s439 = scalar_lea.sflag [#allocation4], %s438
          %s440 = sand.u32 %s135, 1
          %s441 = smul.addr %s440, 16
          %s442 = scalar_lea.vmem [#allocation3], %s441
          %443 = dma.done %s439, 256
        $region52: #{img_text_model_forward.13} parent=47 // pred_fallthru
          _
      $region48: #{img_text_model_forward.13} parent=5 // pred_fallthru
        _
    $region6: #{img_text_model_forward.13} parent=1 // loop_footer
      %s17 = sadd.s32 1, %s13
    $region7: #{img_text_model_forward.13} parent=1 // loop_footer_branch
      %12 = sbr.rel target = $region3
    $region8: #{img_text_model_forward.13} parent=1 // loop_exit
      _
    %444 = vsyncpa [#allocation4], 1
    %s445 = scalar_lea.sflag [#allocation4], 1
    %446 = vsyncpa %s445, 1

// kernel: img_text_model_forward.11
$region0: #{img_text_model_forward.11}
  #allocation0 [shape = 'u32[]', space=smem, size = 0x4, offset = 0x4, fixed_abs, tag = 'smem constant byte address 0x4 - core index']
  #allocation1 [shape = 'u32[144,128]{1,0:T(1,128)}', space=vmem, size = 0x12000, scoped, tag = 'internal scratch']
  %s0 = inlined_call_operand.vmem [shape: f32[2,12,128], index: 0, kind: input, shape index: {}]
  %s1 = inlined_call_operand.vmem [shape: f32[1,128], index: 1, kind: input, shape index: {}]
  %s2 = inlined_call_operand.vmem [shape: f32[1,128], index: 2, kind: input, shape index: {}]
  %s3 = inlined_call_operand.vmem [shape: bf16[128,384], index: 3, kind: input, shape index: {}]
  %s4 = inlined_call_operand.vmem [shape: f32[1,384], index: 4, kind: input, shape index: {}]
  %s5 = inlined_call_operand.vmem [shape: bf16[128,128], index: 5, kind: input, shape index: {}]
  %s6 = inlined_call_operand.vmem [shape: f32[1,128], index: 6, kind: input, shape index: {}]
  %s7 = inlined_call_operand.vmem [shape: f32[1,128], index: 7, kind: input, shape index: {}]
  %s8 = inlined_call_operand.vmem [shape: f32[1,128], index: 8, kind: input, shape index: {}]
  %s9 = inlined_call_operand.vmem [shape: bf16[128,512], index: 9, kind: input, shape index: {}]
  %s10 = inlined_call_operand.vmem [shape: f32[1,512], index: 10, kind: input, shape index: {}]
  %s11 = inlined_call_operand.vmem [shape: bf16[512,128], index: 11, kind: input, shape index: {}]
  %s12 = inlined_call_operand.vmem [shape: f32[1,128], index: 12, kind: input, shape index: {}]
  %s13 = inlined_call_operand.vmem [shape: f32[2,12,128], index: 13, kind: output, shape index: {}]
  %s14 = sld [smem:[#allocation0]]
  $region85: #{img_text_model_forward.11} parent=0
    _
  %s16 = ssub.s32 1, %s14
  %s17 = scalar_select 0, %s16, %s14
  loop: start=0, step=1, limit=4
  $region2: #{img_text_model_forward.11} parent=0 // loop_pre_header
    _
  $region3: #{img_text_model_forward.11} parent=0 // loop_header
    %s19 = sphi 0, %s23
    %p20 = scmp.ge.s32.totalorder %s19, 4
    %s29 = sphi 0, %s31
    %s32 = sphi 0, %s29
    %s33 = sphi 0, %s32
    %s49 = sphi 0, %s33
    %s53 = sphi 0, %s53
    %s55 = sphi 0, %s53
    %s56 = sphi 0, %s55
    %s70 = sphi 0, %s56
    %s74 = sphi 0, %s74
    %s76 = sphi 0, %s74
    %s77 = sphi 0, %s76
    %s91 = sphi 0, %s77
    %s95 = sphi 0, %s95
    %s97 = sphi 0, %s95
    %s98 = sphi 0, %s97
    %s112 = sphi 0, %s98
    %s116 = sphi 0, %s116
    %s118 = sphi 0, %s116
    %s119 = sphi 0, %s118
    %s133 = sphi 0, %s119
    %s137 = sphi 0, %s137
    %s139 = sphi 0, %s137
    %s140 = sphi 0, %s139
    %s154 = sphi 0, %s140
    %s158 = sphi 0, %s158
    %s160 = sphi 0, %s158
    %s161 = sphi 0, %s160
    %s175 = sphi 0, %s161
    %s179 = sphi 0, %s179
    %s181 = sphi 0, %s179
    %s182 = sphi 0, %s181
    %s196 = sphi 0, %s182
    %s200 = sphi 0, %s200
    %s202 = sphi 0, %s200
    %s203 = sphi 0, %s202
    %s217 = sphi 0, %s203
    %s221 = sphi 0, %s221
    %s223 = sphi 0, %s221
    %s224 = sphi 0, %s223
    %s238 = sphi 0, %s224
    %s242 = sphi 0, %s242
    %s244 = sphi 0, %s242
    %s245 = sphi 0, %s244
    %s259 = sphi 0, %s245
    %s263 = sphi 0, %s263
    %s265 = sphi 0, %s263
    %s266 = sphi 0, %s265
    %s280 = sphi 0, %s266
    %s284 = sphi 0, %s284
    %s286 = sphi 0, %s284
    %s287 = sphi 0, %s286
    %s301 = sphi 0, %s287
    %s307 = sphi 0, %s309
    %s310 = sphi 0, %s307
    %s311 = sphi 0, %s310
    %s327 = sphi 0, %s311
  $region4: #{img_text_model_forward.11} parent=0 // loop_header_branch
    %22 = sbr.rel (%p20) target = $region8
  $region5: #{img_text_model_forward.11} parent=0 // loop_body
    %s24 = ssub.s32 %s19, 1
    %s25 = ssub.s32 %s19, 2
    %s26 = sadd.s32 %s19, 1
    %s27 = ssub.s32 %s19, %s26
    %p28 = scmp.eq.s32.totalorder %s27, 0
    %s30 = sadd.s32 %s29, 1
    %s31 = scalar_select %p28, %s29, %s30
    %p34 = pneg %p28
    %p35 = scmp.eq.s32.totalorder %s19, 1
    %p36 = por %p34, %p35
    %p37 = scmp.ne.s32.totalorder %s29, %s32
    %p38 = scmp.eq.s32.totalorder %s19, 0
    %p39 = por %p37, %p38
    %p40 = scmp.ne.s32.totalorder %s29, %s32
    %p41 = scmp.eq.s32.totalorder %s24, 1
    %p42 = por %p40, %p41
    %p43 = scmp.ne.s32.totalorder %s32, %s33
    %p44 = scmp.eq.s32.totalorder %s24, 0
    %p45 = por %p43, %p44
    %p46 = scmp.ne.s32.totalorder %s32, %s33
    %p47 = scmp.eq.s32.totalorder %s25, 1
    %p48 = por %p46, %p47
    %p50 = scmp.ne.s32.totalorder %s33, %s49
    %p51 = scmp.eq.s32.totalorder %s25, 0
    %p52 = por %p50, %p51
    %s54 = sadd.s32 %s53, 1
    %p57 = scmp.eq.s32.totalorder %s19, 1
    %p58 = scmp.ne.s32.totalorder %s53, %s55
    %p59 = scmp.eq.s32.totalorder %s19, 0
    %p60 = por %p58, %p59
    %p61 = scmp.ne.s32.totalorder %s53, %s55
    %p62 = scmp.eq.s32.totalorder %s24, 1
    %p63 = por %p61, %p62
    %p64 = scmp.ne.s32.totalorder %s55, %s56
    %p65 = scmp.eq.s32.totalorder %s24, 0
    %p66 = por %p64, %p65
    %p67 = scmp.ne.s32.totalorder %s55, %s56
    %p68 = scmp.eq.s32.totalorder %s25, 1
    %p69 = por %p67, %p68
    %p71 = scmp.ne.s32.totalorder %s56, %s70
    %p72 = scmp.eq.s32.totalorder %s25, 0
    %p73 = por %p71, %p72
    %s75 = sadd.s32 %s74, 1
    %p78 = scmp.eq.s32.totalorder %s19, 1
    %p79 = scmp.ne.s32.totalorder %s74, %s76
    %p80 = scmp.eq.s32.totalorder %s19, 0
    %p81 = por %p79, %p80
    %p82 = scmp.ne.s32.totalorder %s74, %s76
    %p83 = scmp.eq.s32.totalorder %s24, 1
    %p84 = por %p82, %p83
    %p85 = scmp.ne.s32.totalorder %s76, %s77
    %p86 = scmp.eq.s32.totalorder %s24, 0
    %p87 = por %p85, %p86
    %p88 = scmp.ne.s32.totalorder %s76, %s77
    %p89 = scmp.eq.s32.totalorder %s25, 1
    %p90 = por %p88, %p89
    %p92 = scmp.ne.s32.totalorder %s77, %s91
    %p93 = scmp.eq.s32.totalorder %s25, 0
    %p94 = por %p92, %p93
    %s96 = sadd.s32 %s95, 1
    %p99 = scmp.eq.s32.totalorder %s19, 1
    %p100 = scmp.ne.s32.totalorder %s95, %s97
    %p101 = scmp.eq.s32.totalorder %s19, 0
    %p102 = por %p100, %p101
    %p103 = scmp.ne.s32.totalorder %s95, %s97
    %p104 = scmp.eq.s32.totalorder %s24, 1
    %p105 = por %p103, %p104
    %p106 = scmp.ne.s32.totalorder %s97, %s98
    %p107 = scmp.eq.s32.totalorder %s24, 0
    %p108 = por %p106, %p107
    %p109 = scmp.ne.s32.totalorder %s97, %s98
    %p110 = scmp.eq.s32.totalorder %s25, 1
    %p111 = por %p109, %p110
    %p113 = scmp.ne.s32.totalorder %s98, %s112
    %p114 = scmp.eq.s32.totalorder %s25, 0
    %p115 = por %p113, %p114
    %s117 = sadd.s32 %s116, 1
    %p120 = scmp.eq.s32.totalorder %s19, 1
    %p121 = scmp.ne.s32.totalorder %s116, %s118
    %p122 = scmp.eq.s32.totalorder %s19, 0
    %p123 = por %p121, %p122
    %p124 = scmp.ne.s32.totalorder %s116, %s118
    %p125 = scmp.eq.s32.totalorder %s24, 1
    %p126 = por %p124, %p125
    %p127 = scmp.ne.s32.totalorder %s118, %s119
    %p128 = scmp.eq.s32.totalorder %s24, 0
    %p129 = por %p127, %p128
    %p130 = scmp.ne.s32.totalorder %s118, %s119
    %p131 = scmp.eq.s32.totalorder %s25, 1
    %p132 = por %p130, %p131
    %p134 = scmp.ne.s32.totalorder %s119, %s133
    %p135 = scmp.eq.s32.totalorder %s25, 0
    %p136 = por %p134, %p135
    %s138 = sadd.s32 %s137, 1
    %p141 = scmp.eq.s32.totalorder %s19, 1
    %p142 = scmp.ne.s32.totalorder %s137, %s139
    %p143 = scmp.eq.s32.totalorder %s19, 0
    %p144 = por %p142, %p143
    %p145 = scmp.ne.s32.totalorder %s137, %s139
    %p146 = scmp.eq.s32.totalorder %s24, 1
    %p147 = por %p145, %p146
    %p148 = scmp.ne.s32.totalorder %s139, %s140
    %p149 = scmp.eq.s32.totalorder %s24, 0
    %p150 = por %p148, %p149
    %p151 = scmp.ne.s32.totalorder %s139, %s140
    %p152 = scmp.eq.s32.totalorder %s25, 1
    %p153 = por %p151, %p152
    %p155 = scmp.ne.s32.totalorder %s140, %s154
    %p156 = scmp.eq.s32.totalorder %s25, 0
    %p157 = por %p155, %p156
    %s159 = sadd.s32 %s158, 1
    %p162 = scmp.eq.s32.totalorder %s19, 1
    %p163 = scmp.ne.s32.totalorder %s158, %s160
    %p164 = scmp.eq.s32.totalorder %s19, 0
    %p165 = por %p163, %p164
    %p166 = scmp.ne.s32.totalorder %s158, %s160
    %p167 = scmp.eq.s32.totalorder %s24, 1
    %p168 = por %p166, %p167
    %p169 = scmp.ne.s32.totalorder %s160, %s161
    %p170 = scmp.eq.s32.totalorder %s24, 0
    %p171 = por %p169, %p170
    %p172 = scmp.ne.s32.totalorder %s160, %s161
    %p173 = scmp.eq.s32.totalorder %s25, 1
    %p174 = por %p172, %p173
    %p176 = scmp.ne.s32.totalorder %s161, %s175
    %p177 = scmp.eq.s32.totalorder %s25, 0
    %p178 = por %p176, %p177
    %s180 = sadd.s32 %s179, 1
    %p183 = scmp.eq.s32.totalorder %s19, 1
    %p184 = scmp.ne.s32.totalorder %s179, %s181
    %p185 = scmp.eq.s32.totalorder %s19, 0
    %p186 = por %p184, %p185
    %p187 = scmp.ne.s32.totalorder %s179, %s181
    %p188 = scmp.eq.s32.totalorder %s24, 1
    %p189 = por %p187, %p188
    %p190 = scmp.ne.s32.totalorder %s181, %s182
    %p191 = scmp.eq.s32.totalorder %s24, 0
    %p192 = por %p190, %p191
    %p193 = scmp.ne.s32.totalorder %s181, %s182
    %p194 = scmp.eq.s32.totalorder %s25, 1
    %p195 = por %p193, %p194
    %p197 = scmp.ne.s32.totalorder %s182, %s196
    %p198 = scmp.eq.s32.totalorder %s25, 0
    %p199 = por %p197, %p198
    %s201 = sadd.s32 %s200, 1
    %p204 = scmp.eq.s32.totalorder %s19, 1
    %p205 = scmp.ne.s32.totalorder %s200, %s202
    %p206 = scmp.eq.s32.totalorder %s19, 0
    %p207 = por %p205, %p206
    %p208 = scmp.ne.s32.totalorder %s200, %s202
    %p209 = scmp.eq.s32.totalorder %s24, 1
    %p210 = por %p208, %p209
    %p211 = scmp.ne.s32.totalorder %s202, %s203
    %p212 = scmp.eq.s32.totalorder %s24, 0
    %p213 = por %p211, %p212
    %p214 = scmp.ne.s32.totalorder %s202, %s203
    %p215 = scmp.eq.s32.totalorder %s25, 1
    %p216 = por %p214, %p215
    %p218 = scmp.ne.s32.totalorder %s203, %s217
    %p219 = scmp.eq.s32.totalorder %s25, 0
    %p220 = por %p218, %p219
    %s222 = sadd.s32 %s221, 1
    %p225 = scmp.eq.s32.totalorder %s19, 1
    %p226 = scmp.ne.s32.totalorder %s221, %s223
    %p227 = scmp.eq.s32.totalorder %s19, 0
    %p228 = por %p226, %p227
    %p229 = scmp.ne.s32.totalorder %s221, %s223
    %p230 = scmp.eq.s32.totalorder %s24, 1
    %p231 = por %p229, %p230
    %p232 = scmp.ne.s32.totalorder %s223, %s224
    %p233 = scmp.eq.s32.totalorder %s24, 0
    %p234 = por %p232, %p233
    %p235 = scmp.ne.s32.totalorder %s223, %s224
    %p236 = scmp.eq.s32.totalorder %s25, 1
    %p237 = por %p235, %p236
    %p239 = scmp.ne.s32.totalorder %s224, %s238
    %p240 = scmp.eq.s32.totalorder %s25, 0
    %p241 = por %p239, %p240
    %s243 = sadd.s32 %s242, 1
    %p246 = scmp.eq.s32.totalorder %s19, 1
    %p247 = scmp.ne.s32.totalorder %s242, %s244
    %p248 = scmp.eq.s32.totalorder %s19, 0
    %p249 = por %p247, %p248
    %p250 = scmp.ne.s32.totalorder %s242, %s244
    %p251 = scmp.eq.s32.totalorder %s24, 1
    %p252 = por %p250, %p251
    %p253 = scmp.ne.s32.totalorder %s244, %s245
    %p254 = scmp.eq.s32.totalorder %s24, 0
    %p255 = por %p253, %p254
    %p256 = scmp.ne.s32.totalorder %s244, %s245
    %p257 = scmp.eq.s32.totalorder %s25, 1
    %p258 = por %p256, %p257
    %p260 = scmp.ne.s32.totalorder %s245, %s259
    %p261 = scmp.eq.s32.totalorder %s25, 0
    %p262 = por %p260, %p261
    %s264 = sadd.s32 %s263, 1
    %p267 = scmp.eq.s32.totalorder %s19, 1
    %p268 = scmp.ne.s32.totalorder %s263, %s265
    %p269 = scmp.eq.s32.totalorder %s19, 0
    %p270 = por %p268, %p269
    %p271 = scmp.ne.s32.totalorder %s263, %s265
    %p272 = scmp.eq.s32.totalorder %s24, 1
    %p273 = por %p271, %p272
    %p274 = scmp.ne.s32.totalorder %s265, %s266
    %p275 = scmp.eq.s32.totalorder %s24, 0
    %p276 = por %p274, %p275
    %p277 = scmp.ne.s32.totalorder %s265, %s266
    %p278 = scmp.eq.s32.totalorder %s25, 1
    %p279 = por %p277, %p278
    %p281 = scmp.ne.s32.totalorder %s266, %s280
    %p282 = scmp.eq.s32.totalorder %s25, 0
    %p283 = por %p281, %p282
    %s285 = sadd.s32 %s284, 1
    %p288 = scmp.eq.s32.totalorder %s19, 1
    %p289 = scmp.ne.s32.totalorder %s284, %s286
    %p290 = scmp.eq.s32.totalorder %s19, 0
    %p291 = por %p289, %p290
    %p292 = scmp.ne.s32.totalorder %s284, %s286
    %p293 = scmp.eq.s32.totalorder %s24, 1
    %p294 = por %p292, %p293
    %p295 = scmp.ne.s32.totalorder %s286, %s287
    %p296 = scmp.eq.s32.totalorder %s24, 0
    %p297 = por %p295, %p296
    %p298 = scmp.ne.s32.totalorder %s286, %s287
    %p299 = scmp.eq.s32.totalorder %s25, 1
    %p300 = por %p298, %p299
    %p302 = scmp.ne.s32.totalorder %s287, %s301
    %p303 = scmp.eq.s32.totalorder %s25, 0
    %p304 = por %p302, %p303
    %s305 = ssub.s32 %s19, %s26
    %p306 = scmp.eq.s32.totalorder %s305, 0
    %s308 = sadd.s32 %s307, 1
    %s309 = scalar_select %p306, %s307, %s308
    %p312 = pneg %p306
    %p313 = scmp.eq.s32.totalorder %s19, 1
    %p314 = por %p312, %p313
    %p315 = scmp.ne.s32.totalorder %s307, %s310
    %p316 = scmp.eq.s32.totalorder %s19, 0
    %p317 = por %p315, %p316
    %p318 = scmp.ne.s32.totalorder %s307, %s310
    %p319 = scmp.eq.s32.totalorder %s24, 1
    %p320 = por %p318, %p319
    %p321 = scmp.ne.s32.totalorder %s310, %s311
    %p322 = scmp.eq.s32.totalorder %s24, 0
    %p323 = por %p321, %p322
    %p324 = scmp.ne.s32.totalorder %s310, %s311
    %p325 = scmp.eq.s32.totalorder %s25, 1
    %p326 = por %p324, %p325
    %p328 = scmp.ne.s32.totalorder %s311, %s327
    %p329 = scmp.eq.s32.totalorder %s25, 0
    %p330 = por %p328, %p329
    %p331 = scmp.le.s32.totalorder 1, %s19
    %p332 = scmp.lt.s32.totalorder %s19, 3
    %p333 = pnand %p331, %p332
    %p334 = pneg %p333
    // Predicated region
    $region9: #{img_text_model_forward.11} parent=5 // pred_check
      _
    $region10: #{img_text_model_forward.11} parent=5 // pred_check_branch
      %336 = sbr.rel (%p333) target = $region12
    $region11: #{img_text_model_forward.11} parent=5 // pred_region
      %s337 = ssub.s32 %s19, 1
      // Predicated region
      $region13: #{img_text_model_forward.11} parent=11 // pred_check
        %p338 = pneg %p66
      $region14: #{img_text_model_forward.11} parent=11 // pred_check_branch
        %340 = sbr.rel (%p338) target = $region16
      $region15: #{img_text_model_forward.11} parent=11 // pred_region
        _
      $region16: #{img_text_model_forward.11} parent=11 // pred_fallthru
        _
      // Predicated region
      $region17: #{img_text_model_forward.11} parent=11 // pred_check
        %p341 = pneg %p87
      $region18: #{img_text_model_forward.11} parent=11 // pred_check_branch
        %343 = sbr.rel (%p341) target = $region20
      $region19: #{img_text_model_forward.11} parent=11 // pred_region
        _
      $region20: #{img_text_model_forward.11} parent=11 // pred_fallthru
        _
      // Predicated region
      $region21: #{img_text_model_forward.11} parent=11 // pred_check
        %p344 = pneg %p108
      $region22: #{img_text_model_forward.11} parent=11 // pred_check_branch
        %346 = sbr.rel (%p344) target = $region24
      $region23: #{img_text_model_forward.11} parent=11 // pred_region
        _
      $region24: #{img_text_model_forward.11} parent=11 // pred_fallthru
        _
      // Predicated region
      $region25: #{img_text_model_forward.11} parent=11 // pred_check
        %p347 = pneg %p129
      $region26: #{img_text_model_forward.11} parent=11 // pred_check_branch
        %349 = sbr.rel (%p347) target = $region28
      $region27: #{img_text_model_forward.11} parent=11 // pred_region
        _
      $region28: #{img_text_model_forward.11} parent=11 // pred_fallthru
        _
      // Predicated region
      $region29: #{img_text_model_forward.11} parent=11 // pred_check
        %p350 = pneg %p150
      $region30: #{img_text_model_forward.11} parent=11 // pred_check_branch
        %352 = sbr.rel (%p350) target = $region32
      $region31: #{img_text_model_forward.11} parent=11 // pred_region
        _
      $region32: #{img_text_model_forward.11} parent=11 // pred_fallthru
        _
      // Predicated region
      $region33: #{img_text_model_forward.11} parent=11 // pred_check
        %p353 = pneg %p171
      $region34: #{img_text_model_forward.11} parent=11 // pred_check_branch
        %355 = sbr.rel (%p353) target = $region36
      $region35: #{img_text_model_forward.11} parent=11 // pred_region
        _
      $region36: #{img_text_model_forward.11} parent=11 // pred_fallthru
        _
      // Predicated region
      $region37: #{img_text_model_forward.11} parent=11 // pred_check
        %p356 = pneg %p192
      $region38: #{img_text_model_forward.11} parent=11 // pred_check_branch
        %358 = sbr.rel (%p356) target = $region40
      $region39: #{img_text_model_forward.11} parent=11 // pred_region
        _
      $region40: #{img_text_model_forward.11} parent=11 // pred_fallthru
        _
      // Predicated region
      $region41: #{img_text_model_forward.11} parent=11 // pred_check
        %p359 = pneg %p213
      $region42: #{img_text_model_forward.11} parent=11 // pred_check_branch
        %361 = sbr.rel (%p359) target = $region44
      $region43: #{img_text_model_forward.11} parent=11 // pred_region
        _
      $region44: #{img_text_model_forward.11} parent=11 // pred_fallthru
        _
      // Predicated region
      $region45: #{img_text_model_forward.11} parent=11 // pred_check
        %p362 = pneg %p234
      $region46: #{img_text_model_forward.11} parent=11 // pred_check_branch
        %364 = sbr.rel (%p362) target = $region48
      $region47: #{img_text_model_forward.11} parent=11 // pred_region
        _
      $region48: #{img_text_model_forward.11} parent=11 // pred_fallthru
        _
      // Predicated region
      $region49: #{img_text_model_forward.11} parent=11 // pred_check
        %p365 = pneg %p255
      $region50: #{img_text_model_forward.11} parent=11 // pred_check_branch
        %367 = sbr.rel (%p365) target = $region52
      $region51: #{img_text_model_forward.11} parent=11 // pred_region
        _
      $region52: #{img_text_model_forward.11} parent=11 // pred_fallthru
        _
      // Predicated region
      $region53: #{img_text_model_forward.11} parent=11 // pred_check
        %p368 = pneg %p276
      $region54: #{img_text_model_forward.11} parent=11 // pred_check_branch
        %370 = sbr.rel (%p368) target = $region56
      $region55: #{img_text_model_forward.11} parent=11 // pred_region
        _
      $region56: #{img_text_model_forward.11} parent=11 // pred_fallthru
        _
      // Predicated region
      $region57: #{img_text_model_forward.11} parent=11 // pred_check
        %p371 = pneg %p297
      $region58: #{img_text_model_forward.11} parent=11 // pred_check_branch
        %373 = sbr.rel (%p371) target = $region60
      $region59: #{img_text_model_forward.11} parent=11 // pred_region
        _
      $region60: #{img_text_model_forward.11} parent=11 // pred_fallthru
        _
    $region12: #{img_text_model_forward.11} parent=5 // pred_fallthru
      _
    %p374 = scmp.lt.s32.totalorder %s19, 2
    // Predicated region
    $region61: #{img_text_model_forward.11} parent=5 // pred_check
      %p375 = pneg %p374
    $region62: #{img_text_model_forward.11} parent=5 // pred_check_branch
      %377 = sbr.rel (%p375) target = $region64
    $region63: #{img_text_model_forward.11} parent=5 // pred_region
      // Predicated region
      $region65: #{img_text_model_forward.11} parent=63 // pred_check
        %p378 = pneg %p39
      $region66: #{img_text_model_forward.11} parent=63 // pred_check_branch
        %380 = sbr.rel (%p378) target = $region68
      $region67: #{img_text_model_forward.11} parent=63 // pred_region
        %p381 = scmp.lt.s32.totalorder %s19, 1
        %s382 = scalar_select %p381, %s19, 1
        %s383 = smul.addr %s382, 2
        %s384 = smul.addr %s383, 8
        %s385 = scalar_lea.vmem %s0, %s384
      $region68: #{img_text_model_forward.11} parent=63 // pred_fallthru
        _
    $region64: #{img_text_model_forward.11} parent=5 // pred_fallthru
      _
    %p386 = scmp.le.s32.totalorder 1, %s19
    %p387 = scmp.lt.s32.totalorder %s19, 3
    %p388 = pnand %p386, %p387
    %p389 = pneg %p388
    // Predicated region
    $region69: #{img_text_model_forward.11} parent=5 // pred_check
      _
    $region70: #{img_text_model_forward.11} parent=5 // pred_check_branch
      %391 = sbr.rel (%p388) target = $region72
    $region71: #{img_text_model_forward.11} parent=5 // pred_region
      %s392 = ssub.s32 %s19, 1
      %p393 = scmp.lt.s32.totalorder %s24, 1
      %s394 = scalar_select %p393, %s24, 1
      %s395 = smul.addr %s394, 2
      %s396 = smul.addr %s395, 8
      %s397 = scalar_lea.vmem %s0, %s396
      %p398 = pneg %p45
      %p399 = pneg %p42
      %p400 = pneg %p66
      %p401 = pneg %p63
      %p402 = pneg %p87
      %p403 = pneg %p84
      %p404 = pneg %p108
      %p405 = pneg %p105
      %p406 = pneg %p129
      %p407 = pneg %p126
      %p408 = pneg %p150
      %p409 = pneg %p147
      %p410 = pneg %p171
      %p411 = pneg %p168
      %p412 = pneg %p192
      %p413 = pneg %p189
      %p414 = pneg %p213
      %p415 = pneg %p210
      %p416 = pneg %p234
      %p417 = pneg %p231
      %p418 = pneg %p255
      %p419 = pneg %p252
      %p420 = pneg %p276
      %p421 = pneg %p273
      %p422 = pneg %p297
      %p423 = pneg %p294
      %p424 = pneg %p323
      %p425 = pneg %p320
      %p426 = scmp.lt.s32.totalorder %s24, 1
      %s427 = scalar_select %p426, %s24, 1
      %s428 = smul.addr %s427, 2
      %s429 = smul.addr %s428, 8
      %s430 = scalar_lea.vmem %s13, %s429
      %p431 = scmp.lt.s32.totalorder %s24, 1
      %s432 = scalar_select %p431, %s24, 1
      %s433 = smul.addr %s432, 2
      %s434 = smul.addr %s433, 8
      %s435 = scalar_lea.vmem %s0, %s434
      %p436 = scmp.lt.s32.totalorder %s24, 1
      %s437 = scalar_select %p436, %s24, 1
      %s438 = smul.addr %s437, 2
      %s439 = smul.addr %s438, 8
      %s440 = scalar_lea.vmem %s13, %s439
      %v442 = vld [vmem:[%s435] sm:$0xff]
      %v443 = vld [vmem:[%s435 + $0x8] sm:$0xf]
      %v444 = vld [vmem:[%s1] sm:$0x1]
      %v445 = vld [vmem:[%s2] sm:$0x1]
      %446 = vadd.xlane.f32.xlu0 %v442
      %v447 = vpop.xlane.xlu0 %446
      %vm448 = vcmask 1043456
      %v449 = vsel %vm448, %v443, 0.0
      %450 = vadd.xlane.f32.xlu0 %v449
      %v451 = vpop.xlane.xlu0 %450
      %v452 = vrcp.pop 128.0
      %v453 = vmul.f32 %v447, %v452
      %v454 = vmul.f32 %v451, %v452
      %v455 = vsub.f32 %v442, %v453
      %v456 = vsub.f32 %v443, %v454
      %v457 = vmul.f32 %v455, %v455
      %v458 = vmul.f32 %v456, %v456
      %459 = vadd.xlane.f32.xlu0 %v457
      %v460 = vpop.xlane.xlu0 %459
      %v461 = vsel %vm448, %v458, 0.0
      %462 = vadd.xlane.f32.xlu0 %v461
      %v463 = vpop.xlane.xlu0 %462
      %v464 = vmul.f32 %v460, %v452
      %v465 = vmul.f32 %v463, %v452
      %v466 = vadd.f32 %v464, 1e-05
      %v467 = vadd.f32 %v465, 1e-05
      %v468 = vrsqrt.pop %v466
      %v469 = vrsqrt.pop %v467
      %v470 = vmul.f32 %v455, %v468
      %v471 = vmul.f32 %v456, %v469
      %v473 = vlaneseq
      %v474 = vshrl.u32 %v473, 7
      %v475 = vsub.s32 0, %v474
      %v476 = vrot.slane %v444, %v475
      %v478 = vmul.f32 %v470, %v476
      %v479 = vmul.f32 %v471, %v476
      %v481 = vlaneseq
      %v482 = vshrl.u32 %v481, 7
      %v483 = vsub.s32 0, %v482
      %v484 = vrot.slane %v445, %v483
      %v486 = vadd.f32 %v478, %v484
      %v487 = vadd.f32 %v479, %v484
      %v488 = vpack.c.bf16 %v487, %v486
      %v489 = vld [vmem:[%s3] sm:$0xff]
      %v490 = vld [vmem:[%s3 + $0x8] sm:$0xf]
      %v491 = vld [vmem:[%s3 + $0xc] sm:$0xff]
      %v492 = vld [vmem:[%s3 + $0x14] sm:$0xf]
      %v493 = vld [vmem:[%s3 + $0x18] sm:$0xff]
      %v494 = vld [vmem:[%s3 + $0x20] sm:$0xf]
      %v495 = vld [vmem:[%s3 + $0x24] sm:$0xff]
      %v496 = vld [vmem:[%s3 + $0x2c] sm:$0xf]
      %v497 = vld [vmem:[%s3 + $0x30] sm:$0xff]
      %v498 = vld [vmem:[%s3 + $0x38] sm:$0xf]
      %v499 = vld [vmem:[%s3 + $0x3c] sm:$0xff]
      %v500 = vld [vmem:[%s3 + $0x44] sm:$0xf]
      %v501 = vld [vmem:[%s3 + $0x48] sm:$0xff]
      %v502 = vld [vmem:[%s3 + $0x50] sm:$0xf]
      %v503 = vld [vmem:[%s3 + $0x54] sm:$0xff]
      %v504 = vld [vmem:[%s3 + $0x5c] sm:$0xf]
      %v505 = vld [vmem:[%s3 + $0x60] sm:$0xff]
      %v506 = vld [vmem:[%s3 + $0x68] sm:$0xf]
      %v507 = vld [vmem:[%s3 + $0x6c] sm:$0xff]
      %v508 = vld [vmem:[%s3 + $0x74] sm:$0xf]
      %v509 = vld [vmem:[%s3 + $0x78] sm:$0xff]
      %v510 = vld [vmem:[%s3 + $0x80] sm:$0xf]
      %v511 = vld [vmem:[%s3 + $0x84] sm:$0xff]
      %v512 = vld [vmem:[%s3 + $0x8c] sm:$0xf]
      %v513 = vld [vmem:[%s3 + $0x90] sm:$0xff]
      %v514 = vld [vmem:[%s3 + $0x98] sm:$0xf]
      %v515 = vld [vmem:[%s3 + $0x9c] sm:$0xff]
      %v516 = vld [vmem:[%s3 + $0xa4] sm:$0xf]
      %v517 = vld [vmem:[%s3 + $0xa8] sm:$0xff]
      %v518 = vld [vmem:[%s3 + $0xb0] sm:$0xf]
      %v519 = vld [vmem:[%s3 + $0xb4] sm:$0xff]
      %v520 = vld [vmem:[%s3 + $0xbc] sm:$0xf]
      %v521 = vld [vmem:[%s4] sm:$0x7]
      %v523 = vlaneseq
      %v524 = vshrl.u32 %v523, 7
      %v525 = vsub.s32 0, %v524
      %v526 = vrot.slane %v521, %v525
      %v527 = vlaneseq
      %v528 = vshrl.u32 %v527, 7
      %v529 = vsub.s32 1, %v528
      %v530 = vrot.slane %v521, %v529
      %v531 = vlaneseq
      %v532 = vshrl.u32 %v531, 7
      %v533 = vsub.s32 2, %v532
      %v534 = vrot.slane %v521, %v533
      %v570 = vunpack.c.l.b16 %v489
      %v571 = vunpack.c.h.b16 %v489
      %v572 = vunpack.c.l.b16 %v490
      %v573 = vunpack.c.l.b16 %v491
      %v574 = vunpack.c.h.b16 %v491
      %v575 = vunpack.c.l.b16 %v492
      %v576 = vunpack.c.l.b16 %v493
      %v577 = vunpack.c.h.b16 %v493
      %v578 = vunpack.c.l.b16 %v494
      %v579 = vunpack.c.l.b16 %v495
      %v580 = vunpack.c.h.b16 %v495
      %v581 = vunpack.c.l.b16 %v496
      %v582 = vunpack.c.l.b16 %v497
      %v583 = vunpack.c.h.b16 %v497
      %v584 = vunpack.c.l.b16 %v498
      %v585 = vunpack.c.l.b16 %v499
      %v586 = vunpack.c.h.b16 %v499
      %v587 = vunpack.c.l.b16 %v500
      %v588 = vunpack.c.l.b16 %v501
      %v589 = vunpack.c.h.b16 %v501
      %v590 = vunpack.c.l.b16 %v502
      %v591 = vunpack.c.l.b16 %v503
      %v592 = vunpack.c.h.b16 %v503
      %v593 = vunpack.c.l.b16 %v504
      %v594 = vunpack.c.l.b16 %v505
      %v595 = vunpack.c.h.b16 %v505
      %v596 = vunpack.c.l.b16 %v506
      %v597 = vunpack.c.l.b16 %v507
      %v598 = vunpack.c.h.b16 %v507
      %v599 = vunpack.c.l.b16 %v508
      %v600 = vunpack.c.l.b16 %v509
      %v601 = vunpack.c.h.b16 %v509
      %v602 = vunpack.c.l.b16 %v510
      %v603 = vunpack.c.l.b16 %v511
      %v604 = vunpack.c.h.b16 %v511
      %v605 = vunpack.c.l.b16 %v512
      %v606 = vunpack.c.l.b16 %v513
      %v607 = vunpack.c.h.b16 %v513
      %v608 = vunpack.c.l.b16 %v514
      %v609 = vunpack.c.l.b16 %v515
      %v610 = vunpack.c.h.b16 %v515
      %v611 = vunpack.c.l.b16 %v516
      %v612 = vunpack.c.l.b16 %v517
      %v613 = vunpack.c.h.b16 %v517
      %v614 = vunpack.c.l.b16 %v518
      %v615 = vunpack.c.l.b16 %v519
      %v616 = vunpack.c.h.b16 %v519
      %v617 = vunpack.c.l.b16 %v520
      %v618 = vpack.c.b16 %v573, %v570
      %v619 = vpack.c.b16 %v574, %v571
      %v620 = vpack.c.b16 %v575, %v572
      %v621 = vpack.c.b16 %v579, %v576
      %v622 = vpack.c.b16 %v580, %v577
      %v623 = vpack.c.b16 %v581, %v578
      %v624 = vpack.c.b16 %v585, %v582
      %v625 = vpack.c.b16 %v586, %v583
      %v626 = vpack.c.b16 %v587, %v584
      %v627 = vpack.c.b16 %v591, %v588
      %v628 = vpack.c.b16 %v592, %v589
      %v629 = vpack.c.b16 %v593, %v590
      %v630 = vpack.c.b16 %v597, %v594
      %v631 = vpack.c.b16 %v598, %v595
      %v632 = vpack.c.b16 %v599, %v596
      %v633 = vpack.c.b16 %v603, %v600
      %v634 = vpack.c.b16 %v604, %v601
      %v635 = vpack.c.b16 %v605, %v602
      %v636 = vpack.c.b16 %v609, %v606
      %v637 = vpack.c.b16 %v610, %v607
      %v638 = vpack.c.b16 %v611, %v608
      %v639 = vpack.c.b16 %v615, %v612
      %v640 = vpack.c.b16 %v616, %v613
      %v641 = vpack.c.b16 %v617, %v614
      %666 = vmatprep.subr.bf16.mxu0 %v619
      %667 = vmatpush1.bf16.msra.mxu0 %v618
      %668 = vmatprep.subr.bf16.mxu0 %v622
      %669 = vmatpush1.bf16.msra.mxu0 %v621
      %670 = vmatprep.subr.bf16.mxu0 %v625
      %671 = vmatpush1.bf16.msra.mxu0 %v624
      %672 = vmatprep.subr.bf16.mxu0 %v628
      %673 = vmatpush1.bf16.msra.mxu0 %v627
      %674 = vmatprep.subr.bf16.mxu0 %v631
      %675 = vmatpush1.bf16.msra.mxu0 %v630
      %676 = vmatprep.subr.bf16.mxu0 %v634
      %677 = vmatpush1.bf16.msra.mxu0 %v633
      %678 = vmatprep.subr.bf16.mxu0 %v637
      %679 = vmatpush1.bf16.msra.mxu0 %v636
      %680 = vmatprep.subr.bf16.mxu0 %v640
      %681 = vmatpush1.bf16.msra.mxu0 %v639
      %682 = vmatprep.subr.bf16.mxu0 0
      %683 = vmatpush1.bf16.msra.mxu0 0
      %684 = vmatprep.subr.bf16.mxu0 0
      %685 = vmatpush1.bf16.msra.mxu0 0
      %686 = vmatprep.subr.bf16.mxu0 0
      %687 = vmatpush1.bf16.msra.mxu0 0
      %688 = vmatprep.subr.bf16.mxu0 0
      %689 = vmatpush1.bf16.msra.mxu0 0
      %690 = vmatprep.subr.bf16.mxu0 0
      %691 = vmatpush1.bf16.msra.mxu0 0
      %692 = vmatprep.subr.bf16.mxu0 0
      %693 = vmatpush1.bf16.msra.mxu0 0
      %694 = vmatprep.subr.bf16.mxu0 0
      %695 = vmatpush1.bf16.msra.mxu0 0
      %696 = vmatprep.subr.bf16.mxu0 0
      %697 = vmatpush1.bf16.msra.mxu0 0
      %698 = vmatprep.mubr.bf16.mxu0 0
      %699 = vmatmul.mubr.bf16.gmra.mrb[0].mxu0 %v488
      %v700 = vpop.f32.mrb[0].mxu0
      %v701 = vadd.f32 %v526, %v700
      %v702 = vpop.f32.mrb[0].mxu0
      %v703 = vadd.f32 %v530, %v702
      %v704 = vpop.f32.mrb[0].mxu0
      %v705 = vadd.f32 %v526, %v704
      %v706 = vpop.f32.mrb[0].mxu0
      %v707 = vadd.f32 %v530, %v706
      %708 = vdwg.mxu0
      %709 = vmatprep.subr.bf16.mxu0 0
      %710 = vmatpush1.bf16.msra.mxu0 %v620
      %711 = vmatprep.subr.bf16.mxu0 0
      %712 = vmatpush1.bf16.msra.mxu0 %v623
      %713 = vmatprep.subr.bf16.mxu0 0
      %714 = vmatpush1.bf16.msra.mxu0 %v626
      %715 = vmatprep.subr.bf16.mxu0 0
      %716 = vmatpush1.bf16.msra.mxu0 %v629
      %717 = vmatprep.subr.bf16.mxu0 0
      %718 = vmatpush1.bf16.msra.mxu0 %v632
      %719 = vmatprep.subr.bf16.mxu0 0
      %720 = vmatpush1.bf16.msra.mxu0 %v635
      %721 = vmatprep.subr.bf16.mxu0 0
      %722 = vmatpush1.bf16.msra.mxu0 %v638
      %723 = vmatprep.subr.bf16.mxu0 0
      %724 = vmatpush1.bf16.msra.mxu0 %v641
      %725 = vmatprep.subr.bf16.mxu0 0
      %726 = vmatpush1.bf16.msra.mxu0 0
      %727 = vmatprep.subr.bf16.mxu0 0
      %728 = vmatpush1.bf16.msra.mxu0 0
      %729 = vmatprep.subr.bf16.mxu0 0
      %730 = vmatpush1.bf16.msra.mxu0 0
      %731 = vmatprep.subr.bf16.mxu0 0
      %732 = vmatpush1.bf16.msra.mxu0 0
      %733 = vmatprep.subr.bf16.mxu0 0
      %734 = vmatpush1.bf16.msra.mxu0 0
      %735 = vmatprep.subr.bf16.mxu0 0
      %736 = vmatpush1.bf16.msra.mxu0 0
      %737 = vmatprep.subr.bf16.mxu0 0
      %738 = vmatpush1.bf16.msra.mxu0 0
      %739 = vmatprep.subr.bf16.mxu0 0
      %740 = vmatpush1.bf16.msra.mxu0 0
      %741 = vmatprep.mubr.bf16.mxu0 0
      %742 = vmatmul.mubr.bf16.gmra.mrb[0].mxu0 %v488
      %v743 = vpop.f32.mrb[0].mxu0
      %v744 = vadd.f32 %v534, %v743
      %v745 = vpop.f32.mrb[0].mxu0
      %v746 = vpop.f32.mrb[0].mxu0
      %v747 = vadd.f32 %v534, %v746
      %v748 = vpop.f32.mrb[0].mxu0
      %749 = vdwg.mxu0
      %752 = vrot.lane.b32.xlu0 %v701, 64
      %v753 = vpop.permute.xlu0 %752
      %754 = vrot.lane.b32.xlu0 %v705, 64
      %v755 = vpop.permute.xlu0 %754
      %v757 = vcombine.high %v701, 0.0
      %v759 = vunpack.c.l.s4 1983009808
      %v760 = vunpack.c.0.s8 %v759
      %v761 = vlaneseq
      %v762 = vshrl.u32 %v761, 7
      %v763 = vsub.s32 %v760, %v762
      %v764 = vrot.slane %v701, %v763
      %v766 = vunpack.c.l.s4 1983009808
      %v767 = vunpack.c.0.s8 %v766
      %v768 = vlaneseq
      %v769 = vshrl.u32 %v768, 7
      %v770 = vsub.s32 %v767, %v769
      %v771 = vrot.slane %v757, %v770
      %v772 = vcombine.high %v753, 0.0
      %v774 = vunpack.c.l.s4 1983009808
      %v775 = vunpack.c.0.s8 %v774
      %v776 = vlaneseq
      %v777 = vshrl.u32 %v776, 7
      %v778 = vsub.s32 %v775, %v777
      %v779 = vrot.slane %v753, %v778
      %v781 = vunpack.c.l.s4 1983009808
      %v782 = vunpack.c.0.s8 %v781
      %v783 = vlaneseq
      %v784 = vshrl.u32 %v783, 7
      %v785 = vsub.s32 %v782, %v784
      %v786 = vrot.slane %v772, %v785
      %v787 = vcombine.low %v764, %v779
      %v788 = vcombine.high %v764, %v779
      %v790 = vunpack.c.l.s4 1934713408
      %v791 = vunpack.c.0.s8 %v790
      %v792 = vlaneseq
      %v793 = vshrl.u32 %v792, 7
      %v794 = vsub.s32 %v791, %v793
      %v795 = vrot.slane %v787, %v794
      %v797 = vunpack.c.l.s4 1934713408
      %v798 = vunpack.c.0.s8 %v797
      %v799 = vlaneseq
      %v800 = vshrl.u32 %v799, 7
      %v801 = vsub.s32 %v798, %v800
      %v802 = vrot.slane %v788, %v801
      %v803 = vcombine.low %v771, %v786
      %v804 = vcombine.high %v771, %v786
      %v806 = vunpack.c.l.s4 1934713408
      %v807 = vunpack.c.0.s8 %v806
      %v808 = vlaneseq
      %v809 = vshrl.u32 %v808, 7
      %v810 = vsub.s32 %v807, %v809
      %v811 = vrot.slane %v803, %v810
      %v813 = vunpack.c.l.s4 1934713408
      %v814 = vunpack.c.0.s8 %v813
      %v815 = vlaneseq
      %v816 = vshrl.u32 %v815, 7
      %v817 = vsub.s32 %v814, %v816
      %v818 = vrot.slane %v804, %v817
      %v819 = vcombine.high %v795, 0.0
      %v820 = vcombine.high %v802, 0.0
      %v821 = vcombine.high %v811, 0.0
      %v822 = vcombine.high %v818, 0.0
      %v824 = vunpack.c.l.s4 1983009808
      %v825 = vunpack.c.0.s8 %v824
      %v826 = vlaneseq
      %v827 = vshrl.u32 %v826, 7
      %v828 = vsub.s32 %v825, %v827
      %v829 = vrot.slane %v705, %v828
      %v832 = vunpack.c.l.s4 1983009808
      %v833 = vunpack.c.0.s8 %v832
      %v834 = vlaneseq
      %v835 = vshrl.u32 %v834, 7
      %v836 = vsub.s32 %v833, %v835
      %v837 = vrot.slane %v755, %v836
      %v838 = vcombine.low %v829, %v837
      %v839 = vcombine.high %v829, %v837
      %v841 = vunpack.c.l.s4 1934713408
      %v842 = vunpack.c.0.s8 %v841
      %v843 = vlaneseq
      %v844 = vshrl.u32 %v843, 7
      %v845 = vsub.s32 %v842, %v844
      %v846 = vrot.slane %v838, %v845
      %v848 = vunpack.c.l.s4 1934713408
      %v849 = vunpack.c.0.s8 %v848
      %v850 = vlaneseq
      %v851 = vshrl.u32 %v850, 7
      %v852 = vsub.s32 %v849, %v851
      %v853 = vrot.slane %v839, %v852
      %v854 = vcombine.high %v846, 0.0
      %v855 = vcombine.high %v853, 0.0
      %v856 = vcombine.low %v795, %v802
      %v858 = vunpack.c.l.s4 1983009808
      %v859 = vunpack.c.0.s8 %v858
      %v860 = vlaneseq
      %v861 = vshrl.u32 %v860, 7
      %v862 = vsub.s32 %v859, %v861
      %v863 = vrot.slane %v856, %v862
      %v864 = vcombine.low %v819, %v820
      %v866 = vunpack.c.l.s4 1983009808
      %v867 = vunpack.c.0.s8 %v866
      %v868 = vlaneseq
      %v869 = vshrl.u32 %v868, 7
      %v870 = vsub.s32 %v867, %v869
      %v871 = vrot.slane %v864, %v870
      %v872 = vcombine.low %v811, %v818
      %v874 = vunpack.c.l.s4 1983009808
      %v875 = vunpack.c.0.s8 %v874
      %v876 = vlaneseq
      %v877 = vshrl.u32 %v876, 7
      %v878 = vsub.s32 %v875, %v877
      %v879 = vrot.slane %v872, %v878
      %v880 = vcombine.low %v821, %v822
      %v882 = vunpack.c.l.s4 1983009808
      %v883 = vunpack.c.0.s8 %v882
      %v884 = vlaneseq
      %v885 = vshrl.u32 %v884, 7
      %v886 = vsub.s32 %v883, %v885
      %v887 = vrot.slane %v880, %v886
      %v888 = vcombine.low %v863, %v871
      %v890 = vunpack.c.l.s4 1934713408
      %v891 = vunpack.c.0.s8 %v890
      %v892 = vlaneseq
      %v893 = vshrl.u32 %v892, 7
      %v894 = vsub.s32 %v891, %v893
      %v895 = vrot.slane %v888, %v894
      %v896 = vcombine.low %v879, %v887
      %v898 = vunpack.c.l.s4 1934713408
      %v899 = vunpack.c.0.s8 %v898
      %v900 = vlaneseq
      %v901 = vshrl.u32 %v900, 7
      %v902 = vsub.s32 %v899, %v901
      %v903 = vrot.slane %v896, %v902
      %v904 = vcombine.low %v895, %v903
      %v905 = vcombine.high %v895, %v903
      %v906 = vcombine.low %v846, %v853
      %v908 = vunpack.c.l.s4 1983009808
      %v909 = vunpack.c.0.s8 %v908
      %v910 = vlaneseq
      %v911 = vshrl.u32 %v910, 7
      %v912 = vsub.s32 %v909, %v911
      %v913 = vrot.slane %v906, %v912
      %v914 = vcombine.low %v854, %v855
      %v916 = vunpack.c.l.s4 1983009808
      %v917 = vunpack.c.0.s8 %v916
      %v918 = vlaneseq
      %v919 = vshrl.u32 %v918, 7
      %v920 = vsub.s32 %v917, %v919
      %v921 = vrot.slane %v914, %v920
      %v922 = vcombine.low %v913, %v921
      %v924 = vunpack.c.l.s4 1934713408
      %v925 = vunpack.c.0.s8 %v924
      %v926 = vlaneseq
      %v927 = vshrl.u32 %v926, 7
      %v928 = vsub.s32 %v925, %v927
      %v929 = vrot.slane %v922, %v928
      %v930 = vcombine.high %v929, 0.0
      %v931 = vpack.c.bf16 %v929, %v904
      %v932 = vpack.c.bf16 %v930, %v905
      %935 = vrot.lane.b32.xlu0 %v703, 64
      %v936 = vpop.permute.xlu0 %935
      %937 = vrot.lane.b32.xlu0 %v707, 64
      %v938 = vpop.permute.xlu0 %937
      %v940 = vcombine.high %v703, 0.0
      %v942 = vunpack.c.l.s4 1983009808
      %v943 = vunpack.c.0.s8 %v942
      %v944 = vlaneseq
      %v945 = vshrl.u32 %v944, 7
      %v946 = vsub.s32 %v943, %v945
      %v947 = vrot.slane %v703, %v946
      %v949 = vunpack.c.l.s4 1983009808
      %v950 = vunpack.c.0.s8 %v949
      %v951 = vlaneseq
      %v952 = vshrl.u32 %v951, 7
      %v953 = vsub.s32 %v950, %v952
      %v954 = vrot.slane %v940, %v953
      %v955 = vcombine.high %v936, 0.0
      %v957 = vunpack.c.l.s4 1983009808
      %v958 = vunpack.c.0.s8 %v957
      %v959 = vlaneseq
      %v960 = vshrl.u32 %v959, 7
      %v961 = vsub.s32 %v958, %v960
      %v962 = vrot.slane %v936, %v961
      %v964 = vunpack.c.l.s4 1983009808
      %v965 = vunpack.c.0.s8 %v964
      %v966 = vlaneseq
      %v967 = vshrl.u32 %v966, 7
      %v968 = vsub.s32 %v965, %v967
      %v969 = vrot.slane %v955, %v968
      %v970 = vcombine.low %v947, %v962
      %v971 = vcombine.high %v947, %v962
      %v973 = vunpack.c.l.s4 1934713408
      %v974 = vunpack.c.0.s8 %v973
      %v975 = vlaneseq
      %v976 = vshrl.u32 %v975, 7
      %v977 = vsub.s32 %v974, %v976
      %v978 = vrot.slane %v970, %v977
      %v980 = vunpack.c.l.s4 1934713408
      %v981 = vunpack.c.0.s8 %v980
      %v982 = vlaneseq
      %v983 = vshrl.u32 %v982, 7
      %v984 = vsub.s32 %v981, %v983
      %v985 = vrot.slane %v971, %v984
      %v986 = vcombine.low %v954, %v969
      %v987 = vcombine.high %v954, %v969
      %v989 = vunpack.c.l.s4 1934713408
      %v990 = vunpack.c.0.s8 %v989
      %v991 = vlaneseq
      %v992 = vshrl.u32 %v991, 7
      %v993 = vsub.s32 %v990, %v992
      %v994 = vrot.slane %v986, %v993
      %v996 = vunpack.c.l.s4 1934713408
      %v997 = vunpack.c.0.s8 %v996
      %v998 = vlaneseq
      %v999 = vshrl.u32 %v998, 7
      %v1000 = vsub.s32 %v997, %v999
      %v1001 = vrot.slane %v987, %v1000
      %v1002 = vcombine.high %v978, 0.0
      %v1003 = vcombine.high %v985, 0.0
      %v1004 = vcombine.high %v994, 0.0
      %v1005 = vcombine.high %v1001, 0.0
      %v1007 = vunpack.c.l.s4 1983009808
      %v1008 = vunpack.c.0.s8 %v1007
      %v1009 = vlaneseq
      %v1010 = vshrl.u32 %v1009, 7
      %v1011 = vsub.s32 %v1008, %v1010
      %v1012 = vrot.slane %v707, %v1011
      %v1015 = vunpack.c.l.s4 1983009808
      %v1016 = vunpack.c.0.s8 %v1015
      %v1017 = vlaneseq
      %v1018 = vshrl.u32 %v1017, 7
      %v1019 = vsub.s32 %v1016, %v1018
      %v1020 = vrot.slane %v938, %v1019
      %v1021 = vcombine.low %v1012, %v1020
      %v1022 = vcombine.high %v1012, %v1020
      %v1024 = vunpack.c.l.s4 1934713408
      %v1025 = vunpack.c.0.s8 %v1024
      %v1026 = vlaneseq
      %v1027 = vshrl.u32 %v1026, 7
      %v1028 = vsub.s32 %v1025, %v1027
      %v1029 = vrot.slane %v1021, %v1028
      %v1031 = vunpack.c.l.s4 1934713408
      %v1032 = vunpack.c.0.s8 %v1031
      %v1033 = vlaneseq
      %v1034 = vshrl.u32 %v1033, 7
      %v1035 = vsub.s32 %v1032, %v1034
      %v1036 = vrot.slane %v1022, %v1035
      %v1037 = vcombine.high %v1029, 0.0
      %v1038 = vcombine.high %v1036, 0.0
      %v1039 = vcombine.low %v978, %v985
      %v1041 = vunpack.c.l.s4 1983009808
      %v1042 = vunpack.c.0.s8 %v1041
      %v1043 = vlaneseq
      %v1044 = vshrl.u32 %v1043, 7
      %v1045 = vsub.s32 %v1042, %v1044
      %v1046 = vrot.slane %v1039, %v1045
      %v1047 = vcombine.low %v1002, %v1003
      %v1049 = vunpack.c.l.s4 1983009808
      %v1050 = vunpack.c.0.s8 %v1049
      %v1051 = vlaneseq
      %v1052 = vshrl.u32 %v1051, 7
      %v1053 = vsub.s32 %v1050, %v1052
      %v1054 = vrot.slane %v1047, %v1053
      %v1055 = vcombine.low %v994, %v1001
      %v1057 = vunpack.c.l.s4 1983009808
      %v1058 = vunpack.c.0.s8 %v1057
      %v1059 = vlaneseq
      %v1060 = vshrl.u32 %v1059, 7
      %v1061 = vsub.s32 %v1058, %v1060
      %v1062 = vrot.slane %v1055, %v1061
      %v1063 = vcombine.low %v1004, %v1005
      %v1065 = vunpack.c.l.s4 1983009808
      %v1066 = vunpack.c.0.s8 %v1065
      %v1067 = vlaneseq
      %v1068 = vshrl.u32 %v1067, 7
      %v1069 = vsub.s32 %v1066, %v1068
      %v1070 = vrot.slane %v1063, %v1069
      %v1071 = vcombine.low %v1046, %v1054
      %v1073 = vunpack.c.l.s4 1934713408
      %v1074 = vunpack.c.0.s8 %v1073
      %v1075 = vlaneseq
      %v1076 = vshrl.u32 %v1075, 7
      %v1077 = vsub.s32 %v1074, %v1076
      %v1078 = vrot.slane %v1071, %v1077
      %v1079 = vcombine.low %v1062, %v1070
      %v1081 = vunpack.c.l.s4 1934713408
      %v1082 = vunpack.c.0.s8 %v1081
      %v1083 = vlaneseq
      %v1084 = vshrl.u32 %v1083, 7
      %v1085 = vsub.s32 %v1082, %v1084
      %v1086 = vrot.slane %v1079, %v1085
      %v1087 = vcombine.low %v1078, %v1086
      %v1088 = vcombine.high %v1078, %v1086
      %v1089 = vcombine.low %v1029, %v1036
      %v1091 = vunpack.c.l.s4 1983009808
      %v1092 = vunpack.c.0.s8 %v1091
      %v1093 = vlaneseq
      %v1094 = vshrl.u32 %v1093, 7
      %v1095 = vsub.s32 %v1092, %v1094
      %v1096 = vrot.slane %v1089, %v1095
      %v1097 = vcombine.low %v1037, %v1038
      %v1099 = vunpack.c.l.s4 1983009808
      %v1100 = vunpack.c.0.s8 %v1099
      %v1101 = vlaneseq
      %v1102 = vshrl.u32 %v1101, 7
      %v1103 = vsub.s32 %v1100, %v1102
      %v1104 = vrot.slane %v1097, %v1103
      %v1105 = vcombine.low %v1096, %v1104
      %v1107 = vunpack.c.l.s4 1934713408
      %v1108 = vunpack.c.0.s8 %v1107
      %v1109 = vlaneseq
      %v1110 = vshrl.u32 %v1109, 7
      %v1111 = vsub.s32 %v1108, %v1110
      %v1112 = vrot.slane %v1105, %v1111
      %v1113 = vcombine.high %v1112, 0.0
      %v1114 = vpack.c.bf16 %v1112, %v1087
      %v1115 = vpack.c.bf16 %v1113, %v1088
      %1118 = vrot.lane.b32.xlu0 %v744, 64
      %v1119 = vpop.permute.xlu0 %1118
      %1120 = vrot.lane.b32.xlu0 %v747, 64
      %v1121 = vpop.permute.xlu0 %1120
      %v1123 = vcombine.high %v744, 0.0
      %v1125 = vunpack.c.l.s4 1983009808
      %v1126 = vunpack.c.0.s8 %v1125
      %v1127 = vlaneseq
      %v1128 = vshrl.u32 %v1127, 7
      %v1129 = vsub.s32 %v1126, %v1128
      %v1130 = vrot.slane %v744, %v1129
      %v1132 = vunpack.c.l.s4 1983009808
      %v1133 = vunpack.c.0.s8 %v1132
      %v1134 = vlaneseq
      %v1135 = vshrl.u32 %v1134, 7
      %v1136 = vsub.s32 %v1133, %v1135
      %v1137 = vrot.slane %v1123, %v1136
      %v1138 = vcombine.high %v1119, 0.0
      %v1140 = vunpack.c.l.s4 1983009808
      %v1141 = vunpack.c.0.s8 %v1140
      %v1142 = vlaneseq
      %v1143 = vshrl.u32 %v1142, 7
      %v1144 = vsub.s32 %v1141, %v1143
      %v1145 = vrot.slane %v1119, %v1144
      %v1147 = vunpack.c.l.s4 1983009808
      %v1148 = vunpack.c.0.s8 %v1147
      %v1149 = vlaneseq
      %v1150 = vshrl.u32 %v1149, 7
      %v1151 = vsub.s32 %v1148, %v1150
      %v1152 = vrot.slane %v1138, %v1151
      %v1153 = vcombine.low %v1130, %v1145
      %v1154 = vcombine.high %v1130, %v1145
      %v1156 = vunpack.c.l.s4 1934713408
      %v1157 = vunpack.c.0.s8 %v1156
      %v1158 = vlaneseq
      %v1159 = vshrl.u32 %v1158, 7
      %v1160 = vsub.s32 %v1157, %v1159
      %v1161 = vrot.slane %v1153, %v1160
      %v1163 = vunpack.c.l.s4 1934713408
      %v1164 = vunpack.c.0.s8 %v1163
      %v1165 = vlaneseq
      %v1166 = vshrl.u32 %v1165, 7
      %v1167 = vsub.s32 %v1164, %v1166
      %v1168 = vrot.slane %v1154, %v1167
      %v1169 = vcombine.low %v1137, %v1152
      %v1170 = vcombine.high %v1137, %v1152
      %v1172 = vunpack.c.l.s4 1934713408
      %v1173 = vunpack.c.0.s8 %v1172
      %v1174 = vlaneseq
      %v1175 = vshrl.u32 %v1174, 7
      %v1176 = vsub.s32 %v1173, %v1175
      %v1177 = vrot.slane %v1169, %v1176
      %v1179 = vunpack.c.l.s4 1934713408
      %v1180 = vunpack.c.0.s8 %v1179
      %v1181 = vlaneseq
      %v1182 = vshrl.u32 %v1181, 7
      %v1183 = vsub.s32 %v1180, %v1182
      %v1184 = vrot.slane %v1170, %v1183
      %v1185 = vcombine.high %v1161, 0.0
      %v1186 = vcombine.high %v1168, 0.0
      %v1187 = vcombine.high %v1177, 0.0
      %v1188 = vcombine.high %v1184, 0.0
      %v1190 = vunpack.c.l.s4 1983009808
      %v1191 = vunpack.c.0.s8 %v1190
      %v1192 = vlaneseq
      %v1193 = vshrl.u32 %v1192, 7
      %v1194 = vsub.s32 %v1191, %v1193
      %v1195 = vrot.slane %v747, %v1194
      %v1198 = vunpack.c.l.s4 1983009808
      %v1199 = vunpack.c.0.s8 %v1198
      %v1200 = vlaneseq
      %v1201 = vshrl.u32 %v1200, 7
      %v1202 = vsub.s32 %v1199, %v1201
      %v1203 = vrot.slane %v1121, %v1202
      %v1204 = vcombine.low %v1195, %v1203
      %v1205 = vcombine.high %v1195, %v1203
      %v1207 = vunpack.c.l.s4 1934713408
      %v1208 = vunpack.c.0.s8 %v1207
      %v1209 = vlaneseq
      %v1210 = vshrl.u32 %v1209, 7
      %v1211 = vsub.s32 %v1208, %v1210
      %v1212 = vrot.slane %v1204, %v1211
      %v1214 = vunpack.c.l.s4 1934713408
      %v1215 = vunpack.c.0.s8 %v1214
      %v1216 = vlaneseq
      %v1217 = vshrl.u32 %v1216, 7
      %v1218 = vsub.s32 %v1215, %v1217
      %v1219 = vrot.slane %v1205, %v1218
      %v1220 = vcombine.high %v1212, 0.0
      %v1221 = vcombine.high %v1219, 0.0
      %v1222 = vcombine.low %v1161, %v1168
      %v1224 = vunpack.c.l.s4 1983009808
      %v1225 = vunpack.c.0.s8 %v1224
      %v1226 = vlaneseq
      %v1227 = vshrl.u32 %v1226, 7
      %v1228 = vsub.s32 %v1225, %v1227
      %v1229 = vrot.slane %v1222, %v1228
      %v1230 = vcombine.low %v1185, %v1186
      %v1232 = vunpack.c.l.s4 1983009808
      %v1233 = vunpack.c.0.s8 %v1232
      %v1234 = vlaneseq
      %v1235 = vshrl.u32 %v1234, 7
      %v1236 = vsub.s32 %v1233, %v1235
      %v1237 = vrot.slane %v1230, %v1236
      %v1238 = vcombine.low %v1177, %v1184
      %v1240 = vunpack.c.l.s4 1983009808
      %v1241 = vunpack.c.0.s8 %v1240
      %v1242 = vlaneseq
      %v1243 = vshrl.u32 %v1242, 7
      %v1244 = vsub.s32 %v1241, %v1243
      %v1245 = vrot.slane %v1238, %v1244
      %v1246 = vcombine.low %v1187, %v1188
      %v1248 = vunpack.c.l.s4 1983009808
      %v1249 = vunpack.c.0.s8 %v1248
      %v1250 = vlaneseq
      %v1251 = vshrl.u32 %v1250, 7
      %v1252 = vsub.s32 %v1249, %v1251
      %v1253 = vrot.slane %v1246, %v1252
      %v1254 = vcombine.low %v1229, %v1237
      %v1256 = vunpack.c.l.s4 1934713408
      %v1257 = vunpack.c.0.s8 %v1256
      %v1258 = vlaneseq
      %v1259 = vshrl.u32 %v1258, 7
      %v1260 = vsub.s32 %v1257, %v1259
      %v1261 = vrot.slane %v1254, %v1260
      %v1262 = vcombine.low %v1245, %v1253
      %v1264 = vunpack.c.l.s4 1934713408
      %v1265 = vunpack.c.0.s8 %v1264
      %v1266 = vlaneseq
      %v1267 = vshrl.u32 %v1266, 7
      %v1268 = vsub.s32 %v1265, %v1267
      %v1269 = vrot.slane %v1262, %v1268
      %v1270 = vcombine.low %v1261, %v1269
      %v1271 = vcombine.high %v1261, %v1269
      %v1272 = vcombine.low %v1212, %v1219
      %v1274 = vunpack.c.l.s4 1983009808
      %v1275 = vunpack.c.0.s8 %v1274
      %v1276 = vlaneseq
      %v1277 = vshrl.u32 %v1276, 7
      %v1278 = vsub.s32 %v1275, %v1277
      %v1279 = vrot.slane %v1272, %v1278
      %v1280 = vcombine.low %v1220, %v1221
      %v1282 = vunpack.c.l.s4 1983009808
      %v1283 = vunpack.c.0.s8 %v1282
      %v1284 = vlaneseq
      %v1285 = vshrl.u32 %v1284, 7
      %v1286 = vsub.s32 %v1283, %v1285
      %v1287 = vrot.slane %v1280, %v1286
      %v1288 = vcombine.low %v1279, %v1287
      %v1290 = vunpack.c.l.s4 1934713408
      %v1291 = vunpack.c.0.s8 %v1290
      %v1292 = vlaneseq
      %v1293 = vshrl.u32 %v1292, 7
      %v1294 = vsub.s32 %v1291, %v1293
      %v1295 = vrot.slane %v1288, %v1294
      %v1296 = vcombine.high %v1295, 0.0
      %v1297 = vpack.c.bf16 %v1295, %v1270
      %v1298 = vpack.c.bf16 %v1296, %v1271
      %vm1299 = vcmask 523264
      %v1301 = vsel %vm1299, %v931, 0
      %v1304 = vsel %vm1299, %v1114, 0
      %1306 = vmatprep.subr.bf16.mxu0 0
      %1307 = vmatpush1.bf16.xpose.msra.mxu0 %v1304
      %1308 = vmatprep.subr.bf16.mxu0 0
      %1309 = vmatpush1.bf16.xpose.msra.mxu0 0
      %1310 = vmatprep.subr.bf16.mxu0 0
      %1311 = vmatpush1.bf16.xpose.msra.mxu0 0
      %1312 = vmatprep.subr.bf16.mxu0 0
      %1313 = vmatpush1.bf16.xpose.msra.mxu0 0
      %1314 = vmatprep.subr.bf16.mxu0 0
      %1315 = vmatpush1.bf16.xpose.msra.mxu0 0
      %1316 = vmatprep.subr.bf16.mxu0 0
      %1317 = vmatpush1.bf16.xpose.msra.mxu0 0
      %1318 = vmatprep.subr.bf16.mxu0 0
      %1319 = vmatpush1.bf16.xpose.msra.mxu0 0
      %1320 = vmatprep.subr.bf16.mxu0 0
      %1321 = vmatpush1.bf16.xpose.msra.mxu0 0
      %1322 = vmatprep.subr.bf16.mxu0 0
      %1323 = vmatpush1.bf16.xpose.msra.mxu0 0
      %1324 = vmatprep.subr.bf16.mxu0 0
      %1325 = vmatpush1.bf16.xpose.msra.mxu0 0
      %1326 = vmatprep.subr.bf16.mxu0 0
      %1327 = vmatpush1.bf16.xpose.msra.mxu0 0
      %1328 = vmatprep.subr.bf16.mxu0 0
      %1329 = vmatpush1.bf16.xpose.msra.mxu0 0
      %1330 = vmatprep.subr.bf16.mxu0 0
      %1331 = vmatpush1.bf16.xpose.msra.mxu0 0
      %1332 = vmatprep.subr.bf16.mxu0 0
      %1333 = vmatpush1.bf16.xpose.msra.mxu0 0
      %1334 = vmatprep.subr.bf16.mxu0 0
      %1335 = vmatpush1.bf16.xpose.msra.mxu0 0
      %1336 = vmatprep.subr.bf16.mxu0 0
      %1337 = vmatpush1.bf16.xpose.msra.mxu0 0
      %1338 = vmatprep.mubr.bf16.mxu0 0
      %1339 = vmatmul.mubr.bf16.gmra.mrb[0].mxu0 %v1301
      %v1340 = vpop.f32.mrb[0].mxu0
      %v1341 = vadd.f32 0.0, %v1340
      %v1342 = vpop.f32.mrb[0].mxu0
      %v1343 = vpop.f32.mrb[0].mxu0
      %v1344 = vadd.f32 0.0, %v1343
      %v1345 = vpop.f32.mrb[0].mxu0
      %1346 = vdwg.mxu0
      %v1348 = vsel %vm1299, %v932, 0
      %v1351 = vsel %vm1299, %v1115, 0
      %1353 = vmatprep.subr.bf16.mxu0 0
      %1354 = vmatpush1.bf16.xpose.msra.mxu0 %v1351
      %1355 = vmatprep.subr.bf16.mxu0 0
      %1356 = vmatpush1.bf16.xpose.msra.mxu0 0
      %1357 = vmatprep.subr.bf16.mxu0 0
      %1358 = vmatpush1.bf16.xpose.msra.mxu0 0
      %1359 = vmatprep.subr.bf16.mxu0 0
      %1360 = vmatpush1.bf16.xpose.msra.mxu0 0
      %1361 = vmatprep.subr.bf16.mxu0 0
      %1362 = vmatpush1.bf16.xpose.msra.mxu0 0
      %1363 = vmatprep.subr.bf16.mxu0 0
      %1364 = vmatpush1.bf16.xpose.msra.mxu0 0
      %1365 = vmatprep.subr.bf16.mxu0 0
      %1366 = vmatpush1.bf16.xpose.msra.mxu0 0
      %1367 = vmatprep.subr.bf16.mxu0 0
      %1368 = vmatpush1.bf16.xpose.msra.mxu0 0
      %1369 = vmatprep.subr.bf16.mxu0 0
      %1370 = vmatpush1.bf16.xpose.msra.mxu0 0
      %1371 = vmatprep.subr.bf16.mxu0 0
      %1372 = vmatpush1.bf16.xpose.msra.mxu0 0
      %1373 = vmatprep.subr.bf16.mxu0 0
      %1374 = vmatpush1.bf16.xpose.msra.mxu0 0
      %1375 = vmatprep.subr.bf16.mxu0 0
      %1376 = vmatpush1.bf16.xpose.msra.mxu0 0
      %1377 = vmatprep.subr.bf16.mxu0 0
      %1378 = vmatpush1.bf16.xpose.msra.mxu0 0
      %1379 = vmatprep.subr.bf16.mxu0 0
      %1380 = vmatpush1.bf16.xpose.msra.mxu0 0
      %1381 = vmatprep.subr.bf16.mxu0 0
      %1382 = vmatpush1.bf16.xpose.msra.mxu0 0
      %1383 = vmatprep.subr.bf16.mxu0 0
      %1384 = vmatpush1.bf16.xpose.msra.mxu0 0
      %1385 = vmatprep.mubr.bf16.mxu0 0
      %1386 = vmatmul.mubr.bf16.gmra.mrb[0].mxu0 %v1348
      %v1387 = vpop.f32.mrb[0].mxu0
      %v1388 = vadd.f32 0.0, %v1387
      %v1389 = vpop.f32.mrb[0].mxu0
      %v1390 = vpop.f32.mrb[0].mxu0
      %v1391 = vadd.f32 0.0, %v1390
      %v1392 = vpop.f32.mrb[0].mxu0
      %1393 = vdwg.mxu0
      %v1394 = vmul.f32 %v1341, 0.125
      %v1395 = vmul.f32 %v1344, 0.125
      %v1396 = vmul.f32 %v1388, 0.125
      %v1397 = vmul.f32 %v1391, 0.125
      %v1398 = vlaneseq
      %v1399 = vshrl.u32 %v1398, 7
      %v1400 = vadd.s32 %v1399, 8
      %v1401 = vlaneseq
      %v1402 = vand.u32 %v1401, 127
      %vm1403 = vcmp.le.s32.totalorder %v1402, %v1399
      %vm1404 = vcmp.le.s32.totalorder %v1402, %v1400
      %v1405 = vsel %vm1403, %v1394, -inf
      %v1406 = vsel %vm1404, %v1395, -inf
      %v1407 = vsel %vm1403, %v1396, -inf
      %v1408 = vsel %vm1404, %v1397, -inf
      %vm1409 = vcmask 97280
      %v1410 = vsel %vm1409, %v1405, -inf
      %1411 = vmax.xlane.f32.xlu0 %v1410
      %v1412 = vpop.xlane.xlu0 %1411
      %vm1413 = vcmask 93184
      %v1414 = vsel %vm1413, %v1406, -inf
      %1415 = vmax.xlane.f32.xlu0 %v1414
      %v1416 = vpop.xlane.xlu0 %1415
      %v1417 = vsel %vm1409, %v1407, -inf
      %1418 = vmax.xlane.f32.xlu0 %v1417
      %v1419 = vpop.xlane.xlu0 %1418
      %v1420 = vsel %vm1413, %v1408, -inf
      %1421 = vmax.xlane.f32.xlu0 %v1420
      %v1422 = vpop.xlane.xlu0 %1421
      %v1423 = vsub.f32 %v1405, %v1412
      %v1424 = vsub.f32 %v1406, %v1416
      %v1425 = vsub.f32 %v1407, %v1419
      %v1426 = vsub.f32 %v1408, %v1422
      %v1427 = vmul.f32 %v1423, 1.442695
      %v1428 = vpow.pop %v1427
      %v1429 = vmul.f32 %v1424, 1.442695
      %v1430 = vpow.pop %v1429
      %v1431 = vmul.f32 %v1425, 1.442695
      %v1432 = vpow.pop %v1431
      %v1433 = vmul.f32 %v1426, 1.442695
      %v1434 = vpow.pop %v1433
      %v1435 = vsel %vm1409, %v1428, 0.0
      %1436 = vadd.xlane.f32.xlu0 %v1435
      %v1437 = vpop.xlane.xlu0 %1436
      %v1438 = vsel %vm1413, %v1430, 0.0
      %1439 = vadd.xlane.f32.xlu0 %v1438
      %v1440 = vpop.xlane.xlu0 %1439
      %v1441 = vsel %vm1409, %v1432, 0.0
      %1442 = vadd.xlane.f32.xlu0 %v1441
      %v1443 = vpop.xlane.xlu0 %1442
      %v1444 = vsel %vm1413, %v1434, 0.0
      %1445 = vadd.xlane.f32.xlu0 %v1444
      %v1446 = vpop.xlane.xlu0 %1445
      %v1447 = vrcp.pop %v1437
      %v1448 = vrcp.pop %v1440
      %v1449 = vrcp.pop %v1443
      %v1450 = vrcp.pop %v1446
      %v1451 = vmul.f32 %v1428, %v1447
      %v1452 = vmul.f32 %v1430, %v1448
      %v1453 = vmul.f32 %v1432, %v1449
      %v1454 = vmul.f32 %v1434, %v1450
      %v1455 = vpack.c.bf16 %v1452, %v1451
      %v1456 = vpack.c.bf16 %v1454, %v1453
      %v1458 = vsel %vm1409, %v1455, 0
      %vm1460 = vcmask 1045504
      %v1462 = vsel %vm1460, %v1297, 0
      %1464 = vmatprep.subr.bf16.mxu0 0
      %1465 = vmatpush1.bf16.msra.mxu0 %v1462
      %1466 = vmatprep.subr.bf16.mxu0 0
      %1467 = vmatpush1.bf16.msra.mxu0 0
      %1468 = vmatprep.subr.bf16.mxu0 0
      %1469 = vmatpush1.bf16.msra.mxu0 0
      %1470 = vmatprep.subr.bf16.mxu0 0
      %1471 = vmatpush1.bf16.msra.mxu0 0
      %1472 = vmatprep.subr.bf16.mxu0 0
      %1473 = vmatpush1.bf16.msra.mxu0 0
      %1474 = vmatprep.subr.bf16.mxu0 0
      %1475 = vmatpush1.bf16.msra.mxu0 0
      %1476 = vmatprep.subr.bf16.mxu0 0
      %1477 = vmatpush1.bf16.msra.mxu0 0
      %1478 = vmatprep.subr.bf16.mxu0 0
      %1479 = vmatpush1.bf16.msra.mxu0 0
      %1480 = vmatprep.subr.bf16.mxu0 0
      %1481 = vmatpush1.bf16.msra.mxu0 0
      %1482 = vmatprep.subr.bf16.mxu0 0
      %1483 = vmatpush1.bf16.msra.mxu0 0
      %1484 = vmatprep.subr.bf16.mxu0 0
      %1485 = vmatpush1.bf16.msra.mxu0 0
      %1486 = vmatprep.subr.bf16.mxu0 0
      %1487 = vmatpush1.bf16.msra.mxu0 0
      %1488 = vmatprep.subr.bf16.mxu0 0
      %1489 = vmatpush1.bf16.msra.mxu0 0
      %1490 = vmatprep.subr.bf16.mxu0 0
      %1491 = vmatpush1.bf16.msra.mxu0 0
      %1492 = vmatprep.subr.bf16.mxu0 0
      %1493 = vmatpush1.bf16.msra.mxu0 0
      %1494 = vmatprep.subr.bf16.mxu0 0
      %1495 = vmatpush1.bf16.msra.mxu0 0
      %1496 = vmatprep.mubr.bf16.mxu0 0
      %1497 = vmatmul.mubr.bf16.gmra.mrb[0].mxu0 %v1458
      %v1498 = vpop.f32.mrb[0].mxu0
      %v1499 = vadd.f32 0.0, %v1498
      %v1500 = vpop.f32.mrb[0].mxu0
      %v1501 = vpop.f32.mrb[0].mxu0
      %v1502 = vadd.f32 0.0, %v1501
      %v1503 = vpop.f32.mrb[0].mxu0
      %1504 = vdwg.mxu0
      %v1506 = vsel %vm1409, %v1456, 0
      %v1509 = vsel %vm1460, %v1298, 0
      %1511 = vmatprep.subr.bf16.mxu0 0
      %1512 = vmatpush1.bf16.msra.mxu0 %v1509
      %1513 = vmatprep.subr.bf16.mxu0 0
      %1514 = vmatpush1.bf16.msra.mxu0 0
      %1515 = vmatprep.subr.bf16.mxu0 0
      %1516 = vmatpush1.bf16.msra.mxu0 0
      %1517 = vmatprep.subr.bf16.mxu0 0
      %1518 = vmatpush1.bf16.msra.mxu0 0
      %1519 = vmatprep.subr.bf16.mxu0 0
      %1520 = vmatpush1.bf16.msra.mxu0 0
      %1521 = vmatprep.subr.bf16.mxu0 0
      %1522 = vmatpush1.bf16.msra.mxu0 0
      %1523 = vmatprep.subr.bf16.mxu0 0
      %1524 = vmatpush1.bf16.msra.mxu0 0
      %1525 = vmatprep.subr.bf16.mxu0 0
      %1526 = vmatpush1.bf16.msra.mxu0 0
      %1527 = vmatprep.subr.bf16.mxu0 0
      %1528 = vmatpush1.bf16.msra.mxu0 0
      %1529 = vmatprep.subr.bf16.mxu0 0
      %1530 = vmatpush1.bf16.msra.mxu0 0
      %1531 = vmatprep.subr.bf16.mxu0 0
      %1532 = vmatpush1.bf16.msra.mxu0 0
      %1533 = vmatprep.subr.bf16.mxu0 0
      %1534 = vmatpush1.bf16.msra.mxu0 0
      %1535 = vmatprep.subr.bf16.mxu0 0
      %1536 = vmatpush1.bf16.msra.mxu0 0
      %1537 = vmatprep.subr.bf16.mxu0 0
      %1538 = vmatpush1.bf16.msra.mxu0 0
      %1539 = vmatprep.subr.bf16.mxu0 0
      %1540 = vmatpush1.bf16.msra.mxu0 0
      %1541 = vmatprep.subr.bf16.mxu0 0
      %1542 = vmatpush1.bf16.msra.mxu0 0
      %1543 = vmatprep.mubr.bf16.mxu0 0
      %1544 = vmatmul.mubr.bf16.gmra.mrb[0].mxu0 %v1506
      %v1545 = vpop.f32.mrb[0].mxu0
      %v1546 = vadd.f32 0.0, %v1545
      %v1547 = vpop.f32.mrb[0].mxu0
      %v1548 = vpop.f32.mrb[0].mxu0
      %v1549 = vadd.f32 0.0, %v1548
      %v1550 = vpop.f32.mrb[0].mxu0
      %1551 = vdwg.mxu0
      %v1552 = vcombine.high %v1499, 0.0
      %v1554 = vunpack.c.l.s4 1983009808
      %v1555 = vunpack.c.0.s8 %v1554
      %v1556 = vlaneseq
      %v1557 = vshrl.u32 %v1556, 7
      %v1558 = vsub.s32 %v1555, %v1557
      %v1559 = vrot.slane %v1499, %v1558
      %v1561 = vunpack.c.l.s4 1983009808
      %v1562 = vunpack.c.0.s8 %v1561
      %v1563 = vlaneseq
      %v1564 = vshrl.u32 %v1563, 7
      %v1565 = vsub.s32 %v1562, %v1564
      %v1566 = vrot.slane %v1552, %v1565
      %v1567 = vcombine.high %v1546, 0.0
      %v1569 = vunpack.c.l.s4 1983009808
      %v1570 = vunpack.c.0.s8 %v1569
      %v1571 = vlaneseq
      %v1572 = vshrl.u32 %v1571, 7
      %v1573 = vsub.s32 %v1570, %v1572
      %v1574 = vrot.slane %v1546, %v1573
      %v1576 = vunpack.c.l.s4 1983009808
      %v1577 = vunpack.c.0.s8 %v1576
      %v1578 = vlaneseq
      %v1579 = vshrl.u32 %v1578, 7
      %v1580 = vsub.s32 %v1577, %v1579
      %v1581 = vrot.slane %v1567, %v1580
      %v1582 = vcombine.low %v1559, %v1574
      %v1583 = vcombine.high %v1559, %v1574
      %v1585 = vunpack.c.l.s4 1934713408
      %v1586 = vunpack.c.0.s8 %v1585
      %v1587 = vlaneseq
      %v1588 = vshrl.u32 %v1587, 7
      %v1589 = vsub.s32 %v1586, %v1588
      %v1590 = vrot.slane %v1582, %v1589
      %v1592 = vunpack.c.l.s4 1934713408
      %v1593 = vunpack.c.0.s8 %v1592
      %v1594 = vlaneseq
      %v1595 = vshrl.u32 %v1594, 7
      %v1596 = vsub.s32 %v1593, %v1595
      %v1597 = vrot.slane %v1583, %v1596
      %v1598 = vcombine.low %v1566, %v1581
      %v1599 = vcombine.high %v1566, %v1581
      %v1601 = vunpack.c.l.s4 1934713408
      %v1602 = vunpack.c.0.s8 %v1601
      %v1603 = vlaneseq
      %v1604 = vshrl.u32 %v1603, 7
      %v1605 = vsub.s32 %v1602, %v1604
      %v1606 = vrot.slane %v1598, %v1605
      %v1608 = vunpack.c.l.s4 1934713408
      %v1609 = vunpack.c.0.s8 %v1608
      %v1610 = vlaneseq
      %v1611 = vshrl.u32 %v1610, 7
      %v1612 = vsub.s32 %v1609, %v1611
      %v1613 = vrot.slane %v1599, %v1612
      %v1614 = vcombine.high %v1590, 0.0
      %v1615 = vcombine.high %v1597, 0.0
      %v1616 = vcombine.high %v1606, 0.0
      %v1617 = vcombine.high %v1613, 0.0
      %v1619 = vunpack.c.l.s4 1983009808
      %v1620 = vunpack.c.0.s8 %v1619
      %v1621 = vlaneseq
      %v1622 = vshrl.u32 %v1621, 7
      %v1623 = vsub.s32 %v1620, %v1622
      %v1624 = vrot.slane %v1502, %v1623
      %v1626 = vunpack.c.l.s4 1983009808
      %v1627 = vunpack.c.0.s8 %v1626
      %v1628 = vlaneseq
      %v1629 = vshrl.u32 %v1628, 7
      %v1630 = vsub.s32 %v1627, %v1629
      %v1631 = vrot.slane %v1549, %v1630
      %v1632 = vcombine.low %v1624, %v1631
      %v1633 = vcombine.high %v1624, %v1631
      %v1635 = vunpack.c.l.s4 1934713408
      %v1636 = vunpack.c.0.s8 %v1635
      %v1637 = vlaneseq
      %v1638 = vshrl.u32 %v1637, 7
      %v1639 = vsub.s32 %v1636, %v1638
      %v1640 = vrot.slane %v1632, %v1639
      %v1642 = vunpack.c.l.s4 1934713408
      %v1643 = vunpack.c.0.s8 %v1642
      %v1644 = vlaneseq
      %v1645 = vshrl.u32 %v1644, 7
      %v1646 = vsub.s32 %v1643, %v1645
      %v1647 = vrot.slane %v1633, %v1646
      %v1648 = vcombine.high %v1640, 0.0
      %v1649 = vcombine.high %v1647, 0.0
      %v1650 = vcombine.low %v1590, %v1597
      %v1652 = vunpack.c.l.s4 1983009808
      %v1653 = vunpack.c.0.s8 %v1652
      %v1654 = vlaneseq
      %v1655 = vshrl.u32 %v1654, 7
      %v1656 = vsub.s32 %v1653, %v1655
      %v1657 = vrot.slane %v1650, %v1656
      %v1658 = vcombine.low %v1614, %v1615
      %v1660 = vunpack.c.l.s4 1983009808
      %v1661 = vunpack.c.0.s8 %v1660
      %v1662 = vlaneseq
      %v1663 = vshrl.u32 %v1662, 7
      %v1664 = vsub.s32 %v1661, %v1663
      %v1665 = vrot.slane %v1658, %v1664
      %v1666 = vcombine.low %v1606, %v1613
      %v1668 = vunpack.c.l.s4 1983009808
      %v1669 = vunpack.c.0.s8 %v1668
      %v1670 = vlaneseq
      %v1671 = vshrl.u32 %v1670, 7
      %v1672 = vsub.s32 %v1669, %v1671
      %v1673 = vrot.slane %v1666, %v1672
      %v1674 = vcombine.low %v1616, %v1617
      %v1676 = vunpack.c.l.s4 1983009808
      %v1677 = vunpack.c.0.s8 %v1676
      %v1678 = vlaneseq
      %v1679 = vshrl.u32 %v1678, 7
      %v1680 = vsub.s32 %v1677, %v1679
      %v1681 = vrot.slane %v1674, %v1680
      %v1682 = vcombine.low %v1657, %v1665
      %v1684 = vunpack.c.l.s4 1934713408
      %v1685 = vunpack.c.0.s8 %v1684
      %v1686 = vlaneseq
      %v1687 = vshrl.u32 %v1686, 7
      %v1688 = vsub.s32 %v1685, %v1687
      %v1689 = vrot.slane %v1682, %v1688
      %v1690 = vcombine.low %v1673, %v1681
      %v1692 = vunpack.c.l.s4 1934713408
      %v1693 = vunpack.c.0.s8 %v1692
      %v1694 = vlaneseq
      %v1695 = vshrl.u32 %v1694, 7
      %v1696 = vsub.s32 %v1693, %v1695
      %v1697 = vrot.slane %v1690, %v1696
      %v1698 = vcombine.low %v1689, %v1697
      %v1699 = vcombine.high %v1689, %v1697
      %v1700 = vcombine.low %v1640, %v1647
      %v1702 = vunpack.c.l.s4 1983009808
      %v1703 = vunpack.c.0.s8 %v1702
      %v1704 = vlaneseq
      %v1705 = vshrl.u32 %v1704, 7
      %v1706 = vsub.s32 %v1703, %v1705
      %v1707 = vrot.slane %v1700, %v1706
      %v1708 = vcombine.low %v1648, %v1649
      %v1710 = vunpack.c.l.s4 1983009808
      %v1711 = vunpack.c.0.s8 %v1710
      %v1712 = vlaneseq
      %v1713 = vshrl.u32 %v1712, 7
      %v1714 = vsub.s32 %v1711, %v1713
      %v1715 = vrot.slane %v1708, %v1714
      %v1716 = vcombine.low %v1707, %v1715
      %v1718 = vunpack.c.l.s4 1934713408
      %v1719 = vunpack.c.0.s8 %v1718
      %v1720 = vlaneseq
      %v1721 = vshrl.u32 %v1720, 7
      %v1722 = vsub.s32 %v1719, %v1721
      %v1723 = vrot.slane %v1716, %v1722
      %v1724 = vcombine.high %v1723, 0.0
      %1727 = vrot.lane.b32.xlu0 %v1699, 64
      %v1728 = vpop.permute.xlu0 %1727
      %1729 = vrot.lane.b32.xlu0 %v1724, 64
      %v1730 = vpop.permute.xlu0 %1729
      %v1733 = vsel %vm1299, %v1698, %v1728
      %v1734 = vsel %vm1299, %v1723, %v1730
      %v1735 = vpack.c.bf16 %v1734, %v1733
      %v1736 = vld [vmem:[%s5] sm:$0xf]
      %v1737 = vld [vmem:[%s5 + $0x4] sm:$0xf]
      %v1738 = vld [vmem:[%s5 + $0x8] sm:$0xf]
      %v1739 = vld [vmem:[%s5 + $0xc] sm:$0xf]
      %v1740 = vld [vmem:[%s5 + $0x10] sm:$0xf]
      %v1741 = vld [vmem:[%s5 + $0x14] sm:$0xf]
      %v1742 = vld [vmem:[%s5 + $0x18] sm:$0xf]
      %v1743 = vld [vmem:[%s5 + $0x1c] sm:$0xf]
      %v1744 = vld [vmem:[%s5 + $0x20] sm:$0xf]
      %v1745 = vld [vmem:[%s5 + $0x24] sm:$0xf]
      %v1746 = vld [vmem:[%s5 + $0x28] sm:$0xf]
      %v1747 = vld [vmem:[%s5 + $0x2c] sm:$0xf]
      %v1748 = vld [vmem:[%s5 + $0x30] sm:$0xf]
      %v1749 = vld [vmem:[%s5 + $0x34] sm:$0xf]
      %v1750 = vld [vmem:[%s5 + $0x38] sm:$0xf]
      %v1751 = vld [vmem:[%s5 + $0x3c] sm:$0xf]
      %v1768 = vunpack.c.l.b16 %v1736
      %v1769 = vunpack.c.l.b16 %v1737
      %v1770 = vunpack.c.l.b16 %v1738
      %v1771 = vunpack.c.l.b16 %v1739
      %v1772 = vunpack.c.l.b16 %v1740
      %v1773 = vunpack.c.l.b16 %v1741
      %v1774 = vunpack.c.l.b16 %v1742
      %v1775 = vunpack.c.l.b16 %v1743
      %v1776 = vunpack.c.l.b16 %v1744
      %v1777 = vunpack.c.l.b16 %v1745
      %v1778 = vunpack.c.l.b16 %v1746
      %v1779 = vunpack.c.l.b16 %v1747
      %v1780 = vunpack.c.l.b16 %v1748
      %v1781 = vunpack.c.l.b16 %v1749
      %v1782 = vunpack.c.l.b16 %v1750
      %v1783 = vunpack.c.l.b16 %v1751
      %v1784 = vpack.c.b16 %v1769, %v1768
      %v1785 = vpack.c.b16 %v1771, %v1770
      %v1786 = vpack.c.b16 %v1773, %v1772
      %v1787 = vpack.c.b16 %v1775, %v1774
      %v1788 = vpack.c.b16 %v1777, %v1776
      %v1789 = vpack.c.b16 %v1779, %v1778
      %v1790 = vpack.c.b16 %v1781, %v1780
      %v1791 = vpack.c.b16 %v1783, %v1782
      %1800 = vmatprep.subr.bf16.mxu0 0
      %1801 = vmatpush1.bf16.msra.mxu0 %v1784
      %1802 = vmatprep.subr.bf16.mxu0 0
      %1803 = vmatpush1.bf16.msra.mxu0 %v1785
      %1804 = vmatprep.subr.bf16.mxu0 0
      %1805 = vmatpush1.bf16.msra.mxu0 %v1786
      %1806 = vmatprep.subr.bf16.mxu0 0
      %1807 = vmatpush1.bf16.msra.mxu0 %v1787
      %1808 = vmatprep.subr.bf16.mxu0 0
      %1809 = vmatpush1.bf16.msra.mxu0 %v1788
      %1810 = vmatprep.subr.bf16.mxu0 0
      %1811 = vmatpush1.bf16.msra.mxu0 %v1789
      %1812 = vmatprep.subr.bf16.mxu0 0
      %1813 = vmatpush1.bf16.msra.mxu0 %v1790
      %1814 = vmatprep.subr.bf16.mxu0 0
      %1815 = vmatpush1.bf16.msra.mxu0 %v1791
      %1816 = vmatprep.subr.bf16.mxu0 0
      %1817 = vmatpush1.bf16.msra.mxu0 0
      %1818 = vmatprep.subr.bf16.mxu0 0
      %1819 = vmatpush1.bf16.msra.mxu0 0
      %1820 = vmatprep.subr.bf16.mxu0 0
      %1821 = vmatpush1.bf16.msra.mxu0 0
      %1822 = vmatprep.subr.bf16.mxu0 0
      %1823 = vmatpush1.bf16.msra.mxu0 0
      %1824 = vmatprep.subr.bf16.mxu0 0
      %1825 = vmatpush1.bf16.msra.mxu0 0
      %1826 = vmatprep.subr.bf16.mxu0 0
      %1827 = vmatpush1.bf16.msra.mxu0 0
      %1828 = vmatprep.subr.bf16.mxu0 0
      %1829 = vmatpush1.bf16.msra.mxu0 0
      %1830 = vmatprep.subr.bf16.mxu0 0
      %1831 = vmatpush1.bf16.msra.mxu0 0
      %1832 = vmatprep.mubr.bf16.mxu0 0
      %1833 = vmatmul.mubr.bf16.gmra.mrb[0].mxu0 %v1735
      %v1834 = vpop.f32.mrb[0].mxu0
      %v1835 = vadd.f32 0.0, %v1834
      %v1836 = vpop.f32.mrb[0].mxu0
      %v1837 = vpop.f32.mrb[0].mxu0
      %v1838 = vadd.f32 0.0, %v1837
      %v1839 = vpop.f32.mrb[0].mxu0
      %1840 = vdwg.mxu0
      %v1841 = vadd.f32 %v442, %v1835
      %v1842 = vadd.f32 %v443, %v1838
      %v1843 = vld [vmem:[%s6] sm:$0x1]
      %v1845 = vlaneseq
      %v1846 = vshrl.u32 %v1845, 7
      %v1847 = vsub.s32 0, %v1846
      %v1848 = vrot.slane %v1843, %v1847
      %v1850 = vadd.f32 %v1841, %v1848
      %v1851 = vadd.f32 %v1842, %v1848
      %v1852 = vld [vmem:[%s7] sm:$0x1]
      %v1853 = vld [vmem:[%s8] sm:$0x1]
      %1854 = vadd.xlane.f32.xlu0 %v1850
      %v1855 = vpop.xlane.xlu0 %1854
      %v1856 = vsel %vm448, %v1851, 0.0
      %1857 = vadd.xlane.f32.xlu0 %v1856
      %v1858 = vpop.xlane.xlu0 %1857
      %v1859 = vmul.f32 %v1855, %v452
      %v1860 = vmul.f32 %v1858, %v452
      %v1861 = vsub.f32 %v1850, %v1859
      %v1862 = vsub.f32 %v1851, %v1860
      %v1863 = vmul.f32 %v1861, %v1861
      %v1864 = vmul.f32 %v1862, %v1862
      %1865 = vadd.xlane.f32.xlu0 %v1863
      %v1866 = vpop.xlane.xlu0 %1865
      %v1867 = vsel %vm448, %v1864, 0.0
      %1868 = vadd.xlane.f32.xlu0 %v1867
      %v1869 = vpop.xlane.xlu0 %1868
      %v1870 = vmul.f32 %v1866, %v452
      %v1871 = vmul.f32 %v1869, %v452
      %v1872 = vadd.f32 %v1870, 1e-05
      %v1873 = vadd.f32 %v1871, 1e-05
      %v1874 = vrsqrt.pop %v1872
      %v1875 = vrsqrt.pop %v1873
      %v1876 = vmul.f32 %v1861, %v1874
      %v1877 = vmul.f32 %v1862, %v1875
      %v1879 = vlaneseq
      %v1880 = vshrl.u32 %v1879, 7
      %v1881 = vsub.s32 0, %v1880
      %v1882 = vrot.slane %v1852, %v1881
      %v1884 = vmul.f32 %v1876, %v1882
      %v1885 = vmul.f32 %v1877, %v1882
      %v1887 = vlaneseq
      %v1888 = vshrl.u32 %v1887, 7
      %v1889 = vsub.s32 0, %v1888
      %v1890 = vrot.slane %v1853, %v1889
      %v1892 = vadd.f32 %v1884, %v1890
      %v1893 = vadd.f32 %v1885, %v1890
      %v1894 = vpack.c.bf16 %v1893, %v1892
      %v1895 = vld [vmem:[%s9] sm:$0xff]
      %v1896 = vld [vmem:[%s9 + $0x8] sm:$0xff]
      %v1897 = vld [vmem:[%s9 + $0x10] sm:$0xff]
      %v1898 = vld [vmem:[%s9 + $0x18] sm:$0xff]
      %v1899 = vld [vmem:[%s9 + $0x20] sm:$0xff]
      %v1900 = vld [vmem:[%s9 + $0x28] sm:$0xff]
      %v1901 = vld [vmem:[%s9 + $0x30] sm:$0xff]
      %v1902 = vld [vmem:[%s9 + $0x38] sm:$0xff]
      %v1903 = vld [vmem:[%s9 + $0x40] sm:$0xff]
      %v1904 = vld [vmem:[%s9 + $0x48] sm:$0xff]
      %v1905 = vld [vmem:[%s9 + $0x50] sm:$0xff]
      %v1906 = vld [vmem:[%s9 + $0x58] sm:$0xff]
      %v1907 = vld [vmem:[%s9 + $0x60] sm:$0xff]
      %v1908 = vld [vmem:[%s9 + $0x68] sm:$0xff]
      %v1909 = vld [vmem:[%s9 + $0x70] sm:$0xff]
      %v1910 = vld [vmem:[%s9 + $0x78] sm:$0xff]
      %v1911 = vld [vmem:[%s9 + $0x80] sm:$0xff]
      %v1912 = vld [vmem:[%s9 + $0x88] sm:$0xff]
      %v1913 = vld [vmem:[%s9 + $0x90] sm:$0xff]
      %v1914 = vld [vmem:[%s9 + $0x98] sm:$0xff]
      %v1915 = vld [vmem:[%s9 + $0xa0] sm:$0xff]
      %v1916 = vld [vmem:[%s9 + $0xa8] sm:$0xff]
      %v1917 = vld [vmem:[%s9 + $0xb0] sm:$0xff]
      %v1918 = vld [vmem:[%s9 + $0xb8] sm:$0xff]
      %v1919 = vld [vmem:[%s9 + $0xc0] sm:$0xff]
      %v1920 = vld [vmem:[%s9 + $0xc8] sm:$0xff]
      %v1921 = vld [vmem:[%s9 + $0xd0] sm:$0xff]
      %v1922 = vld [vmem:[%s9 + $0xd8] sm:$0xff]
      %v1923 = vld [vmem:[%s9 + $0xe0] sm:$0xff]
      %v1924 = vld [vmem:[%s9 + $0xe8] sm:$0xff]
      %v1925 = vld [vmem:[%s9 + $0xf0] sm:$0xff]
      %v1926 = vld [vmem:[%s9 + $0xf8] sm:$0xff]
      %v1927 = vld [vmem:[%s10] sm:$0xf]
      %v1929 = vlaneseq
      %v1930 = vshrl.u32 %v1929, 7
      %v1931 = vsub.s32 0, %v1930
      %v1932 = vrot.slane %v1927, %v1931
      %v1933 = vlaneseq
      %v1934 = vshrl.u32 %v1933, 7
      %v1935 = vsub.s32 1, %v1934
      %v1936 = vrot.slane %v1927, %v1935
      %v1937 = vlaneseq
      %v1938 = vshrl.u32 %v1937, 7
      %v1939 = vsub.s32 2, %v1938
      %v1940 = vrot.slane %v1927, %v1939
      %v1941 = vlaneseq
      %v1942 = vshrl.u32 %v1941, 7
      %v1943 = vsub.s32 3, %v1942
      %v1944 = vrot.slane %v1927, %v1943
      %v1981 = vunpack.c.l.b16 %v1895
      %v1982 = vunpack.c.h.b16 %v1895
      %v1983 = vunpack.c.l.b16 %v1896
      %v1984 = vunpack.c.h.b16 %v1896
      %v1985 = vunpack.c.l.b16 %v1897
      %v1986 = vunpack.c.h.b16 %v1897
      %v1987 = vunpack.c.l.b16 %v1898
      %v1988 = vunpack.c.h.b16 %v1898
      %v1989 = vunpack.c.l.b16 %v1899
      %v1990 = vunpack.c.h.b16 %v1899
      %v1991 = vunpack.c.l.b16 %v1900
      %v1992 = vunpack.c.h.b16 %v1900
      %v1993 = vunpack.c.l.b16 %v1901
      %v1994 = vunpack.c.h.b16 %v1901
      %v1995 = vunpack.c.l.b16 %v1902
      %v1996 = vunpack.c.h.b16 %v1902
      %v1997 = vunpack.c.l.b16 %v1903
      %v1998 = vunpack.c.h.b16 %v1903
      %v1999 = vunpack.c.l.b16 %v1904
      %v2000 = vunpack.c.h.b16 %v1904
      %v2001 = vunpack.c.l.b16 %v1905
      %v2002 = vunpack.c.h.b16 %v1905
      %v2003 = vunpack.c.l.b16 %v1906
      %v2004 = vunpack.c.h.b16 %v1906
      %v2005 = vunpack.c.l.b16 %v1907
      %v2006 = vunpack.c.h.b16 %v1907
      %v2007 = vunpack.c.l.b16 %v1908
      %v2008 = vunpack.c.h.b16 %v1908
      %v2009 = vunpack.c.l.b16 %v1909
      %v2010 = vunpack.c.h.b16 %v1909
      %v2011 = vunpack.c.l.b16 %v1910
      %v2012 = vunpack.c.h.b16 %v1910
      %v2013 = vunpack.c.l.b16 %v1911
      %v2014 = vunpack.c.h.b16 %v1911
      %v2015 = vunpack.c.l.b16 %v1912
      %v2016 = vunpack.c.h.b16 %v1912
      %v2017 = vunpack.c.l.b16 %v1913
      %v2018 = vunpack.c.h.b16 %v1913
      %v2019 = vunpack.c.l.b16 %v1914
      %v2020 = vunpack.c.h.b16 %v1914
      %v2021 = vunpack.c.l.b16 %v1915
      %v2022 = vunpack.c.h.b16 %v1915
      %v2023 = vunpack.c.l.b16 %v1916
      %v2024 = vunpack.c.h.b16 %v1916
      %v2025 = vunpack.c.l.b16 %v1917
      %v2026 = vunpack.c.h.b16 %v1917
      %v2027 = vunpack.c.l.b16 %v1918
      %v2028 = vunpack.c.h.b16 %v1918
      %v2029 = vunpack.c.l.b16 %v1919
      %v2030 = vunpack.c.h.b16 %v1919
      %v2031 = vunpack.c.l.b16 %v1920
      %v2032 = vunpack.c.h.b16 %v1920
      %v2033 = vunpack.c.l.b16 %v1921
      %v2034 = vunpack.c.h.b16 %v1921
      %v2035 = vunpack.c.l.b16 %v1922
      %v2036 = vunpack.c.h.b16 %v1922
      %v2037 = vunpack.c.l.b16 %v1923
      %v2038 = vunpack.c.h.b16 %v1923
      %v2039 = vunpack.c.l.b16 %v1924
      %v2040 = vunpack.c.h.b16 %v1924
      %v2041 = vunpack.c.l.b16 %v1925
      %v2042 = vunpack.c.h.b16 %v1925
      %v2043 = vunpack.c.l.b16 %v1926
      %v2044 = vunpack.c.h.b16 %v1926
      %v2045 = vpack.c.b16 %v1985, %v1981
      %v2046 = vpack.c.b16 %v1986, %v1982
      %v2047 = vpack.c.b16 %v1987, %v1983
      %v2048 = vpack.c.b16 %v1988, %v1984
      %v2049 = vpack.c.b16 %v1993, %v1989
      %v2050 = vpack.c.b16 %v1994, %v1990
      %v2051 = vpack.c.b16 %v1995, %v1991
      %v2052 = vpack.c.b16 %v1996, %v1992
      %v2053 = vpack.c.b16 %v2001, %v1997
      %v2054 = vpack.c.b16 %v2002, %v1998
      %v2055 = vpack.c.b16 %v2003, %v1999
      %v2056 = vpack.c.b16 %v2004, %v2000
      %v2057 = vpack.c.b16 %v2009, %v2005
      %v2058 = vpack.c.b16 %v2010, %v2006
      %v2059 = vpack.c.b16 %v2011, %v2007
      %v2060 = vpack.c.b16 %v2012, %v2008
      %v2061 = vpack.c.b16 %v2017, %v2013
      %v2062 = vpack.c.b16 %v2018, %v2014
      %v2063 = vpack.c.b16 %v2019, %v2015
      %v2064 = vpack.c.b16 %v2020, %v2016
      %v2065 = vpack.c.b16 %v2025, %v2021
      %v2066 = vpack.c.b16 %v2026, %v2022
      %v2067 = vpack.c.b16 %v2027, %v2023
      %v2068 = vpack.c.b16 %v2028, %v2024
      %v2069 = vpack.c.b16 %v2033, %v2029
      %v2070 = vpack.c.b16 %v2034, %v2030
      %v2071 = vpack.c.b16 %v2035, %v2031
      %v2072 = vpack.c.b16 %v2036, %v2032
      %v2073 = vpack.c.b16 %v2041, %v2037
      %v2074 = vpack.c.b16 %v2042, %v2038
      %v2075 = vpack.c.b16 %v2043, %v2039
      %v2076 = vpack.c.b16 %v2044, %v2040
      %2109 = vmatprep.subr.bf16.mxu0 %v2046
      %2110 = vmatpush1.bf16.msra.mxu0 %v2045
      %2111 = vmatprep.subr.bf16.mxu0 %v2050
      %2112 = vmatpush1.bf16.msra.mxu0 %v2049
      %2113 = vmatprep.subr.bf16.mxu0 %v2054
      %2114 = vmatpush1.bf16.msra.mxu0 %v2053
      %2115 = vmatprep.subr.bf16.mxu0 %v2058
      %2116 = vmatpush1.bf16.msra.mxu0 %v2057
      %2117 = vmatprep.subr.bf16.mxu0 %v2062
      %2118 = vmatpush1.bf16.msra.mxu0 %v2061
      %2119 = vmatprep.subr.bf16.mxu0 %v2066
      %2120 = vmatpush1.bf16.msra.mxu0 %v2065
      %2121 = vmatprep.subr.bf16.mxu0 %v2070
      %2122 = vmatpush1.bf16.msra.mxu0 %v2069
      %2123 = vmatprep.subr.bf16.mxu0 %v2074
      %2124 = vmatpush1.bf16.msra.mxu0 %v2073
      %2125 = vmatprep.subr.bf16.mxu0 0
      %2126 = vmatpush1.bf16.msra.mxu0 0
      %2127 = vmatprep.subr.bf16.mxu0 0
      %2128 = vmatpush1.bf16.msra.mxu0 0
      %2129 = vmatprep.subr.bf16.mxu0 0
      %2130 = vmatpush1.bf16.msra.mxu0 0
      %2131 = vmatprep.subr.bf16.mxu0 0
      %2132 = vmatpush1.bf16.msra.mxu0 0
      %2133 = vmatprep.subr.bf16.mxu0 0
      %2134 = vmatpush1.bf16.msra.mxu0 0
      %2135 = vmatprep.subr.bf16.mxu0 0
      %2136 = vmatpush1.bf16.msra.mxu0 0
      %2137 = vmatprep.subr.bf16.mxu0 0
      %2138 = vmatpush1.bf16.msra.mxu0 0
      %2139 = vmatprep.subr.bf16.mxu0 0
      %2140 = vmatpush1.bf16.msra.mxu0 0
      %2141 = vmatprep.mubr.bf16.mxu0 0
      %2142 = vmatmul.mubr.bf16.gmra.mrb[0].mxu0 %v1894
      %v2143 = vpop.f32.mrb[0].mxu0
      %v2144 = vadd.f32 %v1932, %v2143
      %v2145 = vpop.f32.mrb[0].mxu0
      %v2146 = vadd.f32 %v1936, %v2145
      %v2147 = vpop.f32.mrb[0].mxu0
      %v2148 = vadd.f32 %v1932, %v2147
      %v2149 = vpop.f32.mrb[0].mxu0
      %v2150 = vadd.f32 %v1936, %v2149
      %2151 = vdwg.mxu0
      %2152 = vmatprep.subr.bf16.mxu0 %v2048
      %2153 = vmatpush1.bf16.msra.mxu0 %v2047
      %2154 = vmatprep.subr.bf16.mxu0 %v2052
      %2155 = vmatpush1.bf16.msra.mxu0 %v2051
      %2156 = vmatprep.subr.bf16.mxu0 %v2056
      %2157 = vmatpush1.bf16.msra.mxu0 %v2055
      %2158 = vmatprep.subr.bf16.mxu0 %v2060
      %2159 = vmatpush1.bf16.msra.mxu0 %v2059
      %2160 = vmatprep.subr.bf16.mxu0 %v2064
      %2161 = vmatpush1.bf16.msra.mxu0 %v2063
      %2162 = vmatprep.subr.bf16.mxu0 %v2068
      %2163 = vmatpush1.bf16.msra.mxu0 %v2067
      %2164 = vmatprep.subr.bf16.mxu0 %v2072
      %2165 = vmatpush1.bf16.msra.mxu0 %v2071
      %2166 = vmatprep.subr.bf16.mxu0 %v2076
      %2167 = vmatpush1.bf16.msra.mxu0 %v2075
      %2168 = vmatprep.subr.bf16.mxu0 0
      %2169 = vmatpush1.bf16.msra.mxu0 0
      %2170 = vmatprep.subr.bf16.mxu0 0
      %2171 = vmatpush1.bf16.msra.mxu0 0
      %2172 = vmatprep.subr.bf16.mxu0 0
      %2173 = vmatpush1.bf16.msra.mxu0 0
      %2174 = vmatprep.subr.bf16.mxu0 0
      %2175 = vmatpush1.bf16.msra.mxu0 0
      %2176 = vmatprep.subr.bf16.mxu0 0
      %2177 = vmatpush1.bf16.msra.mxu0 0
      %2178 = vmatprep.subr.bf16.mxu0 0
      %2179 = vmatpush1.bf16.msra.mxu0 0
      %2180 = vmatprep.subr.bf16.mxu0 0
      %2181 = vmatpush1.bf16.msra.mxu0 0
      %2182 = vmatprep.subr.bf16.mxu0 0
      %2183 = vmatpush1.bf16.msra.mxu0 0
      %2184 = vmatprep.mubr.bf16.mxu0 0
      %2185 = vmatmul.mubr.bf16.gmra.mrb[0].mxu0 %v1894
      %v2186 = vpop.f32.mrb[0].mxu0
      %v2187 = vadd.f32 %v1940, %v2186
      %v2188 = vpop.f32.mrb[0].mxu0
      %v2189 = vadd.f32 %v1944, %v2188
      %v2190 = vpop.f32.mrb[0].mxu0
      %v2191 = vadd.f32 %v1940, %v2190
      %v2192 = vpop.f32.mrb[0].mxu0
      %v2193 = vadd.f32 %v1944, %v2192
      %2194 = vdwg.mxu0
      %v2195 = vmul.f32 %v2144, 0.5
      %v2196 = vmul.f32 %v2146, 0.5
      %v2197 = vmul.f32 %v2187, 0.5
      %v2198 = vmul.f32 %v2189, 0.5
      %v2199 = vmul.f32 %v2148, 0.5
      %v2200 = vmul.f32 %v2150, 0.5
      %v2201 = vmul.f32 %v2191, 0.5
      %v2202 = vmul.f32 %v2193, 0.5
      %v2203 = vmul.f32 %v2144, 0.044715
      %v2204 = vmul.f32 %v2146, 0.044715
      %v2205 = vmul.f32 %v2187, 0.044715
      %v2206 = vmul.f32 %v2189, 0.044715
      %v2207 = vmul.f32 %v2148, 0.044715
      %v2208 = vmul.f32 %v2150, 0.044715
      %v2209 = vmul.f32 %v2191, 0.044715
      %v2210 = vmul.f32 %v2193, 0.044715
      %v2211 = vmul.f32 %v2203, %v2144
      %v2212 = vmul.f32 %v2204, %v2146
      %v2213 = vmul.f32 %v2205, %v2187
      %v2214 = vmul.f32 %v2206, %v2189
      %v2215 = vmul.f32 %v2207, %v2148
      %v2216 = vmul.f32 %v2208, %v2150
      %v2217 = vmul.f32 %v2209, %v2191
      %v2218 = vmul.f32 %v2210, %v2193
      %v2219 = vmul.f32 %v2211, %v2144
      %v2220 = vmul.f32 %v2212, %v2146
      %v2221 = vmul.f32 %v2213, %v2187
      %v2222 = vmul.f32 %v2214, %v2189
      %v2223 = vmul.f32 %v2215, %v2148
      %v2224 = vmul.f32 %v2216, %v2150
      %v2225 = vmul.f32 %v2217, %v2191
      %v2226 = vmul.f32 %v2218, %v2193
      %v2227 = vadd.f32 %v2144, %v2219
      %v2228 = vadd.f32 %v2146, %v2220
      %v2229 = vadd.f32 %v2187, %v2221
      %v2230 = vadd.f32 %v2189, %v2222
      %v2231 = vadd.f32 %v2148, %v2223
      %v2232 = vadd.f32 %v2150, %v2224
      %v2233 = vadd.f32 %v2191, %v2225
      %v2234 = vadd.f32 %v2193, %v2226
      %v2235 = vmul.f32 %v2227, 0.7978846
      %v2236 = vmul.f32 %v2228, 0.7978846
      %v2237 = vmul.f32 %v2229, 0.7978846
      %v2238 = vmul.f32 %v2230, 0.7978846
      %v2239 = vmul.f32 %v2231, 0.7978846
      %v2240 = vmul.f32 %v2232, 0.7978846
      %v2241 = vmul.f32 %v2233, 0.7978846
      %v2242 = vmul.f32 %v2234, 0.7978846
      %v2243 = vtanh.pop %v2235
      %v2244 = vtanh.pop %v2236
      %v2245 = vtanh.pop %v2237
      %v2246 = vtanh.pop %v2238
      %v2247 = vtanh.pop %v2239
      %v2248 = vtanh.pop %v2240
      %v2249 = vtanh.pop %v2241
      %v2250 = vtanh.pop %v2242
      %v2251 = vadd.f32 %v2243, 1.0
      %v2252 = vadd.f32 %v2244, 1.0
      %v2253 = vadd.f32 %v2245, 1.0
      %v2254 = vadd.f32 %v2246, 1.0
      %v2255 = vadd.f32 %v2247, 1.0
      %v2256 = vadd.f32 %v2248, 1.0
      %v2257 = vadd.f32 %v2249, 1.0
      %v2258 = vadd.f32 %v2250, 1.0
      %v2259 = vmul.f32 %v2195, %v2251
      %v2260 = vmul.f32 %v2196, %v2252
      %v2261 = vmul.f32 %v2197, %v2253
      %v2262 = vmul.f32 %v2198, %v2254
      %v2263 = vmul.f32 %v2199, %v2255
      %v2264 = vmul.f32 %v2200, %v2256
      %v2265 = vmul.f32 %v2201, %v2257
      %v2266 = vmul.f32 %v2202, %v2258
      %v2267 = vpack.c.bf16 %v2263, %v2259
      %v2268 = vpack.c.bf16 %v2264, %v2260
      %v2269 = vpack.c.bf16 %v2265, %v2261
      %v2270 = vpack.c.bf16 %v2266, %v2262
      %v2271 = vld [vmem:[%s11] sm:$0xf]
      %v2272 = vld [vmem:[%s11 + $0x4] sm:$0xf]
      %v2273 = vld [vmem:[%s11 + $0x8] sm:$0xf]
      %v2274 = vld [vmem:[%s11 + $0xc] sm:$0xf]
      %v2275 = vld [vmem:[%s11 + $0x10] sm:$0xf]
      %v2276 = vld [vmem:[%s11 + $0x14] sm:$0xf]
      %v2277 = vld [vmem:[%s11 + $0x18] sm:$0xf]
      %v2278 = vld [vmem:[%s11 + $0x1c] sm:$0xf]
      %v2279 = vld [vmem:[%s11 + $0x20] sm:$0xf]
      %v2280 = vld [vmem:[%s11 + $0x24] sm:$0xf]
      %v2281 = vld [vmem:[%s11 + $0x28] sm:$0xf]
      %v2282 = vld [vmem:[%s11 + $0x2c] sm:$0xf]
      %v2283 = vld [vmem:[%s11 + $0x30] sm:$0xf]
      %v2284 = vld [vmem:[%s11 + $0x34] sm:$0xf]
      %v2285 = vld [vmem:[%s11 + $0x38] sm:$0xf]
      %v2286 = vld [vmem:[%s11 + $0x3c] sm:$0xf]
      %v2287 = vld [vmem:[%s11 + $0x40] sm:$0xf]
      %v2288 = vld [vmem:[%s11 + $0x44] sm:$0xf]
      %v2289 = vld [vmem:[%s11 + $0x48] sm:$0xf]
      %v2290 = vld [vmem:[%s11 + $0x4c] sm:$0xf]
      %v2291 = vld [vmem:[%s11 + $0x50] sm:$0xf]
      %v2292 = vld [vmem:[%s11 + $0x54] sm:$0xf]
      %v2293 = vld [vmem:[%s11 + $0x58] sm:$0xf]
      %v2294 = vld [vmem:[%s11 + $0x5c] sm:$0xf]
      %v2295 = vld [vmem:[%s11 + $0x60] sm:$0xf]
      %v2296 = vld [vmem:[%s11 + $0x64] sm:$0xf]
      %v2297 = vld [vmem:[%s11 + $0x68] sm:$0xf]
      %v2298 = vld [vmem:[%s11 + $0x6c] sm:$0xf]
      %v2299 = vld [vmem:[%s11 + $0x70] sm:$0xf]
      %v2300 = vld [vmem:[%s11 + $0x74] sm:$0xf]
      %v2301 = vld [vmem:[%s11 + $0x78] sm:$0xf]
      %v2302 = vld [vmem:[%s11 + $0x7c] sm:$0xf]
      %v2303 = vld [vmem:[%s11 + $0x80] sm:$0xf]
      %v2304 = vld [vmem:[%s11 + $0x84] sm:$0xf]
      %v2305 = vld [vmem:[%s11 + $0x88] sm:$0xf]
      %v2306 = vld [vmem:[%s11 + $0x8c] sm:$0xf]
      %v2307 = vld [vmem:[%s11 + $0x90] sm:$0xf]
      %v2308 = vld [vmem:[%s11 + $0x94] sm:$0xf]
      %v2309 = vld [vmem:[%s11 + $0x98] sm:$0xf]
      %v2310 = vld [vmem:[%s11 + $0x9c] sm:$0xf]
      %v2311 = vld [vmem:[%s11 + $0xa0] sm:$0xf]
      %v2312 = vld [vmem:[%s11 + $0xa4] sm:$0xf]
      %v2313 = vld [vmem:[%s11 + $0xa8] sm:$0xf]
      %v2314 = vld [vmem:[%s11 + $0xac] sm:$0xf]
      %v2315 = vld [vmem:[%s11 + $0xb0] sm:$0xf]
      %v2316 = vld [vmem:[%s11 + $0xb4] sm:$0xf]
      %v2317 = vld [vmem:[%s11 + $0xb8] sm:$0xf]
      %v2318 = vld [vmem:[%s11 + $0xbc] sm:$0xf]
      %v2319 = vld [vmem:[%s11 + $0xc0] sm:$0xf]
      %v2320 = vld [vmem:[%s11 + $0xc4] sm:$0xf]
      %v2321 = vld [vmem:[%s11 + $0xc8] sm:$0xf]
      %v2322 = vld [vmem:[%s11 + $0xcc] sm:$0xf]
      %v2323 = vld [vmem:[%s11 + $0xd0] sm:$0xf]
      %v2324 = vld [vmem:[%s11 + $0xd4] sm:$0xf]
      %v2325 = vld [vmem:[%s11 + $0xd8] sm:$0xf]
      %v2326 = vld [vmem:[%s11 + $0xdc] sm:$0xf]
      %v2327 = vld [vmem:[%s11 + $0xe0] sm:$0xf]
      %v2328 = vld [vmem:[%s11 + $0xe4] sm:$0xf]
      %v2329 = vld [vmem:[%s11 + $0xe8] sm:$0xf]
      %v2330 = vld [vmem:[%s11 + $0xec] sm:$0xf]
      %v2331 = vld [vmem:[%s11 + $0xf0] sm:$0xf]
      %v2332 = vld [vmem:[%s11 + $0xf4] sm:$0xf]
      %v2333 = vld [vmem:[%s11 + $0xf8] sm:$0xf]
      %v2334 = vld [vmem:[%s11 + $0xfc] sm:$0xf]
      %v2399 = vunpack.c.l.b16 %v2271
      %v2400 = vunpack.c.l.b16 %v2272
      %v2401 = vunpack.c.l.b16 %v2273
      %v2402 = vunpack.c.l.b16 %v2274
      %v2403 = vunpack.c.l.b16 %v2275
      %v2404 = vunpack.c.l.b16 %v2276
      %v2405 = vunpack.c.l.b16 %v2277
      %v2406 = vunpack.c.l.b16 %v2278
      %v2407 = vunpack.c.l.b16 %v2279
      %v2408 = vunpack.c.l.b16 %v2280
      %v2409 = vunpack.c.l.b16 %v2281
      %v2410 = vunpack.c.l.b16 %v2282
      %v2411 = vunpack.c.l.b16 %v2283
      %v2412 = vunpack.c.l.b16 %v2284
      %v2413 = vunpack.c.l.b16 %v2285
      %v2414 = vunpack.c.l.b16 %v2286
      %v2415 = vunpack.c.l.b16 %v2287
      %v2416 = vunpack.c.l.b16 %v2288
      %v2417 = vunpack.c.l.b16 %v2289
      %v2418 = vunpack.c.l.b16 %v2290
      %v2419 = vunpack.c.l.b16 %v2291
      %v2420 = vunpack.c.l.b16 %v2292
      %v2421 = vunpack.c.l.b16 %v2293
      %v2422 = vunpack.c.l.b16 %v2294
      %v2423 = vunpack.c.l.b16 %v2295
      %v2424 = vunpack.c.l.b16 %v2296
      %v2425 = vunpack.c.l.b16 %v2297
      %v2426 = vunpack.c.l.b16 %v2298
      %v2427 = vunpack.c.l.b16 %v2299
      %v2428 = vunpack.c.l.b16 %v2300
      %v2429 = vunpack.c.l.b16 %v2301
      %v2430 = vunpack.c.l.b16 %v2302
      %v2431 = vunpack.c.l.b16 %v2303
      %v2432 = vunpack.c.l.b16 %v2304
      %v2433 = vunpack.c.l.b16 %v2305
      %v2434 = vunpack.c.l.b16 %v2306
      %v2435 = vunpack.c.l.b16 %v2307
      %v2436 = vunpack.c.l.b16 %v2308
      %v2437 = vunpack.c.l.b16 %v2309
      %v2438 = vunpack.c.l.b16 %v2310
      %v2439 = vunpack.c.l.b16 %v2311
      %v2440 = vunpack.c.l.b16 %v2312
      %v2441 = vunpack.c.l.b16 %v2313
      %v2442 = vunpack.c.l.b16 %v2314
      %v2443 = vunpack.c.l.b16 %v2315
      %v2444 = vunpack.c.l.b16 %v2316
      %v2445 = vunpack.c.l.b16 %v2317
      %v2446 = vunpack.c.l.b16 %v2318
      %v2447 = vunpack.c.l.b16 %v2319
      %v2448 = vunpack.c.l.b16 %v2320
      %v2449 = vunpack.c.l.b16 %v2321
      %v2450 = vunpack.c.l.b16 %v2322
      %v2451 = vunpack.c.l.b16 %v2323
      %v2452 = vunpack.c.l.b16 %v2324
      %v2453 = vunpack.c.l.b16 %v2325
      %v2454 = vunpack.c.l.b16 %v2326
      %v2455 = vunpack.c.l.b16 %v2327
      %v2456 = vunpack.c.l.b16 %v2328
      %v2457 = vunpack.c.l.b16 %v2329
      %v2458 = vunpack.c.l.b16 %v2330
      %v2459 = vunpack.c.l.b16 %v2331
      %v2460 = vunpack.c.l.b16 %v2332
      %v2461 = vunpack.c.l.b16 %v2333
      %v2462 = vunpack.c.l.b16 %v2334
      %v2463 = vpack.c.b16 %v2400, %v2399
      %v2464 = vpack.c.b16 %v2402, %v2401
      %v2465 = vpack.c.b16 %v2404, %v2403
      %v2466 = vpack.c.b16 %v2406, %v2405
      %v2467 = vpack.c.b16 %v2408, %v2407
      %v2468 = vpack.c.b16 %v2410, %v2409
      %v2469 = vpack.c.b16 %v2412, %v2411
      %v2470 = vpack.c.b16 %v2414, %v2413
      %v2471 = vpack.c.b16 %v2416, %v2415
      %v2472 = vpack.c.b16 %v2418, %v2417
      %v2473 = vpack.c.b16 %v2420, %v2419
      %v2474 = vpack.c.b16 %v2422, %v2421
      %v2475 = vpack.c.b16 %v2424, %v2423
      %v2476 = vpack.c.b16 %v2426, %v2425
      %v2477 = vpack.c.b16 %v2428, %v2427
      %v2478 = vpack.c.b16 %v2430, %v2429
      %v2479 = vpack.c.b16 %v2432, %v2431
      %v2480 = vpack.c.b16 %v2434, %v2433
      %v2481 = vpack.c.b16 %v2436, %v2435
      %v2482 = vpack.c.b16 %v2438, %v2437
      %v2483 = vpack.c.b16 %v2440, %v2439
      %v2484 = vpack.c.b16 %v2442, %v2441
      %v2485 = vpack.c.b16 %v2444, %v2443
      %v2486 = vpack.c.b16 %v2446, %v2445
      %v2487 = vpack.c.b16 %v2448, %v2447
      %v2488 = vpack.c.b16 %v2450, %v2449
      %v2489 = vpack.c.b16 %v2452, %v2451
      %v2490 = vpack.c.b16 %v2454, %v2453
      %v2491 = vpack.c.b16 %v2456, %v2455
      %v2492 = vpack.c.b16 %v2458, %v2457
      %v2493 = vpack.c.b16 %v2460, %v2459
      %v2494 = vpack.c.b16 %v2462, %v2461
      %2527 = vmatprep.subr.bf16.mxu0 0
      %2528 = vmatpush1.bf16.msra.mxu0 %v2463
      %2529 = vmatprep.subr.bf16.mxu0 0
      %2530 = vmatpush1.bf16.msra.mxu0 %v2464
      %2531 = vmatprep.subr.bf16.mxu0 0
      %2532 = vmatpush1.bf16.msra.mxu0 %v2465
      %2533 = vmatprep.subr.bf16.mxu0 0
      %2534 = vmatpush1.bf16.msra.mxu0 %v2466
      %2535 = vmatprep.subr.bf16.mxu0 0
      %2536 = vmatpush1.bf16.msra.mxu0 %v2467
      %2537 = vmatprep.subr.bf16.mxu0 0
      %2538 = vmatpush1.bf16.msra.mxu0 %v2468
      %2539 = vmatprep.subr.bf16.mxu0 0
      %2540 = vmatpush1.bf16.msra.mxu0 %v2469
      %2541 = vmatprep.subr.bf16.mxu0 0
      %2542 = vmatpush1.bf16.msra.mxu0 %v2470
      %2543 = vmatprep.subr.bf16.mxu0 0
      %2544 = vmatpush1.bf16.msra.mxu0 %v2471
      %2545 = vmatprep.subr.bf16.mxu0 0
      %2546 = vmatpush1.bf16.msra.mxu0 %v2472
      %2547 = vmatprep.subr.bf16.mxu0 0
      %2548 = vmatpush1.bf16.msra.mxu0 %v2473
      %2549 = vmatprep.subr.bf16.mxu0 0
      %2550 = vmatpush1.bf16.msra.mxu0 %v2474
      %2551 = vmatprep.subr.bf16.mxu0 0
      %2552 = vmatpush1.bf16.msra.mxu0 %v2475
      %2553 = vmatprep.subr.bf16.mxu0 0
      %2554 = vmatpush1.bf16.msra.mxu0 %v2476
      %2555 = vmatprep.subr.bf16.mxu0 0
      %2556 = vmatpush1.bf16.msra.mxu0 %v2477
      %2557 = vmatprep.subr.bf16.mxu0 0
      %2558 = vmatpush1.bf16.msra.mxu0 %v2478
      %2559 = vmatprep.mubr.bf16.mxu0 %v2268
      %2560 = vmatmul.mubr.bf16.gmra.mrb[0].mxu0 %v2267
      %v2561 = vpop.f32.mrb[0].mxu0
      %v2562 = vadd.f32 0.0, %v2561
      %v2563 = vpop.f32.mrb[0].mxu0
      %v2564 = vpop.f32.mrb[0].mxu0
      %v2565 = vadd.f32 0.0, %v2564
      %v2566 = vpop.f32.mrb[0].mxu0
      %2567 = vdwg.mxu0
      %2568 = vmatprep.subr.bf16.mxu0 0
      %2569 = vmatpush1.bf16.msra.mxu0 %v2479
      %2570 = vmatprep.subr.bf16.mxu0 0
      %2571 = vmatpush1.bf16.msra.mxu0 %v2480
      %2572 = vmatprep.subr.bf16.mxu0 0
      %2573 = vmatpush1.bf16.msra.mxu0 %v2481
      %2574 = vmatprep.subr.bf16.mxu0 0
      %2575 = vmatpush1.bf16.msra.mxu0 %v2482
      %2576 = vmatprep.subr.bf16.mxu0 0
      %2577 = vmatpush1.bf16.msra.mxu0 %v2483
      %2578 = vmatprep.subr.bf16.mxu0 0
      %2579 = vmatpush1.bf16.msra.mxu0 %v2484
      %2580 = vmatprep.subr.bf16.mxu0 0
      %2581 = vmatpush1.bf16.msra.mxu0 %v2485
      %2582 = vmatprep.subr.bf16.mxu0 0
      %2583 = vmatpush1.bf16.msra.mxu0 %v2486
      %2584 = vmatprep.subr.bf16.mxu0 0
      %2585 = vmatpush1.bf16.msra.mxu0 %v2487
      %2586 = vmatprep.subr.bf16.mxu0 0
      %2587 = vmatpush1.bf16.msra.mxu0 %v2488
      %2588 = vmatprep.subr.bf16.mxu0 0
      %2589 = vmatpush1.bf16.msra.mxu0 %v2489
      %2590 = vmatprep.subr.bf16.mxu0 0
      %2591 = vmatpush1.bf16.msra.mxu0 %v2490
      %2592 = vmatprep.subr.bf16.mxu0 0
      %2593 = vmatpush1.bf16.msra.mxu0 %v2491
      %2594 = vmatprep.subr.bf16.mxu0 0
      %2595 = vmatpush1.bf16.msra.mxu0 %v2492
      %2596 = vmatprep.subr.bf16.mxu0 0
      %2597 = vmatpush1.bf16.msra.mxu0 %v2493
      %2598 = vmatprep.subr.bf16.mxu0 0
      %2599 = vmatpush1.bf16.msra.mxu0 %v2494
      %2600 = vmatprep.mubr.bf16.mxu0 %v2270
      %2601 = vmatmul.mubr.bf16.gmra.mrb[0].mxu0 %v2269
      %v2602 = vpop.f32.mrb[0].mxu0
      %v2603 = vadd.f32 %v2562, %v2602
      %v2604 = vpop.f32.mrb[0].mxu0
      %v2605 = vpop.f32.mrb[0].mxu0
      %v2606 = vadd.f32 %v2565, %v2605
      %v2607 = vpop.f32.mrb[0].mxu0
      %2608 = vdwg.mxu0
      %v2609 = vadd.f32 %v1850, %v2603
      %v2610 = vadd.f32 %v1851, %v2606
      %v2611 = vld [vmem:[%s12] sm:$0x1]
      %v2613 = vlaneseq
      %v2614 = vshrl.u32 %v2613, 7
      %v2615 = vsub.s32 0, %v2614
      %v2616 = vrot.slane %v2611, %v2615
      %v2618 = vadd.f32 %v2609, %v2616
      %v2619 = vadd.f32 %v2610, %v2616
      %2620 = vst [vmem:[%s440] sm:$0xff] %v2618
      %2621 = vst [vmem:[%s440 + $0x8] sm:$0xf] %v2619
      %p2622 = scmp.lt.s32.totalorder %s24, 1
      %s2623 = scalar_select %p2622, %s24, 1
      %s2624 = smul.addr %s2623, 2
      %s2625 = smul.addr %s2624, 8
      %s2626 = scalar_lea.vmem %s13, %s2625
      // Predicated region
      $region73: #{img_text_model_forward.11} parent=71 // pred_check
        %p2627 = pneg %p320
      $region74: #{img_text_model_forward.11} parent=71 // pred_check_branch
        %2629 = sbr.rel (%p2627) target = $region76
      $region75: #{img_text_model_forward.11} parent=71 // pred_region
        _
      $region76: #{img_text_model_forward.11} parent=71 // pred_fallthru
        _
    $region72: #{img_text_model_forward.11} parent=5 // pred_fallthru
      _
    %p2630 = scmp.le.s32.totalorder 2, %s19
    // Predicated region
    $region77: #{img_text_model_forward.11} parent=5 // pred_check
      %p2631 = pneg %p2630
    $region78: #{img_text_model_forward.11} parent=5 // pred_check_branch
      %2633 = sbr.rel (%p2631) target = $region80
    $region79: #{img_text_model_forward.11} parent=5 // pred_region
      %s2634 = ssub.s32 %s19, 2
      // Predicated region
      $region81: #{img_text_model_forward.11} parent=79 // pred_check
        %p2635 = pneg %p326
      $region82: #{img_text_model_forward.11} parent=79 // pred_check_branch
        %2637 = sbr.rel (%p2635) target = $region84
      $region83: #{img_text_model_forward.11} parent=79 // pred_region
        %p2638 = scmp.lt.s32.totalorder %s25, 1
        %s2639 = scalar_select %p2638, %s25, 1
        %s2640 = smul.addr %s2639, 2
        %s2641 = smul.addr %s2640, 8
        %s2642 = scalar_lea.vmem %s13, %s2641
      $region84: #{img_text_model_forward.11} parent=79 // pred_fallthru
        _
    $region80: #{img_text_model_forward.11} parent=5 // pred_fallthru
      _
  $region6: #{img_text_model_forward.11} parent=0 // loop_footer
    %s23 = sadd.s32 1, %s19
  $region7: #{img_text_model_forward.11} parent=0 // loop_footer_branch
    %18 = sbr.rel target = $region3
  $region8: #{img_text_model_forward.11} parent=0 // loop_exit
    _

</llo_original>
